<compile_context>
chip_gen: v7x
topology: tpu7x:2x2x1
jax: 0.10.0
libtpu: 0.0.40
codegen_flags: <defaults>
</compile_context>

<pallas_src>
import functools

import jax
import jax.numpy as jnp
from jax.experimental import pallas as pl
from jax.experimental.pallas import tpu as pltpu

# ---------------- scaled-down hyper-parameters -------------------------------
IMG = 16            # image spatial size        (orig 256)
PATCH = 4           # ViT patch size            (orig 16 / 32)
NPATCH = (IMG // PATCH) ** 2          # 16 patches
NTOK = NPATCH + 1                     # +cls = 17 real tokens
NPAD = 24                             # token axis padded to 8-sublane multiple
DIM = 64            # transformer dim           (orig 192 / 1024)
HEADS = 2
HEAD_DIM = DIM // HEADS
MLP = 128           # transformer MLP dim       (orig 2048)
C_LAT = 64          # latent channels           (orig 512)
LAT = 4             # latent spatial size (4x4, same as original)
LATF = C_LAT * LAT * LAT              # 1024


# ---------------- BlockSpec helpers -------------------------------------------
def _full_spec(shape):
    n = len(shape)
    return pl.BlockSpec(shape, lambda *args, _n=n: (0,) * _n)


def _branch_spec(*rest):
    n = len(rest)
    return pl.BlockSpec((1,) + tuple(rest), lambda i, _n=n: (i,) + (0,) * _n)


# ---------------- in-kernel helpers -------------------------------------------
def _ln(v, g, b):
    mu = jnp.mean(v, axis=-1, keepdims=True)
    var = jnp.mean((v - mu) ** 2, axis=-1, keepdims=True)
    return (v - mu) * jax.lax.rsqrt(var + 1e-5) * g + b


def _masked_softmax(s):
    """Softmax over last axis, masking the padded key columns (>= NTOK)."""
    key_valid = jax.lax.broadcasted_iota(jnp.int32, (1, 1, NPAD), 2) < NTOK
    s = jnp.where(key_valid, s, -1e30)
    m = jnp.max(s, axis=-1, keepdims=True)
    p = jnp.exp(s - m)
    return p * pl.reciprocal(jnp.sum(p, axis=-1, keepdims=True), approx=True)


# ---------------- fused ViT-branch kernel --------------------------------------
def _vit_branch_kernel(patch_ref, pw_ref, base_ref,
                       ln1g_ref, ln1b_ref, wqkv_ref, bqkv_ref, wo_ref, bo_ref,
                       ln2g_ref, ln2b_ref, w1_ref, b1_ref, w2_ref, b2_ref,
                       out_ref, *, batch):
    f32, bf16 = jnp.float32, jnp.bfloat16

    # patch embedding; rows 0 (cls slot) and >= NTOK are zero in `patches`
    # so the matmul leaves them zero; cls/pos/patch-bias are pre-folded in base.
    emb = jnp.dot(patch_ref[0], pw_ref[0], preferred_element_type=f32)  # (B*NPAD, DIM)
    x = emb.reshape(batch, NPAD, DIM) + base_ref[0][None]
    x2 = x.reshape(batch * NPAD, DIM)                                   # f32 residual stream

    # ---- attention (fused QKV, per-head lane slices, in-kernel softmax) ----
    h = _ln(x2, ln1g_ref[0], ln1b_ref[0])
    qkv = jnp.dot(h.astype(bf16), wqkv_ref[0], preferred_element_type=f32) + bqkv_ref[0]
    qkv3 = qkv.reshape(batch, NPAD, 3 * DIM)
    scale = HEAD_DIM ** -0.5
    head_outs = []
    for hd in range(HEADS):
        q = qkv3[..., hd * HEAD_DIM:(hd + 1) * HEAD_DIM]
        k = qkv3[..., DIM + hd * HEAD_DIM:DIM + (hd + 1) * HEAD_DIM]
        v = qkv3[..., 2 * DIM + hd * HEAD_DIM:2 * DIM + (hd + 1) * HEAD_DIM]
        s = jnp.einsum('bqd,bkd->bqk', q.astype(bf16), k.astype(bf16),
                       preferred_element_type=f32) * scale
        p = _masked_softmax(s)
        head_outs.append(jnp.einsum('bqk,bkd->bqd', p.astype(bf16), v.astype(bf16),
                                    preferred_element_type=f32))
    attn = jnp.concatenate(head_outs, axis=-1).reshape(batch * NPAD, DIM)
    attn = jnp.dot(attn.astype(bf16), wo_ref[0], preferred_element_type=f32) + bo_ref[0]
    x2 = x2 + attn

    # ---- MLP ----
    h = _ln(x2, ln2g_ref[0], ln2b_ref[0])
    h = jnp.dot(h.astype(bf16), w1_ref[0], preferred_element_type=f32) + b1_ref[0]
    h = jax.nn.gelu(h, approximate=True)
    h = jnp.dot(h.astype(bf16), w2_ref[0], preferred_element_type=f32) + b2_ref[0]
    x2 = x2 + h

    out_ref[0] = x2.reshape(batch, NPAD, DIM)


# ---------------- fused cross-attention + head kernel ---------------------------
def _cross_head_kernel(tok_ref, cls_ref, wq_ref, bq_ref, wkv_ref, bkv_ref,
                       wo_ref, bo_ref, ln3g_ref, ln3b_ref, hw_ref, hb_ref,
                       out_ref, *, batch):
    f32, bf16 = jnp.float32, jnp.bfloat16
    toks = tok_ref[...]                                   # (2, B, NPAD, DIM)
    scale = DIM ** -0.5
    feats = []
    for br in range(2):
        cls2 = cls_ref[br]                                # (B, DIM)  own branch cls
        ctx2 = toks[1 - br].reshape(batch * NPAD, DIM)    # other branch tokens
        q = jnp.dot(cls2.astype(bf16), wq_ref[br], preferred_element_type=f32) + bq_ref[br]
        kv = jnp.dot(ctx2.astype(bf16), wkv_ref[br], preferred_element_type=f32) + bkv_ref[br]
        kv3 = kv.reshape(batch, NPAD, 2 * DIM)
        k3 = kv3[..., :DIM]
        v3 = kv3[..., DIM:]
        s = jnp.einsum('bqd,bkd->bqk', q.reshape(batch, 1, DIM).astype(bf16),
                       k3.astype(bf16), preferred_element_type=f32) * scale
        p = _masked_softmax(s)                            # (B, 1, NPAD)
        o = jnp.einsum('bqk,bkd->bqd', p.astype(bf16), v3.astype(bf16),
                       preferred_element_type=f32).reshape(batch, DIM)
        o = jnp.dot(o.astype(bf16), wo_ref[br], preferred_element_type=f32) + bo_ref[br]
        feats.append(_ln(cls2 + o, ln3g_ref[br], ln3b_ref[br]))
    feat = jnp.concatenate(feats, axis=-1)                # (B, 2*DIM)
    out_ref[...] = (jnp.dot(feat.astype(bf16), hw_ref[...],
                            preferred_element_type=f32) + hb_ref[...])


# ---------------- conv (im2col matmul) kernels ----------------------------------
def _conv_mm_kernel(col_ref, w_ref, b_ref, o_ref, *, act):
    y = jnp.dot(col_ref[...], w_ref[...], preferred_element_type=jnp.float32) + b_ref[...]
    if act == "relu":
        y = jnp.maximum(y, 0.0)
    elif act == "tanh":
        y = jnp.tanh(y)
    o_ref[...] = y


def _enc_final_kernel(col_ref, w_ref, b_ref, vit_ref, o_ref, *, half_rows):
    # last encoder conv on the [vi; ir] stacked batch + fused x1 + x2 + vit_feat
    y = jnp.dot(col_ref[...], w_ref[...], preferred_element_type=jnp.float32) + b_ref[...]
    y = y.reshape(2, half_rows, C_LAT)
    o_ref[...] = y[0] + y[1] + vit_ref[...]


# ---------------- wrapper-side glue (pure XLA, fused under jit) ------------------
def im2col(x, stride, pad):
    Bc, H, W, C = x.shape
    xp = jnp.pad(x, ((0, 0), (pad, pad), (pad, pad), (0, 0)))
    Ho = (H + 2 * pad - 3) // stride + 1
    Wo = (W + 2 * pad - 3) // stride + 1
    cols = []
    for i in range(3):
        for j in range(3):
            cols.append(xp[:, i:i + Ho * stride:stride, j:j + Wo * stride:stride, :])
    col = jnp.concatenate(cols, axis=-1).reshape(Bc * Ho * Wo, 9 * C)
    return col, (Bc, Ho, Wo)


def conv2d(x, w, b, *, stride=1, pad=1, act="none"):
    col, (Bc, Ho, Wo) = im2col(x, stride, pad)
    Cout = w.shape[-1]
    M, K = col.shape
    y = pl.pallas_call(
        functools.partial(_conv_mm_kernel, act=act),
        out_shape=jax.ShapeDtypeStruct((M, Cout), jnp.float32),
        grid=(1,),
        in_specs=[_full_spec((M, K)), _full_spec((K, Cout)), _full_spec((1, Cout))],
        out_specs=_full_spec((M, Cout)),
    )(col.astype(jnp.bfloat16), w.reshape(K, Cout).astype(jnp.bfloat16),
      b.reshape(1, Cout).astype(jnp.float32))
    return y.reshape(Bc, Ho, Wo, Cout)


def upsample2x(x):
    return jnp.repeat(jnp.repeat(x, 2, axis=1), 2, axis=2)


def encoder_fused(x, vit_feat_rows, p, batch):
    """x: (2B,16,16,1) = [vi; ir]; vit_feat_rows: (B*16, C_LAT).  Returns fused latent."""
    h = conv2d(x, p[0]["w"], p[0]["b"], stride=2, act="relu")       # (2B, 8, 8, 16)
    h = conv2d(h, p[1]["w"], p[1]["b"], stride=2, act="relu")       # (2B, 4, 4, 32)
    col, _ = im2col(h, 1, 1)                                        # (2B*16, 288)
    M, K = col.shape
    half = batch * LAT * LAT
    fused = pl.pallas_call(
        functools.partial(_enc_final_kernel, half_rows=half),
        out_shape=jax.ShapeDtypeStruct((half, C_LAT), jnp.float32),
        grid=(1,),
        in_specs=[_full_spec((M, K)), _full_spec((K, C_LAT)),
                  _full_spec((1, C_LAT)), _full_spec((half, C_LAT))],
        out_specs=_full_spec((half, C_LAT)),
    )(col.astype(jnp.bfloat16), p[2]["w"].reshape(K, C_LAT).astype(jnp.bfloat16),
      p[2]["b"].reshape(1, C_LAT).astype(jnp.float32), vit_feat_rows)
    return fused.reshape(batch, LAT, LAT, C_LAT)


def decoder_fused(x, p):
    x = conv2d(x, p[0]["w"], p[0]["b"], stride=1, act="relu")       # (B,4,4,32)
    x = upsample2x(x)                                               # -> 8x8
    x = conv2d(x, p[1]["w"], p[1]["b"], stride=1, act="relu")       # (B,8,8,16)
    x = upsample2x(x)                                               # -> 16x16
    x = conv2d(x, p[2]["w"], p[2]["b"], stride=1, act="tanh")       # (B,16,16,1)
    return x


def cross_vit_fused(vi, ir, params):
    B = vi.shape[0]
    bf16 = jnp.bfloat16

    def patches_of(img):
        p = img.reshape(B, IMG // PATCH, PATCH, IMG // PATCH, PATCH, 1)
        p = p.transpose(0, 1, 3, 2, 4, 5).reshape(B, NPATCH, PATCH * PATCH)
        p = jnp.pad(p, ((0, 0), (1, NPAD - NTOK), (0, 0)))   # zero cls slot + tail pad
        return p.reshape(B * NPAD, PATCH * PATCH)

    patches = jnp.stack([patches_of(vi), patches_of(ir)], 0).astype(bf16)   # (2,B*NPAD,16)

    sm, lg = params["sm"], params["lg"]

    def st(k):
        return jnp.stack([sm[k], lg[k]], 0)

    def r2(k):
        v = st(k)
        return v.reshape(2, 1, v.shape[-1])

    def base_of(p):
        row0 = p["pos"][0:1] + p["cls"].reshape(1, DIM)
        rows = p["pos"][1:] + p["patch_b"].reshape(1, DIM)
        return jnp.concatenate(
            [row0, rows, jnp.zeros((NPAD - NTOK, DIM), jnp.float32)], axis=0)

    base = jnp.stack([base_of(sm), base_of(lg)], 0)                          # (2,NPAD,DIM)

    tokens = pl.pallas_call(
        functools.partial(_vit_branch_kernel, batch=B),
        out_shape=jax.ShapeDtypeStruct((2, B, NPAD, DIM), jnp.float32),
        grid=(2,),
        in_specs=[
            _branch_spec(B * NPAD, PATCH * PATCH),
            _branch_spec(PATCH * PATCH, DIM),
            _branch_spec(NPAD, DIM),
            _branch_spec(1, DIM), _branch_spec(1, DIM),
            _branch_spec(DIM, 3 * DIM), _branch_spec(1, 3 * DIM),
            _branch_spec(DIM, DIM), _branch_spec(1, DIM),
            _branch_spec(1, DIM), _branch_spec(1, DIM),
            _branch_spec(DIM, MLP), _branch_spec(1, MLP),
            _branch_spec(MLP, DIM), _branch_spec(1, DIM),
        ],
        out_specs=pl.BlockSpec((1, B, NPAD, DIM), lambda i: (i, 0, 0, 0)),
        compiler_params=pltpu.CompilerParams(dimension_semantics=("parallel",)),
    )(patches,
      st("patch_w").astype(bf16),
      base,
      r2("ln1_g"), r2("ln1_b"),
      st("wqkv").astype(bf16), r2("bqkv"),
      st("wo").astype(bf16), r2("bo"),
      r2("ln2_g"), r2("ln2_b"),
      st("mlp_w1").astype(bf16), r2("mlp_b1"),
      st("mlp_w2").astype(bf16), r2("mlp_b2"))

    cls_in = tokens[:, :, 0, :]                                    # (2, B, DIM)

    cs, cl = params["cross_sm"], params["cross_lg"]

    def xst(k):
        return jnp.stack([cs[k], cl[k]], 0)

    def xr2(k):
        v = xst(k)
        return v.reshape(2, 1, v.shape[-1])

    vit_x = pl.pallas_call(
        functools.partial(_cross_head_kernel, batch=B),
        out_shape=jax.ShapeDtypeStruct((B, LATF), jnp.float32),
        grid=(1,),
        in_specs=[
            _full_spec((2, B, NPAD, DIM)),
            _full_spec((2, B, DIM)),
            _full_spec((2, DIM, DIM)), _full_spec((2, 1, DIM)),
            _full_spec((2, DIM, 2 * DIM)), _full_spec((2, 1, 2 * DIM)),
            _full_spec((2, DIM, DIM)), _full_spec((2, 1, DIM)),
            _full_spec((2, 1, DIM)), _full_spec((2, 1, DIM)),
            _full_spec((2 * DIM, LATF)), _full_spec((1, LATF)),
        ],
        out_specs=_full_spec((B, LATF)),
    )(tokens, cls_in,
      xst("wq").astype(bf16), xr2("bq"),
      xst("wkv").astype(bf16), xr2("bkv"),
      xst("wo").astype(bf16), xr2("bo"),
      jnp.stack([sm["ln3_g"], lg["ln3_g"]], 0).reshape(2, 1, DIM),
      jnp.stack([sm["ln3_b"], lg["ln3_b"]], 0).reshape(2, 1, DIM),
      params["head_w"].astype(bf16),
      params["head_b"].reshape(1, LATF))
    return vit_x                                                   # (B, LATF)


def autoencoder_forward(vi_nchw, ir_nchw, params):
    vi = vi_nchw.transpose(0, 2, 3, 1).astype(jnp.float32)         # NCHW -> NHWC
    ir = ir_nchw.transpose(0, 2, 3, 1).astype(jnp.float32)
    B = vi.shape[0]
    vit_x = cross_vit_fused(vi, ir, params)                        # (B, C_LAT*LAT*LAT)
    # torch's .view(-1, 512, 4, 4) is channel-major (NCHW) -> convert to NHWC rows
    vit_feat = (vit_x.reshape(B, C_LAT, LAT, LAT)
                .transpose(0, 2, 3, 1).reshape(B * LAT * LAT, C_LAT))
    x = jnp.concatenate([vi, ir], axis=0)                          # (2B,16,16,1)
    fused = encoder_fused(x, vit_feat, params["enc"], B)           # (B,4,4,C_LAT)
    out = decoder_fused(fused, params["dec"])                      # (B,16,16,1)
    return out.transpose(0, 3, 1, 2)                               # back to NCHW


# ---------------- deterministic parameter init ---------------------------------
def make_params(key):
    kit = iter(jax.random.split(key, 64))

    def W(*shape, scale=0.05):
        return jax.random.normal(next(kit), shape, dtype=jnp.float32) * scale

    def Z(*shape):
        return jnp.zeros(shape, jnp.float32)

    def O(*shape):
        return jnp.ones(shape, jnp.float32)

    def branch_p():
        return dict(
            patch_w=W(PATCH * PATCH, DIM), patch_b=Z(DIM),
            cls=W(DIM), pos=W(NTOK, DIM),
            ln1_g=O(DIM), ln1_b=Z(DIM),
            wqkv=W(DIM, 3 * DIM), bqkv=Z(3 * DIM),        # fused Q|K|V
            wo=W(DIM, DIM), bo=Z(DIM),
            ln2_g=O(DIM), ln2_b=Z(DIM),
            mlp_w1=W(DIM, MLP), mlp_b1=Z(MLP),
            mlp_w2=W(MLP, DIM), mlp_b2=Z(DIM),
            ln3_g=O(DIM), ln3_b=Z(DIM),
        )

    def cross_p():
        return dict(wq=W(DIM, DIM), bq=Z(DIM),
                    wkv=W(DIM, 2 * DIM), bkv=Z(2 * DIM),  # fused K|V
                    wo=W(DIM, DIM), bo=Z(DIM))

    return dict(
        enc=[dict(w=W(3, 3, 1, 16), b=Z(16)),
             dict(w=W(3, 3, 16, 32), b=Z(32)),
             dict(w=W(3, 3, 32, C_LAT), b=Z(C_LAT))],
        dec=[dict(w=W(3, 3, C_LAT, 32), b=Z(32)),
             dict(w=W(3, 3, 32, 16), b=Z(16)),
             dict(w=W(3, 3, 16, 1), b=Z(1))],
        sm=branch_p(), lg=branch_p(),
        cross_sm=cross_p(), cross_lg=cross_p(),
        head_w=W(2 * DIM, LATF), head_b=Z(LATF),
    )


# ---------------- main ----------------------------------------------------------
if __name__ == "__main__":
    params = make_params(jax.random.PRNGKey(42))
    k_vi, k_ir = jax.random.split(jax.random.PRNGKey(0))
    vi = jax.random.normal(k_vi, (2, 1, IMG, IMG), dtype=jnp.float32)   # NCHW
    ir = jax.random.normal(k_ir, (2, 1, IMG, IMG), dtype=jnp.float32)   # NCHW

    fwd = jax.jit(autoencoder_forward)
    out = fwd(vi, ir, params)
    jax.block_until_ready(out)
    assert out.shape == (2, 1, IMG, IMG), out.shape
    assert jnp.all(jnp.isfinite(out))
    print("KERNEL_OK")
</pallas_src>

<mosaic_0001>
module attributes {stable_mosaic.version = 11 : i64} {
  func.func @_conv_mm_kernel(%arg0: i32, %arg1: memref<256x9xbf16, #tpu.memory_space<vmem>>, %arg2: memref<9x16xbf16, #tpu.memory_space<vmem>>, %arg3: memref<1x16xf32, #tpu.memory_space<vmem>>, %arg4: memref<256x16xf32, #tpu.memory_space<vmem>>) attributes {dimension_semantics = [#tpu.dimension_semantics<arbitrary>], iteration_bounds = array<i64: 1>, scalar_prefetch = 0 : i64, scratch_operands = 0 : i64, tpu.core_type = #tpu.core_type<tc>, window_params = [{pipeline_mode = #tpu.pipeline_mode<synchronous>, transform_indices = @transform_0, window_bounds = array<i64: 256, 9>}, {pipeline_mode = #tpu.pipeline_mode<synchronous>, transform_indices = @transform_1, window_bounds = array<i64: 9, 16>}, {pipeline_mode = #tpu.pipeline_mode<synchronous>, transform_indices = @transform_2, window_bounds = array<i64: 1, 16>}, {pipeline_mode = #tpu.pipeline_mode<synchronous>, transform_indices = @transform_3, window_bounds = array<i64: 256, 16>}]} {
    %c0 = arith.constant 0 : index
    %c0_0 = arith.constant 0 : index
    %0 = vector.load %arg1[%c0, %c0_0] : memref<256x9xbf16, #tpu.memory_space<vmem>>, vector<256x9xbf16>
    %c0_1 = arith.constant 0 : index
    %c0_2 = arith.constant 0 : index
    %1 = vector.load %arg2[%c0_1, %c0_2] : memref<9x16xbf16, #tpu.memory_space<vmem>>, vector<9x16xbf16>
    %cst = arith.constant dense<0.000000e+00> : vector<256x16xf32>
    %2 = tpu.matmul %0, %1, %cst {dimension_numbers = #tpu.dot_dimension_numbers<[1], [0], [0], [1], [0, 0, 1, 1], [], []>} : vector<256x9xbf16>, vector<9x16xbf16>, vector<256x16xf32> -> vector<256x16xf32>
    %c0_3 = arith.constant 0 : index
    %c0_4 = arith.constant 0 : index
    %3 = vector.load %arg3[%c0_3, %c0_4] : memref<1x16xf32, #tpu.memory_space<vmem>>, vector<1x16xf32>
    %4 = vector.broadcast %3 : vector<1x16xf32> to vector<256x16xf32>
    %5 = arith.addf %2, %4 : vector<256x16xf32>
    %cst_5 = arith.constant 0.000000e+00 : f32
    %6 = vector.broadcast %cst_5 : f32 to vector<256x16xf32>
    %7 = arith.maximumf %5, %6 : vector<256x16xf32>
    %c0_6 = arith.constant 0 : index
    %c0_7 = arith.constant 0 : index
    %8 = vector.load %arg4[%c0_6, %c0_7] : memref<256x16xf32, #tpu.memory_space<vmem>>, vector<256x16xf32>
    tpu.vector_store %arg4[%c0_6, %c0_7], %7 {strides = array<i32>} : memref<256x16xf32, #tpu.memory_space<vmem>>, vector<256x16xf32>,
    return
  }
  func.func @transform_0(%arg0: i32) -> (i32, i32) {
    %c0_i32 = arith.constant 0 : i32
    %c0_i32_0 = arith.constant 0 : i32
    %c0_i32_1 = arith.constant 0 : i32
    return %c0_i32, %c0_i32_0 : i32, i32
  }
  func.func @transform_1(%arg0: i32) -> (i32, i32) {
    %c0_i32 = arith.constant 0 : i32
    %c0_i32_0 = arith.constant 0 : i32
    %c0_i32_1 = arith.constant 0 : i32
    return %c0_i32, %c0_i32_0 : i32, i32
  }
  func.func @transform_2(%arg0: i32) -> (i32, i32) {
    %c0_i32 = arith.constant 0 : i32
    %c0_i32_0 = arith.constant 0 : i32
    %c0_i32_1 = arith.constant 0 : i32
    return %c0_i32, %c0_i32_0 : i32, i32
  }
  func.func @transform_3(%arg0: i32) -> (i32, i32) {
    %c0_i32 = arith.constant 0 : i32
    %c0_i32_0 = arith.constant 0 : i32
    %c0_i32_1 = arith.constant 0 : i32
    return %c0_i32, %c0_i32_0 : i32, i32
  }
}

module attributes {stable_mosaic.version = 11 : i64} {
  func.func @_conv_mm_kernel(%arg0: i32, %arg1: memref<64x144xbf16, #tpu.memory_space<vmem>>, %arg2: memref<144x32xbf16, #tpu.memory_space<vmem>>, %arg3: memref<1x32xf32, #tpu.memory_space<vmem>>, %arg4: memref<64x32xf32, #tpu.memory_space<vmem>>) attributes {dimension_semantics = [#tpu.dimension_semantics<arbitrary>], iteration_bounds = array<i64: 1>, scalar_prefetch = 0 : i64, scratch_operands = 0 : i64, tpu.core_type = #tpu.core_type<tc>, window_params = [{pipeline_mode = #tpu.pipeline_mode<synchronous>, transform_indices = @transform_0, window_bounds = array<i64: 64, 144>}, {pipeline_mode = #tpu.pipeline_mode<synchronous>, transform_indices = @transform_1, window_bounds = array<i64: 144, 32>}, {pipeline_mode = #tpu.pipeline_mode<synchronous>, transform_indices = @transform_2, window_bounds = array<i64: 1, 32>}, {pipeline_mode = #tpu.pipeline_mode<synchronous>, transform_indices = @transform_3, window_bounds = array<i64: 64, 32>}]} {
    %c0 = arith.constant 0 : index
    %c0_0 = arith.constant 0 : index
    %0 = vector.load %arg1[%c0, %c0_0] : memref<64x144xbf16, #tpu.memory_space<vmem>>, vector<64x144xbf16>
    %c0_1 = arith.constant 0 : index
    %c0_2 = arith.constant 0 : index
    %1 = vector.load %arg2[%c0_1, %c0_2] : memref<144x32xbf16, #tpu.memory_space<vmem>>, vector<144x32xbf16>
    %cst = arith.constant dense<0.000000e+00> : vector<64x32xf32>
    %2 = tpu.matmul %0, %1, %cst {dimension_numbers = #tpu.dot_dimension_numbers<[1], [0], [0], [1], [0, 0, 1, 1], [], []>} : vector<64x144xbf16>, vector<144x32xbf16>, vector<64x32xf32> -> vector<64x32xf32>
    %c0_3 = arith.constant 0 : index
    %c0_4 = arith.constant 0 : index
    %3 = vector.load %arg3[%c0_3, %c0_4] : memref<1x32xf32, #tpu.memory_space<vmem>>, vector<1x32xf32>
    %4 = vector.broadcast %3 : vector<1x32xf32> to vector<64x32xf32>
    %5 = arith.addf %2, %4 : vector<64x32xf32>
    %cst_5 = arith.constant 0.000000e+00 : f32
    %6 = vector.broadcast %cst_5 : f32 to vector<64x32xf32>
    %7 = arith.maximumf %5, %6 : vector<64x32xf32>
    %c0_6 = arith.constant 0 : index
    %c0_7 = arith.constant 0 : index
    %8 = vector.load %arg4[%c0_6, %c0_7] : memref<64x32xf32, #tpu.memory_space<vmem>>, vector<64x32xf32>
    tpu.vector_store %arg4[%c0_6, %c0_7], %7 {strides = array<i32>} : memref<64x32xf32, #tpu.memory_space<vmem>>, vector<64x32xf32>,
    return
  }
  func.func @transform_0(%arg0: i32) -> (i32, i32) {
    %c0_i32 = arith.constant 0 : i32
    %c0_i32_0 = arith.constant 0 : i32
    %c0_i32_1 = arith.constant 0 : i32
    return %c0_i32, %c0_i32_0 : i32, i32
  }
  func.func @transform_1(%arg0: i32) -> (i32, i32) {
    %c0_i32 = arith.constant 0 : i32
    %c0_i32_0 = arith.constant 0 : i32
    %c0_i32_1 = arith.constant 0 : i32
    return %c0_i32, %c0_i32_0 : i32, i32
  }
  func.func @transform_2(%arg0: i32) -> (i32, i32) {
    %c0_i32 = arith.constant 0 : i32
    %c0_i32_0 = arith.constant 0 : i32
    %c0_i32_1 = arith.constant 0 : i32
    return %c0_i32, %c0_i32_0 : i32, i32
  }
  func.func @transform_3(%arg0: i32) -> (i32, i32) {
    %c0_i32 = arith.constant 0 : i32
    %c0_i32_0 = arith.constant 0 : i32
    %c0_i32_1 = arith.constant 0 : i32
    return %c0_i32, %c0_i32_0 : i32, i32
  }
}

module attributes {stable_mosaic.version = 11 : i64} {
  func.func @_vit_branch_kernel(%arg0: i32, %arg1: memref<1x48x16xbf16, #tpu.memory_space<vmem>>, %arg2: memref<1x16x64xbf16, #tpu.memory_space<vmem>>, %arg3: memref<1x24x64xf32, #tpu.memory_space<vmem>>, %arg4: memref<1x1x64xf32, #tpu.memory_space<vmem>>, %arg5: memref<1x1x64xf32, #tpu.memory_space<vmem>>, %arg6: memref<1x64x192xbf16, #tpu.memory_space<vmem>>, %arg7: memref<1x1x192xf32, #tpu.memory_space<vmem>>, %arg8: memref<1x64x64xbf16, #tpu.memory_space<vmem>>, %arg9: memref<1x1x64xf32, #tpu.memory_space<vmem>>, %arg10: memref<1x1x64xf32, #tpu.memory_space<vmem>>, %arg11: memref<1x1x64xf32, #tpu.memory_space<vmem>>, %arg12: memref<1x64x128xbf16, #tpu.memory_space<vmem>>, %arg13: memref<1x1x128xf32, #tpu.memory_space<vmem>>, %arg14: memref<1x128x64xbf16, #tpu.memory_space<vmem>>, %arg15: memref<1x1x64xf32, #tpu.memory_space<vmem>>, %arg16: memref<1x2x24x64xf32, #tpu.memory_space<vmem>>) attributes {dimension_semantics = [#tpu.dimension_semantics<parallel>], iteration_bounds = array<i64: 2>, scalar_prefetch = 0 : i64, scratch_operands = 0 : i64, tpu.core_type = #tpu.core_type<tc>, window_params = [{transform_indices = @transform_0, window_bounds = array<i64: 1, 48, 16>}, {transform_indices = @transform_1, window_bounds = array<i64: 1, 16, 64>}, {transform_indices = @transform_2, window_bounds = array<i64: 1, 24, 64>}, {transform_indices = @transform_3, window_bounds = array<i64: 1, 1, 64>}, {transform_indices = @transform_4, window_bounds = array<i64: 1, 1, 64>}, {transform_indices = @transform_5, window_bounds = array<i64: 1, 64, 192>}, {transform_indices = @transform_6, window_bounds = array<i64: 1, 1, 192>}, {transform_indices = @transform_7, window_bounds = array<i64: 1, 64, 64>}, {transform_indices = @transform_8, window_bounds = array<i64: 1, 1, 64>}, {transform_indices = @transform_9, window_bounds = array<i64: 1, 1, 64>}, {transform_indices = @transform_10, window_bounds = array<i64: 1, 1, 64>}, {transform_indices = @transform_11, window_bounds = array<i64: 1, 64, 128>}, {transform_indices = @transform_12, window_bounds = array<i64: 1, 1, 128>}, {transform_indices = @transform_13, window_bounds = array<i64: 1, 128, 64>}, {transform_indices = @transform_14, window_bounds = array<i64: 1, 1, 64>}, {transform_indices = @transform_15, window_bounds = array<i64: 1, 2, 24, 64>}]} {
    %c0 = arith.constant 0 : index
    %c0_0 = arith.constant 0 : index
    %c0_1 = arith.constant 0 : index
    %0 = vector.load %arg1[%c0, %c0_0, %c0_1] : memref<1x48x16xbf16, #tpu.memory_space<vmem>>, vector<1x48x16xbf16>
    %1 = vector.shape_cast %0 : vector<1x48x16xbf16> to vector<48x16xbf16>
    %c0_2 = arith.constant 0 : index
    %c0_3 = arith.constant 0 : index
    %c0_4 = arith.constant 0 : index
    %2 = vector.load %arg2[%c0_2, %c0_3, %c0_4] : memref<1x16x64xbf16, #tpu.memory_space<vmem>>, vector<1x16x64xbf16>
    %3 = vector.shape_cast %2 : vector<1x16x64xbf16> to vector<16x64xbf16>
    %cst = arith.constant dense<0.000000e+00> : vector<48x64xf32>
    %4 = tpu.matmul %1, %3, %cst {dimension_numbers = #tpu.dot_dimension_numbers<[1], [0], [0], [1], [0, 0, 1, 1], [], []>} : vector<48x16xbf16>, vector<16x64xbf16>, vector<48x64xf32> -> vector<48x64xf32>
    %5 = vector.shape_cast %4 : vector<48x64xf32> to vector<2x24x64xf32>
    %c0_5 = arith.constant 0 : index
    %c0_6 = arith.constant 0 : index
    %c0_7 = arith.constant 0 : index
    %6 = vector.load %arg3[%c0_5, %c0_6, %c0_7] : memref<1x24x64xf32, #tpu.memory_space<vmem>>, vector<1x24x64xf32>
    %7 = vector.shape_cast %6 : vector<1x24x64xf32> to vector<24x64xf32>
    %8 = vector.shape_cast %7 : vector<24x64xf32> to vector<1x24x64xf32>
    %9 = vector.broadcast %8 : vector<1x24x64xf32> to vector<2x24x64xf32>
    %10 = arith.addf %5, %9 : vector<2x24x64xf32>
    %11 = vector.shape_cast %10 : vector<2x24x64xf32> to vector<48x64xf32>
    %c0_8 = arith.constant 0 : index
    %c0_9 = arith.constant 0 : index
    %c0_10 = arith.constant 0 : index
    %12 = vector.load %arg4[%c0_8, %c0_9, %c0_10] : memref<1x1x64xf32, #tpu.memory_space<vmem>>, vector<1x1x64xf32>
    %13 = vector.shape_cast %12 : vector<1x1x64xf32> to vector<1x64xf32>
    %c0_11 = arith.constant 0 : index
    %c0_12 = arith.constant 0 : index
    %c0_13 = arith.constant 0 : index
    %14 = vector.load %arg5[%c0_11, %c0_12, %c0_13] : memref<1x1x64xf32, #tpu.memory_space<vmem>>, vector<1x1x64xf32>
    %15 = vector.shape_cast %14 : vector<1x1x64xf32> to vector<1x64xf32>
    %cst_14 = arith.constant dense<0.000000e+00> : vector<48xf32>
    %16 = vector.multi_reduction <add>, %11, %cst_14 [1] : vector<48x64xf32> to vector<48xf32>
    %17 = vector.shape_cast %16 : vector<48xf32> to vector<48x1xf32>
    %cst_15 = arith.constant 6.400000e+01 : f32
    %18 = vector.broadcast %cst_15 : f32 to vector<48x1xf32>
    %19 = arith.divf %17, %18 : vector<48x1xf32>
    %20 = vector.broadcast %19 : vector<48x1xf32> to vector<48x64xf32>
    %21 = arith.subf %11, %20 : vector<48x64xf32>
    %22 = arith.mulf %21, %21 : vector<48x64xf32>
    %cst_16 = arith.constant dense<0.000000e+00> : vector<48xf32>
    %23 = vector.multi_reduction <add>, %22, %cst_16 [1] : vector<48x64xf32> to vector<48xf32>
    %24 = vector.shape_cast %23 : vector<48xf32> to vector<48x1xf32>
    %cst_17 = arith.constant 6.400000e+01 : f32
    %25 = vector.broadcast %cst_17 : f32 to vector<48x1xf32>
    %26 = arith.divf %24, %25 : vector<48x1xf32>
    %27 = vector.broadcast %19 : vector<48x1xf32> to vector<48x64xf32>
    %28 = arith.subf %11, %27 : vector<48x64xf32>
    %cst_18 = arith.constant 9.99999974E-6 : f32
    %29 = vector.broadcast %cst_18 : f32 to vector<48x1xf32>
    %30 = arith.addf %26, %29 : vector<48x1xf32>
    %31 = math.rsqrt %30 : vector<48x1xf32>
    %32 = vector.broadcast %31 : vector<48x1xf32> to vector<48x64xf32>
    %33 = arith.mulf %28, %32 : vector<48x64xf32>
    %34 = vector.broadcast %13 : vector<1x64xf32> to vector<48x64xf32>
    %35 = arith.mulf %33, %34 : vector<48x64xf32>
    %36 = vector.broadcast %15 : vector<1x64xf32> to vector<48x64xf32>
    %37 = arith.addf %35, %36 : vector<48x64xf32>
    %38 = arith.truncf %37 : vector<48x64xf32> to vector<48x64xbf16>
    %c0_19 = arith.constant 0 : index
    %c0_20 = arith.constant 0 : index
    %c0_21 = arith.constant 0 : index
    %39 = vector.load %arg6[%c0_19, %c0_20, %c0_21] : memref<1x64x192xbf16, #tpu.memory_space<vmem>>, vector<1x64x192xbf16>
    %40 = vector.shape_cast %39 : vector<1x64x192xbf16> to vector<64x192xbf16>
    %cst_22 = arith.constant dense<0.000000e+00> : vector<48x192xf32>
    %41 = tpu.matmul %38, %40, %cst_22 {dimension_numbers = #tpu.dot_dimension_numbers<[1], [0], [0], [1], [0, 0, 1, 1], [], []>} : vector<48x64xbf16>, vector<64x192xbf16>, vector<48x192xf32> -> vector<48x192xf32>
    %c0_23 = arith.constant 0 : index
    %c0_24 = arith.constant 0 : index
    %c0_25 = arith.constant 0 : index
    %42 = vector.load %arg7[%c0_23, %c0_24, %c0_25] : memref<1x1x192xf32, #tpu.memory_space<vmem>>, vector<1x1x192xf32>
    %43 = vector.shape_cast %42 : vector<1x1x192xf32> to vector<1x192xf32>
    %44 = vector.broadcast %43 : vector<1x192xf32> to vector<48x192xf32>
    %45 = arith.addf %41, %44 : vector<48x192xf32>
    %46 = vector.shape_cast %45 : vector<48x192xf32> to vector<2x24x192xf32>
    %47 = vector.extract_strided_slice %46 {offsets = [0, 0, 0], sizes = [2, 24, 32], strides = [1, 1, 1]} : vector<2x24x192xf32> to vector<2x24x32xf32>
    %48 = vector.extract_strided_slice %46 {offsets = [0, 0, 64], sizes = [2, 24, 32], strides = [1, 1, 1]} : vector<2x24x192xf32> to vector<2x24x32xf32>
    %49 = vector.extract_strided_slice %46 {offsets = [0, 0, 128], sizes = [2, 24, 32], strides = [1, 1, 1]} : vector<2x24x192xf32> to vector<2x24x32xf32>
    %50 = arith.truncf %47 : vector<2x24x32xf32> to vector<2x24x32xbf16>
    %51 = arith.truncf %48 : vector<2x24x32xf32> to vector<2x24x32xbf16>
    "tpu.trace_start"() <{level = 10 : i32, message = "bqd,bkd->bqk"}> : () -> ()
    %cst_26 = arith.constant dense<0.000000e+00> : vector<2x24x24xf32>
    %52 = tpu.matmul %50, %51, %cst_26 {dimension_numbers = #tpu.dot_dimension_numbers<[2], [2], [1], [1], [0, 0, 0, 1, 1, 1], [0], [0]>} : vector<2x24x32xbf16>, vector<2x24x32xbf16>, vector<2x24x24xf32> -> vector<2x24x24xf32>
    "tpu.trace_stop"() : () -> ()
    %cst_27 = arith.constant 0.176776692 : f32
    %53 = vector.broadcast %cst_27 : f32 to vector<2x24x24xf32>
    %54 = arith.mulf %52, %53 : vector<2x24x24xf32>
    %55 = tpu.iota {dimensions = array<i32: 2>} : vector<1x1x24xi32>
    %c17_i32 = arith.constant 17 : i32
    %56 = vector.broadcast %c17_i32 : i32 to vector<1x1x24xi32>
    %57 = arith.cmpi slt, %55, %56 : vector<1x1x24xi32>
    %cst_28 = arith.constant -1.000000e+30 : f32
    %58 = vector.shape_cast %57 : vector<1x1x24xi1> to vector<1x1x24xi1>
    %59 = vector.broadcast %58 : vector<1x1x24xi1> to vector<2x24x24xi1>
    %60 = vector.broadcast %cst_28 : f32 to vector<2x24x24xf32>
    %61 = arith.select %59, %54, %60 : vector<2x24x24xi1>, vector<2x24x24xf32>
    %cst_29 = arith.constant dense<0xFF800000> : vector<2x24xf32>
    %62 = vector.multi_reduction <maximumf>, %61, %cst_29 [2] : vector<2x24x24xf32> to vector<2x24xf32>
    %63 = vector.shape_cast %62 : vector<2x24xf32> to vector<2x24x1xf32>
    %64 = vector.broadcast %63 : vector<2x24x1xf32> to vector<2x24x24xf32>
    %65 = arith.subf %61, %64 : vector<2x24x24xf32>
    %66 = math.exp %65 : vector<2x24x24xf32>
    %cst_30 = arith.constant dense<0.000000e+00> : vector<2x24xf32>
    %67 = vector.multi_reduction <add>, %66, %cst_30 [2] : vector<2x24x24xf32> to vector<2x24xf32>
    %68 = vector.shape_cast %67 : vector<2x24xf32> to vector<2x24x1xf32>
    %69 = tpu.reciprocal %68 {approx = true} : vector<2x24x1xf32> -> vector<2x24x1xf32>
    %70 = vector.broadcast %69 : vector<2x24x1xf32> to vector<2x24x24xf32>
    %71 = arith.mulf %66, %70 : vector<2x24x24xf32>
    %72 = arith.truncf %71 : vector<2x24x24xf32> to vector<2x24x24xbf16>
    %73 = arith.truncf %49 : vector<2x24x32xf32> to vector<2x24x32xbf16>
    "tpu.trace_start"() <{level = 10 : i32, message = "bqk,bkd->bqd"}> : () -> ()
    %cst_31 = arith.constant dense<0.000000e+00> : vector<2x24x32xf32>
    %74 = tpu.matmul %72, %73, %cst_31 {dimension_numbers = #tpu.dot_dimension_numbers<[2], [1], [1], [2], [0, 0, 0, 1, 1, 2], [0], [0]>} : vector<2x24x24xbf16>, vector<2x24x32xbf16>, vector<2x24x32xf32> -> vector<2x24x32xf32>
    "tpu.trace_stop"() : () -> ()
    %75 = vector.extract_strided_slice %46 {offsets = [0, 0, 32], sizes = [2, 24, 32], strides = [1, 1, 1]} : vector<2x24x192xf32> to vector<2x24x32xf32>
    %76 = vector.extract_strided_slice %46 {offsets = [0, 0, 96], sizes = [2, 24, 32], strides = [1, 1, 1]} : vector<2x24x192xf32> to vector<2x24x32xf32>
    %77 = vector.extract_strided_slice %46 {offsets = [0, 0, 160], sizes = [2, 24, 32], strides = [1, 1, 1]} : vector<2x24x192xf32> to vector<2x24x32xf32>
    %78 = arith.truncf %75 : vector<2x24x32xf32> to vector<2x24x32xbf16>
    %79 = arith.truncf %76 : vector<2x24x32xf32> to vector<2x24x32xbf16>
    "tpu.trace_start"() <{level = 10 : i32, message = "bqd,bkd->bqk"}> : () -> ()
    %cst_32 = arith.constant dense<0.000000e+00> : vector<2x24x24xf32>
    %80 = tpu.matmul %78, %79, %cst_32 {dimension_numbers = #tpu.dot_dimension_numbers<[2], [2], [1], [1], [0, 0, 0, 1, 1, 1], [0], [0]>} : vector<2x24x32xbf16>, vector<2x24x32xbf16>, vector<2x24x24xf32> -> vector<2x24x24xf32>
    "tpu.trace_stop"() : () -> ()
    %cst_33 = arith.constant 0.176776692 : f32
    %81 = vector.broadcast %cst_33 : f32 to vector<2x24x24xf32>
    %82 = arith.mulf %80, %81 : vector<2x24x24xf32>
    %83 = tpu.iota {dimensions = array<i32: 2>} : vector<1x1x24xi32>
    %c17_i32_34 = arith.constant 17 : i32
    %84 = vector.broadcast %c17_i32_34 : i32 to vector<1x1x24xi32>
    %85 = arith.cmpi slt, %83, %84 : vector<1x1x24xi32>
    %cst_35 = arith.constant -1.000000e+30 : f32
    %86 = vector.shape_cast %85 : vector<1x1x24xi1> to vector<1x1x24xi1>
    %87 = vector.broadcast %86 : vector<1x1x24xi1> to vector<2x24x24xi1>
    %88 = vector.broadcast %cst_35 : f32 to vector<2x24x24xf32>
    %89 = arith.select %87, %82, %88 : vector<2x24x24xi1>, vector<2x24x24xf32>
    %cst_36 = arith.constant dense<0xFF800000> : vector<2x24xf32>
    %90 = vector.multi_reduction <maximumf>, %89, %cst_36 [2] : vector<2x24x24xf32> to vector<2x24xf32>
    %91 = vector.shape_cast %90 : vector<2x24xf32> to vector<2x24x1xf32>
    %92 = vector.broadcast %91 : vector<2x24x1xf32> to vector<2x24x24xf32>
    %93 = arith.subf %89, %92 : vector<2x24x24xf32>
    %94 = math.exp %93 : vector<2x24x24xf32>
    %cst_37 = arith.constant dense<0.000000e+00> : vector<2x24xf32>
    %95 = vector.multi_reduction <add>, %94, %cst_37 [2] : vector<2x24x24xf32> to vector<2x24xf32>
    %96 = vector.shape_cast %95 : vector<2x24xf32> to vector<2x24x1xf32>
    %97 = tpu.reciprocal %96 {approx = true} : vector<2x24x1xf32> -> vector<2x24x1xf32>
    %98 = vector.broadcast %97 : vector<2x24x1xf32> to vector<2x24x24xf32>
    %99 = arith.mulf %94, %98 : vector<2x24x24xf32>
    %100 = arith.truncf %99 : vector<2x24x24xf32> to vector<2x24x24xbf16>
    %101 = arith.truncf %77 : vector<2x24x32xf32> to vector<2x24x32xbf16>
    "tpu.trace_start"() <{level = 10 : i32, message = "bqk,bkd->bqd"}> : () -> ()
    %cst_38 = arith.constant dense<0.000000e+00> : vector<2x24x32xf32>
    %102 = tpu.matmul %100, %101, %cst_38 {dimension_numbers = #tpu.dot_dimension_numbers<[2], [1], [1], [2], [0, 0, 0, 1, 1, 2], [0], [0]>} : vector<2x24x24xbf16>, vector<2x24x32xbf16>, vector<2x24x32xf32> -> vector<2x24x32xf32>
    "tpu.trace_stop"() : () -> ()
    %103 = tpu.concatenate %74, %102 in 2 : vector<2x24x32xf32>, vector<2x24x32xf32> -> vector<2x24x64xf32>
    %104 = vector.shape_cast %103 : vector<2x24x64xf32> to vector<48x64xf32>
    %105 = arith.truncf %104 : vector<48x64xf32> to vector<48x64xbf16>
    %c0_39 = arith.constant 0 : index
    %c0_40 = arith.constant 0 : index
    %c0_41 = arith.constant 0 : index
    %106 = vector.load %arg8[%c0_39, %c0_40, %c0_41] : memref<1x64x64xbf16, #tpu.memory_space<vmem>>, vector<1x64x64xbf16>
    %107 = vector.shape_cast %106 : vector<1x64x64xbf16> to vector<64x64xbf16>
    %cst_42 = arith.constant dense<0.000000e+00> : vector<48x64xf32>
    %108 = tpu.matmul %105, %107, %cst_42 {dimension_numbers = #tpu.dot_dimension_numbers<[1], [0], [0], [1], [0, 0, 1, 1], [], []>} : vector<48x64xbf16>, vector<64x64xbf16>, vector<48x64xf32> -> vector<48x64xf32>
    %c0_43 = arith.constant 0 : index
    %c0_44 = arith.constant 0 : index
    %c0_45 = arith.constant 0 : index
    %109 = vector.load %arg9[%c0_43, %c0_44, %c0_45] : memref<1x1x64xf32, #tpu.memory_space<vmem>>, vector<1x1x64xf32>
    %110 = vector.shape_cast %109 : vector<1x1x64xf32> to vector<1x64xf32>
    %111 = vector.broadcast %110 : vector<1x64xf32> to vector<48x64xf32>
    %112 = arith.addf %108, %111 : vector<48x64xf32>
    %113 = arith.addf %11, %112 : vector<48x64xf32>
    %c0_46 = arith.constant 0 : index
    %c0_47 = arith.constant 0 : index
    %c0_48 = arith.constant 0 : index
    %114 = vector.load %arg10[%c0_46, %c0_47, %c0_48] : memref<1x1x64xf32, #tpu.memory_space<vmem>>, vector<1x1x64xf32>
    %115 = vector.shape_cast %114 : vector<1x1x64xf32> to vector<1x64xf32>
    %c0_49 = arith.constant 0 : index
    %c0_50 = arith.constant 0 : index
    %c0_51 = arith.constant 0 : index
    %116 = vector.load %arg11[%c0_49, %c0_50, %c0_51] : memref<1x1x64xf32, #tpu.memory_space<vmem>>, vector<1x1x64xf32>
    %117 = vector.shape_cast %116 : vector<1x1x64xf32> to vector<1x64xf32>
    %cst_52 = arith.constant dense<0.000000e+00> : vector<48xf32>
    %118 = vector.multi_reduction <add>, %113, %cst_52 [1] : vector<48x64xf32> to vector<48xf32>
    %119 = vector.shape_cast %118 : vector<48xf32> to vector<48x1xf32>
    %cst_53 = arith.constant 6.400000e+01 : f32
    %120 = vector.broadcast %cst_53 : f32 to vector<48x1xf32>
    %121 = arith.divf %119, %120 : vector<48x1xf32>
    %122 = vector.broadcast %121 : vector<48x1xf32> to vector<48x64xf32>
    %123 = arith.subf %113, %122 : vector<48x64xf32>
    %124 = arith.mulf %123, %123 : vector<48x64xf32>
    %cst_54 = arith.constant dense<0.000000e+00> : vector<48xf32>
    %125 = vector.multi_reduction <add>, %124, %cst_54 [1] : vector<48x64xf32> to vector<48xf32>
    %126 = vector.shape_cast %125 : vector<48xf32> to vector<48x1xf32>
    %cst_55 = arith.constant 6.400000e+01 : f32
    %127 = vector.broadcast %cst_55 : f32 to vector<48x1xf32>
    %128 = arith.divf %126, %127 : vector<48x1xf32>
    %129 = vector.broadcast %121 : vector<48x1xf32> to vector<48x64xf32>
    %130 = arith.subf %113, %129 : vector<48x64xf32>
    %cst_56 = arith.constant 9.99999974E-6 : f32
    %131 = vector.broadcast %cst_56 : f32 to vector<48x1xf32>
    %132 = arith.addf %128, %131 : vector<48x1xf32>
    %133 = math.rsqrt %132 : vector<48x1xf32>
    %134 = vector.broadcast %133 : vector<48x1xf32> to vector<48x64xf32>
    %135 = arith.mulf %130, %134 : vector<48x64xf32>
    %136 = vector.broadcast %115 : vector<1x64xf32> to vector<48x64xf32>
    %137 = arith.mulf %135, %136 : vector<48x64xf32>
    %138 = vector.broadcast %117 : vector<1x64xf32> to vector<48x64xf32>
    %139 = arith.addf %137, %138 : vector<48x64xf32>
    %140 = arith.truncf %139 : vector<48x64xf32> to vector<48x64xbf16>
    %c0_57 = arith.constant 0 : index
    %c0_58 = arith.constant 0 : index
    %c0_59 = arith.constant 0 : index
    %141 = vector.load %arg12[%c0_57, %c0_58, %c0_59] : memref<1x64x128xbf16, #tpu.memory_space<vmem>>, vector<1x64x128xbf16>
    %142 = vector.shape_cast %141 : vector<1x64x128xbf16> to vector<64x128xbf16>
    %cst_60 = arith.constant dense<0.000000e+00> : vector<48x128xf32>
    %143 = tpu.matmul %140, %142, %cst_60 {dimension_numbers = #tpu.dot_dimension_numbers<[1], [0], [0], [1], [0, 0, 1, 1], [], []>} : vector<48x64xbf16>, vector<64x128xbf16>, vector<48x128xf32> -> vector<48x128xf32>
    %c0_61 = arith.constant 0 : index
    %c0_62 = arith.constant 0 : index
    %c0_63 = arith.constant 0 : index
    %144 = vector.load %arg13[%c0_61, %c0_62, %c0_63] : memref<1x1x128xf32, #tpu.memory_space<vmem>>, vector<1x1x128xf32>
    %145 = vector.shape_cast %144 : vector<1x1x128xf32> to vector<1x128xf32>
    %146 = vector.broadcast %145 : vector<1x128xf32> to vector<48x128xf32>
    %147 = arith.addf %143, %146 : vector<48x128xf32>
    %148 = arith.mulf %147, %147 : vector<48x128xf32>
    %149 = arith.mulf %147, %148 : vector<48x128xf32>
    %cst_64 = arith.constant 4.471500e-02 : f32
    %150 = vector.broadcast %cst_64 : f32 to vector<48x128xf32>
    %151 = arith.mulf %150, %149 : vector<48x128xf32>
    %152 = arith.addf %147, %151 : vector<48x128xf32>
    %cst_65 = arith.constant 0.797884583 : f32
    %153 = vector.broadcast %cst_65 : f32 to vector<48x128xf32>
    %154 = arith.mulf %153, %152 : vector<48x128xf32>
    %155 = math.tanh %154 : vector<48x128xf32>
    %cst_66 = arith.constant 1.000000e+00 : f32
    %156 = vector.broadcast %cst_66 : f32 to vector<48x128xf32>
    %157 = arith.addf %156, %155 : vector<48x128xf32>
    %cst_67 = arith.constant 5.000000e-01 : f32
    %158 = vector.broadcast %cst_67 : f32 to vector<48x128xf32>
    %159 = arith.mulf %158, %157 : vector<48x128xf32>
    %160 = arith.mulf %147, %159 : vector<48x128xf32>
    %161 = arith.truncf %160 : vector<48x128xf32> to vector<48x128xbf16>
    %c0_68 = arith.constant 0 : index
    %c0_69 = arith.constant 0 : index
    %c0_70 = arith.constant 0 : index
    %162 = vector.load %arg14[%c0_68, %c0_69, %c0_70] : memref<1x128x64xbf16, #tpu.memory_space<vmem>>, vector<1x128x64xbf16>
    %163 = vector.shape_cast %162 : vector<1x128x64xbf16> to vector<128x64xbf16>
    %cst_71 = arith.constant dense<0.000000e+00> : vector<48x64xf32>
    %164 = tpu.matmul %161, %163, %cst_71 {dimension_numbers = #tpu.dot_dimension_numbers<[1], [0], [0], [1], [0, 0, 1, 1], [], []>} : vector<48x128xbf16>, vector<128x64xbf16>, vector<48x64xf32> -> vector<48x64xf32>
    %c0_72 = arith.constant 0 : index
    %c0_73 = arith.constant 0 : index
    %c0_74 = arith.constant 0 : index
    %165 = vector.load %arg15[%c0_72, %c0_73, %c0_74] : memref<1x1x64xf32, #tpu.memory_space<vmem>>, vector<1x1x64xf32>
    %166 = vector.shape_cast %165 : vector<1x1x64xf32> to vector<1x64xf32>
    %167 = vector.broadcast %166 : vector<1x64xf32> to vector<48x64xf32>
    %168 = arith.addf %164, %167 : vector<48x64xf32>
    %169 = arith.addf %113, %168 : vector<48x64xf32>
    %170 = vector.shape_cast %169 : vector<48x64xf32> to vector<2x24x64xf32>
    %c0_75 = arith.constant 0 : index
    %c0_76 = arith.constant 0 : index
    %c0_77 = arith.constant 0 : index
    %c0_78 = arith.constant 0 : index
    %171 = vector.load %arg16[%c0_75, %c0_76, %c0_77, %c0_78] : memref<1x2x24x64xf32, #tpu.memory_space<vmem>>, vector<1x2x24x64xf32>
    %172 = vector.shape_cast %171 : vector<1x2x24x64xf32> to vector<2x24x64xf32>
    %173 = vector.shape_cast %170 : vector<2x24x64xf32> to vector<1x2x24x64xf32>
    tpu.vector_store %arg16[%c0_75, %c0_76, %c0_77, %c0_78], %173 {strides = array<i32>} : memref<1x2x24x64xf32, #tpu.memory_space<vmem>>, vector<1x2x24x64xf32>,
    return
  }
  func.func @transform_0(%arg0: i32) -> (i32, i32, i32) {
    %c0_i32 = arith.constant 0 : i32
    %c0_i32_0 = arith.constant 0 : i32
    %c0_i32_1 = arith.constant 0 : i32
    return %arg0, %c0_i32, %c0_i32_0 : i32, i32, i32
  }
  func.func @transform_1(%arg0: i32) -> (i32, i32, i32) {
    %c0_i32 = arith.constant 0 : i32
    %c0_i32_0 = arith.constant 0 : i32
    %c0_i32_1 = arith.constant 0 : i32
    return %arg0, %c0_i32, %c0_i32_0 : i32, i32, i32
  }
  func.func @transform_2(%arg0: i32) -> (i32, i32, i32) {
    %c0_i32 = arith.constant 0 : i32
    %c0_i32_0 = arith.constant 0 : i32
    %c0_i32_1 = arith.constant 0 : i32
    return %arg0, %c0_i32, %c0_i32_0 : i32, i32, i32
  }
  func.func @transform_3(%arg0: i32) -> (i32, i32, i32) {
    %c0_i32 = arith.constant 0 : i32
    %c0_i32_0 = arith.constant 0 : i32
    %c0_i32_1 = arith.constant 0 : i32
    return %arg0, %c0_i32, %c0_i32_0 : i32, i32, i32
  }
  func.func @transform_4(%arg0: i32) -> (i32, i32, i32) {
    %c0_i32 = arith.constant 0 : i32
    %c0_i32_0 = arith.constant 0 : i32
    %c0_i32_1 = arith.constant 0 : i32
    return %arg0, %c0_i32, %c0_i32_0 : i32, i32, i32
  }
  func.func @transform_5(%arg0: i32) -> (i32, i32, i32) {
    %c0_i32 = arith.constant 0 : i32
    %c0_i32_0 = arith.constant 0 : i32
    %c0_i32_1 = arith.constant 0 : i32
    return %arg0, %c0_i32, %c0_i32_0 : i32, i32, i32
  }
  func.func @transform_6(%arg0: i32) -> (i32, i32, i32) {
    %c0_i32 = arith.constant 0 : i32
    %c0_i32_0 = arith.constant 0 : i32
    %c0_i32_1 = arith.constant 0 : i32
    return %arg0, %c0_i32, %c0_i32_0 : i32, i32, i32
  }
  func.func @transform_7(%arg0: i32) -> (i32, i32, i32) {
    %c0_i32 = arith.constant 0 : i32
    %c0_i32_0 = arith.constant 0 : i32
    %c0_i32_1 = arith.constant 0 : i32
    return %arg0, %c0_i32, %c0_i32_0 : i32, i32, i32
  }
  func.func @transform_8(%arg0: i32) -> (i32, i32, i32) {
    %c0_i32 = arith.constant 0 : i32
    %c0_i32_0 = arith.constant 0 : i32
    %c0_i32_1 = arith.constant 0 : i32
    return %arg0, %c0_i32, %c0_i32_0 : i32, i32, i32
  }
  func.func @transform_9(%arg0: i32) -> (i32, i32, i32) {
    %c0_i32 = arith.constant 0 : i32
    %c0_i32_0 = arith.constant 0 : i32
    %c0_i32_1 = arith.constant 0 : i32
    return %arg0, %c0_i32, %c0_i32_0 : i32, i32, i32
  }
  func.func @transform_10(%arg0: i32) -> (i32, i32, i32) {
    %c0_i32 = arith.constant 0 : i32
    %c0_i32_0 = arith.constant 0 : i32
    %c0_i32_1 = arith.constant 0 : i32
    return %arg0, %c0_i32, %c0_i32_0 : i32, i32, i32
  }
  func.func @transform_11(%arg0: i32) -> (i32, i32, i32) {
    %c0_i32 = arith.constant 0 : i32
    %c0_i32_0 = arith.constant 0 : i32
    %c0_i32_1 = arith.constant 0 : i32
    return %arg0, %c0_i32, %c0_i32_0 : i32, i32, i32
  }
  func.func @transform_12(%arg0: i32) -> (i32, i32, i32) {
    %c0_i32 = arith.constant 0 : i32
    %c0_i32_0 = arith.constant 0 : i32
    %c0_i32_1 = arith.constant 0 : i32
    return %arg0, %c0_i32, %c0_i32_0 : i32, i32, i32
  }
  func.func @transform_13(%arg0: i32) -> (i32, i32, i32) {
    %c0_i32 = arith.constant 0 : i32
    %c0_i32_0 = arith.constant 0 : i32
    %c0_i32_1 = arith.constant 0 : i32
    return %arg0, %c0_i32, %c0_i32_0 : i32, i32, i32
  }
  func.func @transform_14(%arg0: i32) -> (i32, i32, i32) {
    %c0_i32 = arith.constant 0 : i32
    %c0_i32_0 = arith.constant 0 : i32
    %c0_i32_1 = arith.constant 0 : i32
    return %arg0, %c0_i32, %c0_i32_0 : i32, i32, i32
  }
  func.func @transform_15(%arg0: i32) -> (i32, i32, i32, i32) {
    %c0_i32 = arith.constant 0 : i32
    %c0_i32_0 = arith.constant 0 : i32
    %c0_i32_1 = arith.constant 0 : i32
    %c0_i32_2 = arith.constant 0 : i32
    return %arg0, %c0_i32, %c0_i32_0, %c0_i32_1 : i32, i32, i32, i32
  }
}

module attributes {stable_mosaic.version = 11 : i64} {
  func.func @_cross_head_kernel(%arg0: i32, %arg1: memref<2x2x24x64xf32, #tpu.memory_space<vmem>>, %arg2: memref<2x2x64xf32, #tpu.memory_space<vmem>>, %arg3: memref<2x64x64xbf16, #tpu.memory_space<vmem>>, %arg4: memref<2x1x64xf32, #tpu.memory_space<vmem>>, %arg5: memref<2x64x128xbf16, #tpu.memory_space<vmem>>, %arg6: memref<2x1x128xf32, #tpu.memory_space<vmem>>, %arg7: memref<2x64x64xbf16, #tpu.memory_space<vmem>>, %arg8: memref<2x1x64xf32, #tpu.memory_space<vmem>>, %arg9: memref<2x1x64xf32, #tpu.memory_space<vmem>>, %arg10: memref<2x1x64xf32, #tpu.memory_space<vmem>>, %arg11: memref<128x1024xbf16, #tpu.memory_space<vmem>>, %arg12: memref<1x1024xf32, #tpu.memory_space<vmem>>, %arg13: memref<2x1024xf32, #tpu.memory_space<vmem>>) attributes {dimension_semantics = [#tpu.dimension_semantics<arbitrary>], iteration_bounds = array<i64: 1>, scalar_prefetch = 0 : i64, scratch_operands = 0 : i64, tpu.core_type = #tpu.core_type<tc>, window_params = [{pipeline_mode = #tpu.pipeline_mode<synchronous>, transform_indices = @transform_0, window_bounds = array<i64: 2, 2, 24, 64>}, {pipeline_mode = #tpu.pipeline_mode<synchronous>, transform_indices = @transform_1, window_bounds = array<i64: 2, 2, 64>}, {pipeline_mode = #tpu.pipeline_mode<synchronous>, transform_indices = @transform_2, window_bounds = array<i64: 2, 64, 64>}, {pipeline_mode = #tpu.pipeline_mode<synchronous>, transform_indices = @transform_3, window_bounds = array<i64: 2, 1, 64>}, {pipeline_mode = #tpu.pipeline_mode<synchronous>, transform_indices = @transform_4, window_bounds = array<i64: 2, 64, 128>}, {pipeline_mode = #tpu.pipeline_mode<synchronous>, transform_indices = @transform_5, window_bounds = array<i64: 2, 1, 128>}, {pipeline_mode = #tpu.pipeline_mode<synchronous>, transform_indices = @transform_6, window_bounds = array<i64: 2, 64, 64>}, {pipeline_mode = #tpu.pipeline_mode<synchronous>, transform_indices = @transform_7, window_bounds = array<i64: 2, 1, 64>}, {pipeline_mode = #tpu.pipeline_mode<synchronous>, transform_indices = @transform_8, window_bounds = array<i64: 2, 1, 64>}, {pipeline_mode = #tpu.pipeline_mode<synchronous>, transform_indices = @transform_9, window_bounds = array<i64: 2, 1, 64>}, {pipeline_mode = #tpu.pipeline_mode<synchronous>, transform_indices = @transform_10, window_bounds = array<i64: 128, 1024>}, {pipeline_mode = #tpu.pipeline_mode<synchronous>, transform_indices = @transform_11, window_bounds = array<i64: 1, 1024>}, {pipeline_mode = #tpu.pipeline_mode<synchronous>, transform_indices = @transform_12, window_bounds = array<i64: 2, 1024>}]} {
    %c0 = arith.constant 0 : index
    %c0_0 = arith.constant 0 : index
    %c0_1 = arith.constant 0 : index
    %c0_2 = arith.constant 0 : index
    %0 = vector.load %arg1[%c0, %c0_0, %c0_1, %c0_2] : memref<2x2x24x64xf32, #tpu.memory_space<vmem>>, vector<2x2x24x64xf32>
    %c0_3 = arith.constant 0 : index
    %c0_4 = arith.constant 0 : index
    %c0_5 = arith.constant 0 : index
    %1 = vector.load %arg2[%c0_3, %c0_4, %c0_5] : memref<2x2x64xf32, #tpu.memory_space<vmem>>, vector<1x2x64xf32>
    %2 = vector.shape_cast %1 : vector<1x2x64xf32> to vector<2x64xf32>
    %3 = vector.extract_strided_slice %0 {offsets = [1, 0, 0, 0], sizes = [1, 2, 24, 64], strides = [1, 1, 1, 1]} : vector<2x2x24x64xf32> to vector<1x2x24x64xf32>
    %4 = vector.shape_cast %3 : vector<1x2x24x64xf32> to vector<2x24x64xf32>
    %5 = vector.shape_cast %4 : vector<2x24x64xf32> to vector<48x64xf32>
    %6 = arith.truncf %2 : vector<2x64xf32> to vector<2x64xbf16>
    %c0_6 = arith.constant 0 : index
    %c0_7 = arith.constant 0 : index
    %c0_8 = arith.constant 0 : index
    %7 = vector.load %arg3[%c0_6, %c0_7, %c0_8] : memref<2x64x64xbf16, #tpu.memory_space<vmem>>, vector<1x64x64xbf16>
    %8 = vector.shape_cast %7 : vector<1x64x64xbf16> to vector<64x64xbf16>
    %cst = arith.constant dense<0.000000e+00> : vector<2x64xf32>
    %9 = tpu.matmul %6, %8, %cst {dimension_numbers = #tpu.dot_dimension_numbers<[1], [0], [0], [1], [0, 0, 1, 1], [], []>} : vector<2x64xbf16>, vector<64x64xbf16>, vector<2x64xf32> -> vector<2x64xf32>
    %c0_9 = arith.constant 0 : index
    %c0_10 = arith.constant 0 : index
    %c0_11 = arith.constant 0 : index
    %10 = vector.load %arg4[%c0_9, %c0_10, %c0_11] : memref<2x1x64xf32, #tpu.memory_space<vmem>>, vector<1x1x64xf32>
    %11 = vector.shape_cast %10 : vector<1x1x64xf32> to vector<1x64xf32>
    %12 = vector.broadcast %11 : vector<1x64xf32> to vector<2x64xf32>
    %13 = arith.addf %9, %12 : vector<2x64xf32>
    %14 = arith.truncf %5 : vector<48x64xf32> to vector<48x64xbf16>
    %c0_12 = arith.constant 0 : index
    %c0_13 = arith.constant 0 : index
    %c0_14 = arith.constant 0 : index
    %15 = vector.load %arg5[%c0_12, %c0_13, %c0_14] : memref<2x64x128xbf16, #tpu.memory_space<vmem>>, vector<1x64x128xbf16>
    %16 = vector.shape_cast %15 : vector<1x64x128xbf16> to vector<64x128xbf16>
    %cst_15 = arith.constant dense<0.000000e+00> : vector<48x128xf32>
    %17 = tpu.matmul %14, %16, %cst_15 {dimension_numbers = #tpu.dot_dimension_numbers<[1], [0], [0], [1], [0, 0, 1, 1], [], []>} : vector<48x64xbf16>, vector<64x128xbf16>, vector<48x128xf32> -> vector<48x128xf32>
    %c0_16 = arith.constant 0 : index
    %c0_17 = arith.constant 0 : index
    %c0_18 = arith.constant 0 : index
    %18 = vector.load %arg6[%c0_16, %c0_17, %c0_18] : memref<2x1x128xf32, #tpu.memory_space<vmem>>, vector<1x1x128xf32>
    %19 = vector.shape_cast %18 : vector<1x1x128xf32> to vector<1x128xf32>
    %20 = vector.broadcast %19 : vector<1x128xf32> to vector<48x128xf32>
    %21 = arith.addf %17, %20 : vector<48x128xf32>
    %22 = vector.shape_cast %21 : vector<48x128xf32> to vector<2x24x128xf32>
    %23 = vector.extract_strided_slice %22 {offsets = [0, 0, 0], sizes = [2, 24, 64], strides = [1, 1, 1]} : vector<2x24x128xf32> to vector<2x24x64xf32>
    %24 = vector.extract_strided_slice %22 {offsets = [0, 0, 64], sizes = [2, 24, 64], strides = [1, 1, 1]} : vector<2x24x128xf32> to vector<2x24x64xf32>
    %25 = vector.shape_cast %13 : vector<2x64xf32> to vector<2x1x64xf32>
    %26 = arith.truncf %25 : vector<2x1x64xf32> to vector<2x1x64xbf16>
    %27 = arith.truncf %23 : vector<2x24x64xf32> to vector<2x24x64xbf16>
    "tpu.trace_start"() <{level = 10 : i32, message = "bqd,bkd->bqk"}> : () -> ()
    %cst_19 = arith.constant dense<0.000000e+00> : vector<2x1x24xf32>
    %28 = tpu.matmul %26, %27, %cst_19 {dimension_numbers = #tpu.dot_dimension_numbers<[2], [2], [1], [1], [0, 0, 0, 1, 1, 1], [0], [0]>} : vector<2x1x64xbf16>, vector<2x24x64xbf16>, vector<2x1x24xf32> -> vector<2x1x24xf32>
    "tpu.trace_stop"() : () -> ()
    %cst_20 = arith.constant 1.250000e-01 : f32
    %29 = vector.broadcast %cst_20 : f32 to vector<2x1x24xf32>
    %30 = arith.mulf %28, %29 : vector<2x1x24xf32>
    %31 = tpu.iota {dimensions = array<i32: 2>} : vector<1x1x24xi32>
    %c17_i32 = arith.constant 17 : i32
    %32 = vector.broadcast %c17_i32 : i32 to vector<1x1x24xi32>
    %33 = arith.cmpi slt, %31, %32 : vector<1x1x24xi32>
    %cst_21 = arith.constant -1.000000e+30 : f32
    %34 = vector.shape_cast %33 : vector<1x1x24xi1> to vector<1x1x24xi1>
    %35 = vector.broadcast %34 : vector<1x1x24xi1> to vector<2x1x24xi1>
    %36 = vector.broadcast %cst_21 : f32 to vector<2x1x24xf32>
    %37 = arith.select %35, %30, %36 : vector<2x1x24xi1>, vector<2x1x24xf32>
    %cst_22 = arith.constant dense<0xFF800000> : vector<2x1xf32>
    %38 = vector.multi_reduction <maximumf>, %37, %cst_22 [2] : vector<2x1x24xf32> to vector<2x1xf32>
    %39 = vector.shape_cast %38 : vector<2x1xf32> to vector<2x1x1xf32>
    %40 = vector.broadcast %39 : vector<2x1x1xf32> to vector<2x1x24xf32>
    %41 = arith.subf %37, %40 : vector<2x1x24xf32>
    %42 = math.exp %41 : vector<2x1x24xf32>
    %cst_23 = arith.constant dense<0.000000e+00> : vector<2x1xf32>
    %43 = vector.multi_reduction <add>, %42, %cst_23 [2] : vector<2x1x24xf32> to vector<2x1xf32>
    %44 = vector.shape_cast %43 : vector<2x1xf32> to vector<2x1x1xf32>
    %45 = tpu.reciprocal %44 {approx = true} : vector<2x1x1xf32> -> vector<2x1x1xf32>
    %46 = vector.broadcast %45 : vector<2x1x1xf32> to vector<2x1x24xf32>
    %47 = arith.mulf %42, %46 : vector<2x1x24xf32>
    %48 = arith.truncf %47 : vector<2x1x24xf32> to vector<2x1x24xbf16>
    %49 = arith.truncf %24 : vector<2x24x64xf32> to vector<2x24x64xbf16>
    "tpu.trace_start"() <{level = 10 : i32, message = "bqk,bkd->bqd"}> : () -> ()
    %cst_24 = arith.constant dense<0.000000e+00> : vector<2x1x64xf32>
    %50 = tpu.matmul %48, %49, %cst_24 {dimension_numbers = #tpu.dot_dimension_numbers<[2], [1], [1], [2], [0, 0, 0, 1, 1, 2], [0], [0]>} : vector<2x1x24xbf16>, vector<2x24x64xbf16>, vector<2x1x64xf32> -> vector<2x1x64xf32>
    "tpu.trace_stop"() : () -> ()
    %51 = vector.shape_cast %50 : vector<2x1x64xf32> to vector<2x64xf32>
    %52 = arith.truncf %51 : vector<2x64xf32> to vector<2x64xbf16>
    %c0_25 = arith.constant 0 : index
    %c0_26 = arith.constant 0 : index
    %c0_27 = arith.constant 0 : index
    %53 = vector.load %arg7[%c0_25, %c0_26, %c0_27] : memref<2x64x64xbf16, #tpu.memory_space<vmem>>, vector<1x64x64xbf16>
    %54 = vector.shape_cast %53 : vector<1x64x64xbf16> to vector<64x64xbf16>
    %cst_28 = arith.constant dense<0.000000e+00> : vector<2x64xf32>
    %55 = tpu.matmul %52, %54, %cst_28 {dimension_numbers = #tpu.dot_dimension_numbers<[1], [0], [0], [1], [0, 0, 1, 1], [], []>} : vector<2x64xbf16>, vector<64x64xbf16>, vector<2x64xf32> -> vector<2x64xf32>
    %c0_29 = arith.constant 0 : index
    %c0_30 = arith.constant 0 : index
    %c0_31 = arith.constant 0 : index
    %56 = vector.load %arg8[%c0_29, %c0_30, %c0_31] : memref<2x1x64xf32, #tpu.memory_space<vmem>>, vector<1x1x64xf32>
    %57 = vector.shape_cast %56 : vector<1x1x64xf32> to vector<1x64xf32>
    %58 = vector.broadcast %57 : vector<1x64xf32> to vector<2x64xf32>
    %59 = arith.addf %55, %58 : vector<2x64xf32>
    %60 = arith.addf %2, %59 : vector<2x64xf32>
    %c0_32 = arith.constant 0 : index
    %c0_33 = arith.constant 0 : index
    %c0_34 = arith.constant 0 : index
    %61 = vector.load %arg9[%c0_32, %c0_33, %c0_34] : memref<2x1x64xf32, #tpu.memory_space<vmem>>, vector<1x1x64xf32>
    %62 = vector.shape_cast %61 : vector<1x1x64xf32> to vector<1x64xf32>
    %c0_35 = arith.constant 0 : index
    %c0_36 = arith.constant 0 : index
    %c0_37 = arith.constant 0 : index
    %63 = vector.load %arg10[%c0_35, %c0_36, %c0_37] : memref<2x1x64xf32, #tpu.memory_space<vmem>>, vector<1x1x64xf32>
    %64 = vector.shape_cast %63 : vector<1x1x64xf32> to vector<1x64xf32>
    %cst_38 = arith.constant dense<0.000000e+00> : vector<2xf32>
    %65 = vector.multi_reduction <add>, %60, %cst_38 [1] : vector<2x64xf32> to vector<2xf32>
    %66 = vector.shape_cast %65 : vector<2xf32> to vector<2x1xf32>
    %cst_39 = arith.constant 6.400000e+01 : f32
    %67 = vector.broadcast %cst_39 : f32 to vector<2x1xf32>
    %68 = arith.divf %66, %67 : vector<2x1xf32>
    %69 = vector.broadcast %68 : vector<2x1xf32> to vector<2x64xf32>
    %70 = arith.subf %60, %69 : vector<2x64xf32>
    %71 = arith.mulf %70, %70 : vector<2x64xf32>
    %cst_40 = arith.constant dense<0.000000e+00> : vector<2xf32>
    %72 = vector.multi_reduction <add>, %71, %cst_40 [1] : vector<2x64xf32> to vector<2xf32>
    %73 = vector.shape_cast %72 : vector<2xf32> to vector<2x1xf32>
    %cst_41 = arith.constant 6.400000e+01 : f32
    %74 = vector.broadcast %cst_41 : f32 to vector<2x1xf32>
    %75 = arith.divf %73, %74 : vector<2x1xf32>
    %76 = vector.broadcast %68 : vector<2x1xf32> to vector<2x64xf32>
    %77 = arith.subf %60, %76 : vector<2x64xf32>
    %cst_42 = arith.constant 9.99999974E-6 : f32
    %78 = vector.broadcast %cst_42 : f32 to vector<2x1xf32>
    %79 = arith.addf %75, %78 : vector<2x1xf32>
    %80 = math.rsqrt %79 : vector<2x1xf32>
    %81 = vector.broadcast %80 : vector<2x1xf32> to vector<2x64xf32>
    %82 = arith.mulf %77, %81 : vector<2x64xf32>
    %83 = vector.broadcast %62 : vector<1x64xf32> to vector<2x64xf32>
    %84 = arith.mulf %82, %83 : vector<2x64xf32>
    %85 = vector.broadcast %64 : vector<1x64xf32> to vector<2x64xf32>
    %86 = arith.addf %84, %85 : vector<2x64xf32>
    %c1 = arith.constant 1 : index
    %c0_43 = arith.constant 0 : index
    %c0_44 = arith.constant 0 : index
    %87 = vector.load %arg2[%c1, %c0_43, %c0_44] : memref<2x2x64xf32, #tpu.memory_space<vmem>>, vector<1x2x64xf32>
    %88 = vector.shape_cast %87 : vector<1x2x64xf32> to vector<2x64xf32>
    %89 = vector.extract_strided_slice %0 {offsets = [0, 0, 0, 0], sizes = [1, 2, 24, 64], strides = [1, 1, 1, 1]} : vector<2x2x24x64xf32> to vector<1x2x24x64xf32>
    %90 = vector.shape_cast %89 : vector<1x2x24x64xf32> to vector<2x24x64xf32>
    %91 = vector.shape_cast %90 : vector<2x24x64xf32> to vector<48x64xf32>
    %92 = arith.truncf %88 : vector<2x64xf32> to vector<2x64xbf16>
    %c1_45 = arith.constant 1 : index
    %c0_46 = arith.constant 0 : index
    %c0_47 = arith.constant 0 : index
    %93 = vector.load %arg3[%c1_45, %c0_46, %c0_47] : memref<2x64x64xbf16, #tpu.memory_space<vmem>>, vector<1x64x64xbf16>
    %94 = vector.shape_cast %93 : vector<1x64x64xbf16> to vector<64x64xbf16>
    %cst_48 = arith.constant dense<0.000000e+00> : vector<2x64xf32>
    %95 = tpu.matmul %92, %94, %cst_48 {dimension_numbers = #tpu.dot_dimension_numbers<[1], [0], [0], [1], [0, 0, 1, 1], [], []>} : vector<2x64xbf16>, vector<64x64xbf16>, vector<2x64xf32> -> vector<2x64xf32>
    %c1_49 = arith.constant 1 : index
    %c0_50 = arith.constant 0 : index
    %c0_51 = arith.constant 0 : index
    %96 = vector.load %arg4[%c1_49, %c0_50, %c0_51] : memref<2x1x64xf32, #tpu.memory_space<vmem>>, vector<1x1x64xf32>
    %97 = vector.shape_cast %96 : vector<1x1x64xf32> to vector<1x64xf32>
    %98 = vector.broadcast %97 : vector<1x64xf32> to vector<2x64xf32>
    %99 = arith.addf %95, %98 : vector<2x64xf32>
    %100 = arith.truncf %91 : vector<48x64xf32> to vector<48x64xbf16>
    %c1_52 = arith.constant 1 : index
    %c0_53 = arith.constant 0 : index
    %c0_54 = arith.constant 0 : index
    %101 = vector.load %arg5[%c1_52, %c0_53, %c0_54] : memref<2x64x128xbf16, #tpu.memory_space<vmem>>, vector<1x64x128xbf16>
    %102 = vector.shape_cast %101 : vector<1x64x128xbf16> to vector<64x128xbf16>
    %cst_55 = arith.constant dense<0.000000e+00> : vector<48x128xf32>
    %103 = tpu.matmul %100, %102, %cst_55 {dimension_numbers = #tpu.dot_dimension_numbers<[1], [0], [0], [1], [0, 0, 1, 1], [], []>} : vector<48x64xbf16>, vector<64x128xbf16>, vector<48x128xf32> -> vector<48x128xf32>
    %c1_56 = arith.constant 1 : index
    %c0_57 = arith.constant 0 : index
    %c0_58 = arith.constant 0 : index
    %104 = vector.load %arg6[%c1_56, %c0_57, %c0_58] : memref<2x1x128xf32, #tpu.memory_space<vmem>>, vector<1x1x128xf32>
    %105 = vector.shape_cast %104 : vector<1x1x128xf32> to vector<1x128xf32>
    %106 = vector.broadcast %105 : vector<1x128xf32> to vector<48x128xf32>
    %107 = arith.addf %103, %106 : vector<48x128xf32>
    %108 = vector.shape_cast %107 : vector<48x128xf32> to vector<2x24x128xf32>
    %109 = vector.extract_strided_slice %108 {offsets = [0, 0, 0], sizes = [2, 24, 64], strides = [1, 1, 1]} : vector<2x24x128xf32> to vector<2x24x64xf32>
    %110 = vector.extract_strided_slice %108 {offsets = [0, 0, 64], sizes = [2, 24, 64], strides = [1, 1, 1]} : vector<2x24x128xf32> to vector<2x24x64xf32>
    %111 = vector.shape_cast %99 : vector<2x64xf32> to vector<2x1x64xf32>
    %112 = arith.truncf %111 : vector<2x1x64xf32> to vector<2x1x64xbf16>
    %113 = arith.truncf %109 : vector<2x24x64xf32> to vector<2x24x64xbf16>
    "tpu.trace_start"() <{level = 10 : i32, message = "bqd,bkd->bqk"}> : () -> ()
    %cst_59 = arith.constant dense<0.000000e+00> : vector<2x1x24xf32>
    %114 = tpu.matmul %112, %113, %cst_59 {dimension_numbers = #tpu.dot_dimension_numbers<[2], [2], [1], [1], [0, 0, 0, 1, 1, 1], [0], [0]>} : vector<2x1x64xbf16>, vector<2x24x64xbf16>, vector<2x1x24xf32> -> vector<2x1x24xf32>
    "tpu.trace_stop"() : () -> ()
    %cst_60 = arith.constant 1.250000e-01 : f32
    %115 = vector.broadcast %cst_60 : f32 to vector<2x1x24xf32>
    %116 = arith.mulf %114, %115 : vector<2x1x24xf32>
    %117 = tpu.iota {dimensions = array<i32: 2>} : vector<1x1x24xi32>
    %c17_i32_61 = arith.constant 17 : i32
    %118 = vector.broadcast %c17_i32_61 : i32 to vector<1x1x24xi32>
    %119 = arith.cmpi slt, %117, %118 : vector<1x1x24xi32>
    %cst_62 = arith.constant -1.000000e+30 : f32
    %120 = vector.shape_cast %119 : vector<1x1x24xi1> to vector<1x1x24xi1>
    %121 = vector.broadcast %120 : vector<1x1x24xi1> to vector<2x1x24xi1>
    %122 = vector.broadcast %cst_62 : f32 to vector<2x1x24xf32>
    %123 = arith.select %121, %116, %122 : vector<2x1x24xi1>, vector<2x1x24xf32>
    %cst_63 = arith.constant dense<0xFF800000> : vector<2x1xf32>
    %124 = vector.multi_reduction <maximumf>, %123, %cst_63 [2] : vector<2x1x24xf32> to vector<2x1xf32>
    %125 = vector.shape_cast %124 : vector<2x1xf32> to vector<2x1x1xf32>
    %126 = vector.broadcast %125 : vector<2x1x1xf32> to vector<2x1x24xf32>
    %127 = arith.subf %123, %126 : vector<2x1x24xf32>
    %128 = math.exp %127 : vector<2x1x24xf32>
    %cst_64 = arith.constant dense<0.000000e+00> : vector<2x1xf32>
    %129 = vector.multi_reduction <add>, %128, %cst_64 [2] : vector<2x1x24xf32> to vector<2x1xf32>
    %130 = vector.shape_cast %129 : vector<2x1xf32> to vector<2x1x1xf32>
    %131 = tpu.reciprocal %130 {approx = true} : vector<2x1x1xf32> -> vector<2x1x1xf32>
    %132 = vector.broadcast %131 : vector<2x1x1xf32> to vector<2x1x24xf32>
    %133 = arith.mulf %128, %132 : vector<2x1x24xf32>
    %134 = arith.truncf %133 : vector<2x1x24xf32> to vector<2x1x24xbf16>
    %135 = arith.truncf %110 : vector<2x24x64xf32> to vector<2x24x64xbf16>
    "tpu.trace_start"() <{level = 10 : i32, message = "bqk,bkd->bqd"}> : () -> ()
    %cst_65 = arith.constant dense<0.000000e+00> : vector<2x1x64xf32>
    %136 = tpu.matmul %134, %135, %cst_65 {dimension_numbers = #tpu.dot_dimension_numbers<[2], [1], [1], [2], [0, 0, 0, 1, 1, 2], [0], [0]>} : vector<2x1x24xbf16>, vector<2x24x64xbf16>, vector<2x1x64xf32> -> vector<2x1x64xf32>
    "tpu.trace_stop"() : () -> ()
    %137 = vector.shape_cast %136 : vector<2x1x64xf32> to vector<2x64xf32>
    %138 = arith.truncf %137 : vector<2x64xf32> to vector<2x64xbf16>
    %c1_66 = arith.constant 1 : index
    %c0_67 = arith.constant 0 : index
    %c0_68 = arith.constant 0 : index
    %139 = vector.load %arg7[%c1_66, %c0_67, %c0_68] : memref<2x64x64xbf16, #tpu.memory_space<vmem>>, vector<1x64x64xbf16>
    %140 = vector.shape_cast %139 : vector<1x64x64xbf16> to vector<64x64xbf16>
    %cst_69 = arith.constant dense<0.000000e+00> : vector<2x64xf32>
    %141 = tpu.matmul %138, %140, %cst_69 {dimension_numbers = #tpu.dot_dimension_numbers<[1], [0], [0], [1], [0, 0, 1, 1], [], []>} : vector<2x64xbf16>, vector<64x64xbf16>, vector<2x64xf32> -> vector<2x64xf32>
    %c1_70 = arith.constant 1 : index
    %c0_71 = arith.constant 0 : index
    %c0_72 = arith.constant 0 : index
    %142 = vector.load %arg8[%c1_70, %c0_71, %c0_72] : memref<2x1x64xf32, #tpu.memory_space<vmem>>, vector<1x1x64xf32>
    %143 = vector.shape_cast %142 : vector<1x1x64xf32> to vector<1x64xf32>
    %144 = vector.broadcast %143 : vector<1x64xf32> to vector<2x64xf32>
    %145 = arith.addf %141, %144 : vector<2x64xf32>
    %146 = arith.addf %88, %145 : vector<2x64xf32>
    %c1_73 = arith.constant 1 : index
    %c0_74 = arith.constant 0 : index
    %c0_75 = arith.constant 0 : index
    %147 = vector.load %arg9[%c1_73, %c0_74, %c0_75] : memref<2x1x64xf32, #tpu.memory_space<vmem>>, vector<1x1x64xf32>
    %148 = vector.shape_cast %147 : vector<1x1x64xf32> to vector<1x64xf32>
    %c1_76 = arith.constant 1 : index
    %c0_77 = arith.constant 0 : index
    %c0_78 = arith.constant 0 : index
    %149 = vector.load %arg10[%c1_76, %c0_77, %c0_78] : memref<2x1x64xf32, #tpu.memory_space<vmem>>, vector<1x1x64xf32>
    %150 = vector.shape_cast %149 : vector<1x1x64xf32> to vector<1x64xf32>
    %cst_79 = arith.constant dense<0.000000e+00> : vector<2xf32>
    %151 = vector.multi_reduction <add>, %146, %cst_79 [1] : vector<2x64xf32> to vector<2xf32>
    %152 = vector.shape_cast %151 : vector<2xf32> to vector<2x1xf32>
    %cst_80 = arith.constant 6.400000e+01 : f32
    %153 = vector.broadcast %cst_80 : f32 to vector<2x1xf32>
    %154 = arith.divf %152, %153 : vector<2x1xf32>
    %155 = vector.broadcast %154 : vector<2x1xf32> to vector<2x64xf32>
    %156 = arith.subf %146, %155 : vector<2x64xf32>
    %157 = arith.mulf %156, %156 : vector<2x64xf32>
    %cst_81 = arith.constant dense<0.000000e+00> : vector<2xf32>
    %158 = vector.multi_reduction <add>, %157, %cst_81 [1] : vector<2x64xf32> to vector<2xf32>
    %159 = vector.shape_cast %158 : vector<2xf32> to vector<2x1xf32>
    %cst_82 = arith.constant 6.400000e+01 : f32
    %160 = vector.broadcast %cst_82 : f32 to vector<2x1xf32>
    %161 = arith.divf %159, %160 : vector<2x1xf32>
    %162 = vector.broadcast %154 : vector<2x1xf32> to vector<2x64xf32>
    %163 = arith.subf %146, %162 : vector<2x64xf32>
    %cst_83 = arith.constant 9.99999974E-6 : f32
    %164 = vector.broadcast %cst_83 : f32 to vector<2x1xf32>
    %165 = arith.addf %161, %164 : vector<2x1xf32>
    %166 = math.rsqrt %165 : vector<2x1xf32>
    %167 = vector.broadcast %166 : vector<2x1xf32> to vector<2x64xf32>
    %168 = arith.mulf %163, %167 : vector<2x64xf32>
    %169 = vector.broadcast %148 : vector<1x64xf32> to vector<2x64xf32>
    %170 = arith.mulf %168, %169 : vector<2x64xf32>
    %171 = vector.broadcast %150 : vector<1x64xf32> to vector<2x64xf32>
    %172 = arith.addf %170, %171 : vector<2x64xf32>
    %173 = tpu.concatenate %86, %172 in 1 : vector<2x64xf32>, vector<2x64xf32> -> vector<2x128xf32>
    %174 = arith.truncf %173 : vector<2x128xf32> to vector<2x128xbf16>
    %c0_84 = arith.constant 0 : index
    %c0_85 = arith.constant 0 : index
    %175 = vector.load %arg11[%c0_84, %c0_85] : memref<128x1024xbf16, #tpu.memory_space<vmem>>, vector<128x1024xbf16>
    %cst_86 = arith.constant dense<0.000000e+00> : vector<2x1024xf32>
    %176 = tpu.matmul %174, %175, %cst_86 {dimension_numbers = #tpu.dot_dimension_numbers<[1], [0], [0], [1], [0, 0, 1, 1], [], []>} : vector<2x128xbf16>, vector<128x1024xbf16>, vector<2x1024xf32> -> vector<2x1024xf32>
    %c0_87 = arith.constant 0 : index
    %c0_88 = arith.constant 0 : index
    %177 = vector.load %arg12[%c0_87, %c0_88] : memref<1x1024xf32, #tpu.memory_space<vmem>>, vector<1x1024xf32>
    %178 = vector.broadcast %177 : vector<1x1024xf32> to vector<2x1024xf32>
    %179 = arith.addf %176, %178 : vector<2x1024xf32>
    %c0_89 = arith.constant 0 : index
    %c0_90 = arith.constant 0 : index
    %180 = vector.load %arg13[%c0_89, %c0_90] : memref<2x1024xf32, #tpu.memory_space<vmem>>, vector<2x1024xf32>
    tpu.vector_store %arg13[%c0_89, %c0_90], %179 {strides = array<i32>} : memref<2x1024xf32, #tpu.memory_space<vmem>>, vector<2x1024xf32>,
    return
  }
  func.func @transform_0(%arg0: i32) -> (i32, i32, i32, i32) {
    %c0_i32 = arith.constant 0 : i32
    %c0_i32_0 = arith.constant 0 : i32
    %c0_i32_1 = arith.constant 0 : i32
    %c0_i32_2 = arith.constant 0 : i32
    %c0_i32_3 = arith.constant 0 : i32
    return %c0_i32, %c0_i32_0, %c0_i32_1, %c0_i32_2 : i32, i32, i32, i32
  }
  func.func @transform_1(%arg0: i32) -> (i32, i32, i32) {
    %c0_i32 = arith.constant 0 : i32
    %c0_i32_0 = arith.constant 0 : i32
    %c0_i32_1 = arith.constant 0 : i32
    %c0_i32_2 = arith.constant 0 : i32
    return %c0_i32, %c0_i32_0, %c0_i32_1 : i32, i32, i32
  }
  func.func @transform_2(%arg0: i32) -> (i32, i32, i32) {
    %c0_i32 = arith.constant 0 : i32
    %c0_i32_0 = arith.constant 0 : i32
    %c0_i32_1 = arith.constant 0 : i32
    %c0_i32_2 = arith.constant 0 : i32
    return %c0_i32, %c0_i32_0, %c0_i32_1 : i32, i32, i32
  }
  func.func @transform_3(%arg0: i32) -> (i32, i32, i32) {
    %c0_i32 = arith.constant 0 : i32
    %c0_i32_0 = arith.constant 0 : i32
    %c0_i32_1 = arith.constant 0 : i32
    %c0_i32_2 = arith.constant 0 : i32
    return %c0_i32, %c0_i32_0, %c0_i32_1 : i32, i32, i32
  }
  func.func @transform_4(%arg0: i32) -> (i32, i32, i32) {
    %c0_i32 = arith.constant 0 : i32
    %c0_i32_0 = arith.constant 0 : i32
    %c0_i32_1 = arith.constant 0 : i32
    %c0_i32_2 = arith.constant 0 : i32
    return %c0_i32, %c0_i32_0, %c0_i32_1 : i32, i32, i32
  }
  func.func @transform_5(%arg0: i32) -> (i32, i32, i32) {
    %c0_i32 = arith.constant 0 : i32
    %c0_i32_0 = arith.constant 0 : i32
    %c0_i32_1 = arith.constant 0 : i32
    %c0_i32_2 = arith.constant 0 : i32
    return %c0_i32, %c0_i32_0, %c0_i32_1 : i32, i32, i32
  }
  func.func @transform_6(%arg0: i32) -> (i32, i32, i32) {
    %c0_i32 = arith.constant 0 : i32
    %c0_i32_0 = arith.constant 0 : i32
    %c0_i32_1 = arith.constant 0 : i32
    %c0_i32_2 = arith.constant 0 : i32
    return %c0_i32, %c0_i32_0, %c0_i32_1 : i32, i32, i32
  }
  func.func @transform_7(%arg0: i32) -> (i32, i32, i32) {
    %c0_i32 = arith.constant 0 : i32
    %c0_i32_0 = arith.constant 0 : i32
    %c0_i32_1 = arith.constant 0 : i32
    %c0_i32_2 = arith.constant 0 : i32
    return %c0_i32, %c0_i32_0, %c0_i32_1 : i32, i32, i32
  }
  func.func @transform_8(%arg0: i32) -> (i32, i32, i32) {
    %c0_i32 = arith.constant 0 : i32
    %c0_i32_0 = arith.constant 0 : i32
    %c0_i32_1 = arith.constant 0 : i32
    %c0_i32_2 = arith.constant 0 : i32
    return %c0_i32, %c0_i32_0, %c0_i32_1 : i32, i32, i32
  }
  func.func @transform_9(%arg0: i32) -> (i32, i32, i32) {
    %c0_i32 = arith.constant 0 : i32
    %c0_i32_0 = arith.constant 0 : i32
    %c0_i32_1 = arith.constant 0 : i32
    %c0_i32_2 = arith.constant 0 : i32
    return %c0_i32, %c0_i32_0, %c0_i32_1 : i32, i32, i32
  }
  func.func @transform_10(%arg0: i32) -> (i32, i32) {
    %c0_i32 = arith.constant 0 : i32
    %c0_i32_0 = arith.constant 0 : i32
    %c0_i32_1 = arith.constant 0 : i32
    return %c0_i32, %c0_i32_0 : i32, i32
  }
  func.func @transform_11(%arg0: i32) -> (i32, i32) {
    %c0_i32 = arith.constant 0 : i32
    %c0_i32_0 = arith.constant 0 : i32
    %c0_i32_1 = arith.constant 0 : i32
    return %c0_i32, %c0_i32_0 : i32, i32
  }
  func.func @transform_12(%arg0: i32) -> (i32, i32) {
    %c0_i32 = arith.constant 0 : i32
    %c0_i32_0 = arith.constant 0 : i32
    %c0_i32_1 = arith.constant 0 : i32
    return %c0_i32, %c0_i32_0 : i32, i32
  }
}

module attributes {stable_mosaic.version = 11 : i64} {
  func.func @_enc_final_kernel(%arg0: i32, %arg1: memref<64x288xbf16, #tpu.memory_space<vmem>>, %arg2: memref<288x64xbf16, #tpu.memory_space<vmem>>, %arg3: memref<1x64xf32, #tpu.memory_space<vmem>>, %arg4: memref<32x64xf32, #tpu.memory_space<vmem>>, %arg5: memref<32x64xf32, #tpu.memory_space<vmem>>) attributes {dimension_semantics = [#tpu.dimension_semantics<arbitrary>], iteration_bounds = array<i64: 1>, scalar_prefetch = 0 : i64, scratch_operands = 0 : i64, tpu.core_type = #tpu.core_type<tc>, window_params = [{pipeline_mode = #tpu.pipeline_mode<synchronous>, transform_indices = @transform_0, window_bounds = array<i64: 64, 288>}, {pipeline_mode = #tpu.pipeline_mode<synchronous>, transform_indices = @transform_1, window_bounds = array<i64: 288, 64>}, {pipeline_mode = #tpu.pipeline_mode<synchronous>, transform_indices = @transform_2, window_bounds = array<i64: 1, 64>}, {pipeline_mode = #tpu.pipeline_mode<synchronous>, transform_indices = @transform_3, window_bounds = array<i64: 32, 64>}, {pipeline_mode = #tpu.pipeline_mode<synchronous>, transform_indices = @transform_4, window_bounds = array<i64: 32, 64>}]} {
    %c0 = arith.constant 0 : index
    %c0_0 = arith.constant 0 : index
    %0 = vector.load %arg1[%c0, %c0_0] : memref<64x288xbf16, #tpu.memory_space<vmem>>, vector<64x288xbf16>
    %c0_1 = arith.constant 0 : index
    %c0_2 = arith.constant 0 : index
    %1 = vector.load %arg2[%c0_1, %c0_2] : memref<288x64xbf16, #tpu.memory_space<vmem>>, vector<288x64xbf16>
    %cst = arith.constant dense<0.000000e+00> : vector<64x64xf32>
    %2 = tpu.matmul %0, %1, %cst {dimension_numbers = #tpu.dot_dimension_numbers<[1], [0], [0], [1], [0, 0, 1, 1], [], []>} : vector<64x288xbf16>, vector<288x64xbf16>, vector<64x64xf32> -> vector<64x64xf32>
    %c0_3 = arith.constant 0 : index
    %c0_4 = arith.constant 0 : index
    %3 = vector.load %arg3[%c0_3, %c0_4] : memref<1x64xf32, #tpu.memory_space<vmem>>, vector<1x64xf32>
    %4 = vector.broadcast %3 : vector<1x64xf32> to vector<64x64xf32>
    %5 = arith.addf %2, %4 : vector<64x64xf32>
    %6 = vector.shape_cast %5 : vector<64x64xf32> to vector<2x32x64xf32>
    %7 = vector.extract_strided_slice %6 {offsets = [0, 0, 0], sizes = [1, 32, 64], strides = [1, 1, 1]} : vector<2x32x64xf32> to vector<1x32x64xf32>
    %8 = vector.shape_cast %7 : vector<1x32x64xf32> to vector<32x64xf32>
    %9 = vector.extract_strided_slice %6 {offsets = [1, 0, 0], sizes = [1, 32, 64], strides = [1, 1, 1]} : vector<2x32x64xf32> to vector<1x32x64xf32>
    %10 = vector.shape_cast %9 : vector<1x32x64xf32> to vector<32x64xf32>
    %11 = arith.addf %8, %10 : vector<32x64xf32>
    %c0_5 = arith.constant 0 : index
    %c0_6 = arith.constant 0 : index
    %12 = vector.load %arg4[%c0_5, %c0_6] : memref<32x64xf32, #tpu.memory_space<vmem>>, vector<32x64xf32>
    %13 = arith.addf %11, %12 : vector<32x64xf32>
    %c0_7 = arith.constant 0 : index
    %c0_8 = arith.constant 0 : index
    %14 = vector.load %arg5[%c0_7, %c0_8] : memref<32x64xf32, #tpu.memory_space<vmem>>, vector<32x64xf32>
    tpu.vector_store %arg5[%c0_7, %c0_8], %13 {strides = array<i32>} : memref<32x64xf32, #tpu.memory_space<vmem>>, vector<32x64xf32>,
    return
  }
  func.func @transform_0(%arg0: i32) -> (i32, i32) {
    %c0_i32 = arith.constant 0 : i32
    %c0_i32_0 = arith.constant 0 : i32
    %c0_i32_1 = arith.constant 0 : i32
    return %c0_i32, %c0_i32_0 : i32, i32
  }
  func.func @transform_1(%arg0: i32) -> (i32, i32) {
    %c0_i32 = arith.constant 0 : i32
    %c0_i32_0 = arith.constant 0 : i32
    %c0_i32_1 = arith.constant 0 : i32
    return %c0_i32, %c0_i32_0 : i32, i32
  }
  func.func @transform_2(%arg0: i32) -> (i32, i32) {
    %c0_i32 = arith.constant 0 : i32
    %c0_i32_0 = arith.constant 0 : i32
    %c0_i32_1 = arith.constant 0 : i32
    return %c0_i32, %c0_i32_0 : i32, i32
  }
  func.func @transform_3(%arg0: i32) -> (i32, i32) {
    %c0_i32 = arith.constant 0 : i32
    %c0_i32_0 = arith.constant 0 : i32
    %c0_i32_1 = arith.constant 0 : i32
    return %c0_i32, %c0_i32_0 : i32, i32
  }
  func.func @transform_4(%arg0: i32) -> (i32, i32) {
    %c0_i32 = arith.constant 0 : i32
    %c0_i32_0 = arith.constant 0 : i32
    %c0_i32_1 = arith.constant 0 : i32
    return %c0_i32, %c0_i32_0 : i32, i32
  }
}

module attributes {stable_mosaic.version = 11 : i64} {
  func.func @_conv_mm_kernel(%arg0: i32, %arg1: memref<32x576xbf16, #tpu.memory_space<vmem>>, %arg2: memref<576x32xbf16, #tpu.memory_space<vmem>>, %arg3: memref<1x32xf32, #tpu.memory_space<vmem>>, %arg4: memref<32x32xf32, #tpu.memory_space<vmem>>) attributes {dimension_semantics = [#tpu.dimension_semantics<arbitrary>], iteration_bounds = array<i64: 1>, scalar_prefetch = 0 : i64, scratch_operands = 0 : i64, tpu.core_type = #tpu.core_type<tc>, window_params = [{pipeline_mode = #tpu.pipeline_mode<synchronous>, transform_indices = @transform_0, window_bounds = array<i64: 32, 576>}, {pipeline_mode = #tpu.pipeline_mode<synchronous>, transform_indices = @transform_1, window_bounds = array<i64: 576, 32>}, {pipeline_mode = #tpu.pipeline_mode<synchronous>, transform_indices = @transform_2, window_bounds = array<i64: 1, 32>}, {pipeline_mode = #tpu.pipeline_mode<synchronous>, transform_indices = @transform_3, window_bounds = array<i64: 32, 32>}]} {
    %c0 = arith.constant 0 : index
    %c0_0 = arith.constant 0 : index
    %0 = vector.load %arg1[%c0, %c0_0] : memref<32x576xbf16, #tpu.memory_space<vmem>>, vector<32x576xbf16>
    %c0_1 = arith.constant 0 : index
    %c0_2 = arith.constant 0 : index
    %1 = vector.load %arg2[%c0_1, %c0_2] : memref<576x32xbf16, #tpu.memory_space<vmem>>, vector<576x32xbf16>
    %cst = arith.constant dense<0.000000e+00> : vector<32x32xf32>
    %2 = tpu.matmul %0, %1, %cst {dimension_numbers = #tpu.dot_dimension_numbers<[1], [0], [0], [1], [0, 0, 1, 1], [], []>} : vector<32x576xbf16>, vector<576x32xbf16>, vector<32x32xf32> -> vector<32x32xf32>
    %c0_3 = arith.constant 0 : index
    %c0_4 = arith.constant 0 : index
    %3 = vector.load %arg3[%c0_3, %c0_4] : memref<1x32xf32, #tpu.memory_space<vmem>>, vector<1x32xf32>
    %4 = vector.broadcast %3 : vector<1x32xf32> to vector<32x32xf32>
    %5 = arith.addf %2, %4 : vector<32x32xf32>
    %cst_5 = arith.constant 0.000000e+00 : f32
    %6 = vector.broadcast %cst_5 : f32 to vector<32x32xf32>
    %7 = arith.maximumf %5, %6 : vector<32x32xf32>
    %c0_6 = arith.constant 0 : index
    %c0_7 = arith.constant 0 : index
    %8 = vector.load %arg4[%c0_6, %c0_7] : memref<32x32xf32, #tpu.memory_space<vmem>>, vector<32x32xf32>
    tpu.vector_store %arg4[%c0_6, %c0_7], %7 {strides = array<i32>} : memref<32x32xf32, #tpu.memory_space<vmem>>, vector<32x32xf32>,
    return
  }
  func.func @transform_0(%arg0: i32) -> (i32, i32) {
    %c0_i32 = arith.constant 0 : i32
    %c0_i32_0 = arith.constant 0 : i32
    %c0_i32_1 = arith.constant 0 : i32
    return %c0_i32, %c0_i32_0 : i32, i32
  }
  func.func @transform_1(%arg0: i32) -> (i32, i32) {
    %c0_i32 = arith.constant 0 : i32
    %c0_i32_0 = arith.constant 0 : i32
    %c0_i32_1 = arith.constant 0 : i32
    return %c0_i32, %c0_i32_0 : i32, i32
  }
  func.func @transform_2(%arg0: i32) -> (i32, i32) {
    %c0_i32 = arith.constant 0 : i32
    %c0_i32_0 = arith.constant 0 : i32
    %c0_i32_1 = arith.constant 0 : i32
    return %c0_i32, %c0_i32_0 : i32, i32
  }
  func.func @transform_3(%arg0: i32) -> (i32, i32) {
    %c0_i32 = arith.constant 0 : i32
    %c0_i32_0 = arith.constant 0 : i32
    %c0_i32_1 = arith.constant 0 : i32
    return %c0_i32, %c0_i32_0 : i32, i32
  }
}

module attributes {stable_mosaic.version = 11 : i64} {
  func.func @_conv_mm_kernel(%arg0: i32, %arg1: memref<128x288xbf16, #tpu.memory_space<vmem>>, %arg2: memref<288x16xbf16, #tpu.memory_space<vmem>>, %arg3: memref<1x16xf32, #tpu.memory_space<vmem>>, %arg4: memref<128x16xf32, #tpu.memory_space<vmem>>) attributes {dimension_semantics = [#tpu.dimension_semantics<arbitrary>], iteration_bounds = array<i64: 1>, scalar_prefetch = 0 : i64, scratch_operands = 0 : i64, tpu.core_type = #tpu.core_type<tc>, window_params = [{pipeline_mode = #tpu.pipeline_mode<synchronous>, transform_indices = @transform_0, window_bounds = array<i64: 128, 288>}, {pipeline_mode = #tpu.pipeline_mode<synchronous>, transform_indices = @transform_1, window_bounds = array<i64: 288, 16>}, {pipeline_mode = #tpu.pipeline_mode<synchronous>, transform_indices = @transform_2, window_bounds = array<i64: 1, 16>}, {pipeline_mode = #tpu.pipeline_mode<synchronous>, transform_indices = @transform_3, window_bounds = array<i64: 128, 16>}]} {
    %c0 = arith.constant 0 : index
    %c0_0 = arith.constant 0 : index
    %0 = vector.load %arg1[%c0, %c0_0] : memref<128x288xbf16, #tpu.memory_space<vmem>>, vector<128x288xbf16>
    %c0_1 = arith.constant 0 : index
    %c0_2 = arith.constant 0 : index
    %1 = vector.load %arg2[%c0_1, %c0_2] : memref<288x16xbf16, #tpu.memory_space<vmem>>, vector<288x16xbf16>
    %cst = arith.constant dense<0.000000e+00> : vector<128x16xf32>
    %2 = tpu.matmul %0, %1, %cst {dimension_numbers = #tpu.dot_dimension_numbers<[1], [0], [0], [1], [0, 0, 1, 1], [], []>} : vector<128x288xbf16>, vector<288x16xbf16>, vector<128x16xf32> -> vector<128x16xf32>
    %c0_3 = arith.constant 0 : index
    %c0_4 = arith.constant 0 : index
    %3 = vector.load %arg3[%c0_3, %c0_4] : memref<1x16xf32, #tpu.memory_space<vmem>>, vector<1x16xf32>
    %4 = vector.broadcast %3 : vector<1x16xf32> to vector<128x16xf32>
    %5 = arith.addf %2, %4 : vector<128x16xf32>
    %cst_5 = arith.constant 0.000000e+00 : f32
    %6 = vector.broadcast %cst_5 : f32 to vector<128x16xf32>
    %7 = arith.maximumf %5, %6 : vector<128x16xf32>
    %c0_6 = arith.constant 0 : index
    %c0_7 = arith.constant 0 : index
    %8 = vector.load %arg4[%c0_6, %c0_7] : memref<128x16xf32, #tpu.memory_space<vmem>>, vector<128x16xf32>
    tpu.vector_store %arg4[%c0_6, %c0_7], %7 {strides = array<i32>} : memref<128x16xf32, #tpu.memory_space<vmem>>, vector<128x16xf32>,
    return
  }
  func.func @transform_0(%arg0: i32) -> (i32, i32) {
    %c0_i32 = arith.constant 0 : i32
    %c0_i32_0 = arith.constant 0 : i32
    %c0_i32_1 = arith.constant 0 : i32
    return %c0_i32, %c0_i32_0 : i32, i32
  }
  func.func @transform_1(%arg0: i32) -> (i32, i32) {
    %c0_i32 = arith.constant 0 : i32
    %c0_i32_0 = arith.constant 0 : i32
    %c0_i32_1 = arith.constant 0 : i32
    return %c0_i32, %c0_i32_0 : i32, i32
  }
  func.func @transform_2(%arg0: i32) -> (i32, i32) {
    %c0_i32 = arith.constant 0 : i32
    %c0_i32_0 = arith.constant 0 : i32
    %c0_i32_1 = arith.constant 0 : i32
    return %c0_i32, %c0_i32_0 : i32, i32
  }
  func.func @transform_3(%arg0: i32) -> (i32, i32) {
    %c0_i32 = arith.constant 0 : i32
    %c0_i32_0 = arith.constant 0 : i32
    %c0_i32_1 = arith.constant 0 : i32
    return %c0_i32, %c0_i32_0 : i32, i32
  }
}

module attributes {stable_mosaic.version = 11 : i64} {
  func.func @_conv_mm_kernel(%arg0: i32, %arg1: memref<512x144xbf16, #tpu.memory_space<vmem>>, %arg2: memref<144x1xbf16, #tpu.memory_space<vmem>>, %arg3: memref<1x1xf32, #tpu.memory_space<vmem>>, %arg4: memref<512x1xf32, #tpu.memory_space<vmem>>) attributes {dimension_semantics = [#tpu.dimension_semantics<arbitrary>], iteration_bounds = array<i64: 1>, scalar_prefetch = 0 : i64, scratch_operands = 0 : i64, tpu.core_type = #tpu.core_type<tc>, window_params = [{pipeline_mode = #tpu.pipeline_mode<synchronous>, transform_indices = @transform_0, window_bounds = array<i64: 512, 144>}, {pipeline_mode = #tpu.pipeline_mode<synchronous>, transform_indices = @transform_1, window_bounds = array<i64: 144, 1>}, {pipeline_mode = #tpu.pipeline_mode<synchronous>, transform_indices = @transform_2, window_bounds = array<i64: 1, 1>}, {pipeline_mode = #tpu.pipeline_mode<synchronous>, transform_indices = @transform_3, window_bounds = array<i64: 512, 1>}]} {
    %c0 = arith.constant 0 : index
    %c0_0 = arith.constant 0 : index
    %0 = vector.load %arg1[%c0, %c0_0] : memref<512x144xbf16, #tpu.memory_space<vmem>>, vector<512x144xbf16>
    %c0_1 = arith.constant 0 : index
    %c0_2 = arith.constant 0 : index
    %1 = vector.load %arg2[%c0_1, %c0_2] : memref<144x1xbf16, #tpu.memory_space<vmem>>, vector<144x1xbf16>
    %cst = arith.constant dense<0.000000e+00> : vector<512x1xf32>
    %2 = tpu.matmul %0, %1, %cst {dimension_numbers = #tpu.dot_dimension_numbers<[1], [0], [0], [1], [0, 0, 1, 1], [], []>} : vector<512x144xbf16>, vector<144x1xbf16>, vector<512x1xf32> -> vector<512x1xf32>
    %c0_3 = arith.constant 0 : index
    %c0_4 = arith.constant 0 : index
    %3 = vector.load %arg3[%c0_3, %c0_4] : memref<1x1xf32, #tpu.memory_space<vmem>>, vector<1x1xf32>
    %4 = vector.broadcast %3 : vector<1x1xf32> to vector<512x1xf32>
    %5 = arith.addf %2, %4 : vector<512x1xf32>
    %6 = math.tanh %5 : vector<512x1xf32>
    %c0_5 = arith.constant 0 : index
    %c0_6 = arith.constant 0 : index
    %7 = vector.load %arg4[%c0_5, %c0_6] : memref<512x1xf32, #tpu.memory_space<vmem>>, vector<512x1xf32>
    tpu.vector_store %arg4[%c0_5, %c0_6], %6 {strides = array<i32>} : memref<512x1xf32, #tpu.memory_space<vmem>>, vector<512x1xf32>,
    return
  }
  func.func @transform_0(%arg0: i32) -> (i32, i32) {
    %c0_i32 = arith.constant 0 : i32
    %c0_i32_0 = arith.constant 0 : i32
    %c0_i32_1 = arith.constant 0 : i32
    return %c0_i32, %c0_i32_0 : i32, i32
  }
  func.func @transform_1(%arg0: i32) -> (i32, i32) {
    %c0_i32 = arith.constant 0 : i32
    %c0_i32_0 = arith.constant 0 : i32
    %c0_i32_1 = arith.constant 0 : i32
    return %c0_i32, %c0_i32_0 : i32, i32
  }
  func.func @transform_2(%arg0: i32) -> (i32, i32) {
    %c0_i32 = arith.constant 0 : i32
    %c0_i32_0 = arith.constant 0 : i32
    %c0_i32_1 = arith.constant 0 : i32
    return %c0_i32, %c0_i32_0 : i32, i32
  }
  func.func @transform_3(%arg0: i32) -> (i32, i32) {
    %c0_i32 = arith.constant 0 : i32
    %c0_i32_0 = arith.constant 0 : i32
    %c0_i32_1 = arith.constant 0 : i32
    return %c0_i32, %c0_i32_0 : i32, i32
  }
}

</mosaic_0001>

<llo_original>
// kernel: autoencoder_forward.10
$region0: #{autoencoder_forward.10}
  #allocation0 [shape = 'u32[]', space=smem, size = 0x4, offset = 0x4, fixed_abs, tag = 'smem constant byte address 0x4 - core index']
  #allocation1 [shape = 'u32[144,128]{1,0:T(1,128)}', space=vmem, size = 0x12000, scoped, tag = 'internal scratch']
  %s0 = inlined_call_operand.vmem [shape: bf16[256,9], index: 0, kind: input, shape index: {}]
  %s1 = inlined_call_operand.vmem [shape: bf16[9,16], index: 1, kind: input, shape index: {}]
  %s2 = inlined_call_operand.vmem [shape: f32[1,16], index: 2, kind: input, shape index: {}]
  %s3 = inlined_call_operand.vmem [shape: f32[256,16], index: 3, kind: output, shape index: {}]
  %s4 = sld [smem:[#allocation0]]
  $region22: #{autoencoder_forward.10} parent=0
    _
  %s6 = ssub.s32 1, %s4
  %s7 = scalar_select 0, %s6, %s4
  // Predicated region
  $region2: #{autoencoder_forward.10} parent=0 // pred_check
    _
  $region3: #{autoencoder_forward.10} parent=0 // pred_check_branch
    %9 = sbr.rel (0) target = $region5
  $region4: #{autoencoder_forward.10} parent=0 // pred_region
    _
  $region5: #{autoencoder_forward.10} parent=0 // pred_fallthru
    _
  // Predicated region
  $region6: #{autoencoder_forward.10} parent=0 // pred_check
    _
  $region7: #{autoencoder_forward.10} parent=0 // pred_check_branch
    %11 = sbr.rel (0) target = $region9
  $region8: #{autoencoder_forward.10} parent=0 // pred_region
    _
  $region9: #{autoencoder_forward.10} parent=0 // pred_fallthru
    _
  // Predicated region
  $region10: #{autoencoder_forward.10} parent=0 // pred_check
    _
  $region11: #{autoencoder_forward.10} parent=0 // pred_check_branch
    %13 = sbr.rel (0) target = $region13
  $region12: #{autoencoder_forward.10} parent=0 // pred_region
    _
  $region13: #{autoencoder_forward.10} parent=0 // pred_fallthru
    _
  %v15 = vld [vmem:[%s0] sm:$0xf]
  %v16 = vld [vmem:[%s0 + $0x4] sm:$0xf]
  %v17 = vld [vmem:[%s0 + $0x8] sm:$0xf]
  %v18 = vld [vmem:[%s0 + $0xc] sm:$0xf]
  %v19 = vld [vmem:[%s0 + $0x10] sm:$0xf]
  %v20 = vld [vmem:[%s0 + $0x14] sm:$0xf]
  %v21 = vld [vmem:[%s0 + $0x18] sm:$0xf]
  %v22 = vld [vmem:[%s0 + $0x1c] sm:$0xf]
  %v23 = vld [vmem:[%s0 + $0x20] sm:$0xf]
  %v24 = vld [vmem:[%s0 + $0x24] sm:$0xf]
  %v25 = vld [vmem:[%s0 + $0x28] sm:$0xf]
  %v26 = vld [vmem:[%s0 + $0x2c] sm:$0xf]
  %v27 = vld [vmem:[%s0 + $0x30] sm:$0xf]
  %v28 = vld [vmem:[%s0 + $0x34] sm:$0xf]
  %v29 = vld [vmem:[%s0 + $0x38] sm:$0xf]
  %v30 = vld [vmem:[%s0 + $0x3c] sm:$0xf]
  %v31 = vld [vmem:[%s0 + $0x40] sm:$0xf]
  %v32 = vld [vmem:[%s0 + $0x44] sm:$0xf]
  %v33 = vld [vmem:[%s0 + $0x48] sm:$0xf]
  %v34 = vld [vmem:[%s0 + $0x4c] sm:$0xf]
  %v35 = vld [vmem:[%s0 + $0x50] sm:$0xf]
  %v36 = vld [vmem:[%s0 + $0x54] sm:$0xf]
  %v37 = vld [vmem:[%s0 + $0x58] sm:$0xf]
  %v38 = vld [vmem:[%s0 + $0x5c] sm:$0xf]
  %v39 = vld [vmem:[%s0 + $0x60] sm:$0xf]
  %v40 = vld [vmem:[%s0 + $0x64] sm:$0xf]
  %v41 = vld [vmem:[%s0 + $0x68] sm:$0xf]
  %v42 = vld [vmem:[%s0 + $0x6c] sm:$0xf]
  %v43 = vld [vmem:[%s0 + $0x70] sm:$0xf]
  %v44 = vld [vmem:[%s0 + $0x74] sm:$0xf]
  %v45 = vld [vmem:[%s0 + $0x78] sm:$0xf]
  %v46 = vld [vmem:[%s0 + $0x7c] sm:$0xf]
  %v47 = vld [vmem:[%s1] sm:$0xf]
  %v48 = vld [vmem:[%s1 + $0x4] sm:$0x1]
  %v49 = vld [vmem:[%s2] sm:$0x1]
  %v51 = vlaneseq
  %v52 = vshrl.u32 %v51, 7
  %v53 = vsub.s32 0, %v52
  %v54 = vrot.slane %v49, %v53
  %v88 = vunpack.c.l.b16 %v15
  %v89 = vunpack.c.l.b16 %v16
  %v90 = vunpack.c.l.b16 %v17
  %v91 = vunpack.c.l.b16 %v18
  %v92 = vunpack.c.l.b16 %v19
  %v93 = vunpack.c.l.b16 %v20
  %v94 = vunpack.c.l.b16 %v21
  %v95 = vunpack.c.l.b16 %v22
  %v96 = vunpack.c.l.b16 %v23
  %v97 = vunpack.c.l.b16 %v24
  %v98 = vunpack.c.l.b16 %v25
  %v99 = vunpack.c.l.b16 %v26
  %v100 = vunpack.c.l.b16 %v27
  %v101 = vunpack.c.l.b16 %v28
  %v102 = vunpack.c.l.b16 %v29
  %v103 = vunpack.c.l.b16 %v30
  %v104 = vunpack.c.l.b16 %v31
  %v105 = vunpack.c.l.b16 %v32
  %v106 = vunpack.c.l.b16 %v33
  %v107 = vunpack.c.l.b16 %v34
  %v108 = vunpack.c.l.b16 %v35
  %v109 = vunpack.c.l.b16 %v36
  %v110 = vunpack.c.l.b16 %v37
  %v111 = vunpack.c.l.b16 %v38
  %v112 = vunpack.c.l.b16 %v39
  %v113 = vunpack.c.l.b16 %v40
  %v114 = vunpack.c.l.b16 %v41
  %v115 = vunpack.c.l.b16 %v42
  %v116 = vunpack.c.l.b16 %v43
  %v117 = vunpack.c.l.b16 %v44
  %v118 = vunpack.c.l.b16 %v45
  %v119 = vunpack.c.l.b16 %v46
  %v120 = vpack.c.b16 %v89, %v88
  %v121 = vpack.c.b16 %v91, %v90
  %v122 = vpack.c.b16 %v93, %v92
  %v123 = vpack.c.b16 %v95, %v94
  %v124 = vpack.c.b16 %v97, %v96
  %v125 = vpack.c.b16 %v99, %v98
  %v126 = vpack.c.b16 %v101, %v100
  %v127 = vpack.c.b16 %v103, %v102
  %v128 = vpack.c.b16 %v105, %v104
  %v129 = vpack.c.b16 %v107, %v106
  %v130 = vpack.c.b16 %v109, %v108
  %v131 = vpack.c.b16 %v111, %v110
  %v132 = vpack.c.b16 %v113, %v112
  %v133 = vpack.c.b16 %v115, %v114
  %v134 = vpack.c.b16 %v117, %v116
  %v135 = vpack.c.b16 %v119, %v118
  %v138 = vunpack.c.l.b16 %v47
  %v139 = vunpack.c.l.b16 %v48
  %v140 = vpack.c.b16 %v139, %v138
  %vm141 = vcmask 72704
  %v143 = vsel %vm141, %v120, 0
  %v146 = vsel %vm141, %v121, 0
  %v149 = vsel %vm141, %v122, 0
  %v152 = vsel %vm141, %v123, 0
  %v155 = vsel %vm141, %v124, 0
  %v158 = vsel %vm141, %v125, 0
  %v161 = vsel %vm141, %v126, 0
  %v164 = vsel %vm141, %v127, 0
  %v167 = vsel %vm141, %v128, 0
  %v170 = vsel %vm141, %v129, 0
  %v173 = vsel %vm141, %v130, 0
  %v176 = vsel %vm141, %v131, 0
  %v179 = vsel %vm141, %v132, 0
  %v182 = vsel %vm141, %v133, 0
  %v185 = vsel %vm141, %v134, 0
  %v188 = vsel %vm141, %v135, 0
  %vm190 = vcmask 1043456
  %vm191 = vcmask 1044480
  %v192 = vsel %vm190, 4294967295, 65535
  %v193 = vsel %vm191, %v192, 0
  %v195 = vand.u32 %v140, %v193
  %197 = vmatprep.subr.bf16.mxu0 0
  %198 = vmatpush1.bf16.msra.mxu0 %v195
  %199 = vmatprep.subr.bf16.mxu0 0
  %200 = vmatpush1.bf16.msra.mxu0 0
  %201 = vmatprep.subr.bf16.mxu0 0
  %202 = vmatpush1.bf16.msra.mxu0 0
  %203 = vmatprep.subr.bf16.mxu0 0
  %204 = vmatpush1.bf16.msra.mxu0 0
  %205 = vmatprep.subr.bf16.mxu0 0
  %206 = vmatpush1.bf16.msra.mxu0 0
  %207 = vmatprep.subr.bf16.mxu0 0
  %208 = vmatpush1.bf16.msra.mxu0 0
  %209 = vmatprep.subr.bf16.mxu0 0
  %210 = vmatpush1.bf16.msra.mxu0 0
  %211 = vmatprep.subr.bf16.mxu0 0
  %212 = vmatpush1.bf16.msra.mxu0 0
  %213 = vmatprep.subr.bf16.mxu0 0
  %214 = vmatpush1.bf16.msra.mxu0 0
  %215 = vmatprep.subr.bf16.mxu0 0
  %216 = vmatpush1.bf16.msra.mxu0 0
  %217 = vmatprep.subr.bf16.mxu0 0
  %218 = vmatpush1.bf16.msra.mxu0 0
  %219 = vmatprep.subr.bf16.mxu0 0
  %220 = vmatpush1.bf16.msra.mxu0 0
  %221 = vmatprep.subr.bf16.mxu0 0
  %222 = vmatpush1.bf16.msra.mxu0 0
  %223 = vmatprep.subr.bf16.mxu0 0
  %224 = vmatpush1.bf16.msra.mxu0 0
  %225 = vmatprep.subr.bf16.mxu0 0
  %226 = vmatpush1.bf16.msra.mxu0 0
  %227 = vmatprep.subr.bf16.mxu0 0
  %228 = vmatpush1.bf16.msra.mxu0 0
  %229 = vmatprep.mubr.bf16.mxu0 0
  %230 = vmatmul.mubr.bf16.gmra.mrb[0].mxu0 %v143
  %v231 = vpop.f32.mrb[0].mxu0
  %v232 = vadd.f32 %v54, %v231
  %v233 = vpop.f32.mrb[0].mxu0
  %v234 = vpop.f32.mrb[0].mxu0
  %v235 = vadd.f32 %v54, %v234
  %v236 = vpop.f32.mrb[0].mxu0
  %237 = vmatprep.mubr.bf16.mxu0 0
  %238 = vmatmul.mubr.bf16.gmra.mrb[0].mxu0 %v146
  %v239 = vpop.f32.mrb[0].mxu0
  %v240 = vadd.f32 %v54, %v239
  %v241 = vpop.f32.mrb[0].mxu0
  %v242 = vpop.f32.mrb[0].mxu0
  %v243 = vadd.f32 %v54, %v242
  %v244 = vpop.f32.mrb[0].mxu0
  %245 = vmatprep.mubr.bf16.mxu0 0
  %246 = vmatmul.mubr.bf16.gmra.mrb[0].mxu0 %v149
  %v247 = vpop.f32.mrb[0].mxu0
  %v248 = vadd.f32 %v54, %v247
  %v249 = vpop.f32.mrb[0].mxu0
  %v250 = vpop.f32.mrb[0].mxu0
  %v251 = vadd.f32 %v54, %v250
  %v252 = vpop.f32.mrb[0].mxu0
  %253 = vmatprep.mubr.bf16.mxu0 0
  %254 = vmatmul.mubr.bf16.gmra.mrb[0].mxu0 %v152
  %v255 = vpop.f32.mrb[0].mxu0
  %v256 = vadd.f32 %v54, %v255
  %v257 = vpop.f32.mrb[0].mxu0
  %v258 = vpop.f32.mrb[0].mxu0
  %v259 = vadd.f32 %v54, %v258
  %v260 = vpop.f32.mrb[0].mxu0
  %261 = vmatprep.mubr.bf16.mxu0 0
  %262 = vmatmul.mubr.bf16.gmra.mrb[0].mxu0 %v155
  %v263 = vpop.f32.mrb[0].mxu0
  %v264 = vadd.f32 %v54, %v263
  %v265 = vpop.f32.mrb[0].mxu0
  %v266 = vpop.f32.mrb[0].mxu0
  %v267 = vadd.f32 %v54, %v266
  %v268 = vpop.f32.mrb[0].mxu0
  %269 = vmatprep.mubr.bf16.mxu0 0
  %270 = vmatmul.mubr.bf16.gmra.mrb[0].mxu0 %v158
  %v271 = vpop.f32.mrb[0].mxu0
  %v272 = vadd.f32 %v54, %v271
  %v273 = vpop.f32.mrb[0].mxu0
  %v274 = vpop.f32.mrb[0].mxu0
  %v275 = vadd.f32 %v54, %v274
  %v276 = vpop.f32.mrb[0].mxu0
  %277 = vmatprep.mubr.bf16.mxu0 0
  %278 = vmatmul.mubr.bf16.gmra.mrb[0].mxu0 %v161
  %v279 = vpop.f32.mrb[0].mxu0
  %v280 = vadd.f32 %v54, %v279
  %v281 = vpop.f32.mrb[0].mxu0
  %v282 = vpop.f32.mrb[0].mxu0
  %v283 = vadd.f32 %v54, %v282
  %v284 = vpop.f32.mrb[0].mxu0
  %285 = vmatprep.mubr.bf16.mxu0 0
  %286 = vmatmul.mubr.bf16.gmra.mrb[0].mxu0 %v164
  %v287 = vpop.f32.mrb[0].mxu0
  %v288 = vadd.f32 %v54, %v287
  %v289 = vpop.f32.mrb[0].mxu0
  %v290 = vpop.f32.mrb[0].mxu0
  %v291 = vadd.f32 %v54, %v290
  %v292 = vpop.f32.mrb[0].mxu0
  %293 = vmatprep.mubr.bf16.mxu0 0
  %294 = vmatmul.mubr.bf16.gmra.mrb[0].mxu0 %v167
  %v295 = vpop.f32.mrb[0].mxu0
  %v296 = vadd.f32 %v54, %v295
  %v297 = vpop.f32.mrb[0].mxu0
  %v298 = vpop.f32.mrb[0].mxu0
  %v299 = vadd.f32 %v54, %v298
  %v300 = vpop.f32.mrb[0].mxu0
  %301 = vmatprep.mubr.bf16.mxu0 0
  %302 = vmatmul.mubr.bf16.gmra.mrb[0].mxu0 %v170
  %v303 = vpop.f32.mrb[0].mxu0
  %v304 = vadd.f32 %v54, %v303
  %v305 = vpop.f32.mrb[0].mxu0
  %v306 = vpop.f32.mrb[0].mxu0
  %v307 = vadd.f32 %v54, %v306
  %v308 = vpop.f32.mrb[0].mxu0
  %309 = vmatprep.mubr.bf16.mxu0 0
  %310 = vmatmul.mubr.bf16.gmra.mrb[0].mxu0 %v173
  %v311 = vpop.f32.mrb[0].mxu0
  %v312 = vadd.f32 %v54, %v311
  %v313 = vpop.f32.mrb[0].mxu0
  %v314 = vpop.f32.mrb[0].mxu0
  %v315 = vadd.f32 %v54, %v314
  %v316 = vpop.f32.mrb[0].mxu0
  %317 = vmatprep.mubr.bf16.mxu0 0
  %318 = vmatmul.mubr.bf16.gmra.mrb[0].mxu0 %v176
  %v319 = vpop.f32.mrb[0].mxu0
  %v320 = vadd.f32 %v54, %v319
  %v321 = vpop.f32.mrb[0].mxu0
  %v322 = vpop.f32.mrb[0].mxu0
  %v323 = vadd.f32 %v54, %v322
  %v324 = vpop.f32.mrb[0].mxu0
  %325 = vmatprep.mubr.bf16.mxu0 0
  %326 = vmatmul.mubr.bf16.gmra.mrb[0].mxu0 %v179
  %v327 = vpop.f32.mrb[0].mxu0
  %v328 = vadd.f32 %v54, %v327
  %v329 = vpop.f32.mrb[0].mxu0
  %v330 = vpop.f32.mrb[0].mxu0
  %v331 = vadd.f32 %v54, %v330
  %v332 = vpop.f32.mrb[0].mxu0
  %333 = vmatprep.mubr.bf16.mxu0 0
  %334 = vmatmul.mubr.bf16.gmra.mrb[0].mxu0 %v182
  %v335 = vpop.f32.mrb[0].mxu0
  %v336 = vadd.f32 %v54, %v335
  %v337 = vpop.f32.mrb[0].mxu0
  %v338 = vpop.f32.mrb[0].mxu0
  %v339 = vadd.f32 %v54, %v338
  %v340 = vpop.f32.mrb[0].mxu0
  %341 = vmatprep.mubr.bf16.mxu0 0
  %342 = vmatmul.mubr.bf16.gmra.mrb[0].mxu0 %v185
  %v343 = vpop.f32.mrb[0].mxu0
  %v344 = vadd.f32 %v54, %v343
  %v345 = vpop.f32.mrb[0].mxu0
  %v346 = vpop.f32.mrb[0].mxu0
  %v347 = vadd.f32 %v54, %v346
  %v348 = vpop.f32.mrb[0].mxu0
  %349 = vmatprep.mubr.bf16.mxu0 0
  %350 = vmatmul.mubr.bf16.gmra.mrb[0].mxu0 %v188
  %v351 = vpop.f32.mrb[0].mxu0
  %v352 = vadd.f32 %v54, %v351
  %v353 = vpop.f32.mrb[0].mxu0
  %v354 = vpop.f32.mrb[0].mxu0
  %v355 = vadd.f32 %v54, %v354
  %v356 = vpop.f32.mrb[0].mxu0
  %357 = vdwg.mxu0
  %v358 = vmax.f32 %v232, 0.0
  %v359 = vmax.f32 %v235, 0.0
  %v360 = vmax.f32 %v240, 0.0
  %v361 = vmax.f32 %v243, 0.0
  %v362 = vmax.f32 %v248, 0.0
  %v363 = vmax.f32 %v251, 0.0
  %v364 = vmax.f32 %v256, 0.0
  %v365 = vmax.f32 %v259, 0.0
  %v366 = vmax.f32 %v264, 0.0
  %v367 = vmax.f32 %v267, 0.0
  %v368 = vmax.f32 %v272, 0.0
  %v369 = vmax.f32 %v275, 0.0
  %v370 = vmax.f32 %v280, 0.0
  %v371 = vmax.f32 %v283, 0.0
  %v372 = vmax.f32 %v288, 0.0
  %v373 = vmax.f32 %v291, 0.0
  %v374 = vmax.f32 %v296, 0.0
  %v375 = vmax.f32 %v299, 0.0
  %v376 = vmax.f32 %v304, 0.0
  %v377 = vmax.f32 %v307, 0.0
  %v378 = vmax.f32 %v312, 0.0
  %v379 = vmax.f32 %v315, 0.0
  %v380 = vmax.f32 %v320, 0.0
  %v381 = vmax.f32 %v323, 0.0
  %v382 = vmax.f32 %v328, 0.0
  %v383 = vmax.f32 %v331, 0.0
  %v384 = vmax.f32 %v336, 0.0
  %v385 = vmax.f32 %v339, 0.0
  %v386 = vmax.f32 %v344, 0.0
  %v387 = vmax.f32 %v347, 0.0
  %v388 = vmax.f32 %v352, 0.0
  %v389 = vmax.f32 %v355, 0.0
  %vm390 = vcmask 130048
  %391 = vst.msk [vmem:[%s3] sm:$0xff] %vm390, %v358
  %392 = vst.msk [vmem:[%s3 + $0x8] sm:$0xff] %vm390, %v359
  %393 = vst.msk [vmem:[%s3 + $0x10] sm:$0xff] %vm390, %v360
  %394 = vst.msk [vmem:[%s3 + $0x18] sm:$0xff] %vm390, %v361
  %395 = vst.msk [vmem:[%s3 + $0x20] sm:$0xff] %vm390, %v362
  %396 = vst.msk [vmem:[%s3 + $0x28] sm:$0xff] %vm390, %v363
  %397 = vst.msk [vmem:[%s3 + $0x30] sm:$0xff] %vm390, %v364
  %398 = vst.msk [vmem:[%s3 + $0x38] sm:$0xff] %vm390, %v365
  %399 = vst.msk [vmem:[%s3 + $0x40] sm:$0xff] %vm390, %v366
  %400 = vst.msk [vmem:[%s3 + $0x48] sm:$0xff] %vm390, %v367
  %401 = vst.msk [vmem:[%s3 + $0x50] sm:$0xff] %vm390, %v368
  %402 = vst.msk [vmem:[%s3 + $0x58] sm:$0xff] %vm390, %v369
  %403 = vst.msk [vmem:[%s3 + $0x60] sm:$0xff] %vm390, %v370
  %404 = vst.msk [vmem:[%s3 + $0x68] sm:$0xff] %vm390, %v371
  %405 = vst.msk [vmem:[%s3 + $0x70] sm:$0xff] %vm390, %v372
  %406 = vst.msk [vmem:[%s3 + $0x78] sm:$0xff] %vm390, %v373
  %407 = vst.msk [vmem:[%s3 + $0x80] sm:$0xff] %vm390, %v374
  %408 = vst.msk [vmem:[%s3 + $0x88] sm:$0xff] %vm390, %v375
  %409 = vst.msk [vmem:[%s3 + $0x90] sm:$0xff] %vm390, %v376
  %410 = vst.msk [vmem:[%s3 + $0x98] sm:$0xff] %vm390, %v377
  %411 = vst.msk [vmem:[%s3 + $0xa0] sm:$0xff] %vm390, %v378
  %412 = vst.msk [vmem:[%s3 + $0xa8] sm:$0xff] %vm390, %v379
  %413 = vst.msk [vmem:[%s3 + $0xb0] sm:$0xff] %vm390, %v380
  %414 = vst.msk [vmem:[%s3 + $0xb8] sm:$0xff] %vm390, %v381
  %415 = vst.msk [vmem:[%s3 + $0xc0] sm:$0xff] %vm390, %v382
  %416 = vst.msk [vmem:[%s3 + $0xc8] sm:$0xff] %vm390, %v383
  %417 = vst.msk [vmem:[%s3 + $0xd0] sm:$0xff] %vm390, %v384
  %418 = vst.msk [vmem:[%s3 + $0xd8] sm:$0xff] %vm390, %v385
  %419 = vst.msk [vmem:[%s3 + $0xe0] sm:$0xff] %vm390, %v386
  %420 = vst.msk [vmem:[%s3 + $0xe8] sm:$0xff] %vm390, %v387
  %421 = vst.msk [vmem:[%s3 + $0xf0] sm:$0xff] %vm390, %v388
  %422 = vst.msk [vmem:[%s3 + $0xf8] sm:$0xff] %vm390, %v389
  // Predicated region
  $region14: #{autoencoder_forward.10} parent=0 // pred_check
    _
  $region15: #{autoencoder_forward.10} parent=0 // pred_check_branch
    %424 = sbr.rel (0) target = $region17
  $region16: #{autoencoder_forward.10} parent=0 // pred_region
    _
  $region17: #{autoencoder_forward.10} parent=0 // pred_fallthru
    _
  // Predicated region
  $region18: #{autoencoder_forward.10} parent=0 // pred_check
    _
  $region19: #{autoencoder_forward.10} parent=0 // pred_check_branch
    %426 = sbr.rel (0) target = $region21
  $region20: #{autoencoder_forward.10} parent=0 // pred_region
    _
  $region21: #{autoencoder_forward.10} parent=0 // pred_fallthru
    _

// kernel: autoencoder_forward.11
$region0: #{autoencoder_forward.11}
  #allocation0 [shape = 'u32[]', space=smem, size = 0x4, offset = 0x4, fixed_abs, tag = 'smem constant byte address 0x4 - core index']
  #allocation1 [shape = 'u32[144,128]{1,0:T(1,128)}', space=vmem, size = 0x12000, scoped, tag = 'internal scratch']
  %s0 = inlined_call_operand.vmem [shape: bf16[64,144], index: 0, kind: input, shape index: {}]
  %s1 = inlined_call_operand.vmem [shape: bf16[144,32], index: 1, kind: input, shape index: {}]
  %s2 = inlined_call_operand.vmem [shape: f32[1,32], index: 2, kind: input, shape index: {}]
  %s3 = inlined_call_operand.vmem [shape: f32[64,32], index: 3, kind: output, shape index: {}]
  %s4 = sld [smem:[#allocation0]]
  $region22: #{autoencoder_forward.11} parent=0
    _
  %s6 = ssub.s32 1, %s4
  %s7 = scalar_select 0, %s6, %s4
  // Predicated region
  $region2: #{autoencoder_forward.11} parent=0 // pred_check
    _
  $region3: #{autoencoder_forward.11} parent=0 // pred_check_branch
    %9 = sbr.rel (0) target = $region5
  $region4: #{autoencoder_forward.11} parent=0 // pred_region
    _
  $region5: #{autoencoder_forward.11} parent=0 // pred_fallthru
    _
  // Predicated region
  $region6: #{autoencoder_forward.11} parent=0 // pred_check
    _
  $region7: #{autoencoder_forward.11} parent=0 // pred_check_branch
    %11 = sbr.rel (0) target = $region9
  $region8: #{autoencoder_forward.11} parent=0 // pred_region
    _
  $region9: #{autoencoder_forward.11} parent=0 // pred_fallthru
    _
  // Predicated region
  $region10: #{autoencoder_forward.11} parent=0 // pred_check
    _
  $region11: #{autoencoder_forward.11} parent=0 // pred_check_branch
    %13 = sbr.rel (0) target = $region13
  $region12: #{autoencoder_forward.11} parent=0 // pred_region
    _
  $region13: #{autoencoder_forward.11} parent=0 // pred_fallthru
    _
  %v15 = vld [vmem:[%s0] sm:$0xff]
  %v16 = vld [vmem:[%s0 + $0x8] sm:$0xff]
  %v17 = vld [vmem:[%s0 + $0x10] sm:$0xff]
  %v18 = vld [vmem:[%s0 + $0x18] sm:$0xff]
  %v19 = vld [vmem:[%s0 + $0x20] sm:$0xff]
  %v20 = vld [vmem:[%s0 + $0x28] sm:$0xff]
  %v21 = vld [vmem:[%s0 + $0x30] sm:$0xff]
  %v22 = vld [vmem:[%s0 + $0x38] sm:$0xff]
  %v23 = vld [vmem:[%s1] sm:$0xf]
  %v24 = vld [vmem:[%s1 + $0x4] sm:$0xf]
  %v25 = vld [vmem:[%s1 + $0x8] sm:$0xf]
  %v26 = vld [vmem:[%s1 + $0xc] sm:$0xf]
  %v27 = vld [vmem:[%s1 + $0x10] sm:$0xf]
  %v28 = vld [vmem:[%s1 + $0x14] sm:$0xf]
  %v29 = vld [vmem:[%s1 + $0x18] sm:$0xf]
  %v30 = vld [vmem:[%s1 + $0x1c] sm:$0xf]
  %v31 = vld [vmem:[%s1 + $0x20] sm:$0xf]
  %v32 = vld [vmem:[%s1 + $0x24] sm:$0xf]
  %v33 = vld [vmem:[%s1 + $0x28] sm:$0xf]
  %v34 = vld [vmem:[%s1 + $0x2c] sm:$0xf]
  %v35 = vld [vmem:[%s1 + $0x30] sm:$0xf]
  %v36 = vld [vmem:[%s1 + $0x34] sm:$0xf]
  %v37 = vld [vmem:[%s1 + $0x38] sm:$0xf]
  %v38 = vld [vmem:[%s1 + $0x3c] sm:$0xf]
  %v39 = vld [vmem:[%s1 + $0x40] sm:$0xf]
  %v40 = vld [vmem:[%s1 + $0x44] sm:$0xf]
  %v41 = vld [vmem:[%s2] sm:$0x1]
  %v43 = vlaneseq
  %v44 = vshrl.u32 %v43, 7
  %v45 = vsub.s32 0, %v44
  %v46 = vrot.slane %v41, %v45
  %v56 = vunpack.c.l.b16 %v15
  %v57 = vunpack.c.h.b16 %v15
  %v58 = vunpack.c.l.b16 %v16
  %v59 = vunpack.c.h.b16 %v16
  %v60 = vunpack.c.l.b16 %v17
  %v61 = vunpack.c.h.b16 %v17
  %v62 = vunpack.c.l.b16 %v18
  %v63 = vunpack.c.h.b16 %v18
  %v64 = vunpack.c.l.b16 %v19
  %v65 = vunpack.c.h.b16 %v19
  %v66 = vunpack.c.l.b16 %v20
  %v67 = vunpack.c.h.b16 %v20
  %v68 = vunpack.c.l.b16 %v21
  %v69 = vunpack.c.h.b16 %v21
  %v70 = vunpack.c.l.b16 %v22
  %v71 = vunpack.c.h.b16 %v22
  %v72 = vpack.c.b16 %v58, %v56
  %v73 = vpack.c.b16 %v59, %v57
  %v74 = vpack.c.b16 %v62, %v60
  %v75 = vpack.c.b16 %v63, %v61
  %v76 = vpack.c.b16 %v66, %v64
  %v77 = vpack.c.b16 %v67, %v65
  %v78 = vpack.c.b16 %v70, %v68
  %v79 = vpack.c.b16 %v71, %v69
  %v102 = vunpack.c.l.b16 %v23
  %v103 = vunpack.c.l.b16 %v24
  %v104 = vunpack.c.l.b16 %v25
  %v105 = vunpack.c.l.b16 %v26
  %v106 = vunpack.c.l.b16 %v27
  %v107 = vunpack.c.l.b16 %v28
  %v108 = vunpack.c.l.b16 %v29
  %v109 = vunpack.c.l.b16 %v30
  %v110 = vunpack.c.l.b16 %v31
  %v111 = vunpack.c.l.b16 %v32
  %v112 = vunpack.c.l.b16 %v33
  %v113 = vunpack.c.l.b16 %v34
  %v114 = vunpack.c.l.b16 %v35
  %v115 = vunpack.c.l.b16 %v36
  %v116 = vunpack.c.l.b16 %v37
  %v117 = vunpack.c.l.b16 %v38
  %v118 = vunpack.c.l.b16 %v39
  %v119 = vunpack.c.l.b16 %v40
  %v120 = vpack.c.b16 %v103, %v102
  %v121 = vpack.c.b16 %v105, %v104
  %v122 = vpack.c.b16 %v107, %v106
  %v123 = vpack.c.b16 %v109, %v108
  %v124 = vpack.c.b16 %v111, %v110
  %v125 = vpack.c.b16 %v113, %v112
  %v126 = vpack.c.b16 %v115, %v114
  %v127 = vpack.c.b16 %v117, %v116
  %v128 = vpack.c.b16 %v119, %v118
  %vm138 = vcmask 130048
  %v140 = vsel %vm138, %v73, 0
  %v143 = vsel %vm138, %v75, 0
  %v146 = vsel %vm138, %v77, 0
  %v149 = vsel %vm138, %v79, 0
  %151 = vmatprep.subr.bf16.mxu0 0
  %152 = vmatpush1.bf16.msra.mxu0 %v120
  %153 = vmatprep.subr.bf16.mxu0 0
  %154 = vmatpush1.bf16.msra.mxu0 %v121
  %155 = vmatprep.subr.bf16.mxu0 0
  %156 = vmatpush1.bf16.msra.mxu0 %v122
  %157 = vmatprep.subr.bf16.mxu0 0
  %158 = vmatpush1.bf16.msra.mxu0 %v123
  %159 = vmatprep.subr.bf16.mxu0 0
  %160 = vmatpush1.bf16.msra.mxu0 %v124
  %161 = vmatprep.subr.bf16.mxu0 0
  %162 = vmatpush1.bf16.msra.mxu0 %v125
  %163 = vmatprep.subr.bf16.mxu0 0
  %164 = vmatpush1.bf16.msra.mxu0 %v126
  %165 = vmatprep.subr.bf16.mxu0 0
  %166 = vmatpush1.bf16.msra.mxu0 %v127
  %167 = vmatprep.subr.bf16.mxu0 0
  %168 = vmatpush1.bf16.msra.mxu0 %v128
  %169 = vmatprep.subr.bf16.mxu0 0
  %170 = vmatpush1.bf16.msra.mxu0 0
  %171 = vmatprep.subr.bf16.mxu0 0
  %172 = vmatpush1.bf16.msra.mxu0 0
  %173 = vmatprep.subr.bf16.mxu0 0
  %174 = vmatpush1.bf16.msra.mxu0 0
  %175 = vmatprep.subr.bf16.mxu0 0
  %176 = vmatpush1.bf16.msra.mxu0 0
  %177 = vmatprep.subr.bf16.mxu0 0
  %178 = vmatpush1.bf16.msra.mxu0 0
  %179 = vmatprep.subr.bf16.mxu0 0
  %180 = vmatpush1.bf16.msra.mxu0 0
  %181 = vmatprep.subr.bf16.mxu0 0
  %182 = vmatpush1.bf16.msra.mxu0 0
  %183 = vmatprep.mubr.bf16.mxu0 %v140
  %184 = vmatmul.mubr.bf16.gmra.mrb[0].mxu0 %v72
  %v185 = vpop.f32.mrb[0].mxu0
  %v186 = vadd.f32 %v46, %v185
  %v187 = vpop.f32.mrb[0].mxu0
  %v188 = vpop.f32.mrb[0].mxu0
  %v189 = vadd.f32 %v46, %v188
  %v190 = vpop.f32.mrb[0].mxu0
  %191 = vmatprep.mubr.bf16.mxu0 %v143
  %192 = vmatmul.mubr.bf16.gmra.mrb[0].mxu0 %v74
  %v193 = vpop.f32.mrb[0].mxu0
  %v194 = vadd.f32 %v46, %v193
  %v195 = vpop.f32.mrb[0].mxu0
  %v196 = vpop.f32.mrb[0].mxu0
  %v197 = vadd.f32 %v46, %v196
  %v198 = vpop.f32.mrb[0].mxu0
  %199 = vmatprep.mubr.bf16.mxu0 %v146
  %200 = vmatmul.mubr.bf16.gmra.mrb[0].mxu0 %v76
  %v201 = vpop.f32.mrb[0].mxu0
  %v202 = vadd.f32 %v46, %v201
  %v203 = vpop.f32.mrb[0].mxu0
  %v204 = vpop.f32.mrb[0].mxu0
  %v205 = vadd.f32 %v46, %v204
  %v206 = vpop.f32.mrb[0].mxu0
  %207 = vmatprep.mubr.bf16.mxu0 %v149
  %208 = vmatmul.mubr.bf16.gmra.mrb[0].mxu0 %v78
  %v209 = vpop.f32.mrb[0].mxu0
  %v210 = vadd.f32 %v46, %v209
  %v211 = vpop.f32.mrb[0].mxu0
  %v212 = vpop.f32.mrb[0].mxu0
  %v213 = vadd.f32 %v46, %v212
  %v214 = vpop.f32.mrb[0].mxu0
  %215 = vdwg.mxu0
  %v216 = vmax.f32 %v186, 0.0
  %v217 = vmax.f32 %v189, 0.0
  %v218 = vmax.f32 %v194, 0.0
  %v219 = vmax.f32 %v197, 0.0
  %v220 = vmax.f32 %v202, 0.0
  %v221 = vmax.f32 %v205, 0.0
  %v222 = vmax.f32 %v210, 0.0
  %v223 = vmax.f32 %v213, 0.0
  %vm224 = vcmask 261120
  %225 = vst.msk [vmem:[%s3] sm:$0xff] %vm224, %v216
  %226 = vst.msk [vmem:[%s3 + $0x8] sm:$0xff] %vm224, %v217
  %227 = vst.msk [vmem:[%s3 + $0x10] sm:$0xff] %vm224, %v218
  %228 = vst.msk [vmem:[%s3 + $0x18] sm:$0xff] %vm224, %v219
  %229 = vst.msk [vmem:[%s3 + $0x20] sm:$0xff] %vm224, %v220
  %230 = vst.msk [vmem:[%s3 + $0x28] sm:$0xff] %vm224, %v221
  %231 = vst.msk [vmem:[%s3 + $0x30] sm:$0xff] %vm224, %v222
  %232 = vst.msk [vmem:[%s3 + $0x38] sm:$0xff] %vm224, %v223
  // Predicated region
  $region14: #{autoencoder_forward.11} parent=0 // pred_check
    _
  $region15: #{autoencoder_forward.11} parent=0 // pred_check_branch
    %234 = sbr.rel (0) target = $region17
  $region16: #{autoencoder_forward.11} parent=0 // pred_region
    _
  $region17: #{autoencoder_forward.11} parent=0 // pred_fallthru
    _
  // Predicated region
  $region18: #{autoencoder_forward.11} parent=0 // pred_check
    _
  $region19: #{autoencoder_forward.11} parent=0 // pred_check_branch
    %236 = sbr.rel (0) target = $region21
  $region20: #{autoencoder_forward.11} parent=0 // pred_region
    _
  $region21: #{autoencoder_forward.11} parent=0 // pred_fallthru
    _

// kernel: autoencoder_forward.12
$region0: #{autoencoder_forward.12}
  #allocation0 [shape = 'u32[]', space=smem, size = 0x4, offset = 0x4, fixed_abs, tag = 'smem constant byte address 0x4 - core index']
  #allocation1 [shape = 'u32[144,128]{1,0:T(1,128)}', space=vmem, size = 0x12000, scoped, tag = 'internal scratch']
  %s0 = inlined_call_operand.vmem [shape: bf16[64,288], index: 0, kind: input, shape index: {}]
  %s1 = inlined_call_operand.vmem [shape: bf16[288,64], index: 1, kind: input, shape index: {}]
  %s2 = inlined_call_operand.vmem [shape: f32[1,64], index: 2, kind: input, shape index: {}]
  %s3 = inlined_call_operand.vmem [shape: f32[32,64], index: 3, kind: input, shape index: {}]
  %s4 = inlined_call_operand.vmem [shape: f32[32,64], index: 4, kind: output, shape index: {}]
  %s5 = sld [smem:[#allocation0]]
  $region26: #{autoencoder_forward.12} parent=0
    _
  %s7 = ssub.s32 1, %s5
  %s8 = scalar_select 0, %s7, %s5
  // Predicated region
  $region2: #{autoencoder_forward.12} parent=0 // pred_check
    _
  $region3: #{autoencoder_forward.12} parent=0 // pred_check_branch
    %10 = sbr.rel (0) target = $region5
  $region4: #{autoencoder_forward.12} parent=0 // pred_region
    _
  $region5: #{autoencoder_forward.12} parent=0 // pred_fallthru
    _
  // Predicated region
  $region6: #{autoencoder_forward.12} parent=0 // pred_check
    _
  $region7: #{autoencoder_forward.12} parent=0 // pred_check_branch
    %12 = sbr.rel (0) target = $region9
  $region8: #{autoencoder_forward.12} parent=0 // pred_region
    _
  $region9: #{autoencoder_forward.12} parent=0 // pred_fallthru
    _
  // Predicated region
  $region10: #{autoencoder_forward.12} parent=0 // pred_check
    _
  $region11: #{autoencoder_forward.12} parent=0 // pred_check_branch
    %14 = sbr.rel (0) target = $region13
  $region12: #{autoencoder_forward.12} parent=0 // pred_region
    _
  $region13: #{autoencoder_forward.12} parent=0 // pred_fallthru
    _
  // Predicated region
  $region14: #{autoencoder_forward.12} parent=0 // pred_check
    _
  $region15: #{autoencoder_forward.12} parent=0 // pred_check_branch
    %16 = sbr.rel (0) target = $region17
  $region16: #{autoencoder_forward.12} parent=0 // pred_region
    _
  $region17: #{autoencoder_forward.12} parent=0 // pred_fallthru
    _
  %v18 = vld [vmem:[%s0] sm:$0xff]
  %v19 = vld [vmem:[%s0 + $0x8] sm:$0xf]
  %v20 = vld [vmem:[%s0 + $0xc] sm:$0xff]
  %v21 = vld [vmem:[%s0 + $0x14] sm:$0xf]
  %v22 = vld [vmem:[%s0 + $0x18] sm:$0xff]
  %v23 = vld [vmem:[%s0 + $0x20] sm:$0xf]
  %v24 = vld [vmem:[%s0 + $0x24] sm:$0xff]
  %v25 = vld [vmem:[%s0 + $0x2c] sm:$0xf]
  %v26 = vld [vmem:[%s0 + $0x30] sm:$0xff]
  %v27 = vld [vmem:[%s0 + $0x38] sm:$0xf]
  %v28 = vld [vmem:[%s0 + $0x3c] sm:$0xff]
  %v29 = vld [vmem:[%s0 + $0x44] sm:$0xf]
  %v30 = vld [vmem:[%s0 + $0x48] sm:$0xff]
  %v31 = vld [vmem:[%s0 + $0x50] sm:$0xf]
  %v32 = vld [vmem:[%s0 + $0x54] sm:$0xff]
  %v33 = vld [vmem:[%s0 + $0x5c] sm:$0xf]
  %v34 = vld [vmem:[%s1] sm:$0xf]
  %v35 = vld [vmem:[%s1 + $0x4] sm:$0xf]
  %v36 = vld [vmem:[%s1 + $0x8] sm:$0xf]
  %v37 = vld [vmem:[%s1 + $0xc] sm:$0xf]
  %v38 = vld [vmem:[%s1 + $0x10] sm:$0xf]
  %v39 = vld [vmem:[%s1 + $0x14] sm:$0xf]
  %v40 = vld [vmem:[%s1 + $0x18] sm:$0xf]
  %v41 = vld [vmem:[%s1 + $0x1c] sm:$0xf]
  %v42 = vld [vmem:[%s1 + $0x20] sm:$0xf]
  %v43 = vld [vmem:[%s1 + $0x24] sm:$0xf]
  %v44 = vld [vmem:[%s1 + $0x28] sm:$0xf]
  %v45 = vld [vmem:[%s1 + $0x2c] sm:$0xf]
  %v46 = vld [vmem:[%s1 + $0x30] sm:$0xf]
  %v47 = vld [vmem:[%s1 + $0x34] sm:$0xf]
  %v48 = vld [vmem:[%s1 + $0x38] sm:$0xf]
  %v49 = vld [vmem:[%s1 + $0x3c] sm:$0xf]
  %v50 = vld [vmem:[%s1 + $0x40] sm:$0xf]
  %v51 = vld [vmem:[%s1 + $0x44] sm:$0xf]
  %v52 = vld [vmem:[%s1 + $0x48] sm:$0xf]
  %v53 = vld [vmem:[%s1 + $0x4c] sm:$0xf]
  %v54 = vld [vmem:[%s1 + $0x50] sm:$0xf]
  %v55 = vld [vmem:[%s1 + $0x54] sm:$0xf]
  %v56 = vld [vmem:[%s1 + $0x58] sm:$0xf]
  %v57 = vld [vmem:[%s1 + $0x5c] sm:$0xf]
  %v58 = vld [vmem:[%s1 + $0x60] sm:$0xf]
  %v59 = vld [vmem:[%s1 + $0x64] sm:$0xf]
  %v60 = vld [vmem:[%s1 + $0x68] sm:$0xf]
  %v61 = vld [vmem:[%s1 + $0x6c] sm:$0xf]
  %v62 = vld [vmem:[%s1 + $0x70] sm:$0xf]
  %v63 = vld [vmem:[%s1 + $0x74] sm:$0xf]
  %v64 = vld [vmem:[%s1 + $0x78] sm:$0xf]
  %v65 = vld [vmem:[%s1 + $0x7c] sm:$0xf]
  %v66 = vld [vmem:[%s1 + $0x80] sm:$0xf]
  %v67 = vld [vmem:[%s1 + $0x84] sm:$0xf]
  %v68 = vld [vmem:[%s1 + $0x88] sm:$0xf]
  %v69 = vld [vmem:[%s1 + $0x8c] sm:$0xf]
  %v70 = vld [vmem:[%s2] sm:$0x1]
  %v72 = vlaneseq
  %v73 = vshrl.u32 %v72, 7
  %v74 = vsub.s32 0, %v73
  %v75 = vrot.slane %v70, %v74
  %v93 = vunpack.c.l.b16 %v18
  %v94 = vunpack.c.h.b16 %v18
  %v95 = vunpack.c.l.b16 %v19
  %v96 = vunpack.c.l.b16 %v20
  %v97 = vunpack.c.h.b16 %v20
  %v98 = vunpack.c.l.b16 %v21
  %v99 = vunpack.c.l.b16 %v22
  %v100 = vunpack.c.h.b16 %v22
  %v101 = vunpack.c.l.b16 %v23
  %v102 = vunpack.c.l.b16 %v24
  %v103 = vunpack.c.h.b16 %v24
  %v104 = vunpack.c.l.b16 %v25
  %v105 = vunpack.c.l.b16 %v26
  %v106 = vunpack.c.h.b16 %v26
  %v107 = vunpack.c.l.b16 %v27
  %v108 = vunpack.c.l.b16 %v28
  %v109 = vunpack.c.h.b16 %v28
  %v110 = vunpack.c.l.b16 %v29
  %v111 = vunpack.c.l.b16 %v30
  %v112 = vunpack.c.h.b16 %v30
  %v113 = vunpack.c.l.b16 %v31
  %v114 = vunpack.c.l.b16 %v32
  %v115 = vunpack.c.h.b16 %v32
  %v116 = vunpack.c.l.b16 %v33
  %v117 = vpack.c.b16 %v96, %v93
  %v118 = vpack.c.b16 %v97, %v94
  %v119 = vpack.c.b16 %v98, %v95
  %v120 = vpack.c.b16 %v102, %v99
  %v121 = vpack.c.b16 %v103, %v100
  %v122 = vpack.c.b16 %v104, %v101
  %v123 = vpack.c.b16 %v108, %v105
  %v124 = vpack.c.b16 %v109, %v106
  %v125 = vpack.c.b16 %v110, %v107
  %v126 = vpack.c.b16 %v114, %v111
  %v127 = vpack.c.b16 %v115, %v112
  %v128 = vpack.c.b16 %v116, %v113
  %v173 = vunpack.c.l.b16 %v34
  %v174 = vunpack.c.l.b16 %v35
  %v175 = vunpack.c.l.b16 %v36
  %v176 = vunpack.c.l.b16 %v37
  %v177 = vunpack.c.l.b16 %v38
  %v178 = vunpack.c.l.b16 %v39
  %v179 = vunpack.c.l.b16 %v40
  %v180 = vunpack.c.l.b16 %v41
  %v181 = vunpack.c.l.b16 %v42
  %v182 = vunpack.c.l.b16 %v43
  %v183 = vunpack.c.l.b16 %v44
  %v184 = vunpack.c.l.b16 %v45
  %v185 = vunpack.c.l.b16 %v46
  %v186 = vunpack.c.l.b16 %v47
  %v187 = vunpack.c.l.b16 %v48
  %v188 = vunpack.c.l.b16 %v49
  %v189 = vunpack.c.l.b16 %v50
  %v190 = vunpack.c.l.b16 %v51
  %v191 = vunpack.c.l.b16 %v52
  %v192 = vunpack.c.l.b16 %v53
  %v193 = vunpack.c.l.b16 %v54
  %v194 = vunpack.c.l.b16 %v55
  %v195 = vunpack.c.l.b16 %v56
  %v196 = vunpack.c.l.b16 %v57
  %v197 = vunpack.c.l.b16 %v58
  %v198 = vunpack.c.l.b16 %v59
  %v199 = vunpack.c.l.b16 %v60
  %v200 = vunpack.c.l.b16 %v61
  %v201 = vunpack.c.l.b16 %v62
  %v202 = vunpack.c.l.b16 %v63
  %v203 = vunpack.c.l.b16 %v64
  %v204 = vunpack.c.l.b16 %v65
  %v205 = vunpack.c.l.b16 %v66
  %v206 = vunpack.c.l.b16 %v67
  %v207 = vunpack.c.l.b16 %v68
  %v208 = vunpack.c.l.b16 %v69
  %v209 = vpack.c.b16 %v174, %v173
  %v210 = vpack.c.b16 %v176, %v175
  %v211 = vpack.c.b16 %v178, %v177
  %v212 = vpack.c.b16 %v180, %v179
  %v213 = vpack.c.b16 %v182, %v181
  %v214 = vpack.c.b16 %v184, %v183
  %v215 = vpack.c.b16 %v186, %v185
  %v216 = vpack.c.b16 %v188, %v187
  %v217 = vpack.c.b16 %v190, %v189
  %v218 = vpack.c.b16 %v192, %v191
  %v219 = vpack.c.b16 %v194, %v193
  %v220 = vpack.c.b16 %v196, %v195
  %v221 = vpack.c.b16 %v198, %v197
  %v222 = vpack.c.b16 %v200, %v199
  %v223 = vpack.c.b16 %v202, %v201
  %v224 = vpack.c.b16 %v204, %v203
  %v225 = vpack.c.b16 %v206, %v205
  %v226 = vpack.c.b16 %v208, %v207
  %vm245 = vcmask 261120
  %v247 = vsel %vm245, %v119, 0
  %v250 = vsel %vm245, %v122, 0
  %v253 = vsel %vm245, %v125, 0
  %v256 = vsel %vm245, %v128, 0
  %258 = vmatprep.subr.bf16.mxu0 0
  %259 = vmatpush1.bf16.msra.mxu0 %v209
  %260 = vmatprep.subr.bf16.mxu0 0
  %261 = vmatpush1.bf16.msra.mxu0 %v210
  %262 = vmatprep.subr.bf16.mxu0 0
  %263 = vmatpush1.bf16.msra.mxu0 %v211
  %264 = vmatprep.subr.bf16.mxu0 0
  %265 = vmatpush1.bf16.msra.mxu0 %v212
  %266 = vmatprep.subr.bf16.mxu0 0
  %267 = vmatpush1.bf16.msra.mxu0 %v213
  %268 = vmatprep.subr.bf16.mxu0 0
  %269 = vmatpush1.bf16.msra.mxu0 %v214
  %270 = vmatprep.subr.bf16.mxu0 0
  %271 = vmatpush1.bf16.msra.mxu0 %v215
  %272 = vmatprep.subr.bf16.mxu0 0
  %273 = vmatpush1.bf16.msra.mxu0 %v216
  %274 = vmatprep.subr.bf16.mxu0 0
  %275 = vmatpush1.bf16.msra.mxu0 %v217
  %276 = vmatprep.subr.bf16.mxu0 0
  %277 = vmatpush1.bf16.msra.mxu0 %v218
  %278 = vmatprep.subr.bf16.mxu0 0
  %279 = vmatpush1.bf16.msra.mxu0 %v219
  %280 = vmatprep.subr.bf16.mxu0 0
  %281 = vmatpush1.bf16.msra.mxu0 %v220
  %282 = vmatprep.subr.bf16.mxu0 0
  %283 = vmatpush1.bf16.msra.mxu0 %v221
  %284 = vmatprep.subr.bf16.mxu0 0
  %285 = vmatpush1.bf16.msra.mxu0 %v222
  %286 = vmatprep.subr.bf16.mxu0 0
  %287 = vmatpush1.bf16.msra.mxu0 %v223
  %288 = vmatprep.subr.bf16.mxu0 0
  %289 = vmatpush1.bf16.msra.mxu0 %v224
  %290 = vmatprep.mubr.bf16.mxu0 %v118
  %291 = vmatmul.mubr.bf16.gmra.mrb[0].mxu0 %v117
  %v292 = vpop.f32.mrb[0].mxu0
  %v293 = vadd.f32 %v75, %v292
  %v294 = vpop.f32.mrb[0].mxu0
  %v295 = vpop.f32.mrb[0].mxu0
  %v296 = vadd.f32 %v75, %v295
  %v297 = vpop.f32.mrb[0].mxu0
  %298 = vmatprep.mubr.bf16.mxu0 %v121
  %299 = vmatmul.mubr.bf16.gmra.mrb[0].mxu0 %v120
  %v300 = vpop.f32.mrb[0].mxu0
  %v301 = vadd.f32 %v75, %v300
  %v302 = vpop.f32.mrb[0].mxu0
  %v303 = vpop.f32.mrb[0].mxu0
  %v304 = vadd.f32 %v75, %v303
  %v305 = vpop.f32.mrb[0].mxu0
  %306 = vmatprep.mubr.bf16.mxu0 %v124
  %307 = vmatmul.mubr.bf16.gmra.mrb[0].mxu0 %v123
  %v308 = vpop.f32.mrb[0].mxu0
  %v309 = vadd.f32 %v75, %v308
  %v310 = vpop.f32.mrb[0].mxu0
  %v311 = vpop.f32.mrb[0].mxu0
  %v312 = vadd.f32 %v75, %v311
  %v313 = vpop.f32.mrb[0].mxu0
  %314 = vmatprep.mubr.bf16.mxu0 %v127
  %315 = vmatmul.mubr.bf16.gmra.mrb[0].mxu0 %v126
  %v316 = vpop.f32.mrb[0].mxu0
  %v317 = vadd.f32 %v75, %v316
  %v318 = vpop.f32.mrb[0].mxu0
  %v319 = vpop.f32.mrb[0].mxu0
  %v320 = vadd.f32 %v75, %v319
  %v321 = vpop.f32.mrb[0].mxu0
  %322 = vdwg.mxu0
  %323 = vmatprep.subr.bf16.mxu0 0
  %324 = vmatpush1.bf16.msra.mxu0 %v225
  %325 = vmatprep.subr.bf16.mxu0 0
  %326 = vmatpush1.bf16.msra.mxu0 %v226
  %327 = vmatprep.subr.bf16.mxu0 0
  %328 = vmatpush1.bf16.msra.mxu0 0
  %329 = vmatprep.subr.bf16.mxu0 0
  %330 = vmatpush1.bf16.msra.mxu0 0
  %331 = vmatprep.subr.bf16.mxu0 0
  %332 = vmatpush1.bf16.msra.mxu0 0
  %333 = vmatprep.subr.bf16.mxu0 0
  %334 = vmatpush1.bf16.msra.mxu0 0
  %335 = vmatprep.subr.bf16.mxu0 0
  %336 = vmatpush1.bf16.msra.mxu0 0
  %337 = vmatprep.subr.bf16.mxu0 0
  %338 = vmatpush1.bf16.msra.mxu0 0
  %339 = vmatprep.subr.bf16.mxu0 0
  %340 = vmatpush1.bf16.msra.mxu0 0
  %341 = vmatprep.subr.bf16.mxu0 0
  %342 = vmatpush1.bf16.msra.mxu0 0
  %343 = vmatprep.subr.bf16.mxu0 0
  %344 = vmatpush1.bf16.msra.mxu0 0
  %345 = vmatprep.subr.bf16.mxu0 0
  %346 = vmatpush1.bf16.msra.mxu0 0
  %347 = vmatprep.subr.bf16.mxu0 0
  %348 = vmatpush1.bf16.msra.mxu0 0
  %349 = vmatprep.subr.bf16.mxu0 0
  %350 = vmatpush1.bf16.msra.mxu0 0
  %351 = vmatprep.subr.bf16.mxu0 0
  %352 = vmatpush1.bf16.msra.mxu0 0
  %353 = vmatprep.subr.bf16.mxu0 0
  %354 = vmatpush1.bf16.msra.mxu0 0
  %355 = vmatprep.mubr.bf16.mxu0 0
  %356 = vmatmul.mubr.bf16.gmra.mrb[0].mxu0 %v247
  %v357 = vpop.f32.mrb[0].mxu0
  %v358 = vadd.f32 %v293, %v357
  %v359 = vpop.f32.mrb[0].mxu0
  %v360 = vpop.f32.mrb[0].mxu0
  %v361 = vadd.f32 %v296, %v360
  %v362 = vpop.f32.mrb[0].mxu0
  %363 = vmatprep.mubr.bf16.mxu0 0
  %364 = vmatmul.mubr.bf16.gmra.mrb[0].mxu0 %v250
  %v365 = vpop.f32.mrb[0].mxu0
  %v366 = vadd.f32 %v301, %v365
  %v367 = vpop.f32.mrb[0].mxu0
  %v368 = vpop.f32.mrb[0].mxu0
  %v369 = vadd.f32 %v304, %v368
  %v370 = vpop.f32.mrb[0].mxu0
  %371 = vmatprep.mubr.bf16.mxu0 0
  %372 = vmatmul.mubr.bf16.gmra.mrb[0].mxu0 %v253
  %v373 = vpop.f32.mrb[0].mxu0
  %v374 = vadd.f32 %v309, %v373
  %v375 = vpop.f32.mrb[0].mxu0
  %v376 = vpop.f32.mrb[0].mxu0
  %v377 = vadd.f32 %v312, %v376
  %v378 = vpop.f32.mrb[0].mxu0
  %379 = vmatprep.mubr.bf16.mxu0 0
  %380 = vmatmul.mubr.bf16.gmra.mrb[0].mxu0 %v256
  %v381 = vpop.f32.mrb[0].mxu0
  %v382 = vadd.f32 %v317, %v381
  %v383 = vpop.f32.mrb[0].mxu0
  %v384 = vpop.f32.mrb[0].mxu0
  %v385 = vadd.f32 %v320, %v384
  %v386 = vpop.f32.mrb[0].mxu0
  %387 = vdwg.mxu0
  %v388 = vadd.f32 %v358, %v374
  %v389 = vadd.f32 %v361, %v377
  %v390 = vadd.f32 %v366, %v382
  %v391 = vadd.f32 %v369, %v385
  %v392 = vld [vmem:[%s3] sm:$0xff]
  %v393 = vld [vmem:[%s3 + $0x8] sm:$0xff]
  %v394 = vld [vmem:[%s3 + $0x10] sm:$0xff]
  %v395 = vld [vmem:[%s3 + $0x18] sm:$0xff]
  %v396 = vadd.f32 %v388, %v392
  %v397 = vadd.f32 %v389, %v393
  %v398 = vadd.f32 %v390, %v394
  %v399 = vadd.f32 %v391, %v395
  %vm400 = vcmask 523264
  %401 = vst.msk [vmem:[%s4] sm:$0xff] %vm400, %v396
  %402 = vst.msk [vmem:[%s4 + $0x8] sm:$0xff] %vm400, %v397
  %403 = vst.msk [vmem:[%s4 + $0x10] sm:$0xff] %vm400, %v398
  %404 = vst.msk [vmem:[%s4 + $0x18] sm:$0xff] %vm400, %v399
  // Predicated region
  $region18: #{autoencoder_forward.12} parent=0 // pred_check
    _
  $region19: #{autoencoder_forward.12} parent=0 // pred_check_branch
    %406 = sbr.rel (0) target = $region21
  $region20: #{autoencoder_forward.12} parent=0 // pred_region
    _
  $region21: #{autoencoder_forward.12} parent=0 // pred_fallthru
    _
  // Predicated region
  $region22: #{autoencoder_forward.12} parent=0 // pred_check
    _
  $region23: #{autoencoder_forward.12} parent=0 // pred_check_branch
    %408 = sbr.rel (0) target = $region25
  $region24: #{autoencoder_forward.12} parent=0 // pred_region
    _
  $region25: #{autoencoder_forward.12} parent=0 // pred_fallthru
    _

// kernel: autoencoder_forward.8
$region0: #{autoencoder_forward.8}
  #allocation0 [shape = 'u32[]', space=smem, size = 0x4, offset = 0x4, fixed_abs, tag = 'smem constant byte address 0x4 - core index']
  #allocation1 [shape = 'u32[144,128]{1,0:T(1,128)}', space=vmem, size = 0x12000, scoped, tag = 'internal scratch']
  %s0 = inlined_call_operand.vmem [shape: bf16[2,48,16], index: 0, kind: input, shape index: {}]
  %s1 = inlined_call_operand.vmem [shape: bf16[2,16,64], index: 1, kind: input, shape index: {}]
  %s2 = inlined_call_operand.vmem [shape: f32[2,24,64], index: 2, kind: input, shape index: {}]
  %s3 = inlined_call_operand.vmem [shape: f32[2,1,64], index: 3, kind: input, shape index: {}]
  %s4 = inlined_call_operand.vmem [shape: f32[2,1,64], index: 4, kind: input, shape index: {}]
  %s5 = inlined_call_operand.vmem [shape: bf16[2,64,192], index: 5, kind: input, shape index: {}]
  %s6 = inlined_call_operand.vmem [shape: f32[2,1,192], index: 6, kind: input, shape index: {}]
  %s7 = inlined_call_operand.vmem [shape: bf16[2,64,64], index: 7, kind: input, shape index: {}]
  %s8 = inlined_call_operand.vmem [shape: f32[2,1,64], index: 8, kind: input, shape index: {}]
  %s9 = inlined_call_operand.vmem [shape: f32[2,1,64], index: 9, kind: input, shape index: {}]
  %s10 = inlined_call_operand.vmem [shape: f32[2,1,64], index: 10, kind: input, shape index: {}]
  %s11 = inlined_call_operand.vmem [shape: bf16[2,64,128], index: 11, kind: input, shape index: {}]
  %s12 = inlined_call_operand.vmem [shape: f32[2,1,128], index: 12, kind: input, shape index: {}]
  %s13 = inlined_call_operand.vmem [shape: bf16[2,128,64], index: 13, kind: input, shape index: {}]
  %s14 = inlined_call_operand.vmem [shape: f32[2,1,64], index: 14, kind: input, shape index: {}]
  %s15 = inlined_call_operand.vmem [shape: f32[2,2,24,64], index: 15, kind: output, shape index: {}]
  %s16 = sld [smem:[#allocation0]]
  $region93: #{autoencoder_forward.8} parent=0
    _
  %s18 = ssub.s32 1, %s16
  %s19 = scalar_select 0, %s18, %s16
  loop: start=0, step=1, limit=4
  $region2: #{autoencoder_forward.8} parent=0 // loop_pre_header
    _
  $region3: #{autoencoder_forward.8} parent=0 // loop_header
    %s21 = sphi 0, %s25
    %p22 = scmp.ge.s32.totalorder %s21, 4
    %s31 = sphi 0, %s33
    %s34 = sphi 0, %s31
    %s35 = sphi 0, %s34
    %s51 = sphi 0, %s35
    %s57 = sphi 0, %s59
    %s60 = sphi 0, %s57
    %s61 = sphi 0, %s60
    %s77 = sphi 0, %s61
    %s83 = sphi 0, %s85
    %s86 = sphi 0, %s83
    %s87 = sphi 0, %s86
    %s103 = sphi 0, %s87
    %s109 = sphi 0, %s111
    %s112 = sphi 0, %s109
    %s113 = sphi 0, %s112
    %s129 = sphi 0, %s113
    %s135 = sphi 0, %s137
    %s138 = sphi 0, %s135
    %s139 = sphi 0, %s138
    %s155 = sphi 0, %s139
    %s161 = sphi 0, %s163
    %s164 = sphi 0, %s161
    %s165 = sphi 0, %s164
    %s181 = sphi 0, %s165
    %s187 = sphi 0, %s189
    %s190 = sphi 0, %s187
    %s191 = sphi 0, %s190
    %s207 = sphi 0, %s191
    %s213 = sphi 0, %s215
    %s216 = sphi 0, %s213
    %s217 = sphi 0, %s216
    %s233 = sphi 0, %s217
    %s239 = sphi 0, %s241
    %s242 = sphi 0, %s239
    %s243 = sphi 0, %s242
    %s259 = sphi 0, %s243
    %s265 = sphi 0, %s267
    %s268 = sphi 0, %s265
    %s269 = sphi 0, %s268
    %s285 = sphi 0, %s269
    %s291 = sphi 0, %s293
    %s294 = sphi 0, %s291
    %s295 = sphi 0, %s294
    %s311 = sphi 0, %s295
    %s317 = sphi 0, %s319
    %s320 = sphi 0, %s317
    %s321 = sphi 0, %s320
    %s337 = sphi 0, %s321
    %s343 = sphi 0, %s345
    %s346 = sphi 0, %s343
    %s347 = sphi 0, %s346
    %s363 = sphi 0, %s347
    %s369 = sphi 0, %s371
    %s372 = sphi 0, %s369
    %s373 = sphi 0, %s372
    %s389 = sphi 0, %s373
    %s395 = sphi 0, %s397
    %s398 = sphi 0, %s395
    %s399 = sphi 0, %s398
    %s415 = sphi 0, %s399
    %s421 = sphi 0, %s423
    %s424 = sphi 0, %s421
    %s425 = sphi 0, %s424
    %s441 = sphi 0, %s425
  $region4: #{autoencoder_forward.8} parent=0 // loop_header_branch
    %24 = sbr.rel (%p22) target = $region8
  $region5: #{autoencoder_forward.8} parent=0 // loop_body
    %s26 = ssub.s32 %s21, 1
    %s27 = ssub.s32 %s21, 2
    %s28 = sadd.s32 %s21, 1
    %s29 = ssub.s32 %s21, %s28
    %p30 = scmp.eq.s32.totalorder %s29, 0
    %s32 = sadd.s32 %s31, 1
    %s33 = scalar_select %p30, %s31, %s32
    %p36 = pneg %p30
    %p37 = scmp.eq.s32.totalorder %s21, 1
    %p38 = por %p36, %p37
    %p39 = scmp.ne.s32.totalorder %s31, %s34
    %p40 = scmp.eq.s32.totalorder %s21, 0
    %p41 = por %p39, %p40
    %p42 = scmp.ne.s32.totalorder %s31, %s34
    %p43 = scmp.eq.s32.totalorder %s26, 1
    %p44 = por %p42, %p43
    %p45 = scmp.ne.s32.totalorder %s34, %s35
    %p46 = scmp.eq.s32.totalorder %s26, 0
    %p47 = por %p45, %p46
    %p48 = scmp.ne.s32.totalorder %s34, %s35
    %p49 = scmp.eq.s32.totalorder %s27, 1
    %p50 = por %p48, %p49
    %p52 = scmp.ne.s32.totalorder %s35, %s51
    %p53 = scmp.eq.s32.totalorder %s27, 0
    %p54 = por %p52, %p53
    %s55 = ssub.s32 %s21, %s28
    %p56 = scmp.eq.s32.totalorder %s55, 0
    %s58 = sadd.s32 %s57, 1
    %s59 = scalar_select %p56, %s57, %s58
    %p62 = pneg %p56
    %p63 = scmp.eq.s32.totalorder %s21, 1
    %p64 = por %p62, %p63
    %p65 = scmp.ne.s32.totalorder %s57, %s60
    %p66 = scmp.eq.s32.totalorder %s21, 0
    %p67 = por %p65, %p66
    %p68 = scmp.ne.s32.totalorder %s57, %s60
    %p69 = scmp.eq.s32.totalorder %s26, 1
    %p70 = por %p68, %p69
    %p71 = scmp.ne.s32.totalorder %s60, %s61
    %p72 = scmp.eq.s32.totalorder %s26, 0
    %p73 = por %p71, %p72
    %p74 = scmp.ne.s32.totalorder %s60, %s61
    %p75 = scmp.eq.s32.totalorder %s27, 1
    %p76 = por %p74, %p75
    %p78 = scmp.ne.s32.totalorder %s61, %s77
    %p79 = scmp.eq.s32.totalorder %s27, 0
    %p80 = por %p78, %p79
    %s81 = ssub.s32 %s21, %s28
    %p82 = scmp.eq.s32.totalorder %s81, 0
    %s84 = sadd.s32 %s83, 1
    %s85 = scalar_select %p82, %s83, %s84
    %p88 = pneg %p82
    %p89 = scmp.eq.s32.totalorder %s21, 1
    %p90 = por %p88, %p89
    %p91 = scmp.ne.s32.totalorder %s83, %s86
    %p92 = scmp.eq.s32.totalorder %s21, 0
    %p93 = por %p91, %p92
    %p94 = scmp.ne.s32.totalorder %s83, %s86
    %p95 = scmp.eq.s32.totalorder %s26, 1
    %p96 = por %p94, %p95
    %p97 = scmp.ne.s32.totalorder %s86, %s87
    %p98 = scmp.eq.s32.totalorder %s26, 0
    %p99 = por %p97, %p98
    %p100 = scmp.ne.s32.totalorder %s86, %s87
    %p101 = scmp.eq.s32.totalorder %s27, 1
    %p102 = por %p100, %p101
    %p104 = scmp.ne.s32.totalorder %s87, %s103
    %p105 = scmp.eq.s32.totalorder %s27, 0
    %p106 = por %p104, %p105
    %s107 = ssub.s32 %s21, %s28
    %p108 = scmp.eq.s32.totalorder %s107, 0
    %s110 = sadd.s32 %s109, 1
    %s111 = scalar_select %p108, %s109, %s110
    %p114 = pneg %p108
    %p115 = scmp.eq.s32.totalorder %s21, 1
    %p116 = por %p114, %p115
    %p117 = scmp.ne.s32.totalorder %s109, %s112
    %p118 = scmp.eq.s32.totalorder %s21, 0
    %p119 = por %p117, %p118
    %p120 = scmp.ne.s32.totalorder %s109, %s112
    %p121 = scmp.eq.s32.totalorder %s26, 1
    %p122 = por %p120, %p121
    %p123 = scmp.ne.s32.totalorder %s112, %s113
    %p124 = scmp.eq.s32.totalorder %s26, 0
    %p125 = por %p123, %p124
    %p126 = scmp.ne.s32.totalorder %s112, %s113
    %p127 = scmp.eq.s32.totalorder %s27, 1
    %p128 = por %p126, %p127
    %p130 = scmp.ne.s32.totalorder %s113, %s129
    %p131 = scmp.eq.s32.totalorder %s27, 0
    %p132 = por %p130, %p131
    %s133 = ssub.s32 %s21, %s28
    %p134 = scmp.eq.s32.totalorder %s133, 0
    %s136 = sadd.s32 %s135, 1
    %s137 = scalar_select %p134, %s135, %s136
    %p140 = pneg %p134
    %p141 = scmp.eq.s32.totalorder %s21, 1
    %p142 = por %p140, %p141
    %p143 = scmp.ne.s32.totalorder %s135, %s138
    %p144 = scmp.eq.s32.totalorder %s21, 0
    %p145 = por %p143, %p144
    %p146 = scmp.ne.s32.totalorder %s135, %s138
    %p147 = scmp.eq.s32.totalorder %s26, 1
    %p148 = por %p146, %p147
    %p149 = scmp.ne.s32.totalorder %s138, %s139
    %p150 = scmp.eq.s32.totalorder %s26, 0
    %p151 = por %p149, %p150
    %p152 = scmp.ne.s32.totalorder %s138, %s139
    %p153 = scmp.eq.s32.totalorder %s27, 1
    %p154 = por %p152, %p153
    %p156 = scmp.ne.s32.totalorder %s139, %s155
    %p157 = scmp.eq.s32.totalorder %s27, 0
    %p158 = por %p156, %p157
    %s159 = ssub.s32 %s21, %s28
    %p160 = scmp.eq.s32.totalorder %s159, 0
    %s162 = sadd.s32 %s161, 1
    %s163 = scalar_select %p160, %s161, %s162
    %p166 = pneg %p160
    %p167 = scmp.eq.s32.totalorder %s21, 1
    %p168 = por %p166, %p167
    %p169 = scmp.ne.s32.totalorder %s161, %s164
    %p170 = scmp.eq.s32.totalorder %s21, 0
    %p171 = por %p169, %p170
    %p172 = scmp.ne.s32.totalorder %s161, %s164
    %p173 = scmp.eq.s32.totalorder %s26, 1
    %p174 = por %p172, %p173
    %p175 = scmp.ne.s32.totalorder %s164, %s165
    %p176 = scmp.eq.s32.totalorder %s26, 0
    %p177 = por %p175, %p176
    %p178 = scmp.ne.s32.totalorder %s164, %s165
    %p179 = scmp.eq.s32.totalorder %s27, 1
    %p180 = por %p178, %p179
    %p182 = scmp.ne.s32.totalorder %s165, %s181
    %p183 = scmp.eq.s32.totalorder %s27, 0
    %p184 = por %p182, %p183
    %s185 = ssub.s32 %s21, %s28
    %p186 = scmp.eq.s32.totalorder %s185, 0
    %s188 = sadd.s32 %s187, 1
    %s189 = scalar_select %p186, %s187, %s188
    %p192 = pneg %p186
    %p193 = scmp.eq.s32.totalorder %s21, 1
    %p194 = por %p192, %p193
    %p195 = scmp.ne.s32.totalorder %s187, %s190
    %p196 = scmp.eq.s32.totalorder %s21, 0
    %p197 = por %p195, %p196
    %p198 = scmp.ne.s32.totalorder %s187, %s190
    %p199 = scmp.eq.s32.totalorder %s26, 1
    %p200 = por %p198, %p199
    %p201 = scmp.ne.s32.totalorder %s190, %s191
    %p202 = scmp.eq.s32.totalorder %s26, 0
    %p203 = por %p201, %p202
    %p204 = scmp.ne.s32.totalorder %s190, %s191
    %p205 = scmp.eq.s32.totalorder %s27, 1
    %p206 = por %p204, %p205
    %p208 = scmp.ne.s32.totalorder %s191, %s207
    %p209 = scmp.eq.s32.totalorder %s27, 0
    %p210 = por %p208, %p209
    %s211 = ssub.s32 %s21, %s28
    %p212 = scmp.eq.s32.totalorder %s211, 0
    %s214 = sadd.s32 %s213, 1
    %s215 = scalar_select %p212, %s213, %s214
    %p218 = pneg %p212
    %p219 = scmp.eq.s32.totalorder %s21, 1
    %p220 = por %p218, %p219
    %p221 = scmp.ne.s32.totalorder %s213, %s216
    %p222 = scmp.eq.s32.totalorder %s21, 0
    %p223 = por %p221, %p222
    %p224 = scmp.ne.s32.totalorder %s213, %s216
    %p225 = scmp.eq.s32.totalorder %s26, 1
    %p226 = por %p224, %p225
    %p227 = scmp.ne.s32.totalorder %s216, %s217
    %p228 = scmp.eq.s32.totalorder %s26, 0
    %p229 = por %p227, %p228
    %p230 = scmp.ne.s32.totalorder %s216, %s217
    %p231 = scmp.eq.s32.totalorder %s27, 1
    %p232 = por %p230, %p231
    %p234 = scmp.ne.s32.totalorder %s217, %s233
    %p235 = scmp.eq.s32.totalorder %s27, 0
    %p236 = por %p234, %p235
    %s237 = ssub.s32 %s21, %s28
    %p238 = scmp.eq.s32.totalorder %s237, 0
    %s240 = sadd.s32 %s239, 1
    %s241 = scalar_select %p238, %s239, %s240
    %p244 = pneg %p238
    %p245 = scmp.eq.s32.totalorder %s21, 1
    %p246 = por %p244, %p245
    %p247 = scmp.ne.s32.totalorder %s239, %s242
    %p248 = scmp.eq.s32.totalorder %s21, 0
    %p249 = por %p247, %p248
    %p250 = scmp.ne.s32.totalorder %s239, %s242
    %p251 = scmp.eq.s32.totalorder %s26, 1
    %p252 = por %p250, %p251
    %p253 = scmp.ne.s32.totalorder %s242, %s243
    %p254 = scmp.eq.s32.totalorder %s26, 0
    %p255 = por %p253, %p254
    %p256 = scmp.ne.s32.totalorder %s242, %s243
    %p257 = scmp.eq.s32.totalorder %s27, 1
    %p258 = por %p256, %p257
    %p260 = scmp.ne.s32.totalorder %s243, %s259
    %p261 = scmp.eq.s32.totalorder %s27, 0
    %p262 = por %p260, %p261
    %s263 = ssub.s32 %s21, %s28
    %p264 = scmp.eq.s32.totalorder %s263, 0
    %s266 = sadd.s32 %s265, 1
    %s267 = scalar_select %p264, %s265, %s266
    %p270 = pneg %p264
    %p271 = scmp.eq.s32.totalorder %s21, 1
    %p272 = por %p270, %p271
    %p273 = scmp.ne.s32.totalorder %s265, %s268
    %p274 = scmp.eq.s32.totalorder %s21, 0
    %p275 = por %p273, %p274
    %p276 = scmp.ne.s32.totalorder %s265, %s268
    %p277 = scmp.eq.s32.totalorder %s26, 1
    %p278 = por %p276, %p277
    %p279 = scmp.ne.s32.totalorder %s268, %s269
    %p280 = scmp.eq.s32.totalorder %s26, 0
    %p281 = por %p279, %p280
    %p282 = scmp.ne.s32.totalorder %s268, %s269
    %p283 = scmp.eq.s32.totalorder %s27, 1
    %p284 = por %p282, %p283
    %p286 = scmp.ne.s32.totalorder %s269, %s285
    %p287 = scmp.eq.s32.totalorder %s27, 0
    %p288 = por %p286, %p287
    %s289 = ssub.s32 %s21, %s28
    %p290 = scmp.eq.s32.totalorder %s289, 0
    %s292 = sadd.s32 %s291, 1
    %s293 = scalar_select %p290, %s291, %s292
    %p296 = pneg %p290
    %p297 = scmp.eq.s32.totalorder %s21, 1
    %p298 = por %p296, %p297
    %p299 = scmp.ne.s32.totalorder %s291, %s294
    %p300 = scmp.eq.s32.totalorder %s21, 0
    %p301 = por %p299, %p300
    %p302 = scmp.ne.s32.totalorder %s291, %s294
    %p303 = scmp.eq.s32.totalorder %s26, 1
    %p304 = por %p302, %p303
    %p305 = scmp.ne.s32.totalorder %s294, %s295
    %p306 = scmp.eq.s32.totalorder %s26, 0
    %p307 = por %p305, %p306
    %p308 = scmp.ne.s32.totalorder %s294, %s295
    %p309 = scmp.eq.s32.totalorder %s27, 1
    %p310 = por %p308, %p309
    %p312 = scmp.ne.s32.totalorder %s295, %s311
    %p313 = scmp.eq.s32.totalorder %s27, 0
    %p314 = por %p312, %p313
    %s315 = ssub.s32 %s21, %s28
    %p316 = scmp.eq.s32.totalorder %s315, 0
    %s318 = sadd.s32 %s317, 1
    %s319 = scalar_select %p316, %s317, %s318
    %p322 = pneg %p316
    %p323 = scmp.eq.s32.totalorder %s21, 1
    %p324 = por %p322, %p323
    %p325 = scmp.ne.s32.totalorder %s317, %s320
    %p326 = scmp.eq.s32.totalorder %s21, 0
    %p327 = por %p325, %p326
    %p328 = scmp.ne.s32.totalorder %s317, %s320
    %p329 = scmp.eq.s32.totalorder %s26, 1
    %p330 = por %p328, %p329
    %p331 = scmp.ne.s32.totalorder %s320, %s321
    %p332 = scmp.eq.s32.totalorder %s26, 0
    %p333 = por %p331, %p332
    %p334 = scmp.ne.s32.totalorder %s320, %s321
    %p335 = scmp.eq.s32.totalorder %s27, 1
    %p336 = por %p334, %p335
    %p338 = scmp.ne.s32.totalorder %s321, %s337
    %p339 = scmp.eq.s32.totalorder %s27, 0
    %p340 = por %p338, %p339
    %s341 = ssub.s32 %s21, %s28
    %p342 = scmp.eq.s32.totalorder %s341, 0
    %s344 = sadd.s32 %s343, 1
    %s345 = scalar_select %p342, %s343, %s344
    %p348 = pneg %p342
    %p349 = scmp.eq.s32.totalorder %s21, 1
    %p350 = por %p348, %p349
    %p351 = scmp.ne.s32.totalorder %s343, %s346
    %p352 = scmp.eq.s32.totalorder %s21, 0
    %p353 = por %p351, %p352
    %p354 = scmp.ne.s32.totalorder %s343, %s346
    %p355 = scmp.eq.s32.totalorder %s26, 1
    %p356 = por %p354, %p355
    %p357 = scmp.ne.s32.totalorder %s346, %s347
    %p358 = scmp.eq.s32.totalorder %s26, 0
    %p359 = por %p357, %p358
    %p360 = scmp.ne.s32.totalorder %s346, %s347
    %p361 = scmp.eq.s32.totalorder %s27, 1
    %p362 = por %p360, %p361
    %p364 = scmp.ne.s32.totalorder %s347, %s363
    %p365 = scmp.eq.s32.totalorder %s27, 0
    %p366 = por %p364, %p365
    %s367 = ssub.s32 %s21, %s28
    %p368 = scmp.eq.s32.totalorder %s367, 0
    %s370 = sadd.s32 %s369, 1
    %s371 = scalar_select %p368, %s369, %s370
    %p374 = pneg %p368
    %p375 = scmp.eq.s32.totalorder %s21, 1
    %p376 = por %p374, %p375
    %p377 = scmp.ne.s32.totalorder %s369, %s372
    %p378 = scmp.eq.s32.totalorder %s21, 0
    %p379 = por %p377, %p378
    %p380 = scmp.ne.s32.totalorder %s369, %s372
    %p381 = scmp.eq.s32.totalorder %s26, 1
    %p382 = por %p380, %p381
    %p383 = scmp.ne.s32.totalorder %s372, %s373
    %p384 = scmp.eq.s32.totalorder %s26, 0
    %p385 = por %p383, %p384
    %p386 = scmp.ne.s32.totalorder %s372, %s373
    %p387 = scmp.eq.s32.totalorder %s27, 1
    %p388 = por %p386, %p387
    %p390 = scmp.ne.s32.totalorder %s373, %s389
    %p391 = scmp.eq.s32.totalorder %s27, 0
    %p392 = por %p390, %p391
    %s393 = ssub.s32 %s21, %s28
    %p394 = scmp.eq.s32.totalorder %s393, 0
    %s396 = sadd.s32 %s395, 1
    %s397 = scalar_select %p394, %s395, %s396
    %p400 = pneg %p394
    %p401 = scmp.eq.s32.totalorder %s21, 1
    %p402 = por %p400, %p401
    %p403 = scmp.ne.s32.totalorder %s395, %s398
    %p404 = scmp.eq.s32.totalorder %s21, 0
    %p405 = por %p403, %p404
    %p406 = scmp.ne.s32.totalorder %s395, %s398
    %p407 = scmp.eq.s32.totalorder %s26, 1
    %p408 = por %p406, %p407
    %p409 = scmp.ne.s32.totalorder %s398, %s399
    %p410 = scmp.eq.s32.totalorder %s26, 0
    %p411 = por %p409, %p410
    %p412 = scmp.ne.s32.totalorder %s398, %s399
    %p413 = scmp.eq.s32.totalorder %s27, 1
    %p414 = por %p412, %p413
    %p416 = scmp.ne.s32.totalorder %s399, %s415
    %p417 = scmp.eq.s32.totalorder %s27, 0
    %p418 = por %p416, %p417
    %s419 = ssub.s32 %s21, %s28
    %p420 = scmp.eq.s32.totalorder %s419, 0
    %s422 = sadd.s32 %s421, 1
    %s423 = scalar_select %p420, %s421, %s422
    %p426 = pneg %p420
    %p427 = scmp.eq.s32.totalorder %s21, 1
    %p428 = por %p426, %p427
    %p429 = scmp.ne.s32.totalorder %s421, %s424
    %p430 = scmp.eq.s32.totalorder %s21, 0
    %p431 = por %p429, %p430
    %p432 = scmp.ne.s32.totalorder %s421, %s424
    %p433 = scmp.eq.s32.totalorder %s26, 1
    %p434 = por %p432, %p433
    %p435 = scmp.ne.s32.totalorder %s424, %s425
    %p436 = scmp.eq.s32.totalorder %s26, 0
    %p437 = por %p435, %p436
    %p438 = scmp.ne.s32.totalorder %s424, %s425
    %p439 = scmp.eq.s32.totalorder %s27, 1
    %p440 = por %p438, %p439
    %p442 = scmp.ne.s32.totalorder %s425, %s441
    %p443 = scmp.eq.s32.totalorder %s27, 0
    %p444 = por %p442, %p443
    %p445 = scmp.le.s32.totalorder 1, %s21
    %p446 = scmp.lt.s32.totalorder %s21, 3
    %p447 = pnand %p445, %p446
    %p448 = pneg %p447
    // Predicated region
    $region9: #{autoencoder_forward.8} parent=5 // pred_check
      _
    $region10: #{autoencoder_forward.8} parent=5 // pred_check_branch
      %450 = sbr.rel (%p447) target = $region12
    $region11: #{autoencoder_forward.8} parent=5 // pred_region
      %s451 = ssub.s32 %s21, 1
    $region12: #{autoencoder_forward.8} parent=5 // pred_fallthru
      _
    %p452 = scmp.lt.s32.totalorder %s21, 2
    // Predicated region
    $region13: #{autoencoder_forward.8} parent=5 // pred_check
      %p453 = pneg %p452
    $region14: #{autoencoder_forward.8} parent=5 // pred_check_branch
      %455 = sbr.rel (%p453) target = $region16
    $region15: #{autoencoder_forward.8} parent=5 // pred_region
      // Predicated region
      $region17: #{autoencoder_forward.8} parent=15 // pred_check
        %p456 = pneg %p41
      $region18: #{autoencoder_forward.8} parent=15 // pred_check_branch
        %458 = sbr.rel (%p456) target = $region20
      $region19: #{autoencoder_forward.8} parent=15 // pred_region
        %p459 = scmp.lt.s32.totalorder %s21, 1
        %s460 = scalar_select %p459, %s21, 1
        %s461 = smul.addr %s460, 6
        %s462 = smul.addr %s461, 4
        %s463 = scalar_lea.vmem %s0, %s462
      $region20: #{autoencoder_forward.8} parent=15 // pred_fallthru
        _
      // Predicated region
      $region21: #{autoencoder_forward.8} parent=15 // pred_check
        %p464 = pneg %p67
      $region22: #{autoencoder_forward.8} parent=15 // pred_check_branch
        %466 = sbr.rel (%p464) target = $region24
      $region23: #{autoencoder_forward.8} parent=15 // pred_region
        %p467 = scmp.lt.s32.totalorder %s21, 1
        %s468 = scalar_select %p467, %s21, 1
        %s469 = smul.addr %s468, 2
        %s470 = smul.addr %s469, 4
        %s471 = scalar_lea.vmem %s1, %s470
      $region24: #{autoencoder_forward.8} parent=15 // pred_fallthru
        _
      // Predicated region
      $region25: #{autoencoder_forward.8} parent=15 // pred_check
        %p472 = pneg %p93
      $region26: #{autoencoder_forward.8} parent=15 // pred_check_branch
        %474 = sbr.rel (%p472) target = $region28
      $region27: #{autoencoder_forward.8} parent=15 // pred_region
        %p475 = scmp.lt.s32.totalorder %s21, 1
        %s476 = scalar_select %p475, %s21, 1
        %s477 = smul.addr %s476, 3
        %s478 = smul.addr %s477, 8
        %s479 = scalar_lea.vmem %s2, %s478
      $region28: #{autoencoder_forward.8} parent=15 // pred_fallthru
        _
      // Predicated region
      $region29: #{autoencoder_forward.8} parent=15 // pred_check
        %p480 = pneg %p119
      $region30: #{autoencoder_forward.8} parent=15 // pred_check_branch
        %482 = sbr.rel (%p480) target = $region32
      $region31: #{autoencoder_forward.8} parent=15 // pred_region
        %p483 = scmp.lt.s32.totalorder %s21, 1
        %s484 = scalar_select %p483, %s21, 1
        %s485 = scalar_lea.vmem %s3, %s484
      $region32: #{autoencoder_forward.8} parent=15 // pred_fallthru
        _
      // Predicated region
      $region33: #{autoencoder_forward.8} parent=15 // pred_check
        %p486 = pneg %p145
      $region34: #{autoencoder_forward.8} parent=15 // pred_check_branch
        %488 = sbr.rel (%p486) target = $region36
      $region35: #{autoencoder_forward.8} parent=15 // pred_region
        %p489 = scmp.lt.s32.totalorder %s21, 1
        %s490 = scalar_select %p489, %s21, 1
        %s491 = scalar_lea.vmem %s4, %s490
      $region36: #{autoencoder_forward.8} parent=15 // pred_fallthru
        _
      // Predicated region
      $region37: #{autoencoder_forward.8} parent=15 // pred_check
        %p492 = pneg %p171
      $region38: #{autoencoder_forward.8} parent=15 // pred_check_branch
        %494 = sbr.rel (%p492) target = $region40
      $region39: #{autoencoder_forward.8} parent=15 // pred_region
        %p495 = scmp.lt.s32.totalorder %s21, 1
        %s496 = scalar_select %p495, %s21, 1
        %s497 = smul.addr %s496, 16
        %s498 = smul.addr %s497, 4
        %s499 = scalar_lea.vmem %s5, %s498
      $region40: #{autoencoder_forward.8} parent=15 // pred_fallthru
        _
      // Predicated region
      $region41: #{autoencoder_forward.8} parent=15 // pred_check
        %p500 = pneg %p197
      $region42: #{autoencoder_forward.8} parent=15 // pred_check_branch
        %502 = sbr.rel (%p500) target = $region44
      $region43: #{autoencoder_forward.8} parent=15 // pred_region
        %p503 = scmp.lt.s32.totalorder %s21, 1
        %s504 = scalar_select %p503, %s21, 1
        %s505 = smul.addr %s504, 2
        %s506 = scalar_lea.vmem %s6, %s505
      $region44: #{autoencoder_forward.8} parent=15 // pred_fallthru
        _
      // Predicated region
      $region45: #{autoencoder_forward.8} parent=15 // pred_check
        %p507 = pneg %p223
      $region46: #{autoencoder_forward.8} parent=15 // pred_check_branch
        %509 = sbr.rel (%p507) target = $region48
      $region47: #{autoencoder_forward.8} parent=15 // pred_region
        %p510 = scmp.lt.s32.totalorder %s21, 1
        %s511 = scalar_select %p510, %s21, 1
        %s512 = smul.addr %s511, 8
        %s513 = smul.addr %s512, 4
        %s514 = scalar_lea.vmem %s7, %s513
      $region48: #{autoencoder_forward.8} parent=15 // pred_fallthru
        _
      // Predicated region
      $region49: #{autoencoder_forward.8} parent=15 // pred_check
        %p515 = pneg %p249
      $region50: #{autoencoder_forward.8} parent=15 // pred_check_branch
        %517 = sbr.rel (%p515) target = $region52
      $region51: #{autoencoder_forward.8} parent=15 // pred_region
        %p518 = scmp.lt.s32.totalorder %s21, 1
        %s519 = scalar_select %p518, %s21, 1
        %s520 = scalar_lea.vmem %s8, %s519
      $region52: #{autoencoder_forward.8} parent=15 // pred_fallthru
        _
      // Predicated region
      $region53: #{autoencoder_forward.8} parent=15 // pred_check
        %p521 = pneg %p275
      $region54: #{autoencoder_forward.8} parent=15 // pred_check_branch
        %523 = sbr.rel (%p521) target = $region56
      $region55: #{autoencoder_forward.8} parent=15 // pred_region
        %p524 = scmp.lt.s32.totalorder %s21, 1
        %s525 = scalar_select %p524, %s21, 1
        %s526 = scalar_lea.vmem %s9, %s525
      $region56: #{autoencoder_forward.8} parent=15 // pred_fallthru
        _
      // Predicated region
      $region57: #{autoencoder_forward.8} parent=15 // pred_check
        %p527 = pneg %p301
      $region58: #{autoencoder_forward.8} parent=15 // pred_check_branch
        %529 = sbr.rel (%p527) target = $region60
      $region59: #{autoencoder_forward.8} parent=15 // pred_region
        %p530 = scmp.lt.s32.totalorder %s21, 1
        %s531 = scalar_select %p530, %s21, 1
        %s532 = scalar_lea.vmem %s10, %s531
      $region60: #{autoencoder_forward.8} parent=15 // pred_fallthru
        _
      // Predicated region
      $region61: #{autoencoder_forward.8} parent=15 // pred_check
        %p533 = pneg %p327
      $region62: #{autoencoder_forward.8} parent=15 // pred_check_branch
        %535 = sbr.rel (%p533) target = $region64
      $region63: #{autoencoder_forward.8} parent=15 // pred_region
        %p536 = scmp.lt.s32.totalorder %s21, 1
        %s537 = scalar_select %p536, %s21, 1
        %s538 = smul.addr %s537, 8
        %s539 = smul.addr %s538, 4
        %s540 = scalar_lea.vmem %s11, %s539
      $region64: #{autoencoder_forward.8} parent=15 // pred_fallthru
        _
      // Predicated region
      $region65: #{autoencoder_forward.8} parent=15 // pred_check
        %p541 = pneg %p353
      $region66: #{autoencoder_forward.8} parent=15 // pred_check_branch
        %543 = sbr.rel (%p541) target = $region68
      $region67: #{autoencoder_forward.8} parent=15 // pred_region
        %p544 = scmp.lt.s32.totalorder %s21, 1
        %s545 = scalar_select %p544, %s21, 1
        %s546 = scalar_lea.vmem %s12, %s545
      $region68: #{autoencoder_forward.8} parent=15 // pred_fallthru
        _
      // Predicated region
      $region69: #{autoencoder_forward.8} parent=15 // pred_check
        %p547 = pneg %p379
      $region70: #{autoencoder_forward.8} parent=15 // pred_check_branch
        %549 = sbr.rel (%p547) target = $region72
      $region71: #{autoencoder_forward.8} parent=15 // pred_region
        %p550 = scmp.lt.s32.totalorder %s21, 1
        %s551 = scalar_select %p550, %s21, 1
        %s552 = smul.addr %s551, 16
        %s553 = smul.addr %s552, 4
        %s554 = scalar_lea.vmem %s13, %s553
      $region72: #{autoencoder_forward.8} parent=15 // pred_fallthru
        _
      // Predicated region
      $region73: #{autoencoder_forward.8} parent=15 // pred_check
        %p555 = pneg %p405
      $region74: #{autoencoder_forward.8} parent=15 // pred_check_branch
        %557 = sbr.rel (%p555) target = $region76
      $region75: #{autoencoder_forward.8} parent=15 // pred_region
        %p558 = scmp.lt.s32.totalorder %s21, 1
        %s559 = scalar_select %p558, %s21, 1
        %s560 = scalar_lea.vmem %s14, %s559
      $region76: #{autoencoder_forward.8} parent=15 // pred_fallthru
        _
    $region16: #{autoencoder_forward.8} parent=5 // pred_fallthru
      _
    %p561 = scmp.le.s32.totalorder 1, %s21
    %p562 = scmp.lt.s32.totalorder %s21, 3
    %p563 = pnand %p561, %p562
    %p564 = pneg %p563
    // Predicated region
    $region77: #{autoencoder_forward.8} parent=5 // pred_check
      _
    $region78: #{autoencoder_forward.8} parent=5 // pred_check_branch
      %566 = sbr.rel (%p563) target = $region80
    $region79: #{autoencoder_forward.8} parent=5 // pred_region
      %s567 = ssub.s32 %s21, 1
      %p568 = scmp.lt.s32.totalorder %s26, 1
      %s569 = scalar_select %p568, %s26, 1
      %s570 = smul.addr %s569, 6
      %s571 = smul.addr %s570, 4
      %s572 = scalar_lea.vmem %s0, %s571
      %p573 = pneg %p47
      %p574 = pneg %p44
      %p575 = scmp.lt.s32.totalorder %s26, 1
      %s576 = scalar_select %p575, %s26, 1
      %s577 = smul.addr %s576, 2
      %s578 = smul.addr %s577, 4
      %s579 = scalar_lea.vmem %s1, %s578
      %p580 = pneg %p73
      %p581 = pneg %p70
      %p582 = scmp.lt.s32.totalorder %s26, 1
      %s583 = scalar_select %p582, %s26, 1
      %s584 = smul.addr %s583, 3
      %s585 = smul.addr %s584, 8
      %s586 = scalar_lea.vmem %s2, %s585
      %p587 = pneg %p99
      %p588 = pneg %p96
      %p589 = scmp.lt.s32.totalorder %s26, 1
      %s590 = scalar_select %p589, %s26, 1
      %s591 = scalar_lea.vmem %s3, %s590
      %p592 = pneg %p125
      %p593 = pneg %p122
      %p594 = scmp.lt.s32.totalorder %s26, 1
      %s595 = scalar_select %p594, %s26, 1
      %s596 = scalar_lea.vmem %s4, %s595
      %p597 = pneg %p151
      %p598 = pneg %p148
      %p599 = scmp.lt.s32.totalorder %s26, 1
      %s600 = scalar_select %p599, %s26, 1
      %s601 = smul.addr %s600, 16
      %s602 = smul.addr %s601, 4
      %s603 = scalar_lea.vmem %s5, %s602
      %p604 = pneg %p177
      %p605 = pneg %p174
      %p606 = scmp.lt.s32.totalorder %s26, 1
      %s607 = scalar_select %p606, %s26, 1
      %s608 = smul.addr %s607, 2
      %s609 = scalar_lea.vmem %s6, %s608
      %p610 = pneg %p203
      %p611 = pneg %p200
      %p612 = scmp.lt.s32.totalorder %s26, 1
      %s613 = scalar_select %p612, %s26, 1
      %s614 = smul.addr %s613, 8
      %s615 = smul.addr %s614, 4
      %s616 = scalar_lea.vmem %s7, %s615
      %p617 = pneg %p229
      %p618 = pneg %p226
      %p619 = scmp.lt.s32.totalorder %s26, 1
      %s620 = scalar_select %p619, %s26, 1
      %s621 = scalar_lea.vmem %s8, %s620
      %p622 = pneg %p255
      %p623 = pneg %p252
      %p624 = scmp.lt.s32.totalorder %s26, 1
      %s625 = scalar_select %p624, %s26, 1
      %s626 = scalar_lea.vmem %s9, %s625
      %p627 = pneg %p281
      %p628 = pneg %p278
      %p629 = scmp.lt.s32.totalorder %s26, 1
      %s630 = scalar_select %p629, %s26, 1
      %s631 = scalar_lea.vmem %s10, %s630
      %p632 = pneg %p307
      %p633 = pneg %p304
      %p634 = scmp.lt.s32.totalorder %s26, 1
      %s635 = scalar_select %p634, %s26, 1
      %s636 = smul.addr %s635, 8
      %s637 = smul.addr %s636, 4
      %s638 = scalar_lea.vmem %s11, %s637
      %p639 = pneg %p333
      %p640 = pneg %p330
      %p641 = scmp.lt.s32.totalorder %s26, 1
      %s642 = scalar_select %p641, %s26, 1
      %s643 = scalar_lea.vmem %s12, %s642
      %p644 = pneg %p359
      %p645 = pneg %p356
      %p646 = scmp.lt.s32.totalorder %s26, 1
      %s647 = scalar_select %p646, %s26, 1
      %s648 = smul.addr %s647, 16
      %s649 = smul.addr %s648, 4
      %s650 = scalar_lea.vmem %s13, %s649
      %p651 = pneg %p385
      %p652 = pneg %p382
      %p653 = scmp.lt.s32.totalorder %s26, 1
      %s654 = scalar_select %p653, %s26, 1
      %s655 = scalar_lea.vmem %s14, %s654
      %p656 = pneg %p411
      %p657 = pneg %p408
      %p658 = pneg %p437
      %p659 = pneg %p434
      %p660 = scmp.lt.s32.totalorder %s26, 1
      %s661 = scalar_select %p660, %s26, 1
      %s662 = smul.addr %s661, 6
      %s663 = smul.addr %s662, 8
      %s664 = scalar_lea.vmem %s15, %s663
      %p665 = scmp.lt.s32.totalorder %s26, 1
      %s666 = scalar_select %p665, %s26, 1
      %s667 = smul.addr %s666, 6
      %s668 = smul.addr %s667, 4
      %s669 = scalar_lea.vmem %s0, %s668
      %p670 = scmp.lt.s32.totalorder %s26, 1
      %s671 = scalar_select %p670, %s26, 1
      %s672 = smul.addr %s671, 2
      %s673 = smul.addr %s672, 4
      %s674 = scalar_lea.vmem %s1, %s673
      %p675 = scmp.lt.s32.totalorder %s26, 1
      %s676 = scalar_select %p675, %s26, 1
      %s677 = smul.addr %s676, 3
      %s678 = smul.addr %s677, 8
      %s679 = scalar_lea.vmem %s2, %s678
      %p680 = scmp.lt.s32.totalorder %s26, 1
      %s681 = scalar_select %p680, %s26, 1
      %s682 = scalar_lea.vmem %s3, %s681
      %p683 = scmp.lt.s32.totalorder %s26, 1
      %s684 = scalar_select %p683, %s26, 1
      %s685 = scalar_lea.vmem %s4, %s684
      %p686 = scmp.lt.s32.totalorder %s26, 1
      %s687 = scalar_select %p686, %s26, 1
      %s688 = smul.addr %s687, 16
      %s689 = smul.addr %s688, 4
      %s690 = scalar_lea.vmem %s5, %s689
      %p691 = scmp.lt.s32.totalorder %s26, 1
      %s692 = scalar_select %p691, %s26, 1
      %s693 = smul.addr %s692, 2
      %s694 = scalar_lea.vmem %s6, %s693
      %p695 = scmp.lt.s32.totalorder %s26, 1
      %s696 = scalar_select %p695, %s26, 1
      %s697 = smul.addr %s696, 8
      %s698 = smul.addr %s697, 4
      %s699 = scalar_lea.vmem %s7, %s698
      %p700 = scmp.lt.s32.totalorder %s26, 1
      %s701 = scalar_select %p700, %s26, 1
      %s702 = scalar_lea.vmem %s8, %s701
      %p703 = scmp.lt.s32.totalorder %s26, 1
      %s704 = scalar_select %p703, %s26, 1
      %s705 = scalar_lea.vmem %s9, %s704
      %p706 = scmp.lt.s32.totalorder %s26, 1
      %s707 = scalar_select %p706, %s26, 1
      %s708 = scalar_lea.vmem %s10, %s707
      %p709 = scmp.lt.s32.totalorder %s26, 1
      %s710 = scalar_select %p709, %s26, 1
      %s711 = smul.addr %s710, 8
      %s712 = smul.addr %s711, 4
      %s713 = scalar_lea.vmem %s11, %s712
      %p714 = scmp.lt.s32.totalorder %s26, 1
      %s715 = scalar_select %p714, %s26, 1
      %s716 = scalar_lea.vmem %s12, %s715
      %p717 = scmp.lt.s32.totalorder %s26, 1
      %s718 = scalar_select %p717, %s26, 1
      %s719 = smul.addr %s718, 16
      %s720 = smul.addr %s719, 4
      %s721 = scalar_lea.vmem %s13, %s720
      %p722 = scmp.lt.s32.totalorder %s26, 1
      %s723 = scalar_select %p722, %s26, 1
      %s724 = scalar_lea.vmem %s14, %s723
      %p725 = scmp.lt.s32.totalorder %s26, 1
      %s726 = scalar_select %p725, %s26, 1
      %s727 = smul.addr %s726, 6
      %s728 = smul.addr %s727, 8
      %s729 = scalar_lea.vmem %s15, %s728
      %v731 = vld [vmem:[%s669] sm:$0xf]
      %v732 = vld [vmem:[%s669 + $0x4] sm:$0xf]
      %v733 = vld [vmem:[%s669 + $0x8] sm:$0xf]
      %v734 = vld [vmem:[%s669 + $0xc] sm:$0xf]
      %v735 = vld [vmem:[%s669 + $0x10] sm:$0xf]
      %v736 = vld [vmem:[%s669 + $0x14] sm:$0xf]
      %v737 = vld [vmem:[%s674] sm:$0xf]
      %v738 = vld [vmem:[%s674 + $0x4] sm:$0xf]
      %v745 = vunpack.c.l.b16 %v731
      %v746 = vunpack.c.l.b16 %v732
      %v747 = vunpack.c.l.b16 %v733
      %v748 = vunpack.c.l.b16 %v734
      %v749 = vunpack.c.l.b16 %v735
      %v750 = vunpack.c.l.b16 %v736
      %v751 = vpack.c.b16 %v746, %v745
      %v752 = vpack.c.b16 %v748, %v747
      %v753 = vpack.c.b16 %v750, %v749
      %v756 = vunpack.c.l.b16 %v737
      %v757 = vunpack.c.l.b16 %v738
      %v758 = vpack.c.b16 %v757, %v756
      %vm760 = vcmask 130048
      %v762 = vsel %vm760, %v751, 0
      %v765 = vsel %vm760, %v752, 0
      %v768 = vsel %vm760, %v753, 0
      %770 = vmatprep.subr.bf16.mxu0 0
      %771 = vmatpush1.bf16.msra.mxu0 %v758
      %772 = vmatprep.subr.bf16.mxu0 0
      %773 = vmatpush1.bf16.msra.mxu0 0
      %774 = vmatprep.subr.bf16.mxu0 0
      %775 = vmatpush1.bf16.msra.mxu0 0
      %776 = vmatprep.subr.bf16.mxu0 0
      %777 = vmatpush1.bf16.msra.mxu0 0
      %778 = vmatprep.subr.bf16.mxu0 0
      %779 = vmatpush1.bf16.msra.mxu0 0
      %780 = vmatprep.subr.bf16.mxu0 0
      %781 = vmatpush1.bf16.msra.mxu0 0
      %782 = vmatprep.subr.bf16.mxu0 0
      %783 = vmatpush1.bf16.msra.mxu0 0
      %784 = vmatprep.subr.bf16.mxu0 0
      %785 = vmatpush1.bf16.msra.mxu0 0
      %786 = vmatprep.subr.bf16.mxu0 0
      %787 = vmatpush1.bf16.msra.mxu0 0
      %788 = vmatprep.subr.bf16.mxu0 0
      %789 = vmatpush1.bf16.msra.mxu0 0
      %790 = vmatprep.subr.bf16.mxu0 0
      %791 = vmatpush1.bf16.msra.mxu0 0
      %792 = vmatprep.subr.bf16.mxu0 0
      %793 = vmatpush1.bf16.msra.mxu0 0
      %794 = vmatprep.subr.bf16.mxu0 0
      %795 = vmatpush1.bf16.msra.mxu0 0
      %796 = vmatprep.subr.bf16.mxu0 0
      %797 = vmatpush1.bf16.msra.mxu0 0
      %798 = vmatprep.subr.bf16.mxu0 0
      %799 = vmatpush1.bf16.msra.mxu0 0
      %800 = vmatprep.subr.bf16.mxu0 0
      %801 = vmatpush1.bf16.msra.mxu0 0
      %802 = vmatprep.mubr.bf16.mxu0 0
      %803 = vmatmul.mubr.bf16.gmra.mrb[0].mxu0 %v762
      %v804 = vpop.f32.mrb[0].mxu0
      %v805 = vadd.f32 0.0, %v804
      %v806 = vpop.f32.mrb[0].mxu0
      %v807 = vpop.f32.mrb[0].mxu0
      %v808 = vadd.f32 0.0, %v807
      %v809 = vpop.f32.mrb[0].mxu0
      %810 = vmatprep.mubr.bf16.mxu0 0
      %811 = vmatmul.mubr.bf16.gmra.mrb[0].mxu0 %v765
      %v812 = vpop.f32.mrb[0].mxu0
      %v813 = vadd.f32 0.0, %v812
      %v814 = vpop.f32.mrb[0].mxu0
      %v815 = vpop.f32.mrb[0].mxu0
      %v816 = vadd.f32 0.0, %v815
      %v817 = vpop.f32.mrb[0].mxu0
      %818 = vmatprep.mubr.bf16.mxu0 0
      %819 = vmatmul.mubr.bf16.gmra.mrb[0].mxu0 %v768
      %v820 = vpop.f32.mrb[0].mxu0
      %v821 = vadd.f32 0.0, %v820
      %v822 = vpop.f32.mrb[0].mxu0
      %v823 = vpop.f32.mrb[0].mxu0
      %v824 = vadd.f32 0.0, %v823
      %v825 = vpop.f32.mrb[0].mxu0
      %826 = vdwg.mxu0
      %v827 = vld [vmem:[%s679] sm:$0xff]
      %v828 = vld [vmem:[%s679 + $0x8] sm:$0xff]
      %v829 = vld [vmem:[%s679 + $0x10] sm:$0xff]
      %v830 = vadd.f32 %v805, %v827
      %v831 = vadd.f32 %v808, %v828
      %v832 = vadd.f32 %v813, %v829
      %v833 = vadd.f32 %v816, %v827
      %v834 = vadd.f32 %v821, %v828
      %v835 = vadd.f32 %v824, %v829
      %v836 = vld [vmem:[%s682] sm:$0x1]
      %v837 = vld [vmem:[%s685] sm:$0x1]
      %vm838 = vcmask 523264
      %v839 = vsel %vm838, %v830, 0.0
      %840 = vadd.xlane.f32.xlu0 %v839
      %v841 = vpop.xlane.xlu0 %840
      %v842 = vsel %vm838, %v831, 0.0
      %843 = vadd.xlane.f32.xlu0 %v842
      %v844 = vpop.xlane.xlu0 %843
      %v845 = vsel %vm838, %v832, 0.0
      %846 = vadd.xlane.f32.xlu0 %v845
      %v847 = vpop.xlane.xlu0 %846
      %v848 = vsel %vm838, %v833, 0.0
      %849 = vadd.xlane.f32.xlu0 %v848
      %v850 = vpop.xlane.xlu0 %849
      %v851 = vsel %vm838, %v834, 0.0
      %852 = vadd.xlane.f32.xlu0 %v851
      %v853 = vpop.xlane.xlu0 %852
      %v854 = vsel %vm838, %v835, 0.0
      %855 = vadd.xlane.f32.xlu0 %v854
      %v856 = vpop.xlane.xlu0 %855
      %v857 = vrcp.pop 64.0
      %v858 = vmul.f32 %v841, %v857
      %v859 = vmul.f32 %v844, %v857
      %v860 = vmul.f32 %v847, %v857
      %v861 = vmul.f32 %v850, %v857
      %v862 = vmul.f32 %v853, %v857
      %v863 = vmul.f32 %v856, %v857
      %v864 = vsub.f32 %v830, %v858
      %v865 = vsub.f32 %v831, %v859
      %v866 = vsub.f32 %v832, %v860
      %v867 = vsub.f32 %v833, %v861
      %v868 = vsub.f32 %v834, %v862
      %v869 = vsub.f32 %v835, %v863
      %v870 = vmul.f32 %v864, %v864
      %v871 = vmul.f32 %v865, %v865
      %v872 = vmul.f32 %v866, %v866
      %v873 = vmul.f32 %v867, %v867
      %v874 = vmul.f32 %v868, %v868
      %v875 = vmul.f32 %v869, %v869
      %v876 = vsel %vm838, %v870, 0.0
      %877 = vadd.xlane.f32.xlu0 %v876
      %v878 = vpop.xlane.xlu0 %877
      %v879 = vsel %vm838, %v871, 0.0
      %880 = vadd.xlane.f32.xlu0 %v879
      %v881 = vpop.xlane.xlu0 %880
      %v882 = vsel %vm838, %v872, 0.0
      %883 = vadd.xlane.f32.xlu0 %v882
      %v884 = vpop.xlane.xlu0 %883
      %v885 = vsel %vm838, %v873, 0.0
      %886 = vadd.xlane.f32.xlu0 %v885
      %v887 = vpop.xlane.xlu0 %886
      %v888 = vsel %vm838, %v874, 0.0
      %889 = vadd.xlane.f32.xlu0 %v888
      %v890 = vpop.xlane.xlu0 %889
      %v891 = vsel %vm838, %v875, 0.0
      %892 = vadd.xlane.f32.xlu0 %v891
      %v893 = vpop.xlane.xlu0 %892
      %v894 = vmul.f32 %v878, %v857
      %v895 = vmul.f32 %v881, %v857
      %v896 = vmul.f32 %v884, %v857
      %v897 = vmul.f32 %v887, %v857
      %v898 = vmul.f32 %v890, %v857
      %v899 = vmul.f32 %v893, %v857
      %v900 = vadd.f32 %v894, 1e-05
      %v901 = vadd.f32 %v895, 1e-05
      %v902 = vadd.f32 %v896, 1e-05
      %v903 = vadd.f32 %v897, 1e-05
      %v904 = vadd.f32 %v898, 1e-05
      %v905 = vadd.f32 %v899, 1e-05
      %v906 = vrsqrt.pop %v900
      %v907 = vrsqrt.pop %v901
      %v908 = vrsqrt.pop %v902
      %v909 = vrsqrt.pop %v903
      %v910 = vrsqrt.pop %v904
      %v911 = vrsqrt.pop %v905
      %v912 = vmul.f32 %v864, %v906
      %v913 = vmul.f32 %v865, %v907
      %v914 = vmul.f32 %v866, %v908
      %v915 = vmul.f32 %v867, %v909
      %v916 = vmul.f32 %v868, %v910
      %v917 = vmul.f32 %v869, %v911
      %v919 = vlaneseq
      %v920 = vshrl.u32 %v919, 7
      %v921 = vsub.s32 0, %v920
      %v922 = vrot.slane %v836, %v921
      %v924 = vmul.f32 %v912, %v922
      %v925 = vmul.f32 %v913, %v922
      %v926 = vmul.f32 %v914, %v922
      %v927 = vmul.f32 %v915, %v922
      %v928 = vmul.f32 %v916, %v922
      %v929 = vmul.f32 %v917, %v922
      %v931 = vlaneseq
      %v932 = vshrl.u32 %v931, 7
      %v933 = vsub.s32 0, %v932
      %v934 = vrot.slane %v837, %v933
      %v936 = vadd.f32 %v924, %v934
      %v937 = vadd.f32 %v925, %v934
      %v938 = vadd.f32 %v926, %v934
      %v939 = vadd.f32 %v927, %v934
      %v940 = vadd.f32 %v928, %v934
      %v941 = vadd.f32 %v929, %v934
      %v942 = vpack.c.bf16 %v937, %v936
      %v943 = vpack.c.bf16 %v939, %v938
      %v944 = vpack.c.bf16 %v941, %v940
      %v945 = vld [vmem:[%s690] sm:$0xff]
      %v946 = vld [vmem:[%s690 + $0x8] sm:$0xff]
      %v947 = vld [vmem:[%s690 + $0x10] sm:$0xff]
      %v948 = vld [vmem:[%s690 + $0x18] sm:$0xff]
      %v949 = vld [vmem:[%s690 + $0x20] sm:$0xff]
      %v950 = vld [vmem:[%s690 + $0x28] sm:$0xff]
      %v951 = vld [vmem:[%s690 + $0x30] sm:$0xff]
      %v952 = vld [vmem:[%s690 + $0x38] sm:$0xff]
      %v953 = vld [vmem:[%s694] sm:$0x3]
      %v955 = vlaneseq
      %v956 = vshrl.u32 %v955, 7
      %v957 = vsub.s32 0, %v956
      %v958 = vrot.slane %v953, %v957
      %v959 = vlaneseq
      %v960 = vshrl.u32 %v959, 7
      %v961 = vsub.s32 1, %v960
      %v962 = vrot.slane %v953, %v961
      %v973 = vunpack.c.l.b16 %v945
      %v974 = vunpack.c.h.b16 %v945
      %v975 = vunpack.c.l.b16 %v946
      %v976 = vunpack.c.h.b16 %v946
      %v977 = vunpack.c.l.b16 %v947
      %v978 = vunpack.c.h.b16 %v947
      %v979 = vunpack.c.l.b16 %v948
      %v980 = vunpack.c.h.b16 %v948
      %v981 = vunpack.c.l.b16 %v949
      %v982 = vunpack.c.h.b16 %v949
      %v983 = vunpack.c.l.b16 %v950
      %v984 = vunpack.c.h.b16 %v950
      %v985 = vunpack.c.l.b16 %v951
      %v986 = vunpack.c.h.b16 %v951
      %v987 = vunpack.c.l.b16 %v952
      %v988 = vunpack.c.h.b16 %v952
      %v989 = vpack.c.b16 %v975, %v973
      %v990 = vpack.c.b16 %v976, %v974
      %v991 = vpack.c.b16 %v979, %v977
      %v992 = vpack.c.b16 %v980, %v978
      %v993 = vpack.c.b16 %v983, %v981
      %v994 = vpack.c.b16 %v984, %v982
      %v995 = vpack.c.b16 %v987, %v985
      %v996 = vpack.c.b16 %v988, %v986
      %v1006 = vsel %vm838, %v942, 0
      %v1009 = vsel %vm838, %v943, 0
      %v1012 = vsel %vm838, %v944, 0
      %1014 = vmatprep.subr.bf16.mxu0 %v990
      %1015 = vmatpush1.bf16.msra.mxu0 %v989
      %1016 = vmatprep.subr.bf16.mxu0 %v992
      %1017 = vmatpush1.bf16.msra.mxu0 %v991
      %1018 = vmatprep.subr.bf16.mxu0 %v994
      %1019 = vmatpush1.bf16.msra.mxu0 %v993
      %1020 = vmatprep.subr.bf16.mxu0 %v996
      %1021 = vmatpush1.bf16.msra.mxu0 %v995
      %1022 = vmatprep.subr.bf16.mxu0 0
      %1023 = vmatpush1.bf16.msra.mxu0 0
      %1024 = vmatprep.subr.bf16.mxu0 0
      %1025 = vmatpush1.bf16.msra.mxu0 0
      %1026 = vmatprep.subr.bf16.mxu0 0
      %1027 = vmatpush1.bf16.msra.mxu0 0
      %1028 = vmatprep.subr.bf16.mxu0 0
      %1029 = vmatpush1.bf16.msra.mxu0 0
      %1030 = vmatprep.subr.bf16.mxu0 0
      %1031 = vmatpush1.bf16.msra.mxu0 0
      %1032 = vmatprep.subr.bf16.mxu0 0
      %1033 = vmatpush1.bf16.msra.mxu0 0
      %1034 = vmatprep.subr.bf16.mxu0 0
      %1035 = vmatpush1.bf16.msra.mxu0 0
      %1036 = vmatprep.subr.bf16.mxu0 0
      %1037 = vmatpush1.bf16.msra.mxu0 0
      %1038 = vmatprep.subr.bf16.mxu0 0
      %1039 = vmatpush1.bf16.msra.mxu0 0
      %1040 = vmatprep.subr.bf16.mxu0 0
      %1041 = vmatpush1.bf16.msra.mxu0 0
      %1042 = vmatprep.subr.bf16.mxu0 0
      %1043 = vmatpush1.bf16.msra.mxu0 0
      %1044 = vmatprep.subr.bf16.mxu0 0
      %1045 = vmatpush1.bf16.msra.mxu0 0
      %1046 = vmatprep.mubr.bf16.mxu0 0
      %1047 = vmatmul.mubr.bf16.gmra.mrb[0].mxu0 %v1006
      %v1048 = vpop.f32.mrb[0].mxu0
      %v1049 = vadd.f32 %v958, %v1048
      %v1050 = vpop.f32.mrb[0].mxu0
      %v1051 = vadd.f32 %v962, %v1050
      %v1052 = vpop.f32.mrb[0].mxu0
      %v1053 = vadd.f32 %v958, %v1052
      %v1054 = vpop.f32.mrb[0].mxu0
      %v1055 = vadd.f32 %v962, %v1054
      %1056 = vmatprep.mubr.bf16.mxu0 0
      %1057 = vmatmul.mubr.bf16.gmra.mrb[0].mxu0 %v1009
      %v1058 = vpop.f32.mrb[0].mxu0
      %v1059 = vadd.f32 %v958, %v1058
      %v1060 = vpop.f32.mrb[0].mxu0
      %v1061 = vadd.f32 %v962, %v1060
      %v1062 = vpop.f32.mrb[0].mxu0
      %v1063 = vadd.f32 %v958, %v1062
      %v1064 = vpop.f32.mrb[0].mxu0
      %v1065 = vadd.f32 %v962, %v1064
      %1066 = vmatprep.mubr.bf16.mxu0 0
      %1067 = vmatmul.mubr.bf16.gmra.mrb[0].mxu0 %v1012
      %v1068 = vpop.f32.mrb[0].mxu0
      %v1069 = vadd.f32 %v958, %v1068
      %v1070 = vpop.f32.mrb[0].mxu0
      %v1071 = vadd.f32 %v962, %v1070
      %v1072 = vpop.f32.mrb[0].mxu0
      %v1073 = vadd.f32 %v958, %v1072
      %v1074 = vpop.f32.mrb[0].mxu0
      %v1075 = vadd.f32 %v962, %v1074
      %1076 = vdwg.mxu0
      %v1077 = vpack.c.bf16 %v1053, %v1049
      %v1078 = vpack.c.bf16 %v1059, %v1059
      %v1079 = vpack.c.bf16 %v1069, %v1063
      %v1080 = vpack.c.bf16 %v1073, %v1073
      %1083 = vrot.lane.b32.xlu0 %v1077, 64
      %v1084 = vpop.permute.xlu0 %1083
      %1085 = vrot.lane.b32.xlu0 %v1078, 64
      %v1086 = vpop.permute.xlu0 %1085
      %vm1087 = vcmask 261120
      %v1089 = vsel %vm1087, %v1077, 0
      %v1092 = vsel %vm1087, %v1078, 0
      %v1095 = vsel %vm1087, %v1084, 0
      %v1098 = vsel %vm1087, %v1086, 0
      %1100 = vmatprep.subr.bf16.mxu0 0
      %1101 = vmatpush1.bf16.xpose.msra.mxu0 %v1095
      %1102 = vmatprep.subr.bf16.mxu0 0
      %1103 = vmatpush1.bf16.xpose.msra.mxu0 %v1098
      %1104 = vmatprep.subr.bf16.mxu0 0
      %1105 = vmatpush1.bf16.xpose.msra.mxu0 0
      %1106 = vmatprep.subr.bf16.mxu0 0
      %1107 = vmatpush1.bf16.xpose.msra.mxu0 0
      %1108 = vmatprep.subr.bf16.mxu0 0
      %1109 = vmatpush1.bf16.xpose.msra.mxu0 0
      %1110 = vmatprep.subr.bf16.mxu0 0
      %1111 = vmatpush1.bf16.xpose.msra.mxu0 0
      %1112 = vmatprep.subr.bf16.mxu0 0
      %1113 = vmatpush1.bf16.xpose.msra.mxu0 0
      %1114 = vmatprep.subr.bf16.mxu0 0
      %1115 = vmatpush1.bf16.xpose.msra.mxu0 0
      %1116 = vmatprep.subr.bf16.mxu0 0
      %1117 = vmatpush1.bf16.xpose.msra.mxu0 0
      %1118 = vmatprep.subr.bf16.mxu0 0
      %1119 = vmatpush1.bf16.xpose.msra.mxu0 0
      %1120 = vmatprep.subr.bf16.mxu0 0
      %1121 = vmatpush1.bf16.xpose.msra.mxu0 0
      %1122 = vmatprep.subr.bf16.mxu0 0
      %1123 = vmatpush1.bf16.xpose.msra.mxu0 0
      %1124 = vmatprep.subr.bf16.mxu0 0
      %1125 = vmatpush1.bf16.xpose.msra.mxu0 0
      %1126 = vmatprep.subr.bf16.mxu0 0
      %1127 = vmatpush1.bf16.xpose.msra.mxu0 0
      %1128 = vmatprep.subr.bf16.mxu0 0
      %1129 = vmatpush1.bf16.xpose.msra.mxu0 0
      %1130 = vmatprep.subr.bf16.mxu0 0
      %1131 = vmatpush1.bf16.xpose.msra.mxu0 0
      %1132 = vmatprep.mubr.bf16.mxu0 0
      %1133 = vmatmul.mubr.bf16.gmra.mrb[0].mxu0 %v1089
      %v1134 = vpop.f32.mrb[0].mxu0
      %v1135 = vadd.f32 0.0, %v1134
      %v1136 = vpop.f32.mrb[0].mxu0
      %v1137 = vpop.f32.mrb[0].mxu0
      %v1138 = vadd.f32 0.0, %v1137
      %v1139 = vpop.f32.mrb[0].mxu0
      %1140 = vmatprep.mubr.bf16.mxu0 0
      %1141 = vmatmul.mubr.bf16.gmra.mrb[0].mxu0 %v1092
      %v1142 = vpop.f32.mrb[0].mxu0
      %v1143 = vadd.f32 0.0, %v1142
      %v1144 = vpop.f32.mrb[0].mxu0
      %v1145 = vpop.f32.mrb[0].mxu0
      %v1146 = vpop.f32.mrb[0].mxu0
      %1147 = vdwg.mxu0
      %1150 = vrot.lane.b32.xlu0 %v1079, 64
      %v1151 = vpop.permute.xlu0 %1150
      %1152 = vrot.lane.b32.xlu0 %v1080, 64
      %v1153 = vpop.permute.xlu0 %1152
      %v1155 = vsel %vm1087, %v1079, 0
      %v1158 = vsel %vm1087, %v1080, 0
      %v1161 = vsel %vm1087, %v1151, 0
      %v1164 = vsel %vm1087, %v1153, 0
      %1166 = vmatprep.subr.bf16.mxu0 0
      %1167 = vmatpush1.bf16.xpose.msra.mxu0 %v1161
      %1168 = vmatprep.subr.bf16.mxu0 0
      %1169 = vmatpush1.bf16.xpose.msra.mxu0 %v1164
      %1170 = vmatprep.subr.bf16.mxu0 0
      %1171 = vmatpush1.bf16.xpose.msra.mxu0 0
      %1172 = vmatprep.subr.bf16.mxu0 0
      %1173 = vmatpush1.bf16.xpose.msra.mxu0 0
      %1174 = vmatprep.subr.bf16.mxu0 0
      %1175 = vmatpush1.bf16.xpose.msra.mxu0 0
      %1176 = vmatprep.subr.bf16.mxu0 0
      %1177 = vmatpush1.bf16.xpose.msra.mxu0 0
      %1178 = vmatprep.subr.bf16.mxu0 0
      %1179 = vmatpush1.bf16.xpose.msra.mxu0 0
      %1180 = vmatprep.subr.bf16.mxu0 0
      %1181 = vmatpush1.bf16.xpose.msra.mxu0 0
      %1182 = vmatprep.subr.bf16.mxu0 0
      %1183 = vmatpush1.bf16.xpose.msra.mxu0 0
      %1184 = vmatprep.subr.bf16.mxu0 0
      %1185 = vmatpush1.bf16.xpose.msra.mxu0 0
      %1186 = vmatprep.subr.bf16.mxu0 0
      %1187 = vmatpush1.bf16.xpose.msra.mxu0 0
      %1188 = vmatprep.subr.bf16.mxu0 0
      %1189 = vmatpush1.bf16.xpose.msra.mxu0 0
      %1190 = vmatprep.subr.bf16.mxu0 0
      %1191 = vmatpush1.bf16.xpose.msra.mxu0 0
      %1192 = vmatprep.subr.bf16.mxu0 0
      %1193 = vmatpush1.bf16.xpose.msra.mxu0 0
      %1194 = vmatprep.subr.bf16.mxu0 0
      %1195 = vmatpush1.bf16.xpose.msra.mxu0 0
      %1196 = vmatprep.subr.bf16.mxu0 0
      %1197 = vmatpush1.bf16.xpose.msra.mxu0 0
      %1198 = vmatprep.mubr.bf16.mxu0 0
      %1199 = vmatmul.mubr.bf16.gmra.mrb[0].mxu0 %v1155
      %v1200 = vpop.f32.mrb[0].mxu0
      %v1201 = vadd.f32 0.0, %v1200
      %v1202 = vpop.f32.mrb[0].mxu0
      %v1203 = vpop.f32.mrb[0].mxu0
      %v1204 = vadd.f32 0.0, %v1203
      %v1205 = vpop.f32.mrb[0].mxu0
      %1206 = vmatprep.mubr.bf16.mxu0 0
      %1207 = vmatmul.mubr.bf16.gmra.mrb[0].mxu0 %v1158
      %v1208 = vpop.f32.mrb[0].mxu0
      %v1209 = vadd.f32 0.0, %v1208
      %v1210 = vpop.f32.mrb[0].mxu0
      %v1211 = vpop.f32.mrb[0].mxu0
      %v1212 = vpop.f32.mrb[0].mxu0
      %1213 = vdwg.mxu0
      %v1214 = vmul.f32 %v1135, 0.17677669
      %v1215 = vmul.f32 %v1138, 0.17677669
      %v1216 = vmul.f32 %v1143, 0.17677669
      %v1217 = vmul.f32 %v1201, 0.17677669
      %v1218 = vmul.f32 %v1204, 0.17677669
      %v1219 = vmul.f32 %v1209, 0.17677669
      %v1220 = vlaneseq
      %v1221 = vand.u32 %v1220, 127
      %vm1222 = vcmp.lt.s32.totalorder %v1221, 17
      %v1223 = vsel %vm1222, 1, 0
      %vm1224 = vcmp.eq.s32.totalorder %v1223, 1
      %v1225 = vsel %vm1224, %v1214, -1e+30
      %v1226 = vsel %vm1224, %v1215, -1e+30
      %v1227 = vsel %vm1224, %v1216, -1e+30
      %v1228 = vsel %vm1224, %v1217, -1e+30
      %v1229 = vsel %vm1224, %v1218, -1e+30
      %v1230 = vsel %vm1224, %v1219, -1e+30
      %vm1231 = vcmask 195584
      %v1232 = vsel %vm1231, %v1225, -inf
      %1233 = vmax.xlane.f32.xlu0 %v1232
      %v1234 = vpop.xlane.xlu0 %1233
      %v1235 = vsel %vm1231, %v1226, -inf
      %1236 = vmax.xlane.f32.xlu0 %v1235
      %v1237 = vpop.xlane.xlu0 %1236
      %v1238 = vsel %vm1231, %v1227, -inf
      %1239 = vmax.xlane.f32.xlu0 %v1238
      %v1240 = vpop.xlane.xlu0 %1239
      %v1241 = vsel %vm1231, %v1228, -inf
      %1242 = vmax.xlane.f32.xlu0 %v1241
      %v1243 = vpop.xlane.xlu0 %1242
      %v1244 = vsel %vm1231, %v1229, -inf
      %1245 = vmax.xlane.f32.xlu0 %v1244
      %v1246 = vpop.xlane.xlu0 %1245
      %v1247 = vsel %vm1231, %v1230, -inf
      %1248 = vmax.xlane.f32.xlu0 %v1247
      %v1249 = vpop.xlane.xlu0 %1248
      %v1250 = vsub.f32 %v1225, %v1234
      %v1251 = vsub.f32 %v1226, %v1237
      %v1252 = vsub.f32 %v1227, %v1240
      %v1253 = vsub.f32 %v1228, %v1243
      %v1254 = vsub.f32 %v1229, %v1246
      %v1255 = vsub.f32 %v1230, %v1249
      %v1256 = vmul.f32 %v1250, 1.442695
      %v1257 = vpow.pop %v1256
      %v1258 = vmul.f32 %v1251, 1.442695
      %v1259 = vpow.pop %v1258
      %v1260 = vmul.f32 %v1252, 1.442695
      %v1261 = vpow.pop %v1260
      %v1262 = vmul.f32 %v1253, 1.442695
      %v1263 = vpow.pop %v1262
      %v1264 = vmul.f32 %v1254, 1.442695
      %v1265 = vpow.pop %v1264
      %v1266 = vmul.f32 %v1255, 1.442695
      %v1267 = vpow.pop %v1266
      %v1268 = vsel %vm1231, %v1257, 0.0
      %1269 = vadd.xlane.f32.xlu0 %v1268
      %v1270 = vpop.xlane.xlu0 %1269
      %v1271 = vsel %vm1231, %v1259, 0.0
      %1272 = vadd.xlane.f32.xlu0 %v1271
      %v1273 = vpop.xlane.xlu0 %1272
      %v1274 = vsel %vm1231, %v1261, 0.0
      %1275 = vadd.xlane.f32.xlu0 %v1274
      %v1276 = vpop.xlane.xlu0 %1275
      %v1277 = vsel %vm1231, %v1263, 0.0
      %1278 = vadd.xlane.f32.xlu0 %v1277
      %v1279 = vpop.xlane.xlu0 %1278
      %v1280 = vsel %vm1231, %v1265, 0.0
      %1281 = vadd.xlane.f32.xlu0 %v1280
      %v1282 = vpop.xlane.xlu0 %1281
      %v1283 = vsel %vm1231, %v1267, 0.0
      %1284 = vadd.xlane.f32.xlu0 %v1283
      %v1285 = vpop.xlane.xlu0 %1284
      %v1286 = vrcp.pop %v1270
      %v1287 = vrcp.pop %v1273
      %v1288 = vrcp.pop %v1276
      %v1289 = vrcp.pop %v1279
      %v1290 = vrcp.pop %v1282
      %v1291 = vrcp.pop %v1285
      %v1292 = vmul.f32 %v1257, %v1286
      %v1293 = vmul.f32 %v1259, %v1287
      %v1294 = vmul.f32 %v1261, %v1288
      %v1295 = vmul.f32 %v1263, %v1289
      %v1296 = vmul.f32 %v1265, %v1290
      %v1297 = vmul.f32 %v1267, %v1291
      %v1298 = vpack.c.bf16 %v1293, %v1292
      %v1299 = vpack.c.bf16 %v1294, %v1294
      %v1300 = vpack.c.bf16 %v1296, %v1295
      %v1301 = vpack.c.bf16 %v1297, %v1297
      %v1302 = vpack.c.bf16 %v1055, %v1051
      %v1303 = vpack.c.bf16 %v1061, %v1061
      %v1304 = vpack.c.bf16 %v1071, %v1065
      %v1305 = vpack.c.bf16 %v1075, %v1075
      %v1307 = vsel %vm1231, %v1298, 0
      %v1310 = vsel %vm1231, %v1299, 0
      %vm1312 = vcmask 1043456
      %v1314 = vsel %vm1312, %v1303, 0
      %1316 = vmatprep.subr.bf16.mxu0 0
      %1317 = vmatpush1.bf16.msra.mxu0 %v1302
      %1318 = vmatprep.subr.bf16.mxu0 0
      %1319 = vmatpush1.bf16.msra.mxu0 %v1314
      %1320 = vmatprep.subr.bf16.mxu0 0
      %1321 = vmatpush1.bf16.msra.mxu0 0
      %1322 = vmatprep.subr.bf16.mxu0 0
      %1323 = vmatpush1.bf16.msra.mxu0 0
      %1324 = vmatprep.subr.bf16.mxu0 0
      %1325 = vmatpush1.bf16.msra.mxu0 0
      %1326 = vmatprep.subr.bf16.mxu0 0
      %1327 = vmatpush1.bf16.msra.mxu0 0
      %1328 = vmatprep.subr.bf16.mxu0 0
      %1329 = vmatpush1.bf16.msra.mxu0 0
      %1330 = vmatprep.subr.bf16.mxu0 0
      %1331 = vmatpush1.bf16.msra.mxu0 0
      %1332 = vmatprep.subr.bf16.mxu0 0
      %1333 = vmatpush1.bf16.msra.mxu0 0
      %1334 = vmatprep.subr.bf16.mxu0 0
      %1335 = vmatpush1.bf16.msra.mxu0 0
      %1336 = vmatprep.subr.bf16.mxu0 0
      %1337 = vmatpush1.bf16.msra.mxu0 0
      %1338 = vmatprep.subr.bf16.mxu0 0
      %1339 = vmatpush1.bf16.msra.mxu0 0
      %1340 = vmatprep.subr.bf16.mxu0 0
      %1341 = vmatpush1.bf16.msra.mxu0 0
      %1342 = vmatprep.subr.bf16.mxu0 0
      %1343 = vmatpush1.bf16.msra.mxu0 0
      %1344 = vmatprep.subr.bf16.mxu0 0
      %1345 = vmatpush1.bf16.msra.mxu0 0
      %1346 = vmatprep.subr.bf16.mxu0 0
      %1347 = vmatpush1.bf16.msra.mxu0 0
      %1348 = vmatprep.mubr.bf16.mxu0 0
      %1349 = vmatmul.mubr.bf16.gmra.mrb[0].mxu0 %v1307
      %v1350 = vpop.f32.mrb[0].mxu0
      %v1351 = vadd.f32 0.0, %v1350
      %v1352 = vpop.f32.mrb[0].mxu0
      %v1353 = vpop.f32.mrb[0].mxu0
      %v1354 = vadd.f32 0.0, %v1353
      %v1355 = vpop.f32.mrb[0].mxu0
      %1356 = vmatprep.mubr.bf16.mxu0 0
      %1357 = vmatmul.mubr.bf16.gmra.mrb[0].mxu0 %v1310
      %v1358 = vpop.f32.mrb[0].mxu0
      %v1359 = vadd.f32 0.0, %v1358
      %v1360 = vpop.f32.mrb[0].mxu0
      %v1361 = vpop.f32.mrb[0].mxu0
      %v1362 = vpop.f32.mrb[0].mxu0
      %1363 = vdwg.mxu0
      %v1365 = vsel %vm1231, %v1300, 0
      %v1368 = vsel %vm1231, %v1301, 0
      %v1371 = vsel %vm1312, %v1305, 0
      %1373 = vmatprep.subr.bf16.mxu0 0
      %1374 = vmatpush1.bf16.msra.mxu0 %v1304
      %1375 = vmatprep.subr.bf16.mxu0 0
      %1376 = vmatpush1.bf16.msra.mxu0 %v1371
      %1377 = vmatprep.subr.bf16.mxu0 0
      %1378 = vmatpush1.bf16.msra.mxu0 0
      %1379 = vmatprep.subr.bf16.mxu0 0
      %1380 = vmatpush1.bf16.msra.mxu0 0
      %1381 = vmatprep.subr.bf16.mxu0 0
      %1382 = vmatpush1.bf16.msra.mxu0 0
      %1383 = vmatprep.subr.bf16.mxu0 0
      %1384 = vmatpush1.bf16.msra.mxu0 0
      %1385 = vmatprep.subr.bf16.mxu0 0
      %1386 = vmatpush1.bf16.msra.mxu0 0
      %1387 = vmatprep.subr.bf16.mxu0 0
      %1388 = vmatpush1.bf16.msra.mxu0 0
      %1389 = vmatprep.subr.bf16.mxu0 0
      %1390 = vmatpush1.bf16.msra.mxu0 0
      %1391 = vmatprep.subr.bf16.mxu0 0
      %1392 = vmatpush1.bf16.msra.mxu0 0
      %1393 = vmatprep.subr.bf16.mxu0 0
      %1394 = vmatpush1.bf16.msra.mxu0 0
      %1395 = vmatprep.subr.bf16.mxu0 0
      %1396 = vmatpush1.bf16.msra.mxu0 0
      %1397 = vmatprep.subr.bf16.mxu0 0
      %1398 = vmatpush1.bf16.msra.mxu0 0
      %1399 = vmatprep.subr.bf16.mxu0 0
      %1400 = vmatpush1.bf16.msra.mxu0 0
      %1401 = vmatprep.subr.bf16.mxu0 0
      %1402 = vmatpush1.bf16.msra.mxu0 0
      %1403 = vmatprep.subr.bf16.mxu0 0
      %1404 = vmatpush1.bf16.msra.mxu0 0
      %1405 = vmatprep.mubr.bf16.mxu0 0
      %1406 = vmatmul.mubr.bf16.gmra.mrb[0].mxu0 %v1365
      %v1407 = vpop.f32.mrb[0].mxu0
      %v1408 = vadd.f32 0.0, %v1407
      %v1409 = vpop.f32.mrb[0].mxu0
      %v1410 = vpop.f32.mrb[0].mxu0
      %v1411 = vadd.f32 0.0, %v1410
      %v1412 = vpop.f32.mrb[0].mxu0
      %1413 = vmatprep.mubr.bf16.mxu0 0
      %1414 = vmatmul.mubr.bf16.gmra.mrb[0].mxu0 %v1368
      %v1415 = vpop.f32.mrb[0].mxu0
      %v1416 = vadd.f32 0.0, %v1415
      %v1417 = vpop.f32.mrb[0].mxu0
      %v1418 = vpop.f32.mrb[0].mxu0
      %v1419 = vpop.f32.mrb[0].mxu0
      %1420 = vdwg.mxu0
      %1421 = vrot.lane.b32.xlu0 %v1077, 96
      %v1422 = vpop.permute.xlu0 %1421
      %1423 = vrot.lane.b32.xlu0 %v1078, 96
      %v1424 = vpop.permute.xlu0 %1423
      %1425 = vrot.lane.b32.xlu0 %v1077, 32
      %v1426 = vpop.permute.xlu0 %1425
      %1427 = vrot.lane.b32.xlu0 %v1078, 32
      %v1428 = vpop.permute.xlu0 %1427
      %v1430 = vsel %vm1087, %v1422, 0
      %v1433 = vsel %vm1087, %v1424, 0
      %v1436 = vsel %vm1087, %v1426, 0
      %v1439 = vsel %vm1087, %v1428, 0
      %1441 = vmatprep.subr.bf16.mxu0 0
      %1442 = vmatpush1.bf16.xpose.msra.mxu0 %v1436
      %1443 = vmatprep.subr.bf16.mxu0 0
      %1444 = vmatpush1.bf16.xpose.msra.mxu0 %v1439
      %1445 = vmatprep.subr.bf16.mxu0 0
      %1446 = vmatpush1.bf16.xpose.msra.mxu0 0
      %1447 = vmatprep.subr.bf16.mxu0 0
      %1448 = vmatpush1.bf16.xpose.msra.mxu0 0
      %1449 = vmatprep.subr.bf16.mxu0 0
      %1450 = vmatpush1.bf16.xpose.msra.mxu0 0
      %1451 = vmatprep.subr.bf16.mxu0 0
      %1452 = vmatpush1.bf16.xpose.msra.mxu0 0
      %1453 = vmatprep.subr.bf16.mxu0 0
      %1454 = vmatpush1.bf16.xpose.msra.mxu0 0
      %1455 = vmatprep.subr.bf16.mxu0 0
      %1456 = vmatpush1.bf16.xpose.msra.mxu0 0
      %1457 = vmatprep.subr.bf16.mxu0 0
      %1458 = vmatpush1.bf16.xpose.msra.mxu0 0
      %1459 = vmatprep.subr.bf16.mxu0 0
      %1460 = vmatpush1.bf16.xpose.msra.mxu0 0
      %1461 = vmatprep.subr.bf16.mxu0 0
      %1462 = vmatpush1.bf16.xpose.msra.mxu0 0
      %1463 = vmatprep.subr.bf16.mxu0 0
      %1464 = vmatpush1.bf16.xpose.msra.mxu0 0
      %1465 = vmatprep.subr.bf16.mxu0 0
      %1466 = vmatpush1.bf16.xpose.msra.mxu0 0
      %1467 = vmatprep.subr.bf16.mxu0 0
      %1468 = vmatpush1.bf16.xpose.msra.mxu0 0
      %1469 = vmatprep.subr.bf16.mxu0 0
      %1470 = vmatpush1.bf16.xpose.msra.mxu0 0
      %1471 = vmatprep.subr.bf16.mxu0 0
      %1472 = vmatpush1.bf16.xpose.msra.mxu0 0
      %1473 = vmatprep.mubr.bf16.mxu0 0
      %1474 = vmatmul.mubr.bf16.gmra.mrb[0].mxu0 %v1430
      %v1475 = vpop.f32.mrb[0].mxu0
      %v1476 = vadd.f32 0.0, %v1475
      %v1477 = vpop.f32.mrb[0].mxu0
      %v1478 = vpop.f32.mrb[0].mxu0
      %v1479 = vadd.f32 0.0, %v1478
      %v1480 = vpop.f32.mrb[0].mxu0
      %1481 = vmatprep.mubr.bf16.mxu0 0
      %1482 = vmatmul.mubr.bf16.gmra.mrb[0].mxu0 %v1433
      %v1483 = vpop.f32.mrb[0].mxu0
      %v1484 = vadd.f32 0.0, %v1483
      %v1485 = vpop.f32.mrb[0].mxu0
      %v1486 = vpop.f32.mrb[0].mxu0
      %v1487 = vpop.f32.mrb[0].mxu0
      %1488 = vdwg.mxu0
      %1489 = vrot.lane.b32.xlu0 %v1079, 96
      %v1490 = vpop.permute.xlu0 %1489
      %1491 = vrot.lane.b32.xlu0 %v1080, 96
      %v1492 = vpop.permute.xlu0 %1491
      %1493 = vrot.lane.b32.xlu0 %v1079, 32
      %v1494 = vpop.permute.xlu0 %1493
      %1495 = vrot.lane.b32.xlu0 %v1080, 32
      %v1496 = vpop.permute.xlu0 %1495
      %v1498 = vsel %vm1087, %v1490, 0
      %v1501 = vsel %vm1087, %v1492, 0
      %v1504 = vsel %vm1087, %v1494, 0
      %v1507 = vsel %vm1087, %v1496, 0
      %1509 = vmatprep.subr.bf16.mxu0 0
      %1510 = vmatpush1.bf16.xpose.msra.mxu0 %v1504
      %1511 = vmatprep.subr.bf16.mxu0 0
      %1512 = vmatpush1.bf16.xpose.msra.mxu0 %v1507
      %1513 = vmatprep.subr.bf16.mxu0 0
      %1514 = vmatpush1.bf16.xpose.msra.mxu0 0
      %1515 = vmatprep.subr.bf16.mxu0 0
      %1516 = vmatpush1.bf16.xpose.msra.mxu0 0
      %1517 = vmatprep.subr.bf16.mxu0 0
      %1518 = vmatpush1.bf16.xpose.msra.mxu0 0
      %1519 = vmatprep.subr.bf16.mxu0 0
      %1520 = vmatpush1.bf16.xpose.msra.mxu0 0
      %1521 = vmatprep.subr.bf16.mxu0 0
      %1522 = vmatpush1.bf16.xpose.msra.mxu0 0
      %1523 = vmatprep.subr.bf16.mxu0 0
      %1524 = vmatpush1.bf16.xpose.msra.mxu0 0
      %1525 = vmatprep.subr.bf16.mxu0 0
      %1526 = vmatpush1.bf16.xpose.msra.mxu0 0
      %1527 = vmatprep.subr.bf16.mxu0 0
      %1528 = vmatpush1.bf16.xpose.msra.mxu0 0
      %1529 = vmatprep.subr.bf16.mxu0 0
      %1530 = vmatpush1.bf16.xpose.msra.mxu0 0
      %1531 = vmatprep.subr.bf16.mxu0 0
      %1532 = vmatpush1.bf16.xpose.msra.mxu0 0
      %1533 = vmatprep.subr.bf16.mxu0 0
      %1534 = vmatpush1.bf16.xpose.msra.mxu0 0
      %1535 = vmatprep.subr.bf16.mxu0 0
      %1536 = vmatpush1.bf16.xpose.msra.mxu0 0
      %1537 = vmatprep.subr.bf16.mxu0 0
      %1538 = vmatpush1.bf16.xpose.msra.mxu0 0
      %1539 = vmatprep.subr.bf16.mxu0 0
      %1540 = vmatpush1.bf16.xpose.msra.mxu0 0
      %1541 = vmatprep.mubr.bf16.mxu0 0
      %1542 = vmatmul.mubr.bf16.gmra.mrb[0].mxu0 %v1498
      %v1543 = vpop.f32.mrb[0].mxu0
      %v1544 = vadd.f32 0.0, %v1543
      %v1545 = vpop.f32.mrb[0].mxu0
      %v1546 = vpop.f32.mrb[0].mxu0
      %v1547 = vadd.f32 0.0, %v1546
      %v1548 = vpop.f32.mrb[0].mxu0
      %1549 = vmatprep.mubr.bf16.mxu0 0
      %1550 = vmatmul.mubr.bf16.gmra.mrb[0].mxu0 %v1501
      %v1551 = vpop.f32.mrb[0].mxu0
      %v1552 = vadd.f32 0.0, %v1551
      %v1553 = vpop.f32.mrb[0].mxu0
      %v1554 = vpop.f32.mrb[0].mxu0
      %v1555 = vpop.f32.mrb[0].mxu0
      %1556 = vdwg.mxu0
      %v1557 = vmul.f32 %v1476, 0.17677669
      %v1558 = vmul.f32 %v1479, 0.17677669
      %v1559 = vmul.f32 %v1484, 0.17677669
      %v1560 = vmul.f32 %v1544, 0.17677669
      %v1561 = vmul.f32 %v1547, 0.17677669
      %v1562 = vmul.f32 %v1552, 0.17677669
      %v1563 = vsel %vm1224, %v1557, -1e+30
      %v1564 = vsel %vm1224, %v1558, -1e+30
      %v1565 = vsel %vm1224, %v1559, -1e+30
      %v1566 = vsel %vm1224, %v1560, -1e+30
      %v1567 = vsel %vm1224, %v1561, -1e+30
      %v1568 = vsel %vm1224, %v1562, -1e+30
      %v1569 = vsel %vm1231, %v1563, -inf
      %1570 = vmax.xlane.f32.xlu0 %v1569
      %v1571 = vpop.xlane.xlu0 %1570
      %v1572 = vsel %vm1231, %v1564, -inf
      %1573 = vmax.xlane.f32.xlu0 %v1572
      %v1574 = vpop.xlane.xlu0 %1573
      %v1575 = vsel %vm1231, %v1565, -inf
      %1576 = vmax.xlane.f32.xlu0 %v1575
      %v1577 = vpop.xlane.xlu0 %1576
      %v1578 = vsel %vm1231, %v1566, -inf
      %1579 = vmax.xlane.f32.xlu0 %v1578
      %v1580 = vpop.xlane.xlu0 %1579
      %v1581 = vsel %vm1231, %v1567, -inf
      %1582 = vmax.xlane.f32.xlu0 %v1581
      %v1583 = vpop.xlane.xlu0 %1582
      %v1584 = vsel %vm1231, %v1568, -inf
      %1585 = vmax.xlane.f32.xlu0 %v1584
      %v1586 = vpop.xlane.xlu0 %1585
      %v1587 = vsub.f32 %v1563, %v1571
      %v1588 = vsub.f32 %v1564, %v1574
      %v1589 = vsub.f32 %v1565, %v1577
      %v1590 = vsub.f32 %v1566, %v1580
      %v1591 = vsub.f32 %v1567, %v1583
      %v1592 = vsub.f32 %v1568, %v1586
      %v1593 = vmul.f32 %v1587, 1.442695
      %v1594 = vpow.pop %v1593
      %v1595 = vmul.f32 %v1588, 1.442695
      %v1596 = vpow.pop %v1595
      %v1597 = vmul.f32 %v1589, 1.442695
      %v1598 = vpow.pop %v1597
      %v1599 = vmul.f32 %v1590, 1.442695
      %v1600 = vpow.pop %v1599
      %v1601 = vmul.f32 %v1591, 1.442695
      %v1602 = vpow.pop %v1601
      %v1603 = vmul.f32 %v1592, 1.442695
      %v1604 = vpow.pop %v1603
      %v1605 = vsel %vm1231, %v1594, 0.0
      %1606 = vadd.xlane.f32.xlu0 %v1605
      %v1607 = vpop.xlane.xlu0 %1606
      %v1608 = vsel %vm1231, %v1596, 0.0
      %1609 = vadd.xlane.f32.xlu0 %v1608
      %v1610 = vpop.xlane.xlu0 %1609
      %v1611 = vsel %vm1231, %v1598, 0.0
      %1612 = vadd.xlane.f32.xlu0 %v1611
      %v1613 = vpop.xlane.xlu0 %1612
      %v1614 = vsel %vm1231, %v1600, 0.0
      %1615 = vadd.xlane.f32.xlu0 %v1614
      %v1616 = vpop.xlane.xlu0 %1615
      %v1617 = vsel %vm1231, %v1602, 0.0
      %1618 = vadd.xlane.f32.xlu0 %v1617
      %v1619 = vpop.xlane.xlu0 %1618
      %v1620 = vsel %vm1231, %v1604, 0.0
      %1621 = vadd.xlane.f32.xlu0 %v1620
      %v1622 = vpop.xlane.xlu0 %1621
      %v1623 = vrcp.pop %v1607
      %v1624 = vrcp.pop %v1610
      %v1625 = vrcp.pop %v1613
      %v1626 = vrcp.pop %v1616
      %v1627 = vrcp.pop %v1619
      %v1628 = vrcp.pop %v1622
      %v1629 = vmul.f32 %v1594, %v1623
      %v1630 = vmul.f32 %v1596, %v1624
      %v1631 = vmul.f32 %v1598, %v1625
      %v1632 = vmul.f32 %v1600, %v1626
      %v1633 = vmul.f32 %v1602, %v1627
      %v1634 = vmul.f32 %v1604, %v1628
      %v1635 = vpack.c.bf16 %v1630, %v1629
      %v1636 = vpack.c.bf16 %v1631, %v1631
      %v1637 = vpack.c.bf16 %v1633, %v1632
      %v1638 = vpack.c.bf16 %v1634, %v1634
      %1641 = vrot.lane.b32.xlu0 %v1302, 96
      %v1642 = vpop.permute.xlu0 %1641
      %1643 = vrot.lane.b32.xlu0 %v1303, 96
      %v1644 = vpop.permute.xlu0 %1643
      %v1647 = vsel %vm1231, %v1635, 0
      %v1650 = vsel %vm1231, %v1636, 0
      %v1653 = vsel %vm1312, %v1644, 0
      %1655 = vmatprep.subr.bf16.mxu0 0
      %1656 = vmatpush1.bf16.msra.mxu0 %v1642
      %1657 = vmatprep.subr.bf16.mxu0 0
      %1658 = vmatpush1.bf16.msra.mxu0 %v1653
      %1659 = vmatprep.subr.bf16.mxu0 0
      %1660 = vmatpush1.bf16.msra.mxu0 0
      %1661 = vmatprep.subr.bf16.mxu0 0
      %1662 = vmatpush1.bf16.msra.mxu0 0
      %1663 = vmatprep.subr.bf16.mxu0 0
      %1664 = vmatpush1.bf16.msra.mxu0 0
      %1665 = vmatprep.subr.bf16.mxu0 0
      %1666 = vmatpush1.bf16.msra.mxu0 0
      %1667 = vmatprep.subr.bf16.mxu0 0
      %1668 = vmatpush1.bf16.msra.mxu0 0
      %1669 = vmatprep.subr.bf16.mxu0 0
      %1670 = vmatpush1.bf16.msra.mxu0 0
      %1671 = vmatprep.subr.bf16.mxu0 0
      %1672 = vmatpush1.bf16.msra.mxu0 0
      %1673 = vmatprep.subr.bf16.mxu0 0
      %1674 = vmatpush1.bf16.msra.mxu0 0
      %1675 = vmatprep.subr.bf16.mxu0 0
      %1676 = vmatpush1.bf16.msra.mxu0 0
      %1677 = vmatprep.subr.bf16.mxu0 0
      %1678 = vmatpush1.bf16.msra.mxu0 0
      %1679 = vmatprep.subr.bf16.mxu0 0
      %1680 = vmatpush1.bf16.msra.mxu0 0
      %1681 = vmatprep.subr.bf16.mxu0 0
      %1682 = vmatpush1.bf16.msra.mxu0 0
      %1683 = vmatprep.subr.bf16.mxu0 0
      %1684 = vmatpush1.bf16.msra.mxu0 0
      %1685 = vmatprep.subr.bf16.mxu0 0
      %1686 = vmatpush1.bf16.msra.mxu0 0
      %1687 = vmatprep.mubr.bf16.mxu0 0
      %1688 = vmatmul.mubr.bf16.gmra.mrb[0].mxu0 %v1647
      %v1689 = vpop.f32.mrb[0].mxu0
      %v1690 = vadd.f32 0.0, %v1689
      %v1691 = vpop.f32.mrb[0].mxu0
      %v1692 = vpop.f32.mrb[0].mxu0
      %v1693 = vadd.f32 0.0, %v1692
      %v1694 = vpop.f32.mrb[0].mxu0
      %1695 = vmatprep.mubr.bf16.mxu0 0
      %1696 = vmatmul.mubr.bf16.gmra.mrb[0].mxu0 %v1650
      %v1697 = vpop.f32.mrb[0].mxu0
      %v1698 = vadd.f32 0.0, %v1697
      %v1699 = vpop.f32.mrb[0].mxu0
      %v1700 = vpop.f32.mrb[0].mxu0
      %v1701 = vpop.f32.mrb[0].mxu0
      %1702 = vdwg.mxu0
      %1705 = vrot.lane.b32.xlu0 %v1304, 96
      %v1706 = vpop.permute.xlu0 %1705
      %1707 = vrot.lane.b32.xlu0 %v1305, 96
      %v1708 = vpop.permute.xlu0 %1707
      %v1711 = vsel %vm1231, %v1637, 0
      %v1714 = vsel %vm1231, %v1638, 0
      %v1717 = vsel %vm1312, %v1708, 0
      %1719 = vmatprep.subr.bf16.mxu0 0
      %1720 = vmatpush1.bf16.msra.mxu0 %v1706
      %1721 = vmatprep.subr.bf16.mxu0 0
      %1722 = vmatpush1.bf16.msra.mxu0 %v1717
      %1723 = vmatprep.subr.bf16.mxu0 0
      %1724 = vmatpush1.bf16.msra.mxu0 0
      %1725 = vmatprep.subr.bf16.mxu0 0
      %1726 = vmatpush1.bf16.msra.mxu0 0
      %1727 = vmatprep.subr.bf16.mxu0 0
      %1728 = vmatpush1.bf16.msra.mxu0 0
      %1729 = vmatprep.subr.bf16.mxu0 0
      %1730 = vmatpush1.bf16.msra.mxu0 0
      %1731 = vmatprep.subr.bf16.mxu0 0
      %1732 = vmatpush1.bf16.msra.mxu0 0
      %1733 = vmatprep.subr.bf16.mxu0 0
      %1734 = vmatpush1.bf16.msra.mxu0 0
      %1735 = vmatprep.subr.bf16.mxu0 0
      %1736 = vmatpush1.bf16.msra.mxu0 0
      %1737 = vmatprep.subr.bf16.mxu0 0
      %1738 = vmatpush1.bf16.msra.mxu0 0
      %1739 = vmatprep.subr.bf16.mxu0 0
      %1740 = vmatpush1.bf16.msra.mxu0 0
      %1741 = vmatprep.subr.bf16.mxu0 0
      %1742 = vmatpush1.bf16.msra.mxu0 0
      %1743 = vmatprep.subr.bf16.mxu0 0
      %1744 = vmatpush1.bf16.msra.mxu0 0
      %1745 = vmatprep.subr.bf16.mxu0 0
      %1746 = vmatpush1.bf16.msra.mxu0 0
      %1747 = vmatprep.subr.bf16.mxu0 0
      %1748 = vmatpush1.bf16.msra.mxu0 0
      %1749 = vmatprep.subr.bf16.mxu0 0
      %1750 = vmatpush1.bf16.msra.mxu0 0
      %1751 = vmatprep.mubr.bf16.mxu0 0
      %1752 = vmatmul.mubr.bf16.gmra.mrb[0].mxu0 %v1711
      %v1753 = vpop.f32.mrb[0].mxu0
      %v1754 = vadd.f32 0.0, %v1753
      %v1755 = vpop.f32.mrb[0].mxu0
      %v1756 = vpop.f32.mrb[0].mxu0
      %v1757 = vadd.f32 0.0, %v1756
      %v1758 = vpop.f32.mrb[0].mxu0
      %1759 = vmatprep.mubr.bf16.mxu0 0
      %1760 = vmatmul.mubr.bf16.gmra.mrb[0].mxu0 %v1714
      %v1761 = vpop.f32.mrb[0].mxu0
      %v1762 = vadd.f32 0.0, %v1761
      %v1763 = vpop.f32.mrb[0].mxu0
      %v1764 = vpop.f32.mrb[0].mxu0
      %v1765 = vpop.f32.mrb[0].mxu0
      %1766 = vdwg.mxu0
      %1773 = vrot.lane.b32.xlu0 %v1690, 32
      %v1774 = vpop.permute.xlu0 %1773
      %1775 = vrot.lane.b32.xlu0 %v1693, 32
      %v1776 = vpop.permute.xlu0 %1775
      %1777 = vrot.lane.b32.xlu0 %v1698, 32
      %v1778 = vpop.permute.xlu0 %1777
      %1779 = vrot.lane.b32.xlu0 %v1754, 32
      %v1780 = vpop.permute.xlu0 %1779
      %1781 = vrot.lane.b32.xlu0 %v1757, 32
      %v1782 = vpop.permute.xlu0 %1781
      %1783 = vrot.lane.b32.xlu0 %v1762, 32
      %v1784 = vpop.permute.xlu0 %1783
      %v1791 = vsel %vm1087, %v1351, %v1774
      %v1792 = vsel %vm1087, %v1354, %v1776
      %v1793 = vsel %vm1087, %v1359, %v1778
      %v1794 = vsel %vm1087, %v1408, %v1780
      %v1795 = vsel %vm1087, %v1411, %v1782
      %v1796 = vsel %vm1087, %v1416, %v1784
      %v1797 = vpack.c.bf16 %v1792, %v1791
      %v1798 = vpack.c.bf16 %v1794, %v1793
      %v1799 = vpack.c.bf16 %v1796, %v1795
      %v1800 = vld [vmem:[%s699] sm:$0xf]
      %v1801 = vld [vmem:[%s699 + $0x4] sm:$0xf]
      %v1802 = vld [vmem:[%s699 + $0x8] sm:$0xf]
      %v1803 = vld [vmem:[%s699 + $0xc] sm:$0xf]
      %v1804 = vld [vmem:[%s699 + $0x10] sm:$0xf]
      %v1805 = vld [vmem:[%s699 + $0x14] sm:$0xf]
      %v1806 = vld [vmem:[%s699 + $0x18] sm:$0xf]
      %v1807 = vld [vmem:[%s699 + $0x1c] sm:$0xf]
      %v1808 = vld [vmem:[%s702] sm:$0x1]
      %v1810 = vlaneseq
      %v1811 = vshrl.u32 %v1810, 7
      %v1812 = vsub.s32 0, %v1811
      %v1813 = vrot.slane %v1808, %v1812
      %v1823 = vunpack.c.l.b16 %v1800
      %v1824 = vunpack.c.l.b16 %v1801
      %v1825 = vunpack.c.l.b16 %v1802
      %v1826 = vunpack.c.l.b16 %v1803
      %v1827 = vunpack.c.l.b16 %v1804
      %v1828 = vunpack.c.l.b16 %v1805
      %v1829 = vunpack.c.l.b16 %v1806
      %v1830 = vunpack.c.l.b16 %v1807
      %v1831 = vpack.c.b16 %v1824, %v1823
      %v1832 = vpack.c.b16 %v1826, %v1825
      %v1833 = vpack.c.b16 %v1828, %v1827
      %v1834 = vpack.c.b16 %v1830, %v1829
      %v1840 = vsel %vm838, %v1797, 0
      %v1843 = vsel %vm838, %v1798, 0
      %v1846 = vsel %vm838, %v1799, 0
      %1848 = vmatprep.subr.bf16.mxu0 0
      %1849 = vmatpush1.bf16.msra.mxu0 %v1831
      %1850 = vmatprep.subr.bf16.mxu0 0
      %1851 = vmatpush1.bf16.msra.mxu0 %v1832
      %1852 = vmatprep.subr.bf16.mxu0 0
      %1853 = vmatpush1.bf16.msra.mxu0 %v1833
      %1854 = vmatprep.subr.bf16.mxu0 0
      %1855 = vmatpush1.bf16.msra.mxu0 %v1834
      %1856 = vmatprep.subr.bf16.mxu0 0
      %1857 = vmatpush1.bf16.msra.mxu0 0
      %1858 = vmatprep.subr.bf16.mxu0 0
      %1859 = vmatpush1.bf16.msra.mxu0 0
      %1860 = vmatprep.subr.bf16.mxu0 0
      %1861 = vmatpush1.bf16.msra.mxu0 0
      %1862 = vmatprep.subr.bf16.mxu0 0
      %1863 = vmatpush1.bf16.msra.mxu0 0
      %1864 = vmatprep.subr.bf16.mxu0 0
      %1865 = vmatpush1.bf16.msra.mxu0 0
      %1866 = vmatprep.subr.bf16.mxu0 0
      %1867 = vmatpush1.bf16.msra.mxu0 0
      %1868 = vmatprep.subr.bf16.mxu0 0
      %1869 = vmatpush1.bf16.msra.mxu0 0
      %1870 = vmatprep.subr.bf16.mxu0 0
      %1871 = vmatpush1.bf16.msra.mxu0 0
      %1872 = vmatprep.subr.bf16.mxu0 0
      %1873 = vmatpush1.bf16.msra.mxu0 0
      %1874 = vmatprep.subr.bf16.mxu0 0
      %1875 = vmatpush1.bf16.msra.mxu0 0
      %1876 = vmatprep.subr.bf16.mxu0 0
      %1877 = vmatpush1.bf16.msra.mxu0 0
      %1878 = vmatprep.subr.bf16.mxu0 0
      %1879 = vmatpush1.bf16.msra.mxu0 0
      %1880 = vmatprep.mubr.bf16.mxu0 0
      %1881 = vmatmul.mubr.bf16.gmra.mrb[0].mxu0 %v1840
      %v1882 = vpop.f32.mrb[0].mxu0
      %v1883 = vadd.f32 %v1813, %v1882
      %v1884 = vpop.f32.mrb[0].mxu0
      %v1885 = vpop.f32.mrb[0].mxu0
      %v1886 = vadd.f32 %v1813, %v1885
      %v1887 = vpop.f32.mrb[0].mxu0
      %1888 = vmatprep.mubr.bf16.mxu0 0
      %1889 = vmatmul.mubr.bf16.gmra.mrb[0].mxu0 %v1843
      %v1890 = vpop.f32.mrb[0].mxu0
      %v1891 = vadd.f32 %v1813, %v1890
      %v1892 = vpop.f32.mrb[0].mxu0
      %v1893 = vpop.f32.mrb[0].mxu0
      %v1894 = vadd.f32 %v1813, %v1893
      %v1895 = vpop.f32.mrb[0].mxu0
      %1896 = vmatprep.mubr.bf16.mxu0 0
      %1897 = vmatmul.mubr.bf16.gmra.mrb[0].mxu0 %v1846
      %v1898 = vpop.f32.mrb[0].mxu0
      %v1899 = vadd.f32 %v1813, %v1898
      %v1900 = vpop.f32.mrb[0].mxu0
      %v1901 = vpop.f32.mrb[0].mxu0
      %v1902 = vadd.f32 %v1813, %v1901
      %v1903 = vpop.f32.mrb[0].mxu0
      %1904 = vdwg.mxu0
      %v1905 = vadd.f32 %v830, %v1883
      %v1906 = vadd.f32 %v831, %v1886
      %v1907 = vadd.f32 %v832, %v1891
      %v1908 = vadd.f32 %v833, %v1894
      %v1909 = vadd.f32 %v834, %v1899
      %v1910 = vadd.f32 %v835, %v1902
      %v1911 = vld [vmem:[%s705] sm:$0x1]
      %v1912 = vld [vmem:[%s708] sm:$0x1]
      %v1913 = vsel %vm838, %v1905, 0.0
      %1914 = vadd.xlane.f32.xlu0 %v1913
      %v1915 = vpop.xlane.xlu0 %1914
      %v1916 = vsel %vm838, %v1906, 0.0
      %1917 = vadd.xlane.f32.xlu0 %v1916
      %v1918 = vpop.xlane.xlu0 %1917
      %v1919 = vsel %vm838, %v1907, 0.0
      %1920 = vadd.xlane.f32.xlu0 %v1919
      %v1921 = vpop.xlane.xlu0 %1920
      %v1922 = vsel %vm838, %v1908, 0.0
      %1923 = vadd.xlane.f32.xlu0 %v1922
      %v1924 = vpop.xlane.xlu0 %1923
      %v1925 = vsel %vm838, %v1909, 0.0
      %1926 = vadd.xlane.f32.xlu0 %v1925
      %v1927 = vpop.xlane.xlu0 %1926
      %v1928 = vsel %vm838, %v1910, 0.0
      %1929 = vadd.xlane.f32.xlu0 %v1928
      %v1930 = vpop.xlane.xlu0 %1929
      %v1931 = vmul.f32 %v1915, %v857
      %v1932 = vmul.f32 %v1918, %v857
      %v1933 = vmul.f32 %v1921, %v857
      %v1934 = vmul.f32 %v1924, %v857
      %v1935 = vmul.f32 %v1927, %v857
      %v1936 = vmul.f32 %v1930, %v857
      %v1937 = vsub.f32 %v1905, %v1931
      %v1938 = vsub.f32 %v1906, %v1932
      %v1939 = vsub.f32 %v1907, %v1933
      %v1940 = vsub.f32 %v1908, %v1934
      %v1941 = vsub.f32 %v1909, %v1935
      %v1942 = vsub.f32 %v1910, %v1936
      %v1943 = vmul.f32 %v1937, %v1937
      %v1944 = vmul.f32 %v1938, %v1938
      %v1945 = vmul.f32 %v1939, %v1939
      %v1946 = vmul.f32 %v1940, %v1940
      %v1947 = vmul.f32 %v1941, %v1941
      %v1948 = vmul.f32 %v1942, %v1942
      %v1949 = vsel %vm838, %v1943, 0.0
      %1950 = vadd.xlane.f32.xlu0 %v1949
      %v1951 = vpop.xlane.xlu0 %1950
      %v1952 = vsel %vm838, %v1944, 0.0
      %1953 = vadd.xlane.f32.xlu0 %v1952
      %v1954 = vpop.xlane.xlu0 %1953
      %v1955 = vsel %vm838, %v1945, 0.0
      %1956 = vadd.xlane.f32.xlu0 %v1955
      %v1957 = vpop.xlane.xlu0 %1956
      %v1958 = vsel %vm838, %v1946, 0.0
      %1959 = vadd.xlane.f32.xlu0 %v1958
      %v1960 = vpop.xlane.xlu0 %1959
      %v1961 = vsel %vm838, %v1947, 0.0
      %1962 = vadd.xlane.f32.xlu0 %v1961
      %v1963 = vpop.xlane.xlu0 %1962
      %v1964 = vsel %vm838, %v1948, 0.0
      %1965 = vadd.xlane.f32.xlu0 %v1964
      %v1966 = vpop.xlane.xlu0 %1965
      %v1967 = vmul.f32 %v1951, %v857
      %v1968 = vmul.f32 %v1954, %v857
      %v1969 = vmul.f32 %v1957, %v857
      %v1970 = vmul.f32 %v1960, %v857
      %v1971 = vmul.f32 %v1963, %v857
      %v1972 = vmul.f32 %v1966, %v857
      %v1973 = vadd.f32 %v1967, 1e-05
      %v1974 = vadd.f32 %v1968, 1e-05
      %v1975 = vadd.f32 %v1969, 1e-05
      %v1976 = vadd.f32 %v1970, 1e-05
      %v1977 = vadd.f32 %v1971, 1e-05
      %v1978 = vadd.f32 %v1972, 1e-05
      %v1979 = vrsqrt.pop %v1973
      %v1980 = vrsqrt.pop %v1974
      %v1981 = vrsqrt.pop %v1975
      %v1982 = vrsqrt.pop %v1976
      %v1983 = vrsqrt.pop %v1977
      %v1984 = vrsqrt.pop %v1978
      %v1985 = vmul.f32 %v1937, %v1979
      %v1986 = vmul.f32 %v1938, %v1980
      %v1987 = vmul.f32 %v1939, %v1981
      %v1988 = vmul.f32 %v1940, %v1982
      %v1989 = vmul.f32 %v1941, %v1983
      %v1990 = vmul.f32 %v1942, %v1984
      %v1992 = vlaneseq
      %v1993 = vshrl.u32 %v1992, 7
      %v1994 = vsub.s32 0, %v1993
      %v1995 = vrot.slane %v1911, %v1994
      %v1997 = vmul.f32 %v1985, %v1995
      %v1998 = vmul.f32 %v1986, %v1995
      %v1999 = vmul.f32 %v1987, %v1995
      %v2000 = vmul.f32 %v1988, %v1995
      %v2001 = vmul.f32 %v1989, %v1995
      %v2002 = vmul.f32 %v1990, %v1995
      %v2004 = vlaneseq
      %v2005 = vshrl.u32 %v2004, 7
      %v2006 = vsub.s32 0, %v2005
      %v2007 = vrot.slane %v1912, %v2006
      %v2009 = vadd.f32 %v1997, %v2007
      %v2010 = vadd.f32 %v1998, %v2007
      %v2011 = vadd.f32 %v1999, %v2007
      %v2012 = vadd.f32 %v2000, %v2007
      %v2013 = vadd.f32 %v2001, %v2007
      %v2014 = vadd.f32 %v2002, %v2007
      %v2015 = vpack.c.bf16 %v2010, %v2009
      %v2016 = vpack.c.bf16 %v2012, %v2011
      %v2017 = vpack.c.bf16 %v2014, %v2013
      %v2018 = vld [vmem:[%s713] sm:$0xf]
      %v2019 = vld [vmem:[%s713 + $0x4] sm:$0xf]
      %v2020 = vld [vmem:[%s713 + $0x8] sm:$0xf]
      %v2021 = vld [vmem:[%s713 + $0xc] sm:$0xf]
      %v2022 = vld [vmem:[%s713 + $0x10] sm:$0xf]
      %v2023 = vld [vmem:[%s713 + $0x14] sm:$0xf]
      %v2024 = vld [vmem:[%s713 + $0x18] sm:$0xf]
      %v2025 = vld [vmem:[%s713 + $0x1c] sm:$0xf]
      %v2026 = vld [vmem:[%s716] sm:$0x1]
      %v2028 = vlaneseq
      %v2029 = vshrl.u32 %v2028, 7
      %v2030 = vsub.s32 0, %v2029
      %v2031 = vrot.slane %v2026, %v2030
      %v2041 = vunpack.c.l.b16 %v2018
      %v2042 = vunpack.c.l.b16 %v2019
      %v2043 = vunpack.c.l.b16 %v2020
      %v2044 = vunpack.c.l.b16 %v2021
      %v2045 = vunpack.c.l.b16 %v2022
      %v2046 = vunpack.c.l.b16 %v2023
      %v2047 = vunpack.c.l.b16 %v2024
      %v2048 = vunpack.c.l.b16 %v2025
      %v2049 = vpack.c.b16 %v2042, %v2041
      %v2050 = vpack.c.b16 %v2044, %v2043
      %v2051 = vpack.c.b16 %v2046, %v2045
      %v2052 = vpack.c.b16 %v2048, %v2047
      %v2058 = vsel %vm838, %v2015, 0
      %v2061 = vsel %vm838, %v2016, 0
      %v2064 = vsel %vm838, %v2017, 0
      %2066 = vmatprep.subr.bf16.mxu0 0
      %2067 = vmatpush1.bf16.msra.mxu0 %v2049
      %2068 = vmatprep.subr.bf16.mxu0 0
      %2069 = vmatpush1.bf16.msra.mxu0 %v2050
      %2070 = vmatprep.subr.bf16.mxu0 0
      %2071 = vmatpush1.bf16.msra.mxu0 %v2051
      %2072 = vmatprep.subr.bf16.mxu0 0
      %2073 = vmatpush1.bf16.msra.mxu0 %v2052
      %2074 = vmatprep.subr.bf16.mxu0 0
      %2075 = vmatpush1.bf16.msra.mxu0 0
      %2076 = vmatprep.subr.bf16.mxu0 0
      %2077 = vmatpush1.bf16.msra.mxu0 0
      %2078 = vmatprep.subr.bf16.mxu0 0
      %2079 = vmatpush1.bf16.msra.mxu0 0
      %2080 = vmatprep.subr.bf16.mxu0 0
      %2081 = vmatpush1.bf16.msra.mxu0 0
      %2082 = vmatprep.subr.bf16.mxu0 0
      %2083 = vmatpush1.bf16.msra.mxu0 0
      %2084 = vmatprep.subr.bf16.mxu0 0
      %2085 = vmatpush1.bf16.msra.mxu0 0
      %2086 = vmatprep.subr.bf16.mxu0 0
      %2087 = vmatpush1.bf16.msra.mxu0 0
      %2088 = vmatprep.subr.bf16.mxu0 0
      %2089 = vmatpush1.bf16.msra.mxu0 0
      %2090 = vmatprep.subr.bf16.mxu0 0
      %2091 = vmatpush1.bf16.msra.mxu0 0
      %2092 = vmatprep.subr.bf16.mxu0 0
      %2093 = vmatpush1.bf16.msra.mxu0 0
      %2094 = vmatprep.subr.bf16.mxu0 0
      %2095 = vmatpush1.bf16.msra.mxu0 0
      %2096 = vmatprep.subr.bf16.mxu0 0
      %2097 = vmatpush1.bf16.msra.mxu0 0
      %2098 = vmatprep.mubr.bf16.mxu0 0
      %2099 = vmatmul.mubr.bf16.gmra.mrb[0].mxu0 %v2058
      %v2100 = vpop.f32.mrb[0].mxu0
      %v2101 = vadd.f32 %v2031, %v2100
      %v2102 = vpop.f32.mrb[0].mxu0
      %v2103 = vpop.f32.mrb[0].mxu0
      %v2104 = vadd.f32 %v2031, %v2103
      %v2105 = vpop.f32.mrb[0].mxu0
      %2106 = vmatprep.mubr.bf16.mxu0 0
      %2107 = vmatmul.mubr.bf16.gmra.mrb[0].mxu0 %v2061
      %v2108 = vpop.f32.mrb[0].mxu0
      %v2109 = vadd.f32 %v2031, %v2108
      %v2110 = vpop.f32.mrb[0].mxu0
      %v2111 = vpop.f32.mrb[0].mxu0
      %v2112 = vadd.f32 %v2031, %v2111
      %v2113 = vpop.f32.mrb[0].mxu0
      %2114 = vmatprep.mubr.bf16.mxu0 0
      %2115 = vmatmul.mubr.bf16.gmra.mrb[0].mxu0 %v2064
      %v2116 = vpop.f32.mrb[0].mxu0
      %v2117 = vadd.f32 %v2031, %v2116
      %v2118 = vpop.f32.mrb[0].mxu0
      %v2119 = vpop.f32.mrb[0].mxu0
      %v2120 = vadd.f32 %v2031, %v2119
      %v2121 = vpop.f32.mrb[0].mxu0
      %2122 = vdwg.mxu0
      %v2123 = vmul.f32 %v2101, %v2101
      %v2124 = vmul.f32 %v2104, %v2104
      %v2125 = vmul.f32 %v2109, %v2109
      %v2126 = vmul.f32 %v2112, %v2112
      %v2127 = vmul.f32 %v2117, %v2117
      %v2128 = vmul.f32 %v2120, %v2120
      %v2129 = vmul.f32 %v2101, %v2123
      %v2130 = vmul.f32 %v2104, %v2124
      %v2131 = vmul.f32 %v2109, %v2125
      %v2132 = vmul.f32 %v2112, %v2126
      %v2133 = vmul.f32 %v2117, %v2127
      %v2134 = vmul.f32 %v2120, %v2128
      %v2135 = vmul.f32 %v2129, 0.044715
      %v2136 = vmul.f32 %v2130, 0.044715
      %v2137 = vmul.f32 %v2131, 0.044715
      %v2138 = vmul.f32 %v2132, 0.044715
      %v2139 = vmul.f32 %v2133, 0.044715
      %v2140 = vmul.f32 %v2134, 0.044715
      %v2141 = vadd.f32 %v2101, %v2135
      %v2142 = vadd.f32 %v2104, %v2136
      %v2143 = vadd.f32 %v2109, %v2137
      %v2144 = vadd.f32 %v2112, %v2138
      %v2145 = vadd.f32 %v2117, %v2139
      %v2146 = vadd.f32 %v2120, %v2140
      %v2147 = vmul.f32 %v2141, 0.7978846
      %v2148 = vmul.f32 %v2142, 0.7978846
      %v2149 = vmul.f32 %v2143, 0.7978846
      %v2150 = vmul.f32 %v2144, 0.7978846
      %v2151 = vmul.f32 %v2145, 0.7978846
      %v2152 = vmul.f32 %v2146, 0.7978846
      %v2153 = vtanh.pop %v2147
      %v2154 = vtanh.pop %v2148
      %v2155 = vtanh.pop %v2149
      %v2156 = vtanh.pop %v2150
      %v2157 = vtanh.pop %v2151
      %v2158 = vtanh.pop %v2152
      %v2159 = vadd.f32 %v2153, 1.0
      %v2160 = vadd.f32 %v2154, 1.0
      %v2161 = vadd.f32 %v2155, 1.0
      %v2162 = vadd.f32 %v2156, 1.0
      %v2163 = vadd.f32 %v2157, 1.0
      %v2164 = vadd.f32 %v2158, 1.0
      %v2165 = vmul.f32 %v2159, 0.5
      %v2166 = vmul.f32 %v2160, 0.5
      %v2167 = vmul.f32 %v2161, 0.5
      %v2168 = vmul.f32 %v2162, 0.5
      %v2169 = vmul.f32 %v2163, 0.5
      %v2170 = vmul.f32 %v2164, 0.5
      %v2171 = vmul.f32 %v2101, %v2165
      %v2172 = vmul.f32 %v2104, %v2166
      %v2173 = vmul.f32 %v2109, %v2167
      %v2174 = vmul.f32 %v2112, %v2168
      %v2175 = vmul.f32 %v2117, %v2169
      %v2176 = vmul.f32 %v2120, %v2170
      %v2177 = vpack.c.bf16 %v2172, %v2171
      %v2178 = vpack.c.bf16 %v2174, %v2173
      %v2179 = vpack.c.bf16 %v2176, %v2175
      %v2180 = vld [vmem:[%s721] sm:$0xf]
      %v2181 = vld [vmem:[%s721 + $0x4] sm:$0xf]
      %v2182 = vld [vmem:[%s721 + $0x8] sm:$0xf]
      %v2183 = vld [vmem:[%s721 + $0xc] sm:$0xf]
      %v2184 = vld [vmem:[%s721 + $0x10] sm:$0xf]
      %v2185 = vld [vmem:[%s721 + $0x14] sm:$0xf]
      %v2186 = vld [vmem:[%s721 + $0x18] sm:$0xf]
      %v2187 = vld [vmem:[%s721 + $0x1c] sm:$0xf]
      %v2188 = vld [vmem:[%s721 + $0x20] sm:$0xf]
      %v2189 = vld [vmem:[%s721 + $0x24] sm:$0xf]
      %v2190 = vld [vmem:[%s721 + $0x28] sm:$0xf]
      %v2191 = vld [vmem:[%s721 + $0x2c] sm:$0xf]
      %v2192 = vld [vmem:[%s721 + $0x30] sm:$0xf]
      %v2193 = vld [vmem:[%s721 + $0x34] sm:$0xf]
      %v2194 = vld [vmem:[%s721 + $0x38] sm:$0xf]
      %v2195 = vld [vmem:[%s721 + $0x3c] sm:$0xf]
      %v2196 = vld [vmem:[%s724] sm:$0x1]
      %v2198 = vlaneseq
      %v2199 = vshrl.u32 %v2198, 7
      %v2200 = vsub.s32 0, %v2199
      %v2201 = vrot.slane %v2196, %v2200
      %v2219 = vunpack.c.l.b16 %v2180
      %v2220 = vunpack.c.l.b16 %v2181
      %v2221 = vunpack.c.l.b16 %v2182
      %v2222 = vunpack.c.l.b16 %v2183
      %v2223 = vunpack.c.l.b16 %v2184
      %v2224 = vunpack.c.l.b16 %v2185
      %v2225 = vunpack.c.l.b16 %v2186
      %v2226 = vunpack.c.l.b16 %v2187
      %v2227 = vunpack.c.l.b16 %v2188
      %v2228 = vunpack.c.l.b16 %v2189
      %v2229 = vunpack.c.l.b16 %v2190
      %v2230 = vunpack.c.l.b16 %v2191
      %v2231 = vunpack.c.l.b16 %v2192
      %v2232 = vunpack.c.l.b16 %v2193
      %v2233 = vunpack.c.l.b16 %v2194
      %v2234 = vunpack.c.l.b16 %v2195
      %v2235 = vpack.c.b16 %v2220, %v2219
      %v2236 = vpack.c.b16 %v2222, %v2221
      %v2237 = vpack.c.b16 %v2224, %v2223
      %v2238 = vpack.c.b16 %v2226, %v2225
      %v2239 = vpack.c.b16 %v2228, %v2227
      %v2240 = vpack.c.b16 %v2230, %v2229
      %v2241 = vpack.c.b16 %v2232, %v2231
      %v2242 = vpack.c.b16 %v2234, %v2233
      %2251 = vmatprep.subr.bf16.mxu0 0
      %2252 = vmatpush1.bf16.msra.mxu0 %v2235
      %2253 = vmatprep.subr.bf16.mxu0 0
      %2254 = vmatpush1.bf16.msra.mxu0 %v2236
      %2255 = vmatprep.subr.bf16.mxu0 0
      %2256 = vmatpush1.bf16.msra.mxu0 %v2237
      %2257 = vmatprep.subr.bf16.mxu0 0
      %2258 = vmatpush1.bf16.msra.mxu0 %v2238
      %2259 = vmatprep.subr.bf16.mxu0 0
      %2260 = vmatpush1.bf16.msra.mxu0 %v2239
      %2261 = vmatprep.subr.bf16.mxu0 0
      %2262 = vmatpush1.bf16.msra.mxu0 %v2240
      %2263 = vmatprep.subr.bf16.mxu0 0
      %2264 = vmatpush1.bf16.msra.mxu0 %v2241
      %2265 = vmatprep.subr.bf16.mxu0 0
      %2266 = vmatpush1.bf16.msra.mxu0 %v2242
      %2267 = vmatprep.subr.bf16.mxu0 0
      %2268 = vmatpush1.bf16.msra.mxu0 0
      %2269 = vmatprep.subr.bf16.mxu0 0
      %2270 = vmatpush1.bf16.msra.mxu0 0
      %2271 = vmatprep.subr.bf16.mxu0 0
      %2272 = vmatpush1.bf16.msra.mxu0 0
      %2273 = vmatprep.subr.bf16.mxu0 0
      %2274 = vmatpush1.bf16.msra.mxu0 0
      %2275 = vmatprep.subr.bf16.mxu0 0
      %2276 = vmatpush1.bf16.msra.mxu0 0
      %2277 = vmatprep.subr.bf16.mxu0 0
      %2278 = vmatpush1.bf16.msra.mxu0 0
      %2279 = vmatprep.subr.bf16.mxu0 0
      %2280 = vmatpush1.bf16.msra.mxu0 0
      %2281 = vmatprep.subr.bf16.mxu0 0
      %2282 = vmatpush1.bf16.msra.mxu0 0
      %2283 = vmatprep.mubr.bf16.mxu0 0
      %2284 = vmatmul.mubr.bf16.gmra.mrb[0].mxu0 %v2177
      %v2285 = vpop.f32.mrb[0].mxu0
      %v2286 = vadd.f32 %v2201, %v2285
      %v2287 = vpop.f32.mrb[0].mxu0
      %v2288 = vpop.f32.mrb[0].mxu0
      %v2289 = vadd.f32 %v2201, %v2288
      %v2290 = vpop.f32.mrb[0].mxu0
      %2291 = vmatprep.mubr.bf16.mxu0 0
      %2292 = vmatmul.mubr.bf16.gmra.mrb[0].mxu0 %v2178
      %v2293 = vpop.f32.mrb[0].mxu0
      %v2294 = vadd.f32 %v2201, %v2293
      %v2295 = vpop.f32.mrb[0].mxu0
      %v2296 = vpop.f32.mrb[0].mxu0
      %v2297 = vadd.f32 %v2201, %v2296
      %v2298 = vpop.f32.mrb[0].mxu0
      %2299 = vmatprep.mubr.bf16.mxu0 0
      %2300 = vmatmul.mubr.bf16.gmra.mrb[0].mxu0 %v2179
      %v2301 = vpop.f32.mrb[0].mxu0
      %v2302 = vadd.f32 %v2201, %v2301
      %v2303 = vpop.f32.mrb[0].mxu0
      %v2304 = vpop.f32.mrb[0].mxu0
      %v2305 = vadd.f32 %v2201, %v2304
      %v2306 = vpop.f32.mrb[0].mxu0
      %2307 = vdwg.mxu0
      %v2308 = vadd.f32 %v1905, %v2286
      %v2309 = vadd.f32 %v1906, %v2289
      %v2310 = vadd.f32 %v1907, %v2294
      %v2311 = vadd.f32 %v1908, %v2297
      %v2312 = vadd.f32 %v1909, %v2302
      %v2313 = vadd.f32 %v1910, %v2305
      %2314 = vst.msk [vmem:[%s729] sm:$0xff] %vm838, %v2308
      %2315 = vst.msk [vmem:[%s729 + $0x8] sm:$0xff] %vm838, %v2309
      %2316 = vst.msk [vmem:[%s729 + $0x10] sm:$0xff] %vm838, %v2310
      %2317 = vst.msk [vmem:[%s729 + $0x18] sm:$0xff] %vm838, %v2311
      %2318 = vst.msk [vmem:[%s729 + $0x20] sm:$0xff] %vm838, %v2312
      %2319 = vst.msk [vmem:[%s729 + $0x28] sm:$0xff] %vm838, %v2313
      %p2320 = scmp.lt.s32.totalorder %s26, 1
      %s2321 = scalar_select %p2320, %s26, 1
      %s2322 = smul.addr %s2321, 6
      %s2323 = smul.addr %s2322, 8
      %s2324 = scalar_lea.vmem %s15, %s2323
      // Predicated region
      $region81: #{autoencoder_forward.8} parent=79 // pred_check
        %p2325 = pneg %p434
      $region82: #{autoencoder_forward.8} parent=79 // pred_check_branch
        %2327 = sbr.rel (%p2325) target = $region84
      $region83: #{autoencoder_forward.8} parent=79 // pred_region
        _
      $region84: #{autoencoder_forward.8} parent=79 // pred_fallthru
        _
    $region80: #{autoencoder_forward.8} parent=5 // pred_fallthru
      _
    %p2328 = scmp.le.s32.totalorder 2, %s21
    // Predicated region
    $region85: #{autoencoder_forward.8} parent=5 // pred_check
      %p2329 = pneg %p2328
    $region86: #{autoencoder_forward.8} parent=5 // pred_check_branch
      %2331 = sbr.rel (%p2329) target = $region88
    $region87: #{autoencoder_forward.8} parent=5 // pred_region
      %s2332 = ssub.s32 %s21, 2
      // Predicated region
      $region89: #{autoencoder_forward.8} parent=87 // pred_check
        %p2333 = pneg %p440
      $region90: #{autoencoder_forward.8} parent=87 // pred_check_branch
        %2335 = sbr.rel (%p2333) target = $region92
      $region91: #{autoencoder_forward.8} parent=87 // pred_region
        %p2336 = scmp.lt.s32.totalorder %s27, 1
        %s2337 = scalar_select %p2336, %s27, 1
        %s2338 = smul.addr %s2337, 6
        %s2339 = smul.addr %s2338, 8
        %s2340 = scalar_lea.vmem %s15, %s2339
      $region92: #{autoencoder_forward.8} parent=87 // pred_fallthru
        _
    $region88: #{autoencoder_forward.8} parent=5 // pred_fallthru
      _
  $region6: #{autoencoder_forward.8} parent=0 // loop_footer
    %s25 = sadd.s32 1, %s21
  $region7: #{autoencoder_forward.8} parent=0 // loop_footer_branch
    %20 = sbr.rel target = $region3
  $region8: #{autoencoder_forward.8} parent=0 // loop_exit
    _

// kernel: autoencoder_forward.9
$region0: #{autoencoder_forward.9}
  #allocation0 [shape = 'u32[]', space=smem, size = 0x4, offset = 0x4, fixed_abs, tag = 'smem constant byte address 0x4 - core index']
  #allocation1 [shape = 'u32[144,128]{1,0:T(1,128)}', space=vmem, size = 0x12000, scoped, tag = 'internal scratch']
  %s0 = inlined_call_operand.vmem [shape: f32[2,2,24,64], index: 0, kind: input, shape index: {}]
  %s1 = inlined_call_operand.vmem [shape: f32[2,2,64], index: 1, kind: input, shape index: {}]
  %s2 = inlined_call_operand.vmem [shape: bf16[2,64,64], index: 2, kind: input, shape index: {}]
  %s3 = inlined_call_operand.vmem [shape: f32[2,1,64], index: 3, kind: input, shape index: {}]
  %s4 = inlined_call_operand.vmem [shape: bf16[2,64,128], index: 4, kind: input, shape index: {}]
  %s5 = inlined_call_operand.vmem [shape: f32[2,1,128], index: 5, kind: input, shape index: {}]
  %s6 = inlined_call_operand.vmem [shape: bf16[2,64,64], index: 6, kind: input, shape index: {}]
  %s7 = inlined_call_operand.vmem [shape: f32[2,1,64], index: 7, kind: input, shape index: {}]
  %s8 = inlined_call_operand.vmem [shape: f32[2,1,64], index: 8, kind: input, shape index: {}]
  %s9 = inlined_call_operand.vmem [shape: f32[2,1,64], index: 9, kind: input, shape index: {}]
  %s10 = inlined_call_operand.vmem [shape: bf16[128,1024], index: 10, kind: input, shape index: {}]
  %s11 = inlined_call_operand.vmem [shape: f32[1,1024], index: 11, kind: input, shape index: {}]
  %s12 = inlined_call_operand.vmem [shape: f32[2,1024], index: 12, kind: output, shape index: {}]
  %s13 = sld [smem:[#allocation0]]
  $region58: #{autoencoder_forward.9} parent=0
    _
  %s15 = ssub.s32 1, %s13
  %s16 = scalar_select 0, %s15, %s13
  // Predicated region
  $region2: #{autoencoder_forward.9} parent=0 // pred_check
    _
  $region3: #{autoencoder_forward.9} parent=0 // pred_check_branch
    %18 = sbr.rel (0) target = $region5
  $region4: #{autoencoder_forward.9} parent=0 // pred_region
    _
  $region5: #{autoencoder_forward.9} parent=0 // pred_fallthru
    _
  // Predicated region
  $region6: #{autoencoder_forward.9} parent=0 // pred_check
    _
  $region7: #{autoencoder_forward.9} parent=0 // pred_check_branch
    %20 = sbr.rel (0) target = $region9
  $region8: #{autoencoder_forward.9} parent=0 // pred_region
    _
  $region9: #{autoencoder_forward.9} parent=0 // pred_fallthru
    _
  // Predicated region
  $region10: #{autoencoder_forward.9} parent=0 // pred_check
    _
  $region11: #{autoencoder_forward.9} parent=0 // pred_check_branch
    %22 = sbr.rel (0) target = $region13
  $region12: #{autoencoder_forward.9} parent=0 // pred_region
    _
  $region13: #{autoencoder_forward.9} parent=0 // pred_fallthru
    _
  // Predicated region
  $region14: #{autoencoder_forward.9} parent=0 // pred_check
    _
  $region15: #{autoencoder_forward.9} parent=0 // pred_check_branch
    %24 = sbr.rel (0) target = $region17
  $region16: #{autoencoder_forward.9} parent=0 // pred_region
    _
  $region17: #{autoencoder_forward.9} parent=0 // pred_fallthru
    _
  // Predicated region
  $region18: #{autoencoder_forward.9} parent=0 // pred_check
    _
  $region19: #{autoencoder_forward.9} parent=0 // pred_check_branch
    %26 = sbr.rel (0) target = $region21
  $region20: #{autoencoder_forward.9} parent=0 // pred_region
    _
  $region21: #{autoencoder_forward.9} parent=0 // pred_fallthru
    _
  // Predicated region
  $region22: #{autoencoder_forward.9} parent=0 // pred_check
    _
  $region23: #{autoencoder_forward.9} parent=0 // pred_check_branch
    %28 = sbr.rel (0) target = $region25
  $region24: #{autoencoder_forward.9} parent=0 // pred_region
    _
  $region25: #{autoencoder_forward.9} parent=0 // pred_fallthru
    _
  // Predicated region
  $region26: #{autoencoder_forward.9} parent=0 // pred_check
    _
  $region27: #{autoencoder_forward.9} parent=0 // pred_check_branch
    %30 = sbr.rel (0) target = $region29
  $region28: #{autoencoder_forward.9} parent=0 // pred_region
    _
  $region29: #{autoencoder_forward.9} parent=0 // pred_fallthru
    _
  // Predicated region
  $region30: #{autoencoder_forward.9} parent=0 // pred_check
    _
  $region31: #{autoencoder_forward.9} parent=0 // pred_check_branch
    %32 = sbr.rel (0) target = $region33
  $region32: #{autoencoder_forward.9} parent=0 // pred_region
    _
  $region33: #{autoencoder_forward.9} parent=0 // pred_fallthru
    _
  // Predicated region
  $region34: #{autoencoder_forward.9} parent=0 // pred_check
    _
  $region35: #{autoencoder_forward.9} parent=0 // pred_check_branch
    %34 = sbr.rel (0) target = $region37
  $region36: #{autoencoder_forward.9} parent=0 // pred_region
    _
  $region37: #{autoencoder_forward.9} parent=0 // pred_fallthru
    _
  // Predicated region
  $region38: #{autoencoder_forward.9} parent=0 // pred_check
    _
  $region39: #{autoencoder_forward.9} parent=0 // pred_check_branch
    %36 = sbr.rel (0) target = $region41
  $region40: #{autoencoder_forward.9} parent=0 // pred_region
    _
  $region41: #{autoencoder_forward.9} parent=0 // pred_fallthru
    _
  // Predicated region
  $region42: #{autoencoder_forward.9} parent=0 // pred_check
    _
  $region43: #{autoencoder_forward.9} parent=0 // pred_check_branch
    %38 = sbr.rel (0) target = $region45
  $region44: #{autoencoder_forward.9} parent=0 // pred_region
    _
  $region45: #{autoencoder_forward.9} parent=0 // pred_fallthru
    _
  // Predicated region
  $region46: #{autoencoder_forward.9} parent=0 // pred_check
    _
  $region47: #{autoencoder_forward.9} parent=0 // pred_check_branch
    %40 = sbr.rel (0) target = $region49
  $region48: #{autoencoder_forward.9} parent=0 // pred_region
    _
  $region49: #{autoencoder_forward.9} parent=0 // pred_fallthru
    _
  %v42 = vld [vmem:[%s0] sm:$0xff]
  %v43 = vld [vmem:[%s0 + $0x8] sm:$0xff]
  %v44 = vld [vmem:[%s0 + $0x10] sm:$0xff]
  %v45 = vld [vmem:[%s0 + $0x18] sm:$0xff]
  %v46 = vld [vmem:[%s0 + $0x20] sm:$0xff]
  %v47 = vld [vmem:[%s0 + $0x28] sm:$0xff]
  %v48 = vld [vmem:[%s0 + $0x30] sm:$0xff]
  %v49 = vld [vmem:[%s0 + $0x38] sm:$0xff]
  %v50 = vld [vmem:[%s0 + $0x40] sm:$0xff]
  %v51 = vld [vmem:[%s0 + $0x48] sm:$0xff]
  %v52 = vld [vmem:[%s0 + $0x50] sm:$0xff]
  %v53 = vld [vmem:[%s0 + $0x58] sm:$0xff]
  %v54 = vld [vmem:[%s1] sm:$0x3]
  %v55 = vpack.c.bf16 %v54, %v54
  %v56 = vld [vmem:[%s2] sm:$0xf]
  %v57 = vld [vmem:[%s2 + $0x4] sm:$0xf]
  %v58 = vld [vmem:[%s2 + $0x8] sm:$0xf]
  %v59 = vld [vmem:[%s2 + $0xc] sm:$0xf]
  %v60 = vld [vmem:[%s2 + $0x10] sm:$0xf]
  %v61 = vld [vmem:[%s2 + $0x14] sm:$0xf]
  %v62 = vld [vmem:[%s2 + $0x18] sm:$0xf]
  %v63 = vld [vmem:[%s2 + $0x1c] sm:$0xf]
  %v64 = vld [vmem:[%s3] sm:$0x1]
  %v66 = vlaneseq
  %v67 = vshrl.u32 %v66, 7
  %v68 = vsub.s32 0, %v67
  %v69 = vrot.slane %v64, %v68
  %v79 = vunpack.c.l.b16 %v56
  %v80 = vunpack.c.l.b16 %v57
  %v81 = vunpack.c.l.b16 %v58
  %v82 = vunpack.c.l.b16 %v59
  %v83 = vunpack.c.l.b16 %v60
  %v84 = vunpack.c.l.b16 %v61
  %v85 = vunpack.c.l.b16 %v62
  %v86 = vunpack.c.l.b16 %v63
  %v87 = vpack.c.b16 %v80, %v79
  %v88 = vpack.c.b16 %v82, %v81
  %v89 = vpack.c.b16 %v84, %v83
  %v90 = vpack.c.b16 %v86, %v85
  %vm95 = vcmask 523264
  %v97 = vsel %vm95, %v55, 0
  %99 = vmatprep.subr.bf16.mxu0 0
  %100 = vmatpush1.bf16.msra.mxu0 %v87
  %101 = vmatprep.subr.bf16.mxu0 0
  %102 = vmatpush1.bf16.msra.mxu0 %v88
  %103 = vmatprep.subr.bf16.mxu0 0
  %104 = vmatpush1.bf16.msra.mxu0 %v89
  %105 = vmatprep.subr.bf16.mxu0 0
  %106 = vmatpush1.bf16.msra.mxu0 %v90
  %107 = vmatprep.subr.bf16.mxu0 0
  %108 = vmatpush1.bf16.msra.mxu0 0
  %109 = vmatprep.subr.bf16.mxu0 0
  %110 = vmatpush1.bf16.msra.mxu0 0
  %111 = vmatprep.subr.bf16.mxu0 0
  %112 = vmatpush1.bf16.msra.mxu0 0
  %113 = vmatprep.subr.bf16.mxu0 0
  %114 = vmatpush1.bf16.msra.mxu0 0
  %115 = vmatprep.subr.bf16.mxu0 0
  %116 = vmatpush1.bf16.msra.mxu0 0
  %117 = vmatprep.subr.bf16.mxu0 0
  %118 = vmatpush1.bf16.msra.mxu0 0
  %119 = vmatprep.subr.bf16.mxu0 0
  %120 = vmatpush1.bf16.msra.mxu0 0
  %121 = vmatprep.subr.bf16.mxu0 0
  %122 = vmatpush1.bf16.msra.mxu0 0
  %123 = vmatprep.subr.bf16.mxu0 0
  %124 = vmatpush1.bf16.msra.mxu0 0
  %125 = vmatprep.subr.bf16.mxu0 0
  %126 = vmatpush1.bf16.msra.mxu0 0
  %127 = vmatprep.subr.bf16.mxu0 0
  %128 = vmatpush1.bf16.msra.mxu0 0
  %129 = vmatprep.subr.bf16.mxu0 0
  %130 = vmatpush1.bf16.msra.mxu0 0
  %131 = vmatprep.mubr.bf16.mxu0 0
  %132 = vmatmul.mubr.bf16.gmra.mrb[0].mxu0 %v97
  %v133 = vpop.f32.mrb[0].mxu0
  %v134 = vadd.f32 %v69, %v133
  %v135 = vpop.f32.mrb[0].mxu0
  %v136 = vpop.f32.mrb[0].mxu0
  %v137 = vpop.f32.mrb[0].mxu0
  %138 = vdwg.mxu0
  %v139 = vpack.c.bf16 %v49, %v48
  %v140 = vpack.c.bf16 %v51, %v50
  %v141 = vpack.c.bf16 %v53, %v52
  %v142 = vld [vmem:[%s4] sm:$0xf]
  %v143 = vld [vmem:[%s4 + $0x4] sm:$0xf]
  %v144 = vld [vmem:[%s4 + $0x8] sm:$0xf]
  %v145 = vld [vmem:[%s4 + $0xc] sm:$0xf]
  %v146 = vld [vmem:[%s4 + $0x10] sm:$0xf]
  %v147 = vld [vmem:[%s4 + $0x14] sm:$0xf]
  %v148 = vld [vmem:[%s4 + $0x18] sm:$0xf]
  %v149 = vld [vmem:[%s4 + $0x1c] sm:$0xf]
  %v150 = vld [vmem:[%s5] sm:$0x1]
  %v152 = vlaneseq
  %v153 = vshrl.u32 %v152, 7
  %v154 = vsub.s32 0, %v153
  %v155 = vrot.slane %v150, %v154
  %v165 = vunpack.c.l.b16 %v142
  %v166 = vunpack.c.l.b16 %v143
  %v167 = vunpack.c.l.b16 %v144
  %v168 = vunpack.c.l.b16 %v145
  %v169 = vunpack.c.l.b16 %v146
  %v170 = vunpack.c.l.b16 %v147
  %v171 = vunpack.c.l.b16 %v148
  %v172 = vunpack.c.l.b16 %v149
  %v173 = vpack.c.b16 %v166, %v165
  %v174 = vpack.c.b16 %v168, %v167
  %v175 = vpack.c.b16 %v170, %v169
  %v176 = vpack.c.b16 %v172, %v171
  %v182 = vsel %vm95, %v139, 0
  %v185 = vsel %vm95, %v140, 0
  %v188 = vsel %vm95, %v141, 0
  %190 = vmatprep.subr.bf16.mxu0 0
  %191 = vmatpush1.bf16.msra.mxu0 %v173
  %192 = vmatprep.subr.bf16.mxu0 0
  %193 = vmatpush1.bf16.msra.mxu0 %v174
  %194 = vmatprep.subr.bf16.mxu0 0
  %195 = vmatpush1.bf16.msra.mxu0 %v175
  %196 = vmatprep.subr.bf16.mxu0 0
  %197 = vmatpush1.bf16.msra.mxu0 %v176
  %198 = vmatprep.subr.bf16.mxu0 0
  %199 = vmatpush1.bf16.msra.mxu0 0
  %200 = vmatprep.subr.bf16.mxu0 0
  %201 = vmatpush1.bf16.msra.mxu0 0
  %202 = vmatprep.subr.bf16.mxu0 0
  %203 = vmatpush1.bf16.msra.mxu0 0
  %204 = vmatprep.subr.bf16.mxu0 0
  %205 = vmatpush1.bf16.msra.mxu0 0
  %206 = vmatprep.subr.bf16.mxu0 0
  %207 = vmatpush1.bf16.msra.mxu0 0
  %208 = vmatprep.subr.bf16.mxu0 0
  %209 = vmatpush1.bf16.msra.mxu0 0
  %210 = vmatprep.subr.bf16.mxu0 0
  %211 = vmatpush1.bf16.msra.mxu0 0
  %212 = vmatprep.subr.bf16.mxu0 0
  %213 = vmatpush1.bf16.msra.mxu0 0
  %214 = vmatprep.subr.bf16.mxu0 0
  %215 = vmatpush1.bf16.msra.mxu0 0
  %216 = vmatprep.subr.bf16.mxu0 0
  %217 = vmatpush1.bf16.msra.mxu0 0
  %218 = vmatprep.subr.bf16.mxu0 0
  %219 = vmatpush1.bf16.msra.mxu0 0
  %220 = vmatprep.subr.bf16.mxu0 0
  %221 = vmatpush1.bf16.msra.mxu0 0
  %222 = vmatprep.mubr.bf16.mxu0 0
  %223 = vmatmul.mubr.bf16.gmra.mrb[0].mxu0 %v182
  %v224 = vpop.f32.mrb[0].mxu0
  %v225 = vadd.f32 %v155, %v224
  %v226 = vpop.f32.mrb[0].mxu0
  %v227 = vpop.f32.mrb[0].mxu0
  %v228 = vadd.f32 %v155, %v227
  %v229 = vpop.f32.mrb[0].mxu0
  %230 = vmatprep.mubr.bf16.mxu0 0
  %231 = vmatmul.mubr.bf16.gmra.mrb[0].mxu0 %v185
  %v232 = vpop.f32.mrb[0].mxu0
  %v233 = vadd.f32 %v155, %v232
  %v234 = vpop.f32.mrb[0].mxu0
  %v235 = vpop.f32.mrb[0].mxu0
  %v236 = vadd.f32 %v155, %v235
  %v237 = vpop.f32.mrb[0].mxu0
  %238 = vmatprep.mubr.bf16.mxu0 0
  %239 = vmatmul.mubr.bf16.gmra.mrb[0].mxu0 %v188
  %v240 = vpop.f32.mrb[0].mxu0
  %v241 = vadd.f32 %v155, %v240
  %v242 = vpop.f32.mrb[0].mxu0
  %v243 = vpop.f32.mrb[0].mxu0
  %v244 = vadd.f32 %v155, %v243
  %v245 = vpop.f32.mrb[0].mxu0
  %246 = vdwg.mxu0
  %v249 = vunpack.c.l.s4 1966171168
  %v250 = vunpack.c.0.s8 %v249
  %v251 = vlaneseq
  %v252 = vshrl.u32 %v251, 7
  %v253 = vsub.s32 %v250, %v252
  %v254 = vrot.slane %v134, %v253
  %v255 = vcombine.high %v254, %v254
  %v257 = vunpack.c.l.s4 1966171168
  %v258 = vunpack.c.0.s8 %v257
  %v259 = vlaneseq
  %v260 = vshrl.u32 %v259, 7
  %v261 = vsub.s32 %v258, %v260
  %v262 = vrot.slane %v254, %v261
  %v264 = vunpack.c.l.s4 1966171168
  %v265 = vunpack.c.0.s8 %v264
  %v266 = vlaneseq
  %v267 = vshrl.u32 %v266, 7
  %v268 = vsub.s32 %v265, %v267
  %v269 = vrot.slane %v255, %v268
  %v272 = vpack.c.bf16 %v262, %v262
  %v273 = vpack.c.bf16 %v269, %v269
  %v274 = vpack.c.bf16 %v228, %v225
  %v275 = vpack.c.bf16 %v233, %v233
  %v276 = vpack.c.bf16 %v241, %v236
  %v277 = vpack.c.bf16 %v244, %v244
  %v279 = vsel %vm95, %v272, 0
  %v282 = vsel %vm95, %v274, 0
  %v285 = vsel %vm95, %v275, 0
  %287 = vmatprep.subr.bf16.mxu0 0
  %288 = vmatpush1.bf16.xpose.msra.mxu0 %v282
  %289 = vmatprep.subr.bf16.mxu0 0
  %290 = vmatpush1.bf16.xpose.msra.mxu0 %v285
  %291 = vmatprep.subr.bf16.mxu0 0
  %292 = vmatpush1.bf16.xpose.msra.mxu0 0
  %293 = vmatprep.subr.bf16.mxu0 0
  %294 = vmatpush1.bf16.xpose.msra.mxu0 0
  %295 = vmatprep.subr.bf16.mxu0 0
  %296 = vmatpush1.bf16.xpose.msra.mxu0 0
  %297 = vmatprep.subr.bf16.mxu0 0
  %298 = vmatpush1.bf16.xpose.msra.mxu0 0
  %299 = vmatprep.subr.bf16.mxu0 0
  %300 = vmatpush1.bf16.xpose.msra.mxu0 0
  %301 = vmatprep.subr.bf16.mxu0 0
  %302 = vmatpush1.bf16.xpose.msra.mxu0 0
  %303 = vmatprep.subr.bf16.mxu0 0
  %304 = vmatpush1.bf16.xpose.msra.mxu0 0
  %305 = vmatprep.subr.bf16.mxu0 0
  %306 = vmatpush1.bf16.xpose.msra.mxu0 0
  %307 = vmatprep.subr.bf16.mxu0 0
  %308 = vmatpush1.bf16.xpose.msra.mxu0 0
  %309 = vmatprep.subr.bf16.mxu0 0
  %310 = vmatpush1.bf16.xpose.msra.mxu0 0
  %311 = vmatprep.subr.bf16.mxu0 0
  %312 = vmatpush1.bf16.xpose.msra.mxu0 0
  %313 = vmatprep.subr.bf16.mxu0 0
  %314 = vmatpush1.bf16.xpose.msra.mxu0 0
  %315 = vmatprep.subr.bf16.mxu0 0
  %316 = vmatpush1.bf16.xpose.msra.mxu0 0
  %317 = vmatprep.subr.bf16.mxu0 0
  %318 = vmatpush1.bf16.xpose.msra.mxu0 0
  %319 = vmatprep.mubr.bf16.mxu0 0
  %320 = vmatmul.mubr.bf16.gmra.mrb[0].mxu0 %v279
  %v321 = vpop.f32.mrb[0].mxu0
  %v322 = vadd.f32 0.0, %v321
  %v323 = vpop.f32.mrb[0].mxu0
  %v324 = vpop.f32.mrb[0].mxu0
  %v325 = vpop.f32.mrb[0].mxu0
  %326 = vdwg.mxu0
  %v328 = vsel %vm95, %v273, 0
  %v331 = vsel %vm95, %v276, 0
  %v334 = vsel %vm95, %v277, 0
  %336 = vmatprep.subr.bf16.mxu0 0
  %337 = vmatpush1.bf16.xpose.msra.mxu0 %v331
  %338 = vmatprep.subr.bf16.mxu0 0
  %339 = vmatpush1.bf16.xpose.msra.mxu0 %v334
  %340 = vmatprep.subr.bf16.mxu0 0
  %341 = vmatpush1.bf16.xpose.msra.mxu0 0
  %342 = vmatprep.subr.bf16.mxu0 0
  %343 = vmatpush1.bf16.xpose.msra.mxu0 0
  %344 = vmatprep.subr.bf16.mxu0 0
  %345 = vmatpush1.bf16.xpose.msra.mxu0 0
  %346 = vmatprep.subr.bf16.mxu0 0
  %347 = vmatpush1.bf16.xpose.msra.mxu0 0
  %348 = vmatprep.subr.bf16.mxu0 0
  %349 = vmatpush1.bf16.xpose.msra.mxu0 0
  %350 = vmatprep.subr.bf16.mxu0 0
  %351 = vmatpush1.bf16.xpose.msra.mxu0 0
  %352 = vmatprep.subr.bf16.mxu0 0
  %353 = vmatpush1.bf16.xpose.msra.mxu0 0
  %354 = vmatprep.subr.bf16.mxu0 0
  %355 = vmatpush1.bf16.xpose.msra.mxu0 0
  %356 = vmatprep.subr.bf16.mxu0 0
  %357 = vmatpush1.bf16.xpose.msra.mxu0 0
  %358 = vmatprep.subr.bf16.mxu0 0
  %359 = vmatpush1.bf16.xpose.msra.mxu0 0
  %360 = vmatprep.subr.bf16.mxu0 0
  %361 = vmatpush1.bf16.xpose.msra.mxu0 0
  %362 = vmatprep.subr.bf16.mxu0 0
  %363 = vmatpush1.bf16.xpose.msra.mxu0 0
  %364 = vmatprep.subr.bf16.mxu0 0
  %365 = vmatpush1.bf16.xpose.msra.mxu0 0
  %366 = vmatprep.subr.bf16.mxu0 0
  %367 = vmatpush1.bf16.xpose.msra.mxu0 0
  %368 = vmatprep.mubr.bf16.mxu0 0
  %369 = vmatmul.mubr.bf16.gmra.mrb[0].mxu0 %v328
  %v370 = vpop.f32.mrb[0].mxu0
  %v371 = vadd.f32 0.0, %v370
  %v372 = vpop.f32.mrb[0].mxu0
  %v373 = vpop.f32.mrb[0].mxu0
  %v374 = vpop.f32.mrb[0].mxu0
  %375 = vdwg.mxu0
  %v376 = vmul.f32 %v322, 0.125
  %v377 = vmul.f32 %v371, 0.125
  %v378 = vlaneseq
  %v379 = vand.u32 %v378, 127
  %vm380 = vcmp.lt.s32.totalorder %v379, 17
  %v381 = vsel %vm380, 1, 0
  %vm382 = vcmp.eq.s32.totalorder %v381, 1
  %v383 = vsel %vm382, %v376, -1e+30
  %v384 = vsel %vm382, %v377, -1e+30
  %vm385 = vcmask 188416
  %v386 = vsel %vm385, %v383, -inf
  %387 = vmax.xlane.f32.xlu0 %v386
  %v388 = vpop.xlane.xlu0 %387
  %v389 = vsel %vm385, %v384, -inf
  %390 = vmax.xlane.f32.xlu0 %v389
  %v391 = vpop.xlane.xlu0 %390
  %v392 = vsub.f32 %v383, %v388
  %v393 = vsub.f32 %v384, %v391
  %v394 = vmul.f32 %v392, 1.442695
  %v395 = vpow.pop %v394
  %v396 = vmul.f32 %v393, 1.442695
  %v397 = vpow.pop %v396
  %v398 = vsel %vm385, %v395, 0.0
  %399 = vadd.xlane.f32.xlu0 %v398
  %v400 = vpop.xlane.xlu0 %399
  %v401 = vsel %vm385, %v397, 0.0
  %402 = vadd.xlane.f32.xlu0 %v401
  %v403 = vpop.xlane.xlu0 %402
  %v404 = vrcp.pop %v400
  %v405 = vrcp.pop %v403
  %v406 = vmul.f32 %v395, %v404
  %v407 = vmul.f32 %v397, %v405
  %v408 = vpack.c.bf16 %v406, %v406
  %v409 = vpack.c.bf16 %v407, %v407
  %412 = vrot.lane.b32.xlu0 %v274, 64
  %v413 = vpop.permute.xlu0 %412
  %414 = vrot.lane.b32.xlu0 %v275, 64
  %v415 = vpop.permute.xlu0 %414
  %vm417 = vcmask 195584
  %v419 = vsel %vm417, %v408, 0
  %vm421 = vcmask 1043456
  %v423 = vsel %vm421, %v415, 0
  %425 = vmatprep.subr.bf16.mxu0 0
  %426 = vmatpush1.bf16.msra.mxu0 %v413
  %427 = vmatprep.subr.bf16.mxu0 0
  %428 = vmatpush1.bf16.msra.mxu0 %v423
  %429 = vmatprep.subr.bf16.mxu0 0
  %430 = vmatpush1.bf16.msra.mxu0 0
  %431 = vmatprep.subr.bf16.mxu0 0
  %432 = vmatpush1.bf16.msra.mxu0 0
  %433 = vmatprep.subr.bf16.mxu0 0
  %434 = vmatpush1.bf16.msra.mxu0 0
  %435 = vmatprep.subr.bf16.mxu0 0
  %436 = vmatpush1.bf16.msra.mxu0 0
  %437 = vmatprep.subr.bf16.mxu0 0
  %438 = vmatpush1.bf16.msra.mxu0 0
  %439 = vmatprep.subr.bf16.mxu0 0
  %440 = vmatpush1.bf16.msra.mxu0 0
  %441 = vmatprep.subr.bf16.mxu0 0
  %442 = vmatpush1.bf16.msra.mxu0 0
  %443 = vmatprep.subr.bf16.mxu0 0
  %444 = vmatpush1.bf16.msra.mxu0 0
  %445 = vmatprep.subr.bf16.mxu0 0
  %446 = vmatpush1.bf16.msra.mxu0 0
  %447 = vmatprep.subr.bf16.mxu0 0
  %448 = vmatpush1.bf16.msra.mxu0 0
  %449 = vmatprep.subr.bf16.mxu0 0
  %450 = vmatpush1.bf16.msra.mxu0 0
  %451 = vmatprep.subr.bf16.mxu0 0
  %452 = vmatpush1.bf16.msra.mxu0 0
  %453 = vmatprep.subr.bf16.mxu0 0
  %454 = vmatpush1.bf16.msra.mxu0 0
  %455 = vmatprep.subr.bf16.mxu0 0
  %456 = vmatpush1.bf16.msra.mxu0 0
  %457 = vmatprep.mubr.bf16.mxu0 0
  %458 = vmatmul.mubr.bf16.gmra.mrb[0].mxu0 %v419
  %v459 = vpop.f32.mrb[0].mxu0
  %v460 = vadd.f32 0.0, %v459
  %v461 = vpop.f32.mrb[0].mxu0
  %v462 = vpop.f32.mrb[0].mxu0
  %v463 = vpop.f32.mrb[0].mxu0
  %464 = vdwg.mxu0
  %467 = vrot.lane.b32.xlu0 %v276, 64
  %v468 = vpop.permute.xlu0 %467
  %469 = vrot.lane.b32.xlu0 %v277, 64
  %v470 = vpop.permute.xlu0 %469
  %v473 = vsel %vm417, %v409, 0
  %v476 = vsel %vm421, %v470, 0
  %478 = vmatprep.subr.bf16.mxu0 0
  %479 = vmatpush1.bf16.msra.mxu0 %v468
  %480 = vmatprep.subr.bf16.mxu0 0
  %481 = vmatpush1.bf16.msra.mxu0 %v476
  %482 = vmatprep.subr.bf16.mxu0 0
  %483 = vmatpush1.bf16.msra.mxu0 0
  %484 = vmatprep.subr.bf16.mxu0 0
  %485 = vmatpush1.bf16.msra.mxu0 0
  %486 = vmatprep.subr.bf16.mxu0 0
  %487 = vmatpush1.bf16.msra.mxu0 0
  %488 = vmatprep.subr.bf16.mxu0 0
  %489 = vmatpush1.bf16.msra.mxu0 0
  %490 = vmatprep.subr.bf16.mxu0 0
  %491 = vmatpush1.bf16.msra.mxu0 0
  %492 = vmatprep.subr.bf16.mxu0 0
  %493 = vmatpush1.bf16.msra.mxu0 0
  %494 = vmatprep.subr.bf16.mxu0 0
  %495 = vmatpush1.bf16.msra.mxu0 0
  %496 = vmatprep.subr.bf16.mxu0 0
  %497 = vmatpush1.bf16.msra.mxu0 0
  %498 = vmatprep.subr.bf16.mxu0 0
  %499 = vmatpush1.bf16.msra.mxu0 0
  %500 = vmatprep.subr.bf16.mxu0 0
  %501 = vmatpush1.bf16.msra.mxu0 0
  %502 = vmatprep.subr.bf16.mxu0 0
  %503 = vmatpush1.bf16.msra.mxu0 0
  %504 = vmatprep.subr.bf16.mxu0 0
  %505 = vmatpush1.bf16.msra.mxu0 0
  %506 = vmatprep.subr.bf16.mxu0 0
  %507 = vmatpush1.bf16.msra.mxu0 0
  %508 = vmatprep.subr.bf16.mxu0 0
  %509 = vmatpush1.bf16.msra.mxu0 0
  %510 = vmatprep.mubr.bf16.mxu0 0
  %511 = vmatmul.mubr.bf16.gmra.mrb[0].mxu0 %v473
  %v512 = vpop.f32.mrb[0].mxu0
  %v513 = vadd.f32 0.0, %v512
  %v514 = vpop.f32.mrb[0].mxu0
  %v515 = vpop.f32.mrb[0].mxu0
  %v516 = vpop.f32.mrb[0].mxu0
  %517 = vdwg.mxu0
  %v518 = vpack.c.bf16 %v460, %v460
  %v519 = vpack.c.bf16 %v513, %v513
  %v520 = vld [vmem:[%s6] sm:$0xf]
  %v521 = vld [vmem:[%s6 + $0x4] sm:$0xf]
  %v522 = vld [vmem:[%s6 + $0x8] sm:$0xf]
  %v523 = vld [vmem:[%s6 + $0xc] sm:$0xf]
  %v524 = vld [vmem:[%s6 + $0x10] sm:$0xf]
  %v525 = vld [vmem:[%s6 + $0x14] sm:$0xf]
  %v526 = vld [vmem:[%s6 + $0x18] sm:$0xf]
  %v527 = vld [vmem:[%s6 + $0x1c] sm:$0xf]
  %v528 = vld [vmem:[%s7] sm:$0x1]
  %v530 = vlaneseq
  %v531 = vshrl.u32 %v530, 7
  %v532 = vsub.s32 0, %v531
  %v533 = vrot.slane %v528, %v532
  %v537 = vunpack.c.l.b16 %v518
  %v538 = vunpack.c.l.b16 %v519
  %v539 = vrot.slane %v538, 7
  %vm540 = vcmask 1041409
  %v541 = vsel %vm540, %v539, %v537
  %v542 = vpack.c.b16 %v541, %v541
  %v551 = vunpack.c.l.b16 %v520
  %v552 = vunpack.c.l.b16 %v521
  %v553 = vunpack.c.l.b16 %v522
  %v554 = vunpack.c.l.b16 %v523
  %v555 = vunpack.c.l.b16 %v524
  %v556 = vunpack.c.l.b16 %v525
  %v557 = vunpack.c.l.b16 %v526
  %v558 = vunpack.c.l.b16 %v527
  %v559 = vpack.c.b16 %v552, %v551
  %v560 = vpack.c.b16 %v554, %v553
  %v561 = vpack.c.b16 %v556, %v555
  %v562 = vpack.c.b16 %v558, %v557
  %v568 = vsel %vm95, %v542, 0
  %570 = vmatprep.subr.bf16.mxu0 0
  %571 = vmatpush1.bf16.msra.mxu0 %v559
  %572 = vmatprep.subr.bf16.mxu0 0
  %573 = vmatpush1.bf16.msra.mxu0 %v560
  %574 = vmatprep.subr.bf16.mxu0 0
  %575 = vmatpush1.bf16.msra.mxu0 %v561
  %576 = vmatprep.subr.bf16.mxu0 0
  %577 = vmatpush1.bf16.msra.mxu0 %v562
  %578 = vmatprep.subr.bf16.mxu0 0
  %579 = vmatpush1.bf16.msra.mxu0 0
  %580 = vmatprep.subr.bf16.mxu0 0
  %581 = vmatpush1.bf16.msra.mxu0 0
  %582 = vmatprep.subr.bf16.mxu0 0
  %583 = vmatpush1.bf16.msra.mxu0 0
  %584 = vmatprep.subr.bf16.mxu0 0
  %585 = vmatpush1.bf16.msra.mxu0 0
  %586 = vmatprep.subr.bf16.mxu0 0
  %587 = vmatpush1.bf16.msra.mxu0 0
  %588 = vmatprep.subr.bf16.mxu0 0
  %589 = vmatpush1.bf16.msra.mxu0 0
  %590 = vmatprep.subr.bf16.mxu0 0
  %591 = vmatpush1.bf16.msra.mxu0 0
  %592 = vmatprep.subr.bf16.mxu0 0
  %593 = vmatpush1.bf16.msra.mxu0 0
  %594 = vmatprep.subr.bf16.mxu0 0
  %595 = vmatpush1.bf16.msra.mxu0 0
  %596 = vmatprep.subr.bf16.mxu0 0
  %597 = vmatpush1.bf16.msra.mxu0 0
  %598 = vmatprep.subr.bf16.mxu0 0
  %599 = vmatpush1.bf16.msra.mxu0 0
  %600 = vmatprep.subr.bf16.mxu0 0
  %601 = vmatpush1.bf16.msra.mxu0 0
  %602 = vmatprep.mubr.bf16.mxu0 0
  %603 = vmatmul.mubr.bf16.gmra.mrb[0].mxu0 %v568
  %v604 = vpop.f32.mrb[0].mxu0
  %v605 = vadd.f32 %v533, %v604
  %v606 = vpop.f32.mrb[0].mxu0
  %v607 = vpop.f32.mrb[0].mxu0
  %v608 = vpop.f32.mrb[0].mxu0
  %609 = vdwg.mxu0
  %v610 = vadd.f32 %v54, %v605
  %v611 = vld [vmem:[%s8] sm:$0x1]
  %v612 = vld [vmem:[%s9] sm:$0x1]
  %vm613 = vcmask 517120
  %v614 = vsel %vm613, %v610, 0.0
  %615 = vadd.xlane.f32.xlu0 %v614
  %v616 = vpop.xlane.xlu0 %615
  %v617 = vrcp.pop 64.0
  %v618 = vmul.f32 %v616, %v617
  %v619 = vsub.f32 %v610, %v618
  %v620 = vmul.f32 %v619, %v619
  %v621 = vsel %vm613, %v620, 0.0
  %622 = vadd.xlane.f32.xlu0 %v621
  %v623 = vpop.xlane.xlu0 %622
  %v624 = vmul.f32 %v623, %v617
  %v625 = vadd.f32 %v624, 1e-05
  %v626 = vrsqrt.pop %v625
  %v627 = vmul.f32 %v619, %v626
  %v629 = vlaneseq
  %v630 = vshrl.u32 %v629, 7
  %v631 = vsub.s32 0, %v630
  %v632 = vrot.slane %v611, %v631
  %v634 = vmul.f32 %v627, %v632
  %v636 = vlaneseq
  %v637 = vshrl.u32 %v636, 7
  %v638 = vsub.s32 0, %v637
  %v639 = vrot.slane %v612, %v638
  %v641 = vadd.f32 %v634, %v639
  %s642 = scalar_lea.vmem %s1, 2
  %v643 = vld [vmem:[%s642] sm:$0x3]
  %v644 = vpack.c.bf16 %v643, %v643
  %s645 = scalar_lea.vmem %s2, 32
  %v646 = vld [vmem:[%s645] sm:$0xf]
  %v647 = vld [vmem:[%s645 + $0x4] sm:$0xf]
  %v648 = vld [vmem:[%s645 + $0x8] sm:$0xf]
  %v649 = vld [vmem:[%s645 + $0xc] sm:$0xf]
  %v650 = vld [vmem:[%s645 + $0x10] sm:$0xf]
  %v651 = vld [vmem:[%s645 + $0x14] sm:$0xf]
  %v652 = vld [vmem:[%s645 + $0x18] sm:$0xf]
  %v653 = vld [vmem:[%s645 + $0x1c] sm:$0xf]
  %s654 = scalar_lea.vmem %s3, 1
  %v655 = vld [vmem:[%s654] sm:$0x1]
  %v657 = vlaneseq
  %v658 = vshrl.u32 %v657, 7
  %v659 = vsub.s32 0, %v658
  %v660 = vrot.slane %v655, %v659
  %v670 = vunpack.c.l.b16 %v646
  %v671 = vunpack.c.l.b16 %v647
  %v672 = vunpack.c.l.b16 %v648
  %v673 = vunpack.c.l.b16 %v649
  %v674 = vunpack.c.l.b16 %v650
  %v675 = vunpack.c.l.b16 %v651
  %v676 = vunpack.c.l.b16 %v652
  %v677 = vunpack.c.l.b16 %v653
  %v678 = vpack.c.b16 %v671, %v670
  %v679 = vpack.c.b16 %v673, %v672
  %v680 = vpack.c.b16 %v675, %v674
  %v681 = vpack.c.b16 %v677, %v676
  %v687 = vsel %vm95, %v644, 0
  %689 = vmatprep.subr.bf16.mxu0 0
  %690 = vmatpush1.bf16.msra.mxu0 %v678
  %691 = vmatprep.subr.bf16.mxu0 0
  %692 = vmatpush1.bf16.msra.mxu0 %v679
  %693 = vmatprep.subr.bf16.mxu0 0
  %694 = vmatpush1.bf16.msra.mxu0 %v680
  %695 = vmatprep.subr.bf16.mxu0 0
  %696 = vmatpush1.bf16.msra.mxu0 %v681
  %697 = vmatprep.subr.bf16.mxu0 0
  %698 = vmatpush1.bf16.msra.mxu0 0
  %699 = vmatprep.subr.bf16.mxu0 0
  %700 = vmatpush1.bf16.msra.mxu0 0
  %701 = vmatprep.subr.bf16.mxu0 0
  %702 = vmatpush1.bf16.msra.mxu0 0
  %703 = vmatprep.subr.bf16.mxu0 0
  %704 = vmatpush1.bf16.msra.mxu0 0
  %705 = vmatprep.subr.bf16.mxu0 0
  %706 = vmatpush1.bf16.msra.mxu0 0
  %707 = vmatprep.subr.bf16.mxu0 0
  %708 = vmatpush1.bf16.msra.mxu0 0
  %709 = vmatprep.subr.bf16.mxu0 0
  %710 = vmatpush1.bf16.msra.mxu0 0
  %711 = vmatprep.subr.bf16.mxu0 0
  %712 = vmatpush1.bf16.msra.mxu0 0
  %713 = vmatprep.subr.bf16.mxu0 0
  %714 = vmatpush1.bf16.msra.mxu0 0
  %715 = vmatprep.subr.bf16.mxu0 0
  %716 = vmatpush1.bf16.msra.mxu0 0
  %717 = vmatprep.subr.bf16.mxu0 0
  %718 = vmatpush1.bf16.msra.mxu0 0
  %719 = vmatprep.subr.bf16.mxu0 0
  %720 = vmatpush1.bf16.msra.mxu0 0
  %721 = vmatprep.mubr.bf16.mxu0 0
  %722 = vmatmul.mubr.bf16.gmra.mrb[0].mxu0 %v687
  %v723 = vpop.f32.mrb[0].mxu0
  %v724 = vadd.f32 %v660, %v723
  %v725 = vpop.f32.mrb[0].mxu0
  %v726 = vpop.f32.mrb[0].mxu0
  %v727 = vpop.f32.mrb[0].mxu0
  %728 = vdwg.mxu0
  %v729 = vpack.c.bf16 %v43, %v42
  %v730 = vpack.c.bf16 %v45, %v44
  %v731 = vpack.c.bf16 %v47, %v46
  %s732 = scalar_lea.vmem %s4, 32
  %v733 = vld [vmem:[%s732] sm:$0xf]
  %v734 = vld [vmem:[%s732 + $0x4] sm:$0xf]
  %v735 = vld [vmem:[%s732 + $0x8] sm:$0xf]
  %v736 = vld [vmem:[%s732 + $0xc] sm:$0xf]
  %v737 = vld [vmem:[%s732 + $0x10] sm:$0xf]
  %v738 = vld [vmem:[%s732 + $0x14] sm:$0xf]
  %v739 = vld [vmem:[%s732 + $0x18] sm:$0xf]
  %v740 = vld [vmem:[%s732 + $0x1c] sm:$0xf]
  %s741 = scalar_lea.vmem %s5, 1
  %v742 = vld [vmem:[%s741] sm:$0x1]
  %v744 = vlaneseq
  %v745 = vshrl.u32 %v744, 7
  %v746 = vsub.s32 0, %v745
  %v747 = vrot.slane %v742, %v746
  %v757 = vunpack.c.l.b16 %v733
  %v758 = vunpack.c.l.b16 %v734
  %v759 = vunpack.c.l.b16 %v735
  %v760 = vunpack.c.l.b16 %v736
  %v761 = vunpack.c.l.b16 %v737
  %v762 = vunpack.c.l.b16 %v738
  %v763 = vunpack.c.l.b16 %v739
  %v764 = vunpack.c.l.b16 %v740
  %v765 = vpack.c.b16 %v758, %v757
  %v766 = vpack.c.b16 %v760, %v759
  %v767 = vpack.c.b16 %v762, %v761
  %v768 = vpack.c.b16 %v764, %v763
  %v774 = vsel %vm95, %v729, 0
  %v777 = vsel %vm95, %v730, 0
  %v780 = vsel %vm95, %v731, 0
  %782 = vmatprep.subr.bf16.mxu0 0
  %783 = vmatpush1.bf16.msra.mxu0 %v765
  %784 = vmatprep.subr.bf16.mxu0 0
  %785 = vmatpush1.bf16.msra.mxu0 %v766
  %786 = vmatprep.subr.bf16.mxu0 0
  %787 = vmatpush1.bf16.msra.mxu0 %v767
  %788 = vmatprep.subr.bf16.mxu0 0
  %789 = vmatpush1.bf16.msra.mxu0 %v768
  %790 = vmatprep.subr.bf16.mxu0 0
  %791 = vmatpush1.bf16.msra.mxu0 0
  %792 = vmatprep.subr.bf16.mxu0 0
  %793 = vmatpush1.bf16.msra.mxu0 0
  %794 = vmatprep.subr.bf16.mxu0 0
  %795 = vmatpush1.bf16.msra.mxu0 0
  %796 = vmatprep.subr.bf16.mxu0 0
  %797 = vmatpush1.bf16.msra.mxu0 0
  %798 = vmatprep.subr.bf16.mxu0 0
  %799 = vmatpush1.bf16.msra.mxu0 0
  %800 = vmatprep.subr.bf16.mxu0 0
  %801 = vmatpush1.bf16.msra.mxu0 0
  %802 = vmatprep.subr.bf16.mxu0 0
  %803 = vmatpush1.bf16.msra.mxu0 0
  %804 = vmatprep.subr.bf16.mxu0 0
  %805 = vmatpush1.bf16.msra.mxu0 0
  %806 = vmatprep.subr.bf16.mxu0 0
  %807 = vmatpush1.bf16.msra.mxu0 0
  %808 = vmatprep.subr.bf16.mxu0 0
  %809 = vmatpush1.bf16.msra.mxu0 0
  %810 = vmatprep.subr.bf16.mxu0 0
  %811 = vmatpush1.bf16.msra.mxu0 0
  %812 = vmatprep.subr.bf16.mxu0 0
  %813 = vmatpush1.bf16.msra.mxu0 0
  %814 = vmatprep.mubr.bf16.mxu0 0
  %815 = vmatmul.mubr.bf16.gmra.mrb[0].mxu0 %v774
  %v816 = vpop.f32.mrb[0].mxu0
  %v817 = vadd.f32 %v747, %v816
  %v818 = vpop.f32.mrb[0].mxu0
  %v819 = vpop.f32.mrb[0].mxu0
  %v820 = vadd.f32 %v747, %v819
  %v821 = vpop.f32.mrb[0].mxu0
  %822 = vmatprep.mubr.bf16.mxu0 0
  %823 = vmatmul.mubr.bf16.gmra.mrb[0].mxu0 %v777
  %v824 = vpop.f32.mrb[0].mxu0
  %v825 = vadd.f32 %v747, %v824
  %v826 = vpop.f32.mrb[0].mxu0
  %v827 = vpop.f32.mrb[0].mxu0
  %v828 = vadd.f32 %v747, %v827
  %v829 = vpop.f32.mrb[0].mxu0
  %830 = vmatprep.mubr.bf16.mxu0 0
  %831 = vmatmul.mubr.bf16.gmra.mrb[0].mxu0 %v780
  %v832 = vpop.f32.mrb[0].mxu0
  %v833 = vadd.f32 %v747, %v832
  %v834 = vpop.f32.mrb[0].mxu0
  %v835 = vpop.f32.mrb[0].mxu0
  %v836 = vadd.f32 %v747, %v835
  %v837 = vpop.f32.mrb[0].mxu0
  %838 = vdwg.mxu0
  %v841 = vunpack.c.l.s4 1966171168
  %v842 = vunpack.c.0.s8 %v841
  %v843 = vlaneseq
  %v844 = vshrl.u32 %v843, 7
  %v845 = vsub.s32 %v842, %v844
  %v846 = vrot.slane %v724, %v845
  %v847 = vcombine.high %v846, %v846
  %v849 = vunpack.c.l.s4 1966171168
  %v850 = vunpack.c.0.s8 %v849
  %v851 = vlaneseq
  %v852 = vshrl.u32 %v851, 7
  %v853 = vsub.s32 %v850, %v852
  %v854 = vrot.slane %v846, %v853
  %v856 = vunpack.c.l.s4 1966171168
  %v857 = vunpack.c.0.s8 %v856
  %v858 = vlaneseq
  %v859 = vshrl.u32 %v858, 7
  %v860 = vsub.s32 %v857, %v859
  %v861 = vrot.slane %v847, %v860
  %v864 = vpack.c.bf16 %v854, %v854
  %v865 = vpack.c.bf16 %v861, %v861
  %v866 = vpack.c.bf16 %v820, %v817
  %v867 = vpack.c.bf16 %v825, %v825
  %v868 = vpack.c.bf16 %v833, %v828
  %v869 = vpack.c.bf16 %v836, %v836
  %v871 = vsel %vm95, %v864, 0
  %v874 = vsel %vm95, %v866, 0
  %v877 = vsel %vm95, %v867, 0
  %879 = vmatprep.subr.bf16.mxu0 0
  %880 = vmatpush1.bf16.xpose.msra.mxu0 %v874
  %881 = vmatprep.subr.bf16.mxu0 0
  %882 = vmatpush1.bf16.xpose.msra.mxu0 %v877
  %883 = vmatprep.subr.bf16.mxu0 0
  %884 = vmatpush1.bf16.xpose.msra.mxu0 0
  %885 = vmatprep.subr.bf16.mxu0 0
  %886 = vmatpush1.bf16.xpose.msra.mxu0 0
  %887 = vmatprep.subr.bf16.mxu0 0
  %888 = vmatpush1.bf16.xpose.msra.mxu0 0
  %889 = vmatprep.subr.bf16.mxu0 0
  %890 = vmatpush1.bf16.xpose.msra.mxu0 0
  %891 = vmatprep.subr.bf16.mxu0 0
  %892 = vmatpush1.bf16.xpose.msra.mxu0 0
  %893 = vmatprep.subr.bf16.mxu0 0
  %894 = vmatpush1.bf16.xpose.msra.mxu0 0
  %895 = vmatprep.subr.bf16.mxu0 0
  %896 = vmatpush1.bf16.xpose.msra.mxu0 0
  %897 = vmatprep.subr.bf16.mxu0 0
  %898 = vmatpush1.bf16.xpose.msra.mxu0 0
  %899 = vmatprep.subr.bf16.mxu0 0
  %900 = vmatpush1.bf16.xpose.msra.mxu0 0
  %901 = vmatprep.subr.bf16.mxu0 0
  %902 = vmatpush1.bf16.xpose.msra.mxu0 0
  %903 = vmatprep.subr.bf16.mxu0 0
  %904 = vmatpush1.bf16.xpose.msra.mxu0 0
  %905 = vmatprep.subr.bf16.mxu0 0
  %906 = vmatpush1.bf16.xpose.msra.mxu0 0
  %907 = vmatprep.subr.bf16.mxu0 0
  %908 = vmatpush1.bf16.xpose.msra.mxu0 0
  %909 = vmatprep.subr.bf16.mxu0 0
  %910 = vmatpush1.bf16.xpose.msra.mxu0 0
  %911 = vmatprep.mubr.bf16.mxu0 0
  %912 = vmatmul.mubr.bf16.gmra.mrb[0].mxu0 %v871
  %v913 = vpop.f32.mrb[0].mxu0
  %v914 = vadd.f32 0.0, %v913
  %v915 = vpop.f32.mrb[0].mxu0
  %v916 = vpop.f32.mrb[0].mxu0
  %v917 = vpop.f32.mrb[0].mxu0
  %918 = vdwg.mxu0
  %v920 = vsel %vm95, %v865, 0
  %v923 = vsel %vm95, %v868, 0
  %v926 = vsel %vm95, %v869, 0
  %928 = vmatprep.subr.bf16.mxu0 0
  %929 = vmatpush1.bf16.xpose.msra.mxu0 %v923
  %930 = vmatprep.subr.bf16.mxu0 0
  %931 = vmatpush1.bf16.xpose.msra.mxu0 %v926
  %932 = vmatprep.subr.bf16.mxu0 0
  %933 = vmatpush1.bf16.xpose.msra.mxu0 0
  %934 = vmatprep.subr.bf16.mxu0 0
  %935 = vmatpush1.bf16.xpose.msra.mxu0 0
  %936 = vmatprep.subr.bf16.mxu0 0
  %937 = vmatpush1.bf16.xpose.msra.mxu0 0
  %938 = vmatprep.subr.bf16.mxu0 0
  %939 = vmatpush1.bf16.xpose.msra.mxu0 0
  %940 = vmatprep.subr.bf16.mxu0 0
  %941 = vmatpush1.bf16.xpose.msra.mxu0 0
  %942 = vmatprep.subr.bf16.mxu0 0
  %943 = vmatpush1.bf16.xpose.msra.mxu0 0
  %944 = vmatprep.subr.bf16.mxu0 0
  %945 = vmatpush1.bf16.xpose.msra.mxu0 0
  %946 = vmatprep.subr.bf16.mxu0 0
  %947 = vmatpush1.bf16.xpose.msra.mxu0 0
  %948 = vmatprep.subr.bf16.mxu0 0
  %949 = vmatpush1.bf16.xpose.msra.mxu0 0
  %950 = vmatprep.subr.bf16.mxu0 0
  %951 = vmatpush1.bf16.xpose.msra.mxu0 0
  %952 = vmatprep.subr.bf16.mxu0 0
  %953 = vmatpush1.bf16.xpose.msra.mxu0 0
  %954 = vmatprep.subr.bf16.mxu0 0
  %955 = vmatpush1.bf16.xpose.msra.mxu0 0
  %956 = vmatprep.subr.bf16.mxu0 0
  %957 = vmatpush1.bf16.xpose.msra.mxu0 0
  %958 = vmatprep.subr.bf16.mxu0 0
  %959 = vmatpush1.bf16.xpose.msra.mxu0 0
  %960 = vmatprep.mubr.bf16.mxu0 0
  %961 = vmatmul.mubr.bf16.gmra.mrb[0].mxu0 %v920
  %v962 = vpop.f32.mrb[0].mxu0
  %v963 = vadd.f32 0.0, %v962
  %v964 = vpop.f32.mrb[0].mxu0
  %v965 = vpop.f32.mrb[0].mxu0
  %v966 = vpop.f32.mrb[0].mxu0
  %967 = vdwg.mxu0
  %v968 = vmul.f32 %v914, 0.125
  %v969 = vmul.f32 %v963, 0.125
  %v970 = vsel %vm382, %v968, -1e+30
  %v971 = vsel %vm382, %v969, -1e+30
  %v972 = vsel %vm385, %v970, -inf
  %973 = vmax.xlane.f32.xlu0 %v972
  %v974 = vpop.xlane.xlu0 %973
  %v975 = vsel %vm385, %v971, -inf
  %976 = vmax.xlane.f32.xlu0 %v975
  %v977 = vpop.xlane.xlu0 %976
  %v978 = vsub.f32 %v970, %v974
  %v979 = vsub.f32 %v971, %v977
  %v980 = vmul.f32 %v978, 1.442695
  %v981 = vpow.pop %v980
  %v982 = vmul.f32 %v979, 1.442695
  %v983 = vpow.pop %v982
  %v984 = vsel %vm385, %v981, 0.0
  %985 = vadd.xlane.f32.xlu0 %v984
  %v986 = vpop.xlane.xlu0 %985
  %v987 = vsel %vm385, %v983, 0.0
  %988 = vadd.xlane.f32.xlu0 %v987
  %v989 = vpop.xlane.xlu0 %988
  %v990 = vrcp.pop %v986
  %v991 = vrcp.pop %v989
  %v992 = vmul.f32 %v981, %v990
  %v993 = vmul.f32 %v983, %v991
  %v994 = vpack.c.bf16 %v992, %v992
  %v995 = vpack.c.bf16 %v993, %v993
  %998 = vrot.lane.b32.xlu0 %v866, 64
  %v999 = vpop.permute.xlu0 %998
  %1000 = vrot.lane.b32.xlu0 %v867, 64
  %v1001 = vpop.permute.xlu0 %1000
  %v1004 = vsel %vm417, %v994, 0
  %v1007 = vsel %vm421, %v1001, 0
  %1009 = vmatprep.subr.bf16.mxu0 0
  %1010 = vmatpush1.bf16.msra.mxu0 %v999
  %1011 = vmatprep.subr.bf16.mxu0 0
  %1012 = vmatpush1.bf16.msra.mxu0 %v1007
  %1013 = vmatprep.subr.bf16.mxu0 0
  %1014 = vmatpush1.bf16.msra.mxu0 0
  %1015 = vmatprep.subr.bf16.mxu0 0
  %1016 = vmatpush1.bf16.msra.mxu0 0
  %1017 = vmatprep.subr.bf16.mxu0 0
  %1018 = vmatpush1.bf16.msra.mxu0 0
  %1019 = vmatprep.subr.bf16.mxu0 0
  %1020 = vmatpush1.bf16.msra.mxu0 0
  %1021 = vmatprep.subr.bf16.mxu0 0
  %1022 = vmatpush1.bf16.msra.mxu0 0
  %1023 = vmatprep.subr.bf16.mxu0 0
  %1024 = vmatpush1.bf16.msra.mxu0 0
  %1025 = vmatprep.subr.bf16.mxu0 0
  %1026 = vmatpush1.bf16.msra.mxu0 0
  %1027 = vmatprep.subr.bf16.mxu0 0
  %1028 = vmatpush1.bf16.msra.mxu0 0
  %1029 = vmatprep.subr.bf16.mxu0 0
  %1030 = vmatpush1.bf16.msra.mxu0 0
  %1031 = vmatprep.subr.bf16.mxu0 0
  %1032 = vmatpush1.bf16.msra.mxu0 0
  %1033 = vmatprep.subr.bf16.mxu0 0
  %1034 = vmatpush1.bf16.msra.mxu0 0
  %1035 = vmatprep.subr.bf16.mxu0 0
  %1036 = vmatpush1.bf16.msra.mxu0 0
  %1037 = vmatprep.subr.bf16.mxu0 0
  %1038 = vmatpush1.bf16.msra.mxu0 0
  %1039 = vmatprep.subr.bf16.mxu0 0
  %1040 = vmatpush1.bf16.msra.mxu0 0
  %1041 = vmatprep.mubr.bf16.mxu0 0
  %1042 = vmatmul.mubr.bf16.gmra.mrb[0].mxu0 %v1004
  %v1043 = vpop.f32.mrb[0].mxu0
  %v1044 = vadd.f32 0.0, %v1043
  %v1045 = vpop.f32.mrb[0].mxu0
  %v1046 = vpop.f32.mrb[0].mxu0
  %v1047 = vpop.f32.mrb[0].mxu0
  %1048 = vdwg.mxu0
  %1051 = vrot.lane.b32.xlu0 %v868, 64
  %v1052 = vpop.permute.xlu0 %1051
  %1053 = vrot.lane.b32.xlu0 %v869, 64
  %v1054 = vpop.permute.xlu0 %1053
  %v1057 = vsel %vm417, %v995, 0
  %v1060 = vsel %vm421, %v1054, 0
  %1062 = vmatprep.subr.bf16.mxu0 0
  %1063 = vmatpush1.bf16.msra.mxu0 %v1052
  %1064 = vmatprep.subr.bf16.mxu0 0
  %1065 = vmatpush1.bf16.msra.mxu0 %v1060
  %1066 = vmatprep.subr.bf16.mxu0 0
  %1067 = vmatpush1.bf16.msra.mxu0 0
  %1068 = vmatprep.subr.bf16.mxu0 0
  %1069 = vmatpush1.bf16.msra.mxu0 0
  %1070 = vmatprep.subr.bf16.mxu0 0
  %1071 = vmatpush1.bf16.msra.mxu0 0
  %1072 = vmatprep.subr.bf16.mxu0 0
  %1073 = vmatpush1.bf16.msra.mxu0 0
  %1074 = vmatprep.subr.bf16.mxu0 0
  %1075 = vmatpush1.bf16.msra.mxu0 0
  %1076 = vmatprep.subr.bf16.mxu0 0
  %1077 = vmatpush1.bf16.msra.mxu0 0
  %1078 = vmatprep.subr.bf16.mxu0 0
  %1079 = vmatpush1.bf16.msra.mxu0 0
  %1080 = vmatprep.subr.bf16.mxu0 0
  %1081 = vmatpush1.bf16.msra.mxu0 0
  %1082 = vmatprep.subr.bf16.mxu0 0
  %1083 = vmatpush1.bf16.msra.mxu0 0
  %1084 = vmatprep.subr.bf16.mxu0 0
  %1085 = vmatpush1.bf16.msra.mxu0 0
  %1086 = vmatprep.subr.bf16.mxu0 0
  %1087 = vmatpush1.bf16.msra.mxu0 0
  %1088 = vmatprep.subr.bf16.mxu0 0
  %1089 = vmatpush1.bf16.msra.mxu0 0
  %1090 = vmatprep.subr.bf16.mxu0 0
  %1091 = vmatpush1.bf16.msra.mxu0 0
  %1092 = vmatprep.subr.bf16.mxu0 0
  %1093 = vmatpush1.bf16.msra.mxu0 0
  %1094 = vmatprep.mubr.bf16.mxu0 0
  %1095 = vmatmul.mubr.bf16.gmra.mrb[0].mxu0 %v1057
  %v1096 = vpop.f32.mrb[0].mxu0
  %v1097 = vadd.f32 0.0, %v1096
  %v1098 = vpop.f32.mrb[0].mxu0
  %v1099 = vpop.f32.mrb[0].mxu0
  %v1100 = vpop.f32.mrb[0].mxu0
  %1101 = vdwg.mxu0
  %v1102 = vpack.c.bf16 %v1044, %v1044
  %v1103 = vpack.c.bf16 %v1097, %v1097
  %s1104 = scalar_lea.vmem %s6, 32
  %v1105 = vld [vmem:[%s1104] sm:$0xf]
  %v1106 = vld [vmem:[%s1104 + $0x4] sm:$0xf]
  %v1107 = vld [vmem:[%s1104 + $0x8] sm:$0xf]
  %v1108 = vld [vmem:[%s1104 + $0xc] sm:$0xf]
  %v1109 = vld [vmem:[%s1104 + $0x10] sm:$0xf]
  %v1110 = vld [vmem:[%s1104 + $0x14] sm:$0xf]
  %v1111 = vld [vmem:[%s1104 + $0x18] sm:$0xf]
  %v1112 = vld [vmem:[%s1104 + $0x1c] sm:$0xf]
  %s1113 = scalar_lea.vmem %s7, 1
  %v1114 = vld [vmem:[%s1113] sm:$0x1]
  %v1116 = vlaneseq
  %v1117 = vshrl.u32 %v1116, 7
  %v1118 = vsub.s32 0, %v1117
  %v1119 = vrot.slane %v1114, %v1118
  %v1123 = vunpack.c.l.b16 %v1102
  %v1124 = vunpack.c.l.b16 %v1103
  %v1125 = vrot.slane %v1124, 7
  %v1126 = vsel %vm540, %v1125, %v1123
  %v1127 = vpack.c.b16 %v1126, %v1126
  %v1136 = vunpack.c.l.b16 %v1105
  %v1137 = vunpack.c.l.b16 %v1106
  %v1138 = vunpack.c.l.b16 %v1107
  %v1139 = vunpack.c.l.b16 %v1108
  %v1140 = vunpack.c.l.b16 %v1109
  %v1141 = vunpack.c.l.b16 %v1110
  %v1142 = vunpack.c.l.b16 %v1111
  %v1143 = vunpack.c.l.b16 %v1112
  %v1144 = vpack.c.b16 %v1137, %v1136
  %v1145 = vpack.c.b16 %v1139, %v1138
  %v1146 = vpack.c.b16 %v1141, %v1140
  %v1147 = vpack.c.b16 %v1143, %v1142
  %v1153 = vsel %vm95, %v1127, 0
  %1155 = vmatprep.subr.bf16.mxu0 0
  %1156 = vmatpush1.bf16.msra.mxu0 %v1144
  %1157 = vmatprep.subr.bf16.mxu0 0
  %1158 = vmatpush1.bf16.msra.mxu0 %v1145
  %1159 = vmatprep.subr.bf16.mxu0 0
  %1160 = vmatpush1.bf16.msra.mxu0 %v1146
  %1161 = vmatprep.subr.bf16.mxu0 0
  %1162 = vmatpush1.bf16.msra.mxu0 %v1147
  %1163 = vmatprep.subr.bf16.mxu0 0
  %1164 = vmatpush1.bf16.msra.mxu0 0
  %1165 = vmatprep.subr.bf16.mxu0 0
  %1166 = vmatpush1.bf16.msra.mxu0 0
  %1167 = vmatprep.subr.bf16.mxu0 0
  %1168 = vmatpush1.bf16.msra.mxu0 0
  %1169 = vmatprep.subr.bf16.mxu0 0
  %1170 = vmatpush1.bf16.msra.mxu0 0
  %1171 = vmatprep.subr.bf16.mxu0 0
  %1172 = vmatpush1.bf16.msra.mxu0 0
  %1173 = vmatprep.subr.bf16.mxu0 0
  %1174 = vmatpush1.bf16.msra.mxu0 0
  %1175 = vmatprep.subr.bf16.mxu0 0
  %1176 = vmatpush1.bf16.msra.mxu0 0
  %1177 = vmatprep.subr.bf16.mxu0 0
  %1178 = vmatpush1.bf16.msra.mxu0 0
  %1179 = vmatprep.subr.bf16.mxu0 0
  %1180 = vmatpush1.bf16.msra.mxu0 0
  %1181 = vmatprep.subr.bf16.mxu0 0
  %1182 = vmatpush1.bf16.msra.mxu0 0
  %1183 = vmatprep.subr.bf16.mxu0 0
  %1184 = vmatpush1.bf16.msra.mxu0 0
  %1185 = vmatprep.subr.bf16.mxu0 0
  %1186 = vmatpush1.bf16.msra.mxu0 0
  %1187 = vmatprep.mubr.bf16.mxu0 0
  %1188 = vmatmul.mubr.bf16.gmra.mrb[0].mxu0 %v1153
  %v1189 = vpop.f32.mrb[0].mxu0
  %v1190 = vadd.f32 %v1119, %v1189
  %v1191 = vpop.f32.mrb[0].mxu0
  %v1192 = vpop.f32.mrb[0].mxu0
  %v1193 = vpop.f32.mrb[0].mxu0
  %1194 = vdwg.mxu0
  %v1195 = vadd.f32 %v643, %v1190
  %s1196 = scalar_lea.vmem %s8, 1
  %v1197 = vld [vmem:[%s1196] sm:$0x1]
  %s1198 = scalar_lea.vmem %s9, 1
  %v1199 = vld [vmem:[%s1198] sm:$0x1]
  %v1200 = vsel %vm613, %v1195, 0.0
  %1201 = vadd.xlane.f32.xlu0 %v1200
  %v1202 = vpop.xlane.xlu0 %1201
  %v1203 = vmul.f32 %v1202, %v617
  %v1204 = vsub.f32 %v1195, %v1203
  %v1205 = vmul.f32 %v1204, %v1204
  %v1206 = vsel %vm613, %v1205, 0.0
  %1207 = vadd.xlane.f32.xlu0 %v1206
  %v1208 = vpop.xlane.xlu0 %1207
  %v1209 = vmul.f32 %v1208, %v617
  %v1210 = vadd.f32 %v1209, 1e-05
  %v1211 = vrsqrt.pop %v1210
  %v1212 = vmul.f32 %v1204, %v1211
  %v1214 = vlaneseq
  %v1215 = vshrl.u32 %v1214, 7
  %v1216 = vsub.s32 0, %v1215
  %v1217 = vrot.slane %v1197, %v1216
  %v1219 = vmul.f32 %v1212, %v1217
  %v1221 = vlaneseq
  %v1222 = vshrl.u32 %v1221, 7
  %v1223 = vsub.s32 0, %v1222
  %v1224 = vrot.slane %v1199, %v1223
  %v1226 = vadd.f32 %v1219, %v1224
  %1228 = vrot.lane.b32.xlu0 %v1226, 64
  %v1229 = vpop.permute.xlu0 %1228
  %v1231 = vsel %vm95, %v641, %v1229
  %v1232 = vpack.c.bf16 %v1231, %v1231
  %v1233 = vld [vmem:[%s10] sm:$0xff]
  %v1234 = vld [vmem:[%s10 + $0x8] sm:$0xff]
  %v1235 = vld [vmem:[%s10 + $0x10] sm:$0xff]
  %v1236 = vld [vmem:[%s10 + $0x18] sm:$0xff]
  %v1237 = vld [vmem:[%s10 + $0x20] sm:$0xff]
  %v1238 = vld [vmem:[%s10 + $0x28] sm:$0xff]
  %v1239 = vld [vmem:[%s10 + $0x30] sm:$0xff]
  %v1240 = vld [vmem:[%s10 + $0x38] sm:$0xff]
  %v1241 = vld [vmem:[%s10 + $0x40] sm:$0xff]
  %v1242 = vld [vmem:[%s10 + $0x48] sm:$0xff]
  %v1243 = vld [vmem:[%s10 + $0x50] sm:$0xff]
  %v1244 = vld [vmem:[%s10 + $0x58] sm:$0xff]
  %v1245 = vld [vmem:[%s10 + $0x60] sm:$0xff]
  %v1246 = vld [vmem:[%s10 + $0x68] sm:$0xff]
  %v1247 = vld [vmem:[%s10 + $0x70] sm:$0xff]
  %v1248 = vld [vmem:[%s10 + $0x78] sm:$0xff]
  %v1249 = vld [vmem:[%s10 + $0x80] sm:$0xff]
  %v1250 = vld [vmem:[%s10 + $0x88] sm:$0xff]
  %v1251 = vld [vmem:[%s10 + $0x90] sm:$0xff]
  %v1252 = vld [vmem:[%s10 + $0x98] sm:$0xff]
  %v1253 = vld [vmem:[%s10 + $0xa0] sm:$0xff]
  %v1254 = vld [vmem:[%s10 + $0xa8] sm:$0xff]
  %v1255 = vld [vmem:[%s10 + $0xb0] sm:$0xff]
  %v1256 = vld [vmem:[%s10 + $0xb8] sm:$0xff]
  %v1257 = vld [vmem:[%s10 + $0xc0] sm:$0xff]
  %v1258 = vld [vmem:[%s10 + $0xc8] sm:$0xff]
  %v1259 = vld [vmem:[%s10 + $0xd0] sm:$0xff]
  %v1260 = vld [vmem:[%s10 + $0xd8] sm:$0xff]
  %v1261 = vld [vmem:[%s10 + $0xe0] sm:$0xff]
  %v1262 = vld [vmem:[%s10 + $0xe8] sm:$0xff]
  %v1263 = vld [vmem:[%s10 + $0xf0] sm:$0xff]
  %v1264 = vld [vmem:[%s10 + $0xf8] sm:$0xff]
  %v1265 = vld [vmem:[%s10 + $0x100] sm:$0xff]
  %v1266 = vld [vmem:[%s10 + $0x108] sm:$0xff]
  %v1267 = vld [vmem:[%s10 + $0x110] sm:$0xff]
  %v1268 = vld [vmem:[%s10 + $0x118] sm:$0xff]
  %v1269 = vld [vmem:[%s10 + $0x120] sm:$0xff]
  %v1270 = vld [vmem:[%s10 + $0x128] sm:$0xff]
  %v1271 = vld [vmem:[%s10 + $0x130] sm:$0xff]
  %v1272 = vld [vmem:[%s10 + $0x138] sm:$0xff]
  %v1273 = vld [vmem:[%s10 + $0x140] sm:$0xff]
  %v1274 = vld [vmem:[%s10 + $0x148] sm:$0xff]
  %v1275 = vld [vmem:[%s10 + $0x150] sm:$0xff]
  %v1276 = vld [vmem:[%s10 + $0x158] sm:$0xff]
  %v1277 = vld [vmem:[%s10 + $0x160] sm:$0xff]
  %v1278 = vld [vmem:[%s10 + $0x168] sm:$0xff]
  %v1279 = vld [vmem:[%s10 + $0x170] sm:$0xff]
  %v1280 = vld [vmem:[%s10 + $0x178] sm:$0xff]
  %v1281 = vld [vmem:[%s10 + $0x180] sm:$0xff]
  %v1282 = vld [vmem:[%s10 + $0x188] sm:$0xff]
  %v1283 = vld [vmem:[%s10 + $0x190] sm:$0xff]
  %v1284 = vld [vmem:[%s10 + $0x198] sm:$0xff]
  %v1285 = vld [vmem:[%s10 + $0x1a0] sm:$0xff]
  %v1286 = vld [vmem:[%s10 + $0x1a8] sm:$0xff]
  %v1287 = vld [vmem:[%s10 + $0x1b0] sm:$0xff]
  %v1288 = vld [vmem:[%s10 + $0x1b8] sm:$0xff]
  %v1289 = vld [vmem:[%s10 + $0x1c0] sm:$0xff]
  %v1290 = vld [vmem:[%s10 + $0x1c8] sm:$0xff]
  %v1291 = vld [vmem:[%s10 + $0x1d0] sm:$0xff]
  %v1292 = vld [vmem:[%s10 + $0x1d8] sm:$0xff]
  %v1293 = vld [vmem:[%s10 + $0x1e0] sm:$0xff]
  %v1294 = vld [vmem:[%s10 + $0x1e8] sm:$0xff]
  %v1295 = vld [vmem:[%s10 + $0x1f0] sm:$0xff]
  %v1296 = vld [vmem:[%s10 + $0x1f8] sm:$0xff]
  %v1297 = vld [vmem:[%s11] sm:$0xff]
  %v1299 = vlaneseq
  %v1300 = vshrl.u32 %v1299, 7
  %v1301 = vsub.s32 0, %v1300
  %v1302 = vrot.slane %v1297, %v1301
  %v1303 = vlaneseq
  %v1304 = vshrl.u32 %v1303, 7
  %v1305 = vsub.s32 1, %v1304
  %v1306 = vrot.slane %v1297, %v1305
  %v1307 = vlaneseq
  %v1308 = vshrl.u32 %v1307, 7
  %v1309 = vsub.s32 2, %v1308
  %v1310 = vrot.slane %v1297, %v1309
  %v1311 = vlaneseq
  %v1312 = vshrl.u32 %v1311, 7
  %v1313 = vsub.s32 3, %v1312
  %v1314 = vrot.slane %v1297, %v1313
  %v1315 = vlaneseq
  %v1316 = vshrl.u32 %v1315, 7
  %v1317 = vsub.s32 4, %v1316
  %v1318 = vrot.slane %v1297, %v1317
  %v1319 = vlaneseq
  %v1320 = vshrl.u32 %v1319, 7
  %v1321 = vsub.s32 5, %v1320
  %v1322 = vrot.slane %v1297, %v1321
  %v1323 = vlaneseq
  %v1324 = vshrl.u32 %v1323, 7
  %v1325 = vsub.s32 6, %v1324
  %v1326 = vrot.slane %v1297, %v1325
  %v1327 = vlaneseq
  %v1328 = vshrl.u32 %v1327, 7
  %v1329 = vsub.s32 7, %v1328
  %v1330 = vrot.slane %v1297, %v1329
  %v1403 = vunpack.c.l.b16 %v1233
  %v1404 = vunpack.c.h.b16 %v1233
  %v1405 = vunpack.c.l.b16 %v1234
  %v1406 = vunpack.c.h.b16 %v1234
  %v1407 = vunpack.c.l.b16 %v1235
  %v1408 = vunpack.c.h.b16 %v1235
  %v1409 = vunpack.c.l.b16 %v1236
  %v1410 = vunpack.c.h.b16 %v1236
  %v1411 = vunpack.c.l.b16 %v1237
  %v1412 = vunpack.c.h.b16 %v1237
  %v1413 = vunpack.c.l.b16 %v1238
  %v1414 = vunpack.c.h.b16 %v1238
  %v1415 = vunpack.c.l.b16 %v1239
  %v1416 = vunpack.c.h.b16 %v1239
  %v1417 = vunpack.c.l.b16 %v1240
  %v1418 = vunpack.c.h.b16 %v1240
  %v1419 = vunpack.c.l.b16 %v1241
  %v1420 = vunpack.c.h.b16 %v1241
  %v1421 = vunpack.c.l.b16 %v1242
  %v1422 = vunpack.c.h.b16 %v1242
  %v1423 = vunpack.c.l.b16 %v1243
  %v1424 = vunpack.c.h.b16 %v1243
  %v1425 = vunpack.c.l.b16 %v1244
  %v1426 = vunpack.c.h.b16 %v1244
  %v1427 = vunpack.c.l.b16 %v1245
  %v1428 = vunpack.c.h.b16 %v1245
  %v1429 = vunpack.c.l.b16 %v1246
  %v1430 = vunpack.c.h.b16 %v1246
  %v1431 = vunpack.c.l.b16 %v1247
  %v1432 = vunpack.c.h.b16 %v1247
  %v1433 = vunpack.c.l.b16 %v1248
  %v1434 = vunpack.c.h.b16 %v1248
  %v1435 = vunpack.c.l.b16 %v1249
  %v1436 = vunpack.c.h.b16 %v1249
  %v1437 = vunpack.c.l.b16 %v1250
  %v1438 = vunpack.c.h.b16 %v1250
  %v1439 = vunpack.c.l.b16 %v1251
  %v1440 = vunpack.c.h.b16 %v1251
  %v1441 = vunpack.c.l.b16 %v1252
  %v1442 = vunpack.c.h.b16 %v1252
  %v1443 = vunpack.c.l.b16 %v1253
  %v1444 = vunpack.c.h.b16 %v1253
  %v1445 = vunpack.c.l.b16 %v1254
  %v1446 = vunpack.c.h.b16 %v1254
  %v1447 = vunpack.c.l.b16 %v1255
  %v1448 = vunpack.c.h.b16 %v1255
  %v1449 = vunpack.c.l.b16 %v1256
  %v1450 = vunpack.c.h.b16 %v1256
  %v1451 = vunpack.c.l.b16 %v1257
  %v1452 = vunpack.c.h.b16 %v1257
  %v1453 = vunpack.c.l.b16 %v1258
  %v1454 = vunpack.c.h.b16 %v1258
  %v1455 = vunpack.c.l.b16 %v1259
  %v1456 = vunpack.c.h.b16 %v1259
  %v1457 = vunpack.c.l.b16 %v1260
  %v1458 = vunpack.c.h.b16 %v1260
  %v1459 = vunpack.c.l.b16 %v1261
  %v1460 = vunpack.c.h.b16 %v1261
  %v1461 = vunpack.c.l.b16 %v1262
  %v1462 = vunpack.c.h.b16 %v1262
  %v1463 = vunpack.c.l.b16 %v1263
  %v1464 = vunpack.c.h.b16 %v1263
  %v1465 = vunpack.c.l.b16 %v1264
  %v1466 = vunpack.c.h.b16 %v1264
  %v1467 = vunpack.c.l.b16 %v1265
  %v1468 = vunpack.c.h.b16 %v1265
  %v1469 = vunpack.c.l.b16 %v1266
  %v1470 = vunpack.c.h.b16 %v1266
  %v1471 = vunpack.c.l.b16 %v1267
  %v1472 = vunpack.c.h.b16 %v1267
  %v1473 = vunpack.c.l.b16 %v1268
  %v1474 = vunpack.c.h.b16 %v1268
  %v1475 = vunpack.c.l.b16 %v1269
  %v1476 = vunpack.c.h.b16 %v1269
  %v1477 = vunpack.c.l.b16 %v1270
  %v1478 = vunpack.c.h.b16 %v1270
  %v1479 = vunpack.c.l.b16 %v1271
  %v1480 = vunpack.c.h.b16 %v1271
  %v1481 = vunpack.c.l.b16 %v1272
  %v1482 = vunpack.c.h.b16 %v1272
  %v1483 = vunpack.c.l.b16 %v1273
  %v1484 = vunpack.c.h.b16 %v1273
  %v1485 = vunpack.c.l.b16 %v1274
  %v1486 = vunpack.c.h.b16 %v1274
  %v1487 = vunpack.c.l.b16 %v1275
  %v1488 = vunpack.c.h.b16 %v1275
  %v1489 = vunpack.c.l.b16 %v1276
  %v1490 = vunpack.c.h.b16 %v1276
  %v1491 = vunpack.c.l.b16 %v1277
  %v1492 = vunpack.c.h.b16 %v1277
  %v1493 = vunpack.c.l.b16 %v1278
  %v1494 = vunpack.c.h.b16 %v1278
  %v1495 = vunpack.c.l.b16 %v1279
  %v1496 = vunpack.c.h.b16 %v1279
  %v1497 = vunpack.c.l.b16 %v1280
  %v1498 = vunpack.c.h.b16 %v1280
  %v1499 = vunpack.c.l.b16 %v1281
  %v1500 = vunpack.c.h.b16 %v1281
  %v1501 = vunpack.c.l.b16 %v1282
  %v1502 = vunpack.c.h.b16 %v1282
  %v1503 = vunpack.c.l.b16 %v1283
  %v1504 = vunpack.c.h.b16 %v1283
  %v1505 = vunpack.c.l.b16 %v1284
  %v1506 = vunpack.c.h.b16 %v1284
  %v1507 = vunpack.c.l.b16 %v1285
  %v1508 = vunpack.c.h.b16 %v1285
  %v1509 = vunpack.c.l.b16 %v1286
  %v1510 = vunpack.c.h.b16 %v1286
  %v1511 = vunpack.c.l.b16 %v1287
  %v1512 = vunpack.c.h.b16 %v1287
  %v1513 = vunpack.c.l.b16 %v1288
  %v1514 = vunpack.c.h.b16 %v1288
  %v1515 = vunpack.c.l.b16 %v1289
  %v1516 = vunpack.c.h.b16 %v1289
  %v1517 = vunpack.c.l.b16 %v1290
  %v1518 = vunpack.c.h.b16 %v1290
  %v1519 = vunpack.c.l.b16 %v1291
  %v1520 = vunpack.c.h.b16 %v1291
  %v1521 = vunpack.c.l.b16 %v1292
  %v1522 = vunpack.c.h.b16 %v1292
  %v1523 = vunpack.c.l.b16 %v1293
  %v1524 = vunpack.c.h.b16 %v1293
  %v1525 = vunpack.c.l.b16 %v1294
  %v1526 = vunpack.c.h.b16 %v1294
  %v1527 = vunpack.c.l.b16 %v1295
  %v1528 = vunpack.c.h.b16 %v1295
  %v1529 = vunpack.c.l.b16 %v1296
  %v1530 = vunpack.c.h.b16 %v1296
  %v1531 = vpack.c.b16 %v1411, %v1403
  %v1532 = vpack.c.b16 %v1412, %v1404
  %v1533 = vpack.c.b16 %v1413, %v1405
  %v1534 = vpack.c.b16 %v1414, %v1406
  %v1535 = vpack.c.b16 %v1415, %v1407
  %v1536 = vpack.c.b16 %v1416, %v1408
  %v1537 = vpack.c.b16 %v1417, %v1409
  %v1538 = vpack.c.b16 %v1418, %v1410
  %v1539 = vpack.c.b16 %v1427, %v1419
  %v1540 = vpack.c.b16 %v1428, %v1420
  %v1541 = vpack.c.b16 %v1429, %v1421
  %v1542 = vpack.c.b16 %v1430, %v1422
  %v1543 = vpack.c.b16 %v1431, %v1423
  %v1544 = vpack.c.b16 %v1432, %v1424
  %v1545 = vpack.c.b16 %v1433, %v1425
  %v1546 = vpack.c.b16 %v1434, %v1426
  %v1547 = vpack.c.b16 %v1443, %v1435
  %v1548 = vpack.c.b16 %v1444, %v1436
  %v1549 = vpack.c.b16 %v1445, %v1437
  %v1550 = vpack.c.b16 %v1446, %v1438
  %v1551 = vpack.c.b16 %v1447, %v1439
  %v1552 = vpack.c.b16 %v1448, %v1440
  %v1553 = vpack.c.b16 %v1449, %v1441
  %v1554 = vpack.c.b16 %v1450, %v1442
  %v1555 = vpack.c.b16 %v1459, %v1451
  %v1556 = vpack.c.b16 %v1460, %v1452
  %v1557 = vpack.c.b16 %v1461, %v1453
  %v1558 = vpack.c.b16 %v1462, %v1454
  %v1559 = vpack.c.b16 %v1463, %v1455
  %v1560 = vpack.c.b16 %v1464, %v1456
  %v1561 = vpack.c.b16 %v1465, %v1457
  %v1562 = vpack.c.b16 %v1466, %v1458
  %v1563 = vpack.c.b16 %v1475, %v1467
  %v1564 = vpack.c.b16 %v1476, %v1468
  %v1565 = vpack.c.b16 %v1477, %v1469
  %v1566 = vpack.c.b16 %v1478, %v1470
  %v1567 = vpack.c.b16 %v1479, %v1471
  %v1568 = vpack.c.b16 %v1480, %v1472
  %v1569 = vpack.c.b16 %v1481, %v1473
  %v1570 = vpack.c.b16 %v1482, %v1474
  %v1571 = vpack.c.b16 %v1491, %v1483
  %v1572 = vpack.c.b16 %v1492, %v1484
  %v1573 = vpack.c.b16 %v1493, %v1485
  %v1574 = vpack.c.b16 %v1494, %v1486
  %v1575 = vpack.c.b16 %v1495, %v1487
  %v1576 = vpack.c.b16 %v1496, %v1488
  %v1577 = vpack.c.b16 %v1497, %v1489
  %v1578 = vpack.c.b16 %v1498, %v1490
  %v1579 = vpack.c.b16 %v1507, %v1499
  %v1580 = vpack.c.b16 %v1508, %v1500
  %v1581 = vpack.c.b16 %v1509, %v1501
  %v1582 = vpack.c.b16 %v1510, %v1502
  %v1583 = vpack.c.b16 %v1511, %v1503
  %v1584 = vpack.c.b16 %v1512, %v1504
  %v1585 = vpack.c.b16 %v1513, %v1505
  %v1586 = vpack.c.b16 %v1514, %v1506
  %v1587 = vpack.c.b16 %v1523, %v1515
  %v1588 = vpack.c.b16 %v1524, %v1516
  %v1589 = vpack.c.b16 %v1525, %v1517
  %v1590 = vpack.c.b16 %v1526, %v1518
  %v1591 = vpack.c.b16 %v1527, %v1519
  %v1592 = vpack.c.b16 %v1528, %v1520
  %v1593 = vpack.c.b16 %v1529, %v1521
  %v1594 = vpack.c.b16 %v1530, %v1522
  %1659 = vmatprep.subr.bf16.mxu0 %v1532
  %1660 = vmatpush1.bf16.msra.mxu0 %v1531
  %1661 = vmatprep.subr.bf16.mxu0 %v1540
  %1662 = vmatpush1.bf16.msra.mxu0 %v1539
  %1663 = vmatprep.subr.bf16.mxu0 %v1548
  %1664 = vmatpush1.bf16.msra.mxu0 %v1547
  %1665 = vmatprep.subr.bf16.mxu0 %v1556
  %1666 = vmatpush1.bf16.msra.mxu0 %v1555
  %1667 = vmatprep.subr.bf16.mxu0 %v1564
  %1668 = vmatpush1.bf16.msra.mxu0 %v1563
  %1669 = vmatprep.subr.bf16.mxu0 %v1572
  %1670 = vmatpush1.bf16.msra.mxu0 %v1571
  %1671 = vmatprep.subr.bf16.mxu0 %v1580
  %1672 = vmatpush1.bf16.msra.mxu0 %v1579
  %1673 = vmatprep.subr.bf16.mxu0 %v1588
  %1674 = vmatpush1.bf16.msra.mxu0 %v1587
  %1675 = vmatprep.subr.bf16.mxu0 0
  %1676 = vmatpush1.bf16.msra.mxu0 0
  %1677 = vmatprep.subr.bf16.mxu0 0
  %1678 = vmatpush1.bf16.msra.mxu0 0
  %1679 = vmatprep.subr.bf16.mxu0 0
  %1680 = vmatpush1.bf16.msra.mxu0 0
  %1681 = vmatprep.subr.bf16.mxu0 0
  %1682 = vmatpush1.bf16.msra.mxu0 0
  %1683 = vmatprep.subr.bf16.mxu0 0
  %1684 = vmatpush1.bf16.msra.mxu0 0
  %1685 = vmatprep.subr.bf16.mxu0 0
  %1686 = vmatpush1.bf16.msra.mxu0 0
  %1687 = vmatprep.subr.bf16.mxu0 0
  %1688 = vmatpush1.bf16.msra.mxu0 0
  %1689 = vmatprep.subr.bf16.mxu0 0
  %1690 = vmatpush1.bf16.msra.mxu0 0
  %1691 = vmatprep.mubr.bf16.mxu0 0
  %1692 = vmatmul.mubr.bf16.gmra.mrb[0].mxu0 %v1232
  %v1693 = vpop.f32.mrb[0].mxu0
  %v1694 = vadd.f32 %v1302, %v1693
  %v1695 = vpop.f32.mrb[0].mxu0
  %v1696 = vadd.f32 %v1306, %v1695
  %v1697 = vpop.f32.mrb[0].mxu0
  %v1698 = vpop.f32.mrb[0].mxu0
  %1699 = vdwg.mxu0
  %1700 = vmatprep.subr.bf16.mxu0 %v1534
  %1701 = vmatpush1.bf16.msra.mxu0 %v1533
  %1702 = vmatprep.subr.bf16.mxu0 %v1542
  %1703 = vmatpush1.bf16.msra.mxu0 %v1541
  %1704 = vmatprep.subr.bf16.mxu0 %v1550
  %1705 = vmatpush1.bf16.msra.mxu0 %v1549
  %1706 = vmatprep.subr.bf16.mxu0 %v1558
  %1707 = vmatpush1.bf16.msra.mxu0 %v1557
  %1708 = vmatprep.subr.bf16.mxu0 %v1566
  %1709 = vmatpush1.bf16.msra.mxu0 %v1565
  %1710 = vmatprep.subr.bf16.mxu0 %v1574
  %1711 = vmatpush1.bf16.msra.mxu0 %v1573
  %1712 = vmatprep.subr.bf16.mxu0 %v1582
  %1713 = vmatpush1.bf16.msra.mxu0 %v1581
  %1714 = vmatprep.subr.bf16.mxu0 %v1590
  %1715 = vmatpush1.bf16.msra.mxu0 %v1589
  %1716 = vmatprep.subr.bf16.mxu0 0
  %1717 = vmatpush1.bf16.msra.mxu0 0
  %1718 = vmatprep.subr.bf16.mxu0 0
  %1719 = vmatpush1.bf16.msra.mxu0 0
  %1720 = vmatprep.subr.bf16.mxu0 0
  %1721 = vmatpush1.bf16.msra.mxu0 0
  %1722 = vmatprep.subr.bf16.mxu0 0
  %1723 = vmatpush1.bf16.msra.mxu0 0
  %1724 = vmatprep.subr.bf16.mxu0 0
  %1725 = vmatpush1.bf16.msra.mxu0 0
  %1726 = vmatprep.subr.bf16.mxu0 0
  %1727 = vmatpush1.bf16.msra.mxu0 0
  %1728 = vmatprep.subr.bf16.mxu0 0
  %1729 = vmatpush1.bf16.msra.mxu0 0
  %1730 = vmatprep.subr.bf16.mxu0 0
  %1731 = vmatpush1.bf16.msra.mxu0 0
  %1732 = vmatprep.mubr.bf16.mxu0 0
  %1733 = vmatmul.mubr.bf16.gmra.mrb[0].mxu0 %v1232
  %v1734 = vpop.f32.mrb[0].mxu0
  %v1735 = vadd.f32 %v1310, %v1734
  %v1736 = vpop.f32.mrb[0].mxu0
  %v1737 = vadd.f32 %v1314, %v1736
  %v1738 = vpop.f32.mrb[0].mxu0
  %v1739 = vpop.f32.mrb[0].mxu0
  %1740 = vdwg.mxu0
  %1741 = vmatprep.subr.bf16.mxu0 %v1536
  %1742 = vmatpush1.bf16.msra.mxu0 %v1535
  %1743 = vmatprep.subr.bf16.mxu0 %v1544
  %1744 = vmatpush1.bf16.msra.mxu0 %v1543
  %1745 = vmatprep.subr.bf16.mxu0 %v1552
  %1746 = vmatpush1.bf16.msra.mxu0 %v1551
  %1747 = vmatprep.subr.bf16.mxu0 %v1560
  %1748 = vmatpush1.bf16.msra.mxu0 %v1559
  %1749 = vmatprep.subr.bf16.mxu0 %v1568
  %1750 = vmatpush1.bf16.msra.mxu0 %v1567
  %1751 = vmatprep.subr.bf16.mxu0 %v1576
  %1752 = vmatpush1.bf16.msra.mxu0 %v1575
  %1753 = vmatprep.subr.bf16.mxu0 %v1584
  %1754 = vmatpush1.bf16.msra.mxu0 %v1583
  %1755 = vmatprep.subr.bf16.mxu0 %v1592
  %1756 = vmatpush1.bf16.msra.mxu0 %v1591
  %1757 = vmatprep.subr.bf16.mxu0 0
  %1758 = vmatpush1.bf16.msra.mxu0 0
  %1759 = vmatprep.subr.bf16.mxu0 0
  %1760 = vmatpush1.bf16.msra.mxu0 0
  %1761 = vmatprep.subr.bf16.mxu0 0
  %1762 = vmatpush1.bf16.msra.mxu0 0
  %1763 = vmatprep.subr.bf16.mxu0 0
  %1764 = vmatpush1.bf16.msra.mxu0 0
  %1765 = vmatprep.subr.bf16.mxu0 0
  %1766 = vmatpush1.bf16.msra.mxu0 0
  %1767 = vmatprep.subr.bf16.mxu0 0
  %1768 = vmatpush1.bf16.msra.mxu0 0
  %1769 = vmatprep.subr.bf16.mxu0 0
  %1770 = vmatpush1.bf16.msra.mxu0 0
  %1771 = vmatprep.subr.bf16.mxu0 0
  %1772 = vmatpush1.bf16.msra.mxu0 0
  %1773 = vmatprep.mubr.bf16.mxu0 0
  %1774 = vmatmul.mubr.bf16.gmra.mrb[0].mxu0 %v1232
  %v1775 = vpop.f32.mrb[0].mxu0
  %v1776 = vadd.f32 %v1318, %v1775
  %v1777 = vpop.f32.mrb[0].mxu0
  %v1778 = vadd.f32 %v1322, %v1777
  %v1779 = vpop.f32.mrb[0].mxu0
  %v1780 = vpop.f32.mrb[0].mxu0
  %1781 = vdwg.mxu0
  %1782 = vmatprep.subr.bf16.mxu0 %v1538
  %1783 = vmatpush1.bf16.msra.mxu0 %v1537
  %1784 = vmatprep.subr.bf16.mxu0 %v1546
  %1785 = vmatpush1.bf16.msra.mxu0 %v1545
  %1786 = vmatprep.subr.bf16.mxu0 %v1554
  %1787 = vmatpush1.bf16.msra.mxu0 %v1553
  %1788 = vmatprep.subr.bf16.mxu0 %v1562
  %1789 = vmatpush1.bf16.msra.mxu0 %v1561
  %1790 = vmatprep.subr.bf16.mxu0 %v1570
  %1791 = vmatpush1.bf16.msra.mxu0 %v1569
  %1792 = vmatprep.subr.bf16.mxu0 %v1578
  %1793 = vmatpush1.bf16.msra.mxu0 %v1577
  %1794 = vmatprep.subr.bf16.mxu0 %v1586
  %1795 = vmatpush1.bf16.msra.mxu0 %v1585
  %1796 = vmatprep.subr.bf16.mxu0 %v1594
  %1797 = vmatpush1.bf16.msra.mxu0 %v1593
  %1798 = vmatprep.subr.bf16.mxu0 0
  %1799 = vmatpush1.bf16.msra.mxu0 0
  %1800 = vmatprep.subr.bf16.mxu0 0
  %1801 = vmatpush1.bf16.msra.mxu0 0
  %1802 = vmatprep.subr.bf16.mxu0 0
  %1803 = vmatpush1.bf16.msra.mxu0 0
  %1804 = vmatprep.subr.bf16.mxu0 0
  %1805 = vmatpush1.bf16.msra.mxu0 0
  %1806 = vmatprep.subr.bf16.mxu0 0
  %1807 = vmatpush1.bf16.msra.mxu0 0
  %1808 = vmatprep.subr.bf16.mxu0 0
  %1809 = vmatpush1.bf16.msra.mxu0 0
  %1810 = vmatprep.subr.bf16.mxu0 0
  %1811 = vmatpush1.bf16.msra.mxu0 0
  %1812 = vmatprep.subr.bf16.mxu0 0
  %1813 = vmatpush1.bf16.msra.mxu0 0
  %1814 = vmatprep.mubr.bf16.mxu0 0
  %1815 = vmatmul.mubr.bf16.gmra.mrb[0].mxu0 %v1232
  %v1816 = vpop.f32.mrb[0].mxu0
  %v1817 = vadd.f32 %v1326, %v1816
  %v1818 = vpop.f32.mrb[0].mxu0
  %v1819 = vadd.f32 %v1330, %v1818
  %v1820 = vpop.f32.mrb[0].mxu0
  %v1821 = vpop.f32.mrb[0].mxu0
  %1822 = vdwg.mxu0
  %v1831 = vcombine.low %v1694, %v1696
  %v1832 = vcombine.low %v1735, %v1737
  %v1834 = vunpack.c.l.s4 1983009808
  %v1835 = vunpack.c.0.s8 %v1834
  %v1836 = vlaneseq
  %v1837 = vshrl.u32 %v1836, 7
  %v1838 = vsub.s32 %v1835, %v1837
  %v1839 = vrot.slane %v1831, %v1838
  %v1841 = vunpack.c.l.s4 1983009808
  %v1842 = vunpack.c.0.s8 %v1841
  %v1843 = vlaneseq
  %v1844 = vshrl.u32 %v1843, 7
  %v1845 = vsub.s32 %v1842, %v1844
  %v1846 = vrot.slane %v1832, %v1845
  %v1847 = vcombine.low %v1839, %v1846
  %v1848 = vcombine.low %v1776, %v1778
  %v1849 = vcombine.low %v1817, %v1819
  %v1851 = vunpack.c.l.s4 1983009808
  %v1852 = vunpack.c.0.s8 %v1851
  %v1853 = vlaneseq
  %v1854 = vshrl.u32 %v1853, 7
  %v1855 = vsub.s32 %v1852, %v1854
  %v1856 = vrot.slane %v1848, %v1855
  %v1858 = vunpack.c.l.s4 1983009808
  %v1859 = vunpack.c.0.s8 %v1858
  %v1860 = vlaneseq
  %v1861 = vshrl.u32 %v1860, 7
  %v1862 = vsub.s32 %v1859, %v1861
  %v1863 = vrot.slane %v1849, %v1862
  %v1864 = vcombine.low %v1856, %v1863
  %1867 = vst [vmem:[%s12] sm:$0xff] %v1847
  %1868 = vst [vmem:[%s12 + $0x8] sm:$0xff] %v1864
  // Predicated region
  $region50: #{autoencoder_forward.9} parent=0 // pred_check
    _
  $region51: #{autoencoder_forward.9} parent=0 // pred_check_branch
    %1870 = sbr.rel (0) target = $region53
  $region52: #{autoencoder_forward.9} parent=0 // pred_region
    _
  $region53: #{autoencoder_forward.9} parent=0 // pred_fallthru
    _
  // Predicated region
  $region54: #{autoencoder_forward.9} parent=0 // pred_check
    _
  $region55: #{autoencoder_forward.9} parent=0 // pred_check_branch
    %1872 = sbr.rel (0) target = $region57
  $region56: #{autoencoder_forward.9} parent=0 // pred_region
    _
  $region57: #{autoencoder_forward.9} parent=0 // pred_fallthru
    _

// kernel: autoencoder_forward.13
$region0: #{autoencoder_forward.13}
  #allocation0 [shape = 'u32[]', space=smem, size = 0x4, offset = 0x4, fixed_abs, tag = 'smem constant byte address 0x4 - core index']
  #allocation1 [shape = 'u32[144,128]{1,0:T(1,128)}', space=vmem, size = 0x12000, scoped, tag = 'internal scratch']
  %s0 = inlined_call_operand.vmem [shape: bf16[32,576], index: 0, kind: input, shape index: {}]
  %s1 = inlined_call_operand.vmem [shape: bf16[576,32], index: 1, kind: input, shape index: {}]
  %s2 = inlined_call_operand.vmem [shape: f32[1,32], index: 2, kind: input, shape index: {}]
  %s3 = inlined_call_operand.vmem [shape: f32[32,32], index: 3, kind: output, shape index: {}]
  %s4 = sld [smem:[#allocation0]]
  $region22: #{autoencoder_forward.13} parent=0
    _
  %s6 = ssub.s32 1, %s4
  %s7 = scalar_select 0, %s6, %s4
  // Predicated region
  $region2: #{autoencoder_forward.13} parent=0 // pred_check
    _
  $region3: #{autoencoder_forward.13} parent=0 // pred_check_branch
    %9 = sbr.rel (0) target = $region5
  $region4: #{autoencoder_forward.13} parent=0 // pred_region
    _
  $region5: #{autoencoder_forward.13} parent=0 // pred_fallthru
    _
  // Predicated region
  $region6: #{autoencoder_forward.13} parent=0 // pred_check
    _
  $region7: #{autoencoder_forward.13} parent=0 // pred_check_branch
    %11 = sbr.rel (0) target = $region9
  $region8: #{autoencoder_forward.13} parent=0 // pred_region
    _
  $region9: #{autoencoder_forward.13} parent=0 // pred_fallthru
    _
  // Predicated region
  $region10: #{autoencoder_forward.13} parent=0 // pred_check
    _
  $region11: #{autoencoder_forward.13} parent=0 // pred_check_branch
    %13 = sbr.rel (0) target = $region13
  $region12: #{autoencoder_forward.13} parent=0 // pred_region
    _
  $region13: #{autoencoder_forward.13} parent=0 // pred_fallthru
    _
  %v15 = vld [vmem:[%s0] sm:$0xff]
  %v16 = vld [vmem:[%s0 + $0x8] sm:$0xff]
  %v17 = vld [vmem:[%s0 + $0x10] sm:$0xf]
  %v18 = vld [vmem:[%s0 + $0x14] sm:$0xff]
  %v19 = vld [vmem:[%s0 + $0x1c] sm:$0xff]
  %v20 = vld [vmem:[%s0 + $0x24] sm:$0xf]
  %v21 = vld [vmem:[%s0 + $0x28] sm:$0xff]
  %v22 = vld [vmem:[%s0 + $0x30] sm:$0xff]
  %v23 = vld [vmem:[%s0 + $0x38] sm:$0xf]
  %v24 = vld [vmem:[%s0 + $0x3c] sm:$0xff]
  %v25 = vld [vmem:[%s0 + $0x44] sm:$0xff]
  %v26 = vld [vmem:[%s0 + $0x4c] sm:$0xf]
  %v27 = vld [vmem:[%s1] sm:$0xf]
  %v28 = vld [vmem:[%s1 + $0x4] sm:$0xf]
  %v29 = vld [vmem:[%s1 + $0x8] sm:$0xf]
  %v30 = vld [vmem:[%s1 + $0xc] sm:$0xf]
  %v31 = vld [vmem:[%s1 + $0x10] sm:$0xf]
  %v32 = vld [vmem:[%s1 + $0x14] sm:$0xf]
  %v33 = vld [vmem:[%s1 + $0x18] sm:$0xf]
  %v34 = vld [vmem:[%s1 + $0x1c] sm:$0xf]
  %v35 = vld [vmem:[%s1 + $0x20] sm:$0xf]
  %v36 = vld [vmem:[%s1 + $0x24] sm:$0xf]
  %v37 = vld [vmem:[%s1 + $0x28] sm:$0xf]
  %v38 = vld [vmem:[%s1 + $0x2c] sm:$0xf]
  %v39 = vld [vmem:[%s1 + $0x30] sm:$0xf]
  %v40 = vld [vmem:[%s1 + $0x34] sm:$0xf]
  %v41 = vld [vmem:[%s1 + $0x38] sm:$0xf]
  %v42 = vld [vmem:[%s1 + $0x3c] sm:$0xf]
  %v43 = vld [vmem:[%s1 + $0x40] sm:$0xf]
  %v44 = vld [vmem:[%s1 + $0x44] sm:$0xf]
  %v45 = vld [vmem:[%s1 + $0x48] sm:$0xf]
  %v46 = vld [vmem:[%s1 + $0x4c] sm:$0xf]
  %v47 = vld [vmem:[%s1 + $0x50] sm:$0xf]
  %v48 = vld [vmem:[%s1 + $0x54] sm:$0xf]
  %v49 = vld [vmem:[%s1 + $0x58] sm:$0xf]
  %v50 = vld [vmem:[%s1 + $0x5c] sm:$0xf]
  %v51 = vld [vmem:[%s1 + $0x60] sm:$0xf]
  %v52 = vld [vmem:[%s1 + $0x64] sm:$0xf]
  %v53 = vld [vmem:[%s1 + $0x68] sm:$0xf]
  %v54 = vld [vmem:[%s1 + $0x6c] sm:$0xf]
  %v55 = vld [vmem:[%s1 + $0x70] sm:$0xf]
  %v56 = vld [vmem:[%s1 + $0x74] sm:$0xf]
  %v57 = vld [vmem:[%s1 + $0x78] sm:$0xf]
  %v58 = vld [vmem:[%s1 + $0x7c] sm:$0xf]
  %v59 = vld [vmem:[%s1 + $0x80] sm:$0xf]
  %v60 = vld [vmem:[%s1 + $0x84] sm:$0xf]
  %v61 = vld [vmem:[%s1 + $0x88] sm:$0xf]
  %v62 = vld [vmem:[%s1 + $0x8c] sm:$0xf]
  %v63 = vld [vmem:[%s1 + $0x90] sm:$0xf]
  %v64 = vld [vmem:[%s1 + $0x94] sm:$0xf]
  %v65 = vld [vmem:[%s1 + $0x98] sm:$0xf]
  %v66 = vld [vmem:[%s1 + $0x9c] sm:$0xf]
  %v67 = vld [vmem:[%s1 + $0xa0] sm:$0xf]
  %v68 = vld [vmem:[%s1 + $0xa4] sm:$0xf]
  %v69 = vld [vmem:[%s1 + $0xa8] sm:$0xf]
  %v70 = vld [vmem:[%s1 + $0xac] sm:$0xf]
  %v71 = vld [vmem:[%s1 + $0xb0] sm:$0xf]
  %v72 = vld [vmem:[%s1 + $0xb4] sm:$0xf]
  %v73 = vld [vmem:[%s1 + $0xb8] sm:$0xf]
  %v74 = vld [vmem:[%s1 + $0xbc] sm:$0xf]
  %v75 = vld [vmem:[%s1 + $0xc0] sm:$0xf]
  %v76 = vld [vmem:[%s1 + $0xc4] sm:$0xf]
  %v77 = vld [vmem:[%s1 + $0xc8] sm:$0xf]
  %v78 = vld [vmem:[%s1 + $0xcc] sm:$0xf]
  %v79 = vld [vmem:[%s1 + $0xd0] sm:$0xf]
  %v80 = vld [vmem:[%s1 + $0xd4] sm:$0xf]
  %v81 = vld [vmem:[%s1 + $0xd8] sm:$0xf]
  %v82 = vld [vmem:[%s1 + $0xdc] sm:$0xf]
  %v83 = vld [vmem:[%s1 + $0xe0] sm:$0xf]
  %v84 = vld [vmem:[%s1 + $0xe4] sm:$0xf]
  %v85 = vld [vmem:[%s1 + $0xe8] sm:$0xf]
  %v86 = vld [vmem:[%s1 + $0xec] sm:$0xf]
  %v87 = vld [vmem:[%s1 + $0xf0] sm:$0xf]
  %v88 = vld [vmem:[%s1 + $0xf4] sm:$0xf]
  %v89 = vld [vmem:[%s1 + $0xf8] sm:$0xf]
  %v90 = vld [vmem:[%s1 + $0xfc] sm:$0xf]
  %v91 = vld [vmem:[%s1 + $0x100] sm:$0xf]
  %v92 = vld [vmem:[%s1 + $0x104] sm:$0xf]
  %v93 = vld [vmem:[%s1 + $0x108] sm:$0xf]
  %v94 = vld [vmem:[%s1 + $0x10c] sm:$0xf]
  %v95 = vld [vmem:[%s1 + $0x110] sm:$0xf]
  %v96 = vld [vmem:[%s1 + $0x114] sm:$0xf]
  %v97 = vld [vmem:[%s1 + $0x118] sm:$0xf]
  %v98 = vld [vmem:[%s1 + $0x11c] sm:$0xf]
  %v99 = vld [vmem:[%s2] sm:$0x1]
  %v101 = vlaneseq
  %v102 = vshrl.u32 %v101, 7
  %v103 = vsub.s32 0, %v102
  %v104 = vrot.slane %v99, %v103
  %v118 = vunpack.c.l.b16 %v15
  %v119 = vunpack.c.h.b16 %v15
  %v120 = vunpack.c.l.b16 %v16
  %v121 = vunpack.c.h.b16 %v16
  %v122 = vunpack.c.l.b16 %v17
  %v123 = vunpack.c.l.b16 %v18
  %v124 = vunpack.c.h.b16 %v18
  %v125 = vunpack.c.l.b16 %v19
  %v126 = vunpack.c.h.b16 %v19
  %v127 = vunpack.c.l.b16 %v20
  %v128 = vunpack.c.l.b16 %v21
  %v129 = vunpack.c.h.b16 %v21
  %v130 = vunpack.c.l.b16 %v22
  %v131 = vunpack.c.h.b16 %v22
  %v132 = vunpack.c.l.b16 %v23
  %v133 = vunpack.c.l.b16 %v24
  %v134 = vunpack.c.h.b16 %v24
  %v135 = vunpack.c.l.b16 %v25
  %v136 = vunpack.c.h.b16 %v25
  %v137 = vunpack.c.l.b16 %v26
  %v138 = vpack.c.b16 %v123, %v118
  %v139 = vpack.c.b16 %v124, %v119
  %v140 = vpack.c.b16 %v125, %v120
  %v141 = vpack.c.b16 %v126, %v121
  %v142 = vpack.c.b16 %v127, %v122
  %v143 = vpack.c.b16 %v133, %v128
  %v144 = vpack.c.b16 %v134, %v129
  %v145 = vpack.c.b16 %v135, %v130
  %v146 = vpack.c.b16 %v136, %v131
  %v147 = vpack.c.b16 %v137, %v132
  %v228 = vunpack.c.l.b16 %v27
  %v229 = vunpack.c.l.b16 %v28
  %v230 = vunpack.c.l.b16 %v29
  %v231 = vunpack.c.l.b16 %v30
  %v232 = vunpack.c.l.b16 %v31
  %v233 = vunpack.c.l.b16 %v32
  %v234 = vunpack.c.l.b16 %v33
  %v235 = vunpack.c.l.b16 %v34
  %v236 = vunpack.c.l.b16 %v35
  %v237 = vunpack.c.l.b16 %v36
  %v238 = vunpack.c.l.b16 %v37
  %v239 = vunpack.c.l.b16 %v38
  %v240 = vunpack.c.l.b16 %v39
  %v241 = vunpack.c.l.b16 %v40
  %v242 = vunpack.c.l.b16 %v41
  %v243 = vunpack.c.l.b16 %v42
  %v244 = vunpack.c.l.b16 %v43
  %v245 = vunpack.c.l.b16 %v44
  %v246 = vunpack.c.l.b16 %v45
  %v247 = vunpack.c.l.b16 %v46
  %v248 = vunpack.c.l.b16 %v47
  %v249 = vunpack.c.l.b16 %v48
  %v250 = vunpack.c.l.b16 %v49
  %v251 = vunpack.c.l.b16 %v50
  %v252 = vunpack.c.l.b16 %v51
  %v253 = vunpack.c.l.b16 %v52
  %v254 = vunpack.c.l.b16 %v53
  %v255 = vunpack.c.l.b16 %v54
  %v256 = vunpack.c.l.b16 %v55
  %v257 = vunpack.c.l.b16 %v56
  %v258 = vunpack.c.l.b16 %v57
  %v259 = vunpack.c.l.b16 %v58
  %v260 = vunpack.c.l.b16 %v59
  %v261 = vunpack.c.l.b16 %v60
  %v262 = vunpack.c.l.b16 %v61
  %v263 = vunpack.c.l.b16 %v62
  %v264 = vunpack.c.l.b16 %v63
  %v265 = vunpack.c.l.b16 %v64
  %v266 = vunpack.c.l.b16 %v65
  %v267 = vunpack.c.l.b16 %v66
  %v268 = vunpack.c.l.b16 %v67
  %v269 = vunpack.c.l.b16 %v68
  %v270 = vunpack.c.l.b16 %v69
  %v271 = vunpack.c.l.b16 %v70
  %v272 = vunpack.c.l.b16 %v71
  %v273 = vunpack.c.l.b16 %v72
  %v274 = vunpack.c.l.b16 %v73
  %v275 = vunpack.c.l.b16 %v74
  %v276 = vunpack.c.l.b16 %v75
  %v277 = vunpack.c.l.b16 %v76
  %v278 = vunpack.c.l.b16 %v77
  %v279 = vunpack.c.l.b16 %v78
  %v280 = vunpack.c.l.b16 %v79
  %v281 = vunpack.c.l.b16 %v80
  %v282 = vunpack.c.l.b16 %v81
  %v283 = vunpack.c.l.b16 %v82
  %v284 = vunpack.c.l.b16 %v83
  %v285 = vunpack.c.l.b16 %v84
  %v286 = vunpack.c.l.b16 %v85
  %v287 = vunpack.c.l.b16 %v86
  %v288 = vunpack.c.l.b16 %v87
  %v289 = vunpack.c.l.b16 %v88
  %v290 = vunpack.c.l.b16 %v89
  %v291 = vunpack.c.l.b16 %v90
  %v292 = vunpack.c.l.b16 %v91
  %v293 = vunpack.c.l.b16 %v92
  %v294 = vunpack.c.l.b16 %v93
  %v295 = vunpack.c.l.b16 %v94
  %v296 = vunpack.c.l.b16 %v95
  %v297 = vunpack.c.l.b16 %v96
  %v298 = vunpack.c.l.b16 %v97
  %v299 = vunpack.c.l.b16 %v98
  %v300 = vpack.c.b16 %v229, %v228
  %v301 = vpack.c.b16 %v231, %v230
  %v302 = vpack.c.b16 %v233, %v232
  %v303 = vpack.c.b16 %v235, %v234
  %v304 = vpack.c.b16 %v237, %v236
  %v305 = vpack.c.b16 %v239, %v238
  %v306 = vpack.c.b16 %v241, %v240
  %v307 = vpack.c.b16 %v243, %v242
  %v308 = vpack.c.b16 %v245, %v244
  %v309 = vpack.c.b16 %v247, %v246
  %v310 = vpack.c.b16 %v249, %v248
  %v311 = vpack.c.b16 %v251, %v250
  %v312 = vpack.c.b16 %v253, %v252
  %v313 = vpack.c.b16 %v255, %v254
  %v314 = vpack.c.b16 %v257, %v256
  %v315 = vpack.c.b16 %v259, %v258
  %v316 = vpack.c.b16 %v261, %v260
  %v317 = vpack.c.b16 %v263, %v262
  %v318 = vpack.c.b16 %v265, %v264
  %v319 = vpack.c.b16 %v267, %v266
  %v320 = vpack.c.b16 %v269, %v268
  %v321 = vpack.c.b16 %v271, %v270
  %v322 = vpack.c.b16 %v273, %v272
  %v323 = vpack.c.b16 %v275, %v274
  %v324 = vpack.c.b16 %v277, %v276
  %v325 = vpack.c.b16 %v279, %v278
  %v326 = vpack.c.b16 %v281, %v280
  %v327 = vpack.c.b16 %v283, %v282
  %v328 = vpack.c.b16 %v285, %v284
  %v329 = vpack.c.b16 %v287, %v286
  %v330 = vpack.c.b16 %v289, %v288
  %v331 = vpack.c.b16 %v291, %v290
  %v332 = vpack.c.b16 %v293, %v292
  %v333 = vpack.c.b16 %v295, %v294
  %v334 = vpack.c.b16 %v297, %v296
  %v335 = vpack.c.b16 %v299, %v298
  %vm372 = vcmask 523264
  %v374 = vsel %vm372, %v142, 0
  %v377 = vsel %vm372, %v147, 0
  %379 = vmatprep.subr.bf16.mxu0 0
  %380 = vmatpush1.bf16.msra.mxu0 %v300
  %381 = vmatprep.subr.bf16.mxu0 0
  %382 = vmatpush1.bf16.msra.mxu0 %v301
  %383 = vmatprep.subr.bf16.mxu0 0
  %384 = vmatpush1.bf16.msra.mxu0 %v302
  %385 = vmatprep.subr.bf16.mxu0 0
  %386 = vmatpush1.bf16.msra.mxu0 %v303
  %387 = vmatprep.subr.bf16.mxu0 0
  %388 = vmatpush1.bf16.msra.mxu0 %v304
  %389 = vmatprep.subr.bf16.mxu0 0
  %390 = vmatpush1.bf16.msra.mxu0 %v305
  %391 = vmatprep.subr.bf16.mxu0 0
  %392 = vmatpush1.bf16.msra.mxu0 %v306
  %393 = vmatprep.subr.bf16.mxu0 0
  %394 = vmatpush1.bf16.msra.mxu0 %v307
  %395 = vmatprep.subr.bf16.mxu0 0
  %396 = vmatpush1.bf16.msra.mxu0 %v308
  %397 = vmatprep.subr.bf16.mxu0 0
  %398 = vmatpush1.bf16.msra.mxu0 %v309
  %399 = vmatprep.subr.bf16.mxu0 0
  %400 = vmatpush1.bf16.msra.mxu0 %v310
  %401 = vmatprep.subr.bf16.mxu0 0
  %402 = vmatpush1.bf16.msra.mxu0 %v311
  %403 = vmatprep.subr.bf16.mxu0 0
  %404 = vmatpush1.bf16.msra.mxu0 %v312
  %405 = vmatprep.subr.bf16.mxu0 0
  %406 = vmatpush1.bf16.msra.mxu0 %v313
  %407 = vmatprep.subr.bf16.mxu0 0
  %408 = vmatpush1.bf16.msra.mxu0 %v314
  %409 = vmatprep.subr.bf16.mxu0 0
  %410 = vmatpush1.bf16.msra.mxu0 %v315
  %411 = vmatprep.mubr.bf16.mxu0 %v139
  %412 = vmatmul.mubr.bf16.gmra.mrb[0].mxu0 %v138
  %v413 = vpop.f32.mrb[0].mxu0
  %v414 = vadd.f32 %v104, %v413
  %v415 = vpop.f32.mrb[0].mxu0
  %v416 = vpop.f32.mrb[0].mxu0
  %v417 = vadd.f32 %v104, %v416
  %v418 = vpop.f32.mrb[0].mxu0
  %419 = vmatprep.mubr.bf16.mxu0 %v144
  %420 = vmatmul.mubr.bf16.gmra.mrb[0].mxu0 %v143
  %v421 = vpop.f32.mrb[0].mxu0
  %v422 = vadd.f32 %v104, %v421
  %v423 = vpop.f32.mrb[0].mxu0
  %v424 = vpop.f32.mrb[0].mxu0
  %v425 = vadd.f32 %v104, %v424
  %v426 = vpop.f32.mrb[0].mxu0
  %427 = vdwg.mxu0
  %428 = vmatprep.subr.bf16.mxu0 0
  %429 = vmatpush1.bf16.msra.mxu0 %v316
  %430 = vmatprep.subr.bf16.mxu0 0
  %431 = vmatpush1.bf16.msra.mxu0 %v317
  %432 = vmatprep.subr.bf16.mxu0 0
  %433 = vmatpush1.bf16.msra.mxu0 %v318
  %434 = vmatprep.subr.bf16.mxu0 0
  %435 = vmatpush1.bf16.msra.mxu0 %v319
  %436 = vmatprep.subr.bf16.mxu0 0
  %437 = vmatpush1.bf16.msra.mxu0 %v320
  %438 = vmatprep.subr.bf16.mxu0 0
  %439 = vmatpush1.bf16.msra.mxu0 %v321
  %440 = vmatprep.subr.bf16.mxu0 0
  %441 = vmatpush1.bf16.msra.mxu0 %v322
  %442 = vmatprep.subr.bf16.mxu0 0
  %443 = vmatpush1.bf16.msra.mxu0 %v323
  %444 = vmatprep.subr.bf16.mxu0 0
  %445 = vmatpush1.bf16.msra.mxu0 %v324
  %446 = vmatprep.subr.bf16.mxu0 0
  %447 = vmatpush1.bf16.msra.mxu0 %v325
  %448 = vmatprep.subr.bf16.mxu0 0
  %449 = vmatpush1.bf16.msra.mxu0 %v326
  %450 = vmatprep.subr.bf16.mxu0 0
  %451 = vmatpush1.bf16.msra.mxu0 %v327
  %452 = vmatprep.subr.bf16.mxu0 0
  %453 = vmatpush1.bf16.msra.mxu0 %v328
  %454 = vmatprep.subr.bf16.mxu0 0
  %455 = vmatpush1.bf16.msra.mxu0 %v329
  %456 = vmatprep.subr.bf16.mxu0 0
  %457 = vmatpush1.bf16.msra.mxu0 %v330
  %458 = vmatprep.subr.bf16.mxu0 0
  %459 = vmatpush1.bf16.msra.mxu0 %v331
  %460 = vmatprep.mubr.bf16.mxu0 %v141
  %461 = vmatmul.mubr.bf16.gmra.mrb[0].mxu0 %v140
  %v462 = vpop.f32.mrb[0].mxu0
  %v463 = vadd.f32 %v414, %v462
  %v464 = vpop.f32.mrb[0].mxu0
  %v465 = vpop.f32.mrb[0].mxu0
  %v466 = vadd.f32 %v417, %v465
  %v467 = vpop.f32.mrb[0].mxu0
  %468 = vmatprep.mubr.bf16.mxu0 %v146
  %469 = vmatmul.mubr.bf16.gmra.mrb[0].mxu0 %v145
  %v470 = vpop.f32.mrb[0].mxu0
  %v471 = vadd.f32 %v422, %v470
  %v472 = vpop.f32.mrb[0].mxu0
  %v473 = vpop.f32.mrb[0].mxu0
  %v474 = vadd.f32 %v425, %v473
  %v475 = vpop.f32.mrb[0].mxu0
  %476 = vdwg.mxu0
  %477 = vmatprep.subr.bf16.mxu0 0
  %478 = vmatpush1.bf16.msra.mxu0 %v332
  %479 = vmatprep.subr.bf16.mxu0 0
  %480 = vmatpush1.bf16.msra.mxu0 %v333
  %481 = vmatprep.subr.bf16.mxu0 0
  %482 = vmatpush1.bf16.msra.mxu0 %v334
  %483 = vmatprep.subr.bf16.mxu0 0
  %484 = vmatpush1.bf16.msra.mxu0 %v335
  %485 = vmatprep.subr.bf16.mxu0 0
  %486 = vmatpush1.bf16.msra.mxu0 0
  %487 = vmatprep.subr.bf16.mxu0 0
  %488 = vmatpush1.bf16.msra.mxu0 0
  %489 = vmatprep.subr.bf16.mxu0 0
  %490 = vmatpush1.bf16.msra.mxu0 0
  %491 = vmatprep.subr.bf16.mxu0 0
  %492 = vmatpush1.bf16.msra.mxu0 0
  %493 = vmatprep.subr.bf16.mxu0 0
  %494 = vmatpush1.bf16.msra.mxu0 0
  %495 = vmatprep.subr.bf16.mxu0 0
  %496 = vmatpush1.bf16.msra.mxu0 0
  %497 = vmatprep.subr.bf16.mxu0 0
  %498 = vmatpush1.bf16.msra.mxu0 0
  %499 = vmatprep.subr.bf16.mxu0 0
  %500 = vmatpush1.bf16.msra.mxu0 0
  %501 = vmatprep.subr.bf16.mxu0 0
  %502 = vmatpush1.bf16.msra.mxu0 0
  %503 = vmatprep.subr.bf16.mxu0 0
  %504 = vmatpush1.bf16.msra.mxu0 0
  %505 = vmatprep.subr.bf16.mxu0 0
  %506 = vmatpush1.bf16.msra.mxu0 0
  %507 = vmatprep.subr.bf16.mxu0 0
  %508 = vmatpush1.bf16.msra.mxu0 0
  %509 = vmatprep.mubr.bf16.mxu0 0
  %510 = vmatmul.mubr.bf16.gmra.mrb[0].mxu0 %v374
  %v511 = vpop.f32.mrb[0].mxu0
  %v512 = vadd.f32 %v463, %v511
  %v513 = vpop.f32.mrb[0].mxu0
  %v514 = vpop.f32.mrb[0].mxu0
  %v515 = vadd.f32 %v466, %v514
  %v516 = vpop.f32.mrb[0].mxu0
  %517 = vmatprep.mubr.bf16.mxu0 0
  %518 = vmatmul.mubr.bf16.gmra.mrb[0].mxu0 %v377
  %v519 = vpop.f32.mrb[0].mxu0
  %v520 = vadd.f32 %v471, %v519
  %v521 = vpop.f32.mrb[0].mxu0
  %v522 = vpop.f32.mrb[0].mxu0
  %v523 = vadd.f32 %v474, %v522
  %v524 = vpop.f32.mrb[0].mxu0
  %525 = vdwg.mxu0
  %v526 = vmax.f32 %v512, 0.0
  %v527 = vmax.f32 %v515, 0.0
  %v528 = vmax.f32 %v520, 0.0
  %v529 = vmax.f32 %v523, 0.0
  %vm530 = vcmask 261120
  %531 = vst.msk [vmem:[%s3] sm:$0xff] %vm530, %v526
  %532 = vst.msk [vmem:[%s3 + $0x8] sm:$0xff] %vm530, %v527
  %533 = vst.msk [vmem:[%s3 + $0x10] sm:$0xff] %vm530, %v528
  %534 = vst.msk [vmem:[%s3 + $0x18] sm:$0xff] %vm530, %v529
  // Predicated region
  $region14: #{autoencoder_forward.13} parent=0 // pred_check
    _
  $region15: #{autoencoder_forward.13} parent=0 // pred_check_branch
    %536 = sbr.rel (0) target = $region17
  $region16: #{autoencoder_forward.13} parent=0 // pred_region
    _
  $region17: #{autoencoder_forward.13} parent=0 // pred_fallthru
    _
  // Predicated region
  $region18: #{autoencoder_forward.13} parent=0 // pred_check
    _
  $region19: #{autoencoder_forward.13} parent=0 // pred_check_branch
    %538 = sbr.rel (0) target = $region21
  $region20: #{autoencoder_forward.13} parent=0 // pred_region
    _
  $region21: #{autoencoder_forward.13} parent=0 // pred_fallthru
    _

// kernel: autoencoder_forward.14
$region0: #{autoencoder_forward.14}
  #allocation0 [shape = 'u32[]', space=smem, size = 0x4, offset = 0x4, fixed_abs, tag = 'smem constant byte address 0x4 - core index']
  #allocation1 [shape = 'u32[144,128]{1,0:T(1,128)}', space=vmem, size = 0x12000, scoped, tag = 'internal scratch']
  %s0 = inlined_call_operand.vmem [shape: bf16[128,288], index: 0, kind: input, shape index: {}]
  %s1 = inlined_call_operand.vmem [shape: bf16[288,16], index: 1, kind: input, shape index: {}]
  %s2 = inlined_call_operand.vmem [shape: f32[1,16], index: 2, kind: input, shape index: {}]
  %s3 = inlined_call_operand.vmem [shape: f32[128,16], index: 3, kind: output, shape index: {}]
  %s4 = sld [smem:[#allocation0]]
  $region22: #{autoencoder_forward.14} parent=0
    _
  %s6 = ssub.s32 1, %s4
  %s7 = scalar_select 0, %s6, %s4
  // Predicated region
  $region2: #{autoencoder_forward.14} parent=0 // pred_check
    _
  $region3: #{autoencoder_forward.14} parent=0 // pred_check_branch
    %9 = sbr.rel (0) target = $region5
  $region4: #{autoencoder_forward.14} parent=0 // pred_region
    _
  $region5: #{autoencoder_forward.14} parent=0 // pred_fallthru
    _
  // Predicated region
  $region6: #{autoencoder_forward.14} parent=0 // pred_check
    _
  $region7: #{autoencoder_forward.14} parent=0 // pred_check_branch
    %11 = sbr.rel (0) target = $region9
  $region8: #{autoencoder_forward.14} parent=0 // pred_region
    _
  $region9: #{autoencoder_forward.14} parent=0 // pred_fallthru
    _
  // Predicated region
  $region10: #{autoencoder_forward.14} parent=0 // pred_check
    _
  $region11: #{autoencoder_forward.14} parent=0 // pred_check_branch
    %13 = sbr.rel (0) target = $region13
  $region12: #{autoencoder_forward.14} parent=0 // pred_region
    _
  $region13: #{autoencoder_forward.14} parent=0 // pred_fallthru
    _
  %v15 = vld [vmem:[%s0] sm:$0xff]
  %v16 = vld [vmem:[%s0 + $0x8] sm:$0xf]
  %v17 = vld [vmem:[%s0 + $0xc] sm:$0xff]
  %v18 = vld [vmem:[%s0 + $0x14] sm:$0xf]
  %v19 = vld [vmem:[%s0 + $0x18] sm:$0xff]
  %v20 = vld [vmem:[%s0 + $0x20] sm:$0xf]
  %v21 = vld [vmem:[%s0 + $0x24] sm:$0xff]
  %v22 = vld [vmem:[%s0 + $0x2c] sm:$0xf]
  %v23 = vld [vmem:[%s0 + $0x30] sm:$0xff]
  %v24 = vld [vmem:[%s0 + $0x38] sm:$0xf]
  %v25 = vld [vmem:[%s0 + $0x3c] sm:$0xff]
  %v26 = vld [vmem:[%s0 + $0x44] sm:$0xf]
  %v27 = vld [vmem:[%s0 + $0x48] sm:$0xff]
  %v28 = vld [vmem:[%s0 + $0x50] sm:$0xf]
  %v29 = vld [vmem:[%s0 + $0x54] sm:$0xff]
  %v30 = vld [vmem:[%s0 + $0x5c] sm:$0xf]
  %v31 = vld [vmem:[%s0 + $0x60] sm:$0xff]
  %v32 = vld [vmem:[%s0 + $0x68] sm:$0xf]
  %v33 = vld [vmem:[%s0 + $0x6c] sm:$0xff]
  %v34 = vld [vmem:[%s0 + $0x74] sm:$0xf]
  %v35 = vld [vmem:[%s0 + $0x78] sm:$0xff]
  %v36 = vld [vmem:[%s0 + $0x80] sm:$0xf]
  %v37 = vld [vmem:[%s0 + $0x84] sm:$0xff]
  %v38 = vld [vmem:[%s0 + $0x8c] sm:$0xf]
  %v39 = vld [vmem:[%s0 + $0x90] sm:$0xff]
  %v40 = vld [vmem:[%s0 + $0x98] sm:$0xf]
  %v41 = vld [vmem:[%s0 + $0x9c] sm:$0xff]
  %v42 = vld [vmem:[%s0 + $0xa4] sm:$0xf]
  %v43 = vld [vmem:[%s0 + $0xa8] sm:$0xff]
  %v44 = vld [vmem:[%s0 + $0xb0] sm:$0xf]
  %v45 = vld [vmem:[%s0 + $0xb4] sm:$0xff]
  %v46 = vld [vmem:[%s0 + $0xbc] sm:$0xf]
  %v47 = vld [vmem:[%s1] sm:$0xf]
  %v48 = vld [vmem:[%s1 + $0x4] sm:$0xf]
  %v49 = vld [vmem:[%s1 + $0x8] sm:$0xf]
  %v50 = vld [vmem:[%s1 + $0xc] sm:$0xf]
  %v51 = vld [vmem:[%s1 + $0x10] sm:$0xf]
  %v52 = vld [vmem:[%s1 + $0x14] sm:$0xf]
  %v53 = vld [vmem:[%s1 + $0x18] sm:$0xf]
  %v54 = vld [vmem:[%s1 + $0x1c] sm:$0xf]
  %v55 = vld [vmem:[%s1 + $0x20] sm:$0xf]
  %v56 = vld [vmem:[%s1 + $0x24] sm:$0xf]
  %v57 = vld [vmem:[%s1 + $0x28] sm:$0xf]
  %v58 = vld [vmem:[%s1 + $0x2c] sm:$0xf]
  %v59 = vld [vmem:[%s1 + $0x30] sm:$0xf]
  %v60 = vld [vmem:[%s1 + $0x34] sm:$0xf]
  %v61 = vld [vmem:[%s1 + $0x38] sm:$0xf]
  %v62 = vld [vmem:[%s1 + $0x3c] sm:$0xf]
  %v63 = vld [vmem:[%s1 + $0x40] sm:$0xf]
  %v64 = vld [vmem:[%s1 + $0x44] sm:$0xf]
  %v65 = vld [vmem:[%s1 + $0x48] sm:$0xf]
  %v66 = vld [vmem:[%s1 + $0x4c] sm:$0xf]
  %v67 = vld [vmem:[%s1 + $0x50] sm:$0xf]
  %v68 = vld [vmem:[%s1 + $0x54] sm:$0xf]
  %v69 = vld [vmem:[%s1 + $0x58] sm:$0xf]
  %v70 = vld [vmem:[%s1 + $0x5c] sm:$0xf]
  %v71 = vld [vmem:[%s1 + $0x60] sm:$0xf]
  %v72 = vld [vmem:[%s1 + $0x64] sm:$0xf]
  %v73 = vld [vmem:[%s1 + $0x68] sm:$0xf]
  %v74 = vld [vmem:[%s1 + $0x6c] sm:$0xf]
  %v75 = vld [vmem:[%s1 + $0x70] sm:$0xf]
  %v76 = vld [vmem:[%s1 + $0x74] sm:$0xf]
  %v77 = vld [vmem:[%s1 + $0x78] sm:$0xf]
  %v78 = vld [vmem:[%s1 + $0x7c] sm:$0xf]
  %v79 = vld [vmem:[%s1 + $0x80] sm:$0xf]
  %v80 = vld [vmem:[%s1 + $0x84] sm:$0xf]
  %v81 = vld [vmem:[%s1 + $0x88] sm:$0xf]
  %v82 = vld [vmem:[%s1 + $0x8c] sm:$0xf]
  %v83 = vld [vmem:[%s2] sm:$0x1]
  %v85 = vlaneseq
  %v86 = vshrl.u32 %v85, 7
  %v87 = vsub.s32 0, %v86
  %v88 = vrot.slane %v83, %v87
  %v122 = vunpack.c.l.b16 %v15
  %v123 = vunpack.c.h.b16 %v15
  %v124 = vunpack.c.l.b16 %v16
  %v125 = vunpack.c.l.b16 %v17
  %v126 = vunpack.c.h.b16 %v17
  %v127 = vunpack.c.l.b16 %v18
  %v128 = vunpack.c.l.b16 %v19
  %v129 = vunpack.c.h.b16 %v19
  %v130 = vunpack.c.l.b16 %v20
  %v131 = vunpack.c.l.b16 %v21
  %v132 = vunpack.c.h.b16 %v21
  %v133 = vunpack.c.l.b16 %v22
  %v134 = vunpack.c.l.b16 %v23
  %v135 = vunpack.c.h.b16 %v23
  %v136 = vunpack.c.l.b16 %v24
  %v137 = vunpack.c.l.b16 %v25
  %v138 = vunpack.c.h.b16 %v25
  %v139 = vunpack.c.l.b16 %v26
  %v140 = vunpack.c.l.b16 %v27
  %v141 = vunpack.c.h.b16 %v27
  %v142 = vunpack.c.l.b16 %v28
  %v143 = vunpack.c.l.b16 %v29
  %v144 = vunpack.c.h.b16 %v29
  %v145 = vunpack.c.l.b16 %v30
  %v146 = vunpack.c.l.b16 %v31
  %v147 = vunpack.c.h.b16 %v31
  %v148 = vunpack.c.l.b16 %v32
  %v149 = vunpack.c.l.b16 %v33
  %v150 = vunpack.c.h.b16 %v33
  %v151 = vunpack.c.l.b16 %v34
  %v152 = vunpack.c.l.b16 %v35
  %v153 = vunpack.c.h.b16 %v35
  %v154 = vunpack.c.l.b16 %v36
  %v155 = vunpack.c.l.b16 %v37
  %v156 = vunpack.c.h.b16 %v37
  %v157 = vunpack.c.l.b16 %v38
  %v158 = vunpack.c.l.b16 %v39
  %v159 = vunpack.c.h.b16 %v39
  %v160 = vunpack.c.l.b16 %v40
  %v161 = vunpack.c.l.b16 %v41
  %v162 = vunpack.c.h.b16 %v41
  %v163 = vunpack.c.l.b16 %v42
  %v164 = vunpack.c.l.b16 %v43
  %v165 = vunpack.c.h.b16 %v43
  %v166 = vunpack.c.l.b16 %v44
  %v167 = vunpack.c.l.b16 %v45
  %v168 = vunpack.c.h.b16 %v45
  %v169 = vunpack.c.l.b16 %v46
  %v170 = vpack.c.b16 %v125, %v122
  %v171 = vpack.c.b16 %v126, %v123
  %v172 = vpack.c.b16 %v127, %v124
  %v173 = vpack.c.b16 %v131, %v128
  %v174 = vpack.c.b16 %v132, %v129
  %v175 = vpack.c.b16 %v133, %v130
  %v176 = vpack.c.b16 %v137, %v134
  %v177 = vpack.c.b16 %v138, %v135
  %v178 = vpack.c.b16 %v139, %v136
  %v179 = vpack.c.b16 %v143, %v140
  %v180 = vpack.c.b16 %v144, %v141
  %v181 = vpack.c.b16 %v145, %v142
  %v182 = vpack.c.b16 %v149, %v146
  %v183 = vpack.c.b16 %v150, %v147
  %v184 = vpack.c.b16 %v151, %v148
  %v185 = vpack.c.b16 %v155, %v152
  %v186 = vpack.c.b16 %v156, %v153
  %v187 = vpack.c.b16 %v157, %v154
  %v188 = vpack.c.b16 %v161, %v158
  %v189 = vpack.c.b16 %v162, %v159
  %v190 = vpack.c.b16 %v163, %v160
  %v191 = vpack.c.b16 %v167, %v164
  %v192 = vpack.c.b16 %v168, %v165
  %v193 = vpack.c.b16 %v169, %v166
  %v246 = vunpack.c.l.b16 %v47
  %v247 = vunpack.c.l.b16 %v48
  %v248 = vunpack.c.l.b16 %v49
  %v249 = vunpack.c.l.b16 %v50
  %v250 = vunpack.c.l.b16 %v51
  %v251 = vunpack.c.l.b16 %v52
  %v252 = vunpack.c.l.b16 %v53
  %v253 = vunpack.c.l.b16 %v54
  %v254 = vunpack.c.l.b16 %v55
  %v255 = vunpack.c.l.b16 %v56
  %v256 = vunpack.c.l.b16 %v57
  %v257 = vunpack.c.l.b16 %v58
  %v258 = vunpack.c.l.b16 %v59
  %v259 = vunpack.c.l.b16 %v60
  %v260 = vunpack.c.l.b16 %v61
  %v261 = vunpack.c.l.b16 %v62
  %v262 = vunpack.c.l.b16 %v63
  %v263 = vunpack.c.l.b16 %v64
  %v264 = vunpack.c.l.b16 %v65
  %v265 = vunpack.c.l.b16 %v66
  %v266 = vunpack.c.l.b16 %v67
  %v267 = vunpack.c.l.b16 %v68
  %v268 = vunpack.c.l.b16 %v69
  %v269 = vunpack.c.l.b16 %v70
  %v270 = vunpack.c.l.b16 %v71
  %v271 = vunpack.c.l.b16 %v72
  %v272 = vunpack.c.l.b16 %v73
  %v273 = vunpack.c.l.b16 %v74
  %v274 = vunpack.c.l.b16 %v75
  %v275 = vunpack.c.l.b16 %v76
  %v276 = vunpack.c.l.b16 %v77
  %v277 = vunpack.c.l.b16 %v78
  %v278 = vunpack.c.l.b16 %v79
  %v279 = vunpack.c.l.b16 %v80
  %v280 = vunpack.c.l.b16 %v81
  %v281 = vunpack.c.l.b16 %v82
  %v282 = vpack.c.b16 %v247, %v246
  %v283 = vpack.c.b16 %v249, %v248
  %v284 = vpack.c.b16 %v251, %v250
  %v285 = vpack.c.b16 %v253, %v252
  %v286 = vpack.c.b16 %v255, %v254
  %v287 = vpack.c.b16 %v257, %v256
  %v288 = vpack.c.b16 %v259, %v258
  %v289 = vpack.c.b16 %v261, %v260
  %v290 = vpack.c.b16 %v263, %v262
  %v291 = vpack.c.b16 %v265, %v264
  %v292 = vpack.c.b16 %v267, %v266
  %v293 = vpack.c.b16 %v269, %v268
  %v294 = vpack.c.b16 %v271, %v270
  %v295 = vpack.c.b16 %v273, %v272
  %v296 = vpack.c.b16 %v275, %v274
  %v297 = vpack.c.b16 %v277, %v276
  %v298 = vpack.c.b16 %v279, %v278
  %v299 = vpack.c.b16 %v281, %v280
  %vm318 = vcmask 261120
  %v320 = vsel %vm318, %v172, 0
  %v323 = vsel %vm318, %v175, 0
  %v326 = vsel %vm318, %v178, 0
  %v329 = vsel %vm318, %v181, 0
  %v332 = vsel %vm318, %v184, 0
  %v335 = vsel %vm318, %v187, 0
  %v338 = vsel %vm318, %v190, 0
  %v341 = vsel %vm318, %v193, 0
  %343 = vmatprep.subr.bf16.mxu0 0
  %344 = vmatpush1.bf16.msra.mxu0 %v282
  %345 = vmatprep.subr.bf16.mxu0 0
  %346 = vmatpush1.bf16.msra.mxu0 %v283
  %347 = vmatprep.subr.bf16.mxu0 0
  %348 = vmatpush1.bf16.msra.mxu0 %v284
  %349 = vmatprep.subr.bf16.mxu0 0
  %350 = vmatpush1.bf16.msra.mxu0 %v285
  %351 = vmatprep.subr.bf16.mxu0 0
  %352 = vmatpush1.bf16.msra.mxu0 %v286
  %353 = vmatprep.subr.bf16.mxu0 0
  %354 = vmatpush1.bf16.msra.mxu0 %v287
  %355 = vmatprep.subr.bf16.mxu0 0
  %356 = vmatpush1.bf16.msra.mxu0 %v288
  %357 = vmatprep.subr.bf16.mxu0 0
  %358 = vmatpush1.bf16.msra.mxu0 %v289
  %359 = vmatprep.subr.bf16.mxu0 0
  %360 = vmatpush1.bf16.msra.mxu0 %v290
  %361 = vmatprep.subr.bf16.mxu0 0
  %362 = vmatpush1.bf16.msra.mxu0 %v291
  %363 = vmatprep.subr.bf16.mxu0 0
  %364 = vmatpush1.bf16.msra.mxu0 %v292
  %365 = vmatprep.subr.bf16.mxu0 0
  %366 = vmatpush1.bf16.msra.mxu0 %v293
  %367 = vmatprep.subr.bf16.mxu0 0
  %368 = vmatpush1.bf16.msra.mxu0 %v294
  %369 = vmatprep.subr.bf16.mxu0 0
  %370 = vmatpush1.bf16.msra.mxu0 %v295
  %371 = vmatprep.subr.bf16.mxu0 0
  %372 = vmatpush1.bf16.msra.mxu0 %v296
  %373 = vmatprep.subr.bf16.mxu0 0
  %374 = vmatpush1.bf16.msra.mxu0 %v297
  %375 = vmatprep.mubr.bf16.mxu0 %v171
  %376 = vmatmul.mubr.bf16.gmra.mrb[0].mxu0 %v170
  %v377 = vpop.f32.mrb[0].mxu0
  %v378 = vadd.f32 %v88, %v377
  %v379 = vpop.f32.mrb[0].mxu0
  %v380 = vpop.f32.mrb[0].mxu0
  %v381 = vadd.f32 %v88, %v380
  %v382 = vpop.f32.mrb[0].mxu0
  %383 = vmatprep.mubr.bf16.mxu0 %v174
  %384 = vmatmul.mubr.bf16.gmra.mrb[0].mxu0 %v173
  %v385 = vpop.f32.mrb[0].mxu0
  %v386 = vadd.f32 %v88, %v385
  %v387 = vpop.f32.mrb[0].mxu0
  %v388 = vpop.f32.mrb[0].mxu0
  %v389 = vadd.f32 %v88, %v388
  %v390 = vpop.f32.mrb[0].mxu0
  %391 = vmatprep.mubr.bf16.mxu0 %v177
  %392 = vmatmul.mubr.bf16.gmra.mrb[0].mxu0 %v176
  %v393 = vpop.f32.mrb[0].mxu0
  %v394 = vadd.f32 %v88, %v393
  %v395 = vpop.f32.mrb[0].mxu0
  %v396 = vpop.f32.mrb[0].mxu0
  %v397 = vadd.f32 %v88, %v396
  %v398 = vpop.f32.mrb[0].mxu0
  %399 = vmatprep.mubr.bf16.mxu0 %v180
  %400 = vmatmul.mubr.bf16.gmra.mrb[0].mxu0 %v179
  %v401 = vpop.f32.mrb[0].mxu0
  %v402 = vadd.f32 %v88, %v401
  %v403 = vpop.f32.mrb[0].mxu0
  %v404 = vpop.f32.mrb[0].mxu0
  %v405 = vadd.f32 %v88, %v404
  %v406 = vpop.f32.mrb[0].mxu0
  %407 = vmatprep.mubr.bf16.mxu0 %v183
  %408 = vmatmul.mubr.bf16.gmra.mrb[0].mxu0 %v182
  %v409 = vpop.f32.mrb[0].mxu0
  %v410 = vadd.f32 %v88, %v409
  %v411 = vpop.f32.mrb[0].mxu0
  %v412 = vpop.f32.mrb[0].mxu0
  %v413 = vadd.f32 %v88, %v412
  %v414 = vpop.f32.mrb[0].mxu0
  %415 = vmatprep.mubr.bf16.mxu0 %v186
  %416 = vmatmul.mubr.bf16.gmra.mrb[0].mxu0 %v185
  %v417 = vpop.f32.mrb[0].mxu0
  %v418 = vadd.f32 %v88, %v417
  %v419 = vpop.f32.mrb[0].mxu0
  %v420 = vpop.f32.mrb[0].mxu0
  %v421 = vadd.f32 %v88, %v420
  %v422 = vpop.f32.mrb[0].mxu0
  %423 = vmatprep.mubr.bf16.mxu0 %v189
  %424 = vmatmul.mubr.bf16.gmra.mrb[0].mxu0 %v188
  %v425 = vpop.f32.mrb[0].mxu0
  %v426 = vadd.f32 %v88, %v425
  %v427 = vpop.f32.mrb[0].mxu0
  %v428 = vpop.f32.mrb[0].mxu0
  %v429 = vadd.f32 %v88, %v428
  %v430 = vpop.f32.mrb[0].mxu0
  %431 = vmatprep.mubr.bf16.mxu0 %v192
  %432 = vmatmul.mubr.bf16.gmra.mrb[0].mxu0 %v191
  %v433 = vpop.f32.mrb[0].mxu0
  %v434 = vadd.f32 %v88, %v433
  %v435 = vpop.f32.mrb[0].mxu0
  %v436 = vpop.f32.mrb[0].mxu0
  %v437 = vadd.f32 %v88, %v436
  %v438 = vpop.f32.mrb[0].mxu0
  %439 = vdwg.mxu0
  %440 = vmatprep.subr.bf16.mxu0 0
  %441 = vmatpush1.bf16.msra.mxu0 %v298
  %442 = vmatprep.subr.bf16.mxu0 0
  %443 = vmatpush1.bf16.msra.mxu0 %v299
  %444 = vmatprep.subr.bf16.mxu0 0
  %445 = vmatpush1.bf16.msra.mxu0 0
  %446 = vmatprep.subr.bf16.mxu0 0
  %447 = vmatpush1.bf16.msra.mxu0 0
  %448 = vmatprep.subr.bf16.mxu0 0
  %449 = vmatpush1.bf16.msra.mxu0 0
  %450 = vmatprep.subr.bf16.mxu0 0
  %451 = vmatpush1.bf16.msra.mxu0 0
  %452 = vmatprep.subr.bf16.mxu0 0
  %453 = vmatpush1.bf16.msra.mxu0 0
  %454 = vmatprep.subr.bf16.mxu0 0
  %455 = vmatpush1.bf16.msra.mxu0 0
  %456 = vmatprep.subr.bf16.mxu0 0
  %457 = vmatpush1.bf16.msra.mxu0 0
  %458 = vmatprep.subr.bf16.mxu0 0
  %459 = vmatpush1.bf16.msra.mxu0 0
  %460 = vmatprep.subr.bf16.mxu0 0
  %461 = vmatpush1.bf16.msra.mxu0 0
  %462 = vmatprep.subr.bf16.mxu0 0
  %463 = vmatpush1.bf16.msra.mxu0 0
  %464 = vmatprep.subr.bf16.mxu0 0
  %465 = vmatpush1.bf16.msra.mxu0 0
  %466 = vmatprep.subr.bf16.mxu0 0
  %467 = vmatpush1.bf16.msra.mxu0 0
  %468 = vmatprep.subr.bf16.mxu0 0
  %469 = vmatpush1.bf16.msra.mxu0 0
  %470 = vmatprep.subr.bf16.mxu0 0
  %471 = vmatpush1.bf16.msra.mxu0 0
  %472 = vmatprep.mubr.bf16.mxu0 0
  %473 = vmatmul.mubr.bf16.gmra.mrb[0].mxu0 %v320
  %v474 = vpop.f32.mrb[0].mxu0
  %v475 = vadd.f32 %v378, %v474
  %v476 = vpop.f32.mrb[0].mxu0
  %v477 = vpop.f32.mrb[0].mxu0
  %v478 = vadd.f32 %v381, %v477
  %v479 = vpop.f32.mrb[0].mxu0
  %480 = vmatprep.mubr.bf16.mxu0 0
  %481 = vmatmul.mubr.bf16.gmra.mrb[0].mxu0 %v323
  %v482 = vpop.f32.mrb[0].mxu0
  %v483 = vadd.f32 %v386, %v482
  %v484 = vpop.f32.mrb[0].mxu0
  %v485 = vpop.f32.mrb[0].mxu0
  %v486 = vadd.f32 %v389, %v485
  %v487 = vpop.f32.mrb[0].mxu0
  %488 = vmatprep.mubr.bf16.mxu0 0
  %489 = vmatmul.mubr.bf16.gmra.mrb[0].mxu0 %v326
  %v490 = vpop.f32.mrb[0].mxu0
  %v491 = vadd.f32 %v394, %v490
  %v492 = vpop.f32.mrb[0].mxu0
  %v493 = vpop.f32.mrb[0].mxu0
  %v494 = vadd.f32 %v397, %v493
  %v495 = vpop.f32.mrb[0].mxu0
  %496 = vmatprep.mubr.bf16.mxu0 0
  %497 = vmatmul.mubr.bf16.gmra.mrb[0].mxu0 %v329
  %v498 = vpop.f32.mrb[0].mxu0
  %v499 = vadd.f32 %v402, %v498
  %v500 = vpop.f32.mrb[0].mxu0
  %v501 = vpop.f32.mrb[0].mxu0
  %v502 = vadd.f32 %v405, %v501
  %v503 = vpop.f32.mrb[0].mxu0
  %504 = vmatprep.mubr.bf16.mxu0 0
  %505 = vmatmul.mubr.bf16.gmra.mrb[0].mxu0 %v332
  %v506 = vpop.f32.mrb[0].mxu0
  %v507 = vadd.f32 %v410, %v506
  %v508 = vpop.f32.mrb[0].mxu0
  %v509 = vpop.f32.mrb[0].mxu0
  %v510 = vadd.f32 %v413, %v509
  %v511 = vpop.f32.mrb[0].mxu0
  %512 = vmatprep.mubr.bf16.mxu0 0
  %513 = vmatmul.mubr.bf16.gmra.mrb[0].mxu0 %v335
  %v514 = vpop.f32.mrb[0].mxu0
  %v515 = vadd.f32 %v418, %v514
  %v516 = vpop.f32.mrb[0].mxu0
  %v517 = vpop.f32.mrb[0].mxu0
  %v518 = vadd.f32 %v421, %v517
  %v519 = vpop.f32.mrb[0].mxu0
  %520 = vmatprep.mubr.bf16.mxu0 0
  %521 = vmatmul.mubr.bf16.gmra.mrb[0].mxu0 %v338
  %v522 = vpop.f32.mrb[0].mxu0
  %v523 = vadd.f32 %v426, %v522
  %v524 = vpop.f32.mrb[0].mxu0
  %v525 = vpop.f32.mrb[0].mxu0
  %v526 = vadd.f32 %v429, %v525
  %v527 = vpop.f32.mrb[0].mxu0
  %528 = vmatprep.mubr.bf16.mxu0 0
  %529 = vmatmul.mubr.bf16.gmra.mrb[0].mxu0 %v341
  %v530 = vpop.f32.mrb[0].mxu0
  %v531 = vadd.f32 %v434, %v530
  %v532 = vpop.f32.mrb[0].mxu0
  %v533 = vpop.f32.mrb[0].mxu0
  %v534 = vadd.f32 %v437, %v533
  %v535 = vpop.f32.mrb[0].mxu0
  %536 = vdwg.mxu0
  %v537 = vmax.f32 %v475, 0.0
  %v538 = vmax.f32 %v478, 0.0
  %v539 = vmax.f32 %v483, 0.0
  %v540 = vmax.f32 %v486, 0.0
  %v541 = vmax.f32 %v491, 0.0
  %v542 = vmax.f32 %v494, 0.0
  %v543 = vmax.f32 %v499, 0.0
  %v544 = vmax.f32 %v502, 0.0
  %v545 = vmax.f32 %v507, 0.0
  %v546 = vmax.f32 %v510, 0.0
  %v547 = vmax.f32 %v515, 0.0
  %v548 = vmax.f32 %v518, 0.0
  %v549 = vmax.f32 %v523, 0.0
  %v550 = vmax.f32 %v526, 0.0
  %v551 = vmax.f32 %v531, 0.0
  %v552 = vmax.f32 %v534, 0.0
  %vm553 = vcmask 130048
  %554 = vst.msk [vmem:[%s3] sm:$0xff] %vm553, %v537
  %555 = vst.msk [vmem:[%s3 + $0x8] sm:$0xff] %vm553, %v538
  %556 = vst.msk [vmem:[%s3 + $0x10] sm:$0xff] %vm553, %v539
  %557 = vst.msk [vmem:[%s3 + $0x18] sm:$0xff] %vm553, %v540
  %558 = vst.msk [vmem:[%s3 + $0x20] sm:$0xff] %vm553, %v541
  %559 = vst.msk [vmem:[%s3 + $0x28] sm:$0xff] %vm553, %v542
  %560 = vst.msk [vmem:[%s3 + $0x30] sm:$0xff] %vm553, %v543
  %561 = vst.msk [vmem:[%s3 + $0x38] sm:$0xff] %vm553, %v544
  %562 = vst.msk [vmem:[%s3 + $0x40] sm:$0xff] %vm553, %v545
  %563 = vst.msk [vmem:[%s3 + $0x48] sm:$0xff] %vm553, %v546
  %564 = vst.msk [vmem:[%s3 + $0x50] sm:$0xff] %vm553, %v547
  %565 = vst.msk [vmem:[%s3 + $0x58] sm:$0xff] %vm553, %v548
  %566 = vst.msk [vmem:[%s3 + $0x60] sm:$0xff] %vm553, %v549
  %567 = vst.msk [vmem:[%s3 + $0x68] sm:$0xff] %vm553, %v550
  %568 = vst.msk [vmem:[%s3 + $0x70] sm:$0xff] %vm553, %v551
  %569 = vst.msk [vmem:[%s3 + $0x78] sm:$0xff] %vm553, %v552
  // Predicated region
  $region14: #{autoencoder_forward.14} parent=0 // pred_check
    _
  $region15: #{autoencoder_forward.14} parent=0 // pred_check_branch
    %571 = sbr.rel (0) target = $region17
  $region16: #{autoencoder_forward.14} parent=0 // pred_region
    _
  $region17: #{autoencoder_forward.14} parent=0 // pred_fallthru
    _
  // Predicated region
  $region18: #{autoencoder_forward.14} parent=0 // pred_check
    _
  $region19: #{autoencoder_forward.14} parent=0 // pred_check_branch
    %573 = sbr.rel (0) target = $region21
  $region20: #{autoencoder_forward.14} parent=0 // pred_region
    _
  $region21: #{autoencoder_forward.14} parent=0 // pred_fallthru
    _

// kernel: autoencoder_forward.15
$region0: #{autoencoder_forward.15}
  #allocation0 [shape = 'u32[]', space=smem, size = 0x4, offset = 0x4, fixed_abs, tag = 'smem constant byte address 0x4 - core index']
  #allocation1 [shape = 'u32[144,128]{1,0:T(1,128)}', space=vmem, size = 0x12000, scoped, tag = 'internal scratch']
  #allocation2 [shape = 'f32[1,1]{1,0:T(1,128)S(1)}', space=vmem, size = 0x200, scoped, tag = 'scoped memory for autoencoder_forward.15']
  %s0 = inlined_call_operand.vmem [shape: bf16[512,144], index: 0, kind: input, shape index: {}]
  %s1 = inlined_call_operand.vmem [shape: bf16[144,1], index: 1, kind: input, shape index: {}]
  %s2 = inlined_call_operand.<no memory space> [shape: f32[1,1], index: 2, kind: input, shape index: {}]
  %s3 = inlined_call_operand.vmem [shape: f32[512,1], index: 3, kind: output, shape index: {}]
  %s4 = sld [smem:[#allocation0]]
  $region22: #{autoencoder_forward.15} parent=0
    _
  %s6 = ssub.s32 1, %s4
  %s7 = scalar_select 0, %s6, %s4
  %v8 = vstv %s2
  %9 = vst [vmem:[#allocation2] sm:$0x1] %v8
  // Predicated region
  $region2: #{autoencoder_forward.15} parent=0 // pred_check
    _
  $region3: #{autoencoder_forward.15} parent=0 // pred_check_branch
    %11 = sbr.rel (0) target = $region5
  $region4: #{autoencoder_forward.15} parent=0 // pred_region
    _
  $region5: #{autoencoder_forward.15} parent=0 // pred_fallthru
    _
  // Predicated region
  $region6: #{autoencoder_forward.15} parent=0 // pred_check
    _
  $region7: #{autoencoder_forward.15} parent=0 // pred_check_branch
    %13 = sbr.rel (0) target = $region9
  $region8: #{autoencoder_forward.15} parent=0 // pred_region
    _
  $region9: #{autoencoder_forward.15} parent=0 // pred_fallthru
    _
  // Predicated region
  $region10: #{autoencoder_forward.15} parent=0 // pred_check
    _
  $region11: #{autoencoder_forward.15} parent=0 // pred_check_branch
    %15 = sbr.rel (0) target = $region13
  $region12: #{autoencoder_forward.15} parent=0 // pred_region
    _
  $region13: #{autoencoder_forward.15} parent=0 // pred_fallthru
    _
  %v17 = vld [vmem:[%s0] sm:$0xff]
  %v18 = vld [vmem:[%s0 + $0x8] sm:$0xff]
  %v19 = vld [vmem:[%s0 + $0x10] sm:$0xff]
  %v20 = vld [vmem:[%s0 + $0x18] sm:$0xff]
  %v21 = vld [vmem:[%s0 + $0x20] sm:$0xff]
  %v22 = vld [vmem:[%s0 + $0x28] sm:$0xff]
  %v23 = vld [vmem:[%s0 + $0x30] sm:$0xff]
  %v24 = vld [vmem:[%s0 + $0x38] sm:$0xff]
  %v25 = vld [vmem:[%s0 + $0x40] sm:$0xff]
  %v26 = vld [vmem:[%s0 + $0x48] sm:$0xff]
  %v27 = vld [vmem:[%s0 + $0x50] sm:$0xff]
  %v28 = vld [vmem:[%s0 + $0x58] sm:$0xff]
  %v29 = vld [vmem:[%s0 + $0x60] sm:$0xff]
  %v30 = vld [vmem:[%s0 + $0x68] sm:$0xff]
  %v31 = vld [vmem:[%s0 + $0x70] sm:$0xff]
  %v32 = vld [vmem:[%s0 + $0x78] sm:$0xff]
  %v33 = vld [vmem:[%s0 + $0x80] sm:$0xff]
  %v34 = vld [vmem:[%s0 + $0x88] sm:$0xff]
  %v35 = vld [vmem:[%s0 + $0x90] sm:$0xff]
  %v36 = vld [vmem:[%s0 + $0x98] sm:$0xff]
  %v37 = vld [vmem:[%s0 + $0xa0] sm:$0xff]
  %v38 = vld [vmem:[%s0 + $0xa8] sm:$0xff]
  %v39 = vld [vmem:[%s0 + $0xb0] sm:$0xff]
  %v40 = vld [vmem:[%s0 + $0xb8] sm:$0xff]
  %v41 = vld [vmem:[%s0 + $0xc0] sm:$0xff]
  %v42 = vld [vmem:[%s0 + $0xc8] sm:$0xff]
  %v43 = vld [vmem:[%s0 + $0xd0] sm:$0xff]
  %v44 = vld [vmem:[%s0 + $0xd8] sm:$0xff]
  %v45 = vld [vmem:[%s0 + $0xe0] sm:$0xff]
  %v46 = vld [vmem:[%s0 + $0xe8] sm:$0xff]
  %v47 = vld [vmem:[%s0 + $0xf0] sm:$0xff]
  %v48 = vld [vmem:[%s0 + $0xf8] sm:$0xff]
  %v49 = vld [vmem:[%s0 + $0x100] sm:$0xff]
  %v50 = vld [vmem:[%s0 + $0x108] sm:$0xff]
  %v51 = vld [vmem:[%s0 + $0x110] sm:$0xff]
  %v52 = vld [vmem:[%s0 + $0x118] sm:$0xff]
  %v53 = vld [vmem:[%s0 + $0x120] sm:$0xff]
  %v54 = vld [vmem:[%s0 + $0x128] sm:$0xff]
  %v55 = vld [vmem:[%s0 + $0x130] sm:$0xff]
  %v56 = vld [vmem:[%s0 + $0x138] sm:$0xff]
  %v57 = vld [vmem:[%s0 + $0x140] sm:$0xff]
  %v58 = vld [vmem:[%s0 + $0x148] sm:$0xff]
  %v59 = vld [vmem:[%s0 + $0x150] sm:$0xff]
  %v60 = vld [vmem:[%s0 + $0x158] sm:$0xff]
  %v61 = vld [vmem:[%s0 + $0x160] sm:$0xff]
  %v62 = vld [vmem:[%s0 + $0x168] sm:$0xff]
  %v63 = vld [vmem:[%s0 + $0x170] sm:$0xff]
  %v64 = vld [vmem:[%s0 + $0x178] sm:$0xff]
  %v65 = vld [vmem:[%s0 + $0x180] sm:$0xff]
  %v66 = vld [vmem:[%s0 + $0x188] sm:$0xff]
  %v67 = vld [vmem:[%s0 + $0x190] sm:$0xff]
  %v68 = vld [vmem:[%s0 + $0x198] sm:$0xff]
  %v69 = vld [vmem:[%s0 + $0x1a0] sm:$0xff]
  %v70 = vld [vmem:[%s0 + $0x1a8] sm:$0xff]
  %v71 = vld [vmem:[%s0 + $0x1b0] sm:$0xff]
  %v72 = vld [vmem:[%s0 + $0x1b8] sm:$0xff]
  %v73 = vld [vmem:[%s0 + $0x1c0] sm:$0xff]
  %v74 = vld [vmem:[%s0 + $0x1c8] sm:$0xff]
  %v75 = vld [vmem:[%s0 + $0x1d0] sm:$0xff]
  %v76 = vld [vmem:[%s0 + $0x1d8] sm:$0xff]
  %v77 = vld [vmem:[%s0 + $0x1e0] sm:$0xff]
  %v78 = vld [vmem:[%s0 + $0x1e8] sm:$0xff]
  %v79 = vld [vmem:[%s0 + $0x1f0] sm:$0xff]
  %v80 = vld [vmem:[%s0 + $0x1f8] sm:$0xff]
  %v81 = vld [vmem:[%s1] sm:$0xf]
  %v82 = vld [vmem:[%s1 + $0x4] sm:$0xf]
  %v83 = vld [vmem:[%s1 + $0x8] sm:$0xf]
  %v84 = vld [vmem:[%s1 + $0xc] sm:$0xf]
  %v85 = vld [vmem:[%s1 + $0x10] sm:$0xf]
  %v86 = vld [vmem:[%s1 + $0x14] sm:$0xf]
  %v87 = vld [vmem:[%s1 + $0x18] sm:$0xf]
  %v88 = vld [vmem:[%s1 + $0x1c] sm:$0xf]
  %v89 = vld [vmem:[%s1 + $0x20] sm:$0xf]
  %v90 = vld [vmem:[%s1 + $0x24] sm:$0xf]
  %v91 = vld [vmem:[%s1 + $0x28] sm:$0xf]
  %v92 = vld [vmem:[%s1 + $0x2c] sm:$0xf]
  %v93 = vld [vmem:[%s1 + $0x30] sm:$0xf]
  %v94 = vld [vmem:[%s1 + $0x34] sm:$0xf]
  %v95 = vld [vmem:[%s1 + $0x38] sm:$0xf]
  %v96 = vld [vmem:[%s1 + $0x3c] sm:$0xf]
  %v97 = vld [vmem:[%s1 + $0x40] sm:$0xf]
  %v98 = vld [vmem:[%s1 + $0x44] sm:$0xf]
  %v99 = vld [vmem:[#allocation2] sm:$0x1]
  %v101 = vlaneseq
  %v102 = vshrl.u32 %v101, 7
  %v103 = vsub.s32 0, %v102
  %v104 = vrot.slane %v99, %v103
  %v170 = vunpack.c.l.b16 %v17
  %v171 = vunpack.c.h.b16 %v17
  %v172 = vunpack.c.l.b16 %v18
  %v173 = vunpack.c.h.b16 %v18
  %v174 = vunpack.c.l.b16 %v19
  %v175 = vunpack.c.h.b16 %v19
  %v176 = vunpack.c.l.b16 %v20
  %v177 = vunpack.c.h.b16 %v20
  %v178 = vunpack.c.l.b16 %v21
  %v179 = vunpack.c.h.b16 %v21
  %v180 = vunpack.c.l.b16 %v22
  %v181 = vunpack.c.h.b16 %v22
  %v182 = vunpack.c.l.b16 %v23
  %v183 = vunpack.c.h.b16 %v23
  %v184 = vunpack.c.l.b16 %v24
  %v185 = vunpack.c.h.b16 %v24
  %v186 = vunpack.c.l.b16 %v25
  %v187 = vunpack.c.h.b16 %v25
  %v188 = vunpack.c.l.b16 %v26
  %v189 = vunpack.c.h.b16 %v26
  %v190 = vunpack.c.l.b16 %v27
  %v191 = vunpack.c.h.b16 %v27
  %v192 = vunpack.c.l.b16 %v28
  %v193 = vunpack.c.h.b16 %v28
  %v194 = vunpack.c.l.b16 %v29
  %v195 = vunpack.c.h.b16 %v29
  %v196 = vunpack.c.l.b16 %v30
  %v197 = vunpack.c.h.b16 %v30
  %v198 = vunpack.c.l.b16 %v31
  %v199 = vunpack.c.h.b16 %v31
  %v200 = vunpack.c.l.b16 %v32
  %v201 = vunpack.c.h.b16 %v32
  %v202 = vunpack.c.l.b16 %v33
  %v203 = vunpack.c.h.b16 %v33
  %v204 = vunpack.c.l.b16 %v34
  %v205 = vunpack.c.h.b16 %v34
  %v206 = vunpack.c.l.b16 %v35
  %v207 = vunpack.c.h.b16 %v35
  %v208 = vunpack.c.l.b16 %v36
  %v209 = vunpack.c.h.b16 %v36
  %v210 = vunpack.c.l.b16 %v37
  %v211 = vunpack.c.h.b16 %v37
  %v212 = vunpack.c.l.b16 %v38
  %v213 = vunpack.c.h.b16 %v38
  %v214 = vunpack.c.l.b16 %v39
  %v215 = vunpack.c.h.b16 %v39
  %v216 = vunpack.c.l.b16 %v40
  %v217 = vunpack.c.h.b16 %v40
  %v218 = vunpack.c.l.b16 %v41
  %v219 = vunpack.c.h.b16 %v41
  %v220 = vunpack.c.l.b16 %v42
  %v221 = vunpack.c.h.b16 %v42
  %v222 = vunpack.c.l.b16 %v43
  %v223 = vunpack.c.h.b16 %v43
  %v224 = vunpack.c.l.b16 %v44
  %v225 = vunpack.c.h.b16 %v44
  %v226 = vunpack.c.l.b16 %v45
  %v227 = vunpack.c.h.b16 %v45
  %v228 = vunpack.c.l.b16 %v46
  %v229 = vunpack.c.h.b16 %v46
  %v230 = vunpack.c.l.b16 %v47
  %v231 = vunpack.c.h.b16 %v47
  %v232 = vunpack.c.l.b16 %v48
  %v233 = vunpack.c.h.b16 %v48
  %v234 = vunpack.c.l.b16 %v49
  %v235 = vunpack.c.h.b16 %v49
  %v236 = vunpack.c.l.b16 %v50
  %v237 = vunpack.c.h.b16 %v50
  %v238 = vunpack.c.l.b16 %v51
  %v239 = vunpack.c.h.b16 %v51
  %v240 = vunpack.c.l.b16 %v52
  %v241 = vunpack.c.h.b16 %v52
  %v242 = vunpack.c.l.b16 %v53
  %v243 = vunpack.c.h.b16 %v53
  %v244 = vunpack.c.l.b16 %v54
  %v245 = vunpack.c.h.b16 %v54
  %v246 = vunpack.c.l.b16 %v55
  %v247 = vunpack.c.h.b16 %v55
  %v248 = vunpack.c.l.b16 %v56
  %v249 = vunpack.c.h.b16 %v56
  %v250 = vunpack.c.l.b16 %v57
  %v251 = vunpack.c.h.b16 %v57
  %v252 = vunpack.c.l.b16 %v58
  %v253 = vunpack.c.h.b16 %v58
  %v254 = vunpack.c.l.b16 %v59
  %v255 = vunpack.c.h.b16 %v59
  %v256 = vunpack.c.l.b16 %v60
  %v257 = vunpack.c.h.b16 %v60
  %v258 = vunpack.c.l.b16 %v61
  %v259 = vunpack.c.h.b16 %v61
  %v260 = vunpack.c.l.b16 %v62
  %v261 = vunpack.c.h.b16 %v62
  %v262 = vunpack.c.l.b16 %v63
  %v263 = vunpack.c.h.b16 %v63
  %v264 = vunpack.c.l.b16 %v64
  %v265 = vunpack.c.h.b16 %v64
  %v266 = vunpack.c.l.b16 %v65
  %v267 = vunpack.c.h.b16 %v65
  %v268 = vunpack.c.l.b16 %v66
  %v269 = vunpack.c.h.b16 %v66
  %v270 = vunpack.c.l.b16 %v67
  %v271 = vunpack.c.h.b16 %v67
  %v272 = vunpack.c.l.b16 %v68
  %v273 = vunpack.c.h.b16 %v68
  %v274 = vunpack.c.l.b16 %v69
  %v275 = vunpack.c.h.b16 %v69
  %v276 = vunpack.c.l.b16 %v70
  %v277 = vunpack.c.h.b16 %v70
  %v278 = vunpack.c.l.b16 %v71
  %v279 = vunpack.c.h.b16 %v71
  %v280 = vunpack.c.l.b16 %v72
  %v281 = vunpack.c.h.b16 %v72
  %v282 = vunpack.c.l.b16 %v73
  %v283 = vunpack.c.h.b16 %v73
  %v284 = vunpack.c.l.b16 %v74
  %v285 = vunpack.c.h.b16 %v74
  %v286 = vunpack.c.l.b16 %v75
  %v287 = vunpack.c.h.b16 %v75
  %v288 = vunpack.c.l.b16 %v76
  %v289 = vunpack.c.h.b16 %v76
  %v290 = vunpack.c.l.b16 %v77
  %v291 = vunpack.c.h.b16 %v77
  %v292 = vunpack.c.l.b16 %v78
  %v293 = vunpack.c.h.b16 %v78
  %v294 = vunpack.c.l.b16 %v79
  %v295 = vunpack.c.h.b16 %v79
  %v296 = vunpack.c.l.b16 %v80
  %v297 = vunpack.c.h.b16 %v80
  %v298 = vpack.c.b16 %v172, %v170
  %v299 = vpack.c.b16 %v173, %v171
  %v300 = vpack.c.b16 %v176, %v174
  %v301 = vpack.c.b16 %v177, %v175
  %v302 = vpack.c.b16 %v180, %v178
  %v303 = vpack.c.b16 %v181, %v179
  %v304 = vpack.c.b16 %v184, %v182
  %v305 = vpack.c.b16 %v185, %v183
  %v306 = vpack.c.b16 %v188, %v186
  %v307 = vpack.c.b16 %v189, %v187
  %v308 = vpack.c.b16 %v192, %v190
  %v309 = vpack.c.b16 %v193, %v191
  %v310 = vpack.c.b16 %v196, %v194
  %v311 = vpack.c.b16 %v197, %v195
  %v312 = vpack.c.b16 %v200, %v198
  %v313 = vpack.c.b16 %v201, %v199
  %v314 = vpack.c.b16 %v204, %v202
  %v315 = vpack.c.b16 %v205, %v203
  %v316 = vpack.c.b16 %v208, %v206
  %v317 = vpack.c.b16 %v209, %v207
  %v318 = vpack.c.b16 %v212, %v210
  %v319 = vpack.c.b16 %v213, %v211
  %v320 = vpack.c.b16 %v216, %v214
  %v321 = vpack.c.b16 %v217, %v215
  %v322 = vpack.c.b16 %v220, %v218
  %v323 = vpack.c.b16 %v221, %v219
  %v324 = vpack.c.b16 %v224, %v222
  %v325 = vpack.c.b16 %v225, %v223
  %v326 = vpack.c.b16 %v228, %v226
  %v327 = vpack.c.b16 %v229, %v227
  %v328 = vpack.c.b16 %v232, %v230
  %v329 = vpack.c.b16 %v233, %v231
  %v330 = vpack.c.b16 %v236, %v234
  %v331 = vpack.c.b16 %v237, %v235
  %v332 = vpack.c.b16 %v240, %v238
  %v333 = vpack.c.b16 %v241, %v239
  %v334 = vpack.c.b16 %v244, %v242
  %v335 = vpack.c.b16 %v245, %v243
  %v336 = vpack.c.b16 %v248, %v246
  %v337 = vpack.c.b16 %v249, %v247
  %v338 = vpack.c.b16 %v252, %v250
  %v339 = vpack.c.b16 %v253, %v251
  %v340 = vpack.c.b16 %v256, %v254
  %v341 = vpack.c.b16 %v257, %v255
  %v342 = vpack.c.b16 %v260, %v258
  %v343 = vpack.c.b16 %v261, %v259
  %v344 = vpack.c.b16 %v264, %v262
  %v345 = vpack.c.b16 %v265, %v263
  %v346 = vpack.c.b16 %v268, %v266
  %v347 = vpack.c.b16 %v269, %v267
  %v348 = vpack.c.b16 %v272, %v270
  %v349 = vpack.c.b16 %v273, %v271
  %v350 = vpack.c.b16 %v276, %v274
  %v351 = vpack.c.b16 %v277, %v275
  %v352 = vpack.c.b16 %v280, %v278
  %v353 = vpack.c.b16 %v281, %v279
  %v354 = vpack.c.b16 %v284, %v282
  %v355 = vpack.c.b16 %v285, %v283
  %v356 = vpack.c.b16 %v288, %v286
  %v357 = vpack.c.b16 %v289, %v287
  %v358 = vpack.c.b16 %v292, %v290
  %v359 = vpack.c.b16 %v293, %v291
  %v360 = vpack.c.b16 %v296, %v294
  %v361 = vpack.c.b16 %v297, %v295
  %v412 = vunpack.c.l.b16 %v81
  %v413 = vunpack.c.l.b16 %v82
  %v414 = vunpack.c.l.b16 %v83
  %v415 = vunpack.c.l.b16 %v84
  %v416 = vunpack.c.l.b16 %v85
  %v417 = vunpack.c.l.b16 %v86
  %v418 = vunpack.c.l.b16 %v87
  %v419 = vunpack.c.l.b16 %v88
  %v420 = vunpack.c.l.b16 %v89
  %v421 = vunpack.c.l.b16 %v90
  %v422 = vunpack.c.l.b16 %v91
  %v423 = vunpack.c.l.b16 %v92
  %v424 = vunpack.c.l.b16 %v93
  %v425 = vunpack.c.l.b16 %v94
  %v426 = vunpack.c.l.b16 %v95
  %v427 = vunpack.c.l.b16 %v96
  %v428 = vunpack.c.l.b16 %v97
  %v429 = vunpack.c.l.b16 %v98
  %v430 = vpack.c.b16 %v413, %v412
  %v431 = vpack.c.b16 %v415, %v414
  %v432 = vpack.c.b16 %v417, %v416
  %v433 = vpack.c.b16 %v419, %v418
  %v434 = vpack.c.b16 %v421, %v420
  %v435 = vpack.c.b16 %v423, %v422
  %v436 = vpack.c.b16 %v425, %v424
  %v437 = vpack.c.b16 %v427, %v426
  %v438 = vpack.c.b16 %v429, %v428
  %vm448 = vcmask 130048
  %v450 = vsel %vm448, %v299, 0
  %v453 = vsel %vm448, %v301, 0
  %v456 = vsel %vm448, %v303, 0
  %v459 = vsel %vm448, %v305, 0
  %v462 = vsel %vm448, %v307, 0
  %v465 = vsel %vm448, %v309, 0
  %v468 = vsel %vm448, %v311, 0
  %v471 = vsel %vm448, %v313, 0
  %v474 = vsel %vm448, %v315, 0
  %v477 = vsel %vm448, %v317, 0
  %v480 = vsel %vm448, %v319, 0
  %v483 = vsel %vm448, %v321, 0
  %v486 = vsel %vm448, %v323, 0
  %v489 = vsel %vm448, %v325, 0
  %v492 = vsel %vm448, %v327, 0
  %v495 = vsel %vm448, %v329, 0
  %v498 = vsel %vm448, %v331, 0
  %v501 = vsel %vm448, %v333, 0
  %v504 = vsel %vm448, %v335, 0
  %v507 = vsel %vm448, %v337, 0
  %v510 = vsel %vm448, %v339, 0
  %v513 = vsel %vm448, %v341, 0
  %v516 = vsel %vm448, %v343, 0
  %v519 = vsel %vm448, %v345, 0
  %v522 = vsel %vm448, %v347, 0
  %v525 = vsel %vm448, %v349, 0
  %v528 = vsel %vm448, %v351, 0
  %v531 = vsel %vm448, %v353, 0
  %v534 = vsel %vm448, %v355, 0
  %v537 = vsel %vm448, %v357, 0
  %v540 = vsel %vm448, %v359, 0
  %v543 = vsel %vm448, %v361, 0
  %545 = vmatprep.subr.bf16.mxu0 0
  %546 = vmatpush1.bf16.msra.mxu0 %v430
  %547 = vmatprep.subr.bf16.mxu0 0
  %548 = vmatpush1.bf16.msra.mxu0 %v431
  %549 = vmatprep.subr.bf16.mxu0 0
  %550 = vmatpush1.bf16.msra.mxu0 %v432
  %551 = vmatprep.subr.bf16.mxu0 0
  %552 = vmatpush1.bf16.msra.mxu0 %v433
  %553 = vmatprep.subr.bf16.mxu0 0
  %554 = vmatpush1.bf16.msra.mxu0 %v434
  %555 = vmatprep.subr.bf16.mxu0 0
  %556 = vmatpush1.bf16.msra.mxu0 %v435
  %557 = vmatprep.subr.bf16.mxu0 0
  %558 = vmatpush1.bf16.msra.mxu0 %v436
  %559 = vmatprep.subr.bf16.mxu0 0
  %560 = vmatpush1.bf16.msra.mxu0 %v437
  %561 = vmatprep.subr.bf16.mxu0 0
  %562 = vmatpush1.bf16.msra.mxu0 %v438
  %563 = vmatprep.subr.bf16.mxu0 0
  %564 = vmatpush1.bf16.msra.mxu0 0
  %565 = vmatprep.subr.bf16.mxu0 0
  %566 = vmatpush1.bf16.msra.mxu0 0
  %567 = vmatprep.subr.bf16.mxu0 0
  %568 = vmatpush1.bf16.msra.mxu0 0
  %569 = vmatprep.subr.bf16.mxu0 0
  %570 = vmatpush1.bf16.msra.mxu0 0
  %571 = vmatprep.subr.bf16.mxu0 0
  %572 = vmatpush1.bf16.msra.mxu0 0
  %573 = vmatprep.subr.bf16.mxu0 0
  %574 = vmatpush1.bf16.msra.mxu0 0
  %575 = vmatprep.subr.bf16.mxu0 0
  %576 = vmatpush1.bf16.msra.mxu0 0
  %577 = vmatprep.mubr.bf16.mxu0 %v450
  %578 = vmatmul.mubr.bf16.gmra.mrb[0].mxu0 %v298
  %v579 = vpop.f32.mrb[0].mxu0
  %v580 = vadd.f32 %v104, %v579
  %v581 = vpop.f32.mrb[0].mxu0
  %v582 = vpop.f32.mrb[0].mxu0
  %v583 = vadd.f32 %v104, %v582
  %v584 = vpop.f32.mrb[0].mxu0
  %585 = vmatprep.mubr.bf16.mxu0 %v453
  %586 = vmatmul.mubr.bf16.gmra.mrb[0].mxu0 %v300
  %v587 = vpop.f32.mrb[0].mxu0
  %v588 = vadd.f32 %v104, %v587
  %v589 = vpop.f32.mrb[0].mxu0
  %v590 = vpop.f32.mrb[0].mxu0
  %v591 = vadd.f32 %v104, %v590
  %v592 = vpop.f32.mrb[0].mxu0
  %593 = vmatprep.mubr.bf16.mxu0 %v456
  %594 = vmatmul.mubr.bf16.gmra.mrb[0].mxu0 %v302
  %v595 = vpop.f32.mrb[0].mxu0
  %v596 = vadd.f32 %v104, %v595
  %v597 = vpop.f32.mrb[0].mxu0
  %v598 = vpop.f32.mrb[0].mxu0
  %v599 = vadd.f32 %v104, %v598
  %v600 = vpop.f32.mrb[0].mxu0
  %601 = vmatprep.mubr.bf16.mxu0 %v459
  %602 = vmatmul.mubr.bf16.gmra.mrb[0].mxu0 %v304
  %v603 = vpop.f32.mrb[0].mxu0
  %v604 = vadd.f32 %v104, %v603
  %v605 = vpop.f32.mrb[0].mxu0
  %v606 = vpop.f32.mrb[0].mxu0
  %v607 = vadd.f32 %v104, %v606
  %v608 = vpop.f32.mrb[0].mxu0
  %609 = vmatprep.mubr.bf16.mxu0 %v462
  %610 = vmatmul.mubr.bf16.gmra.mrb[0].mxu0 %v306
  %v611 = vpop.f32.mrb[0].mxu0
  %v612 = vadd.f32 %v104, %v611
  %v613 = vpop.f32.mrb[0].mxu0
  %v614 = vpop.f32.mrb[0].mxu0
  %v615 = vadd.f32 %v104, %v614
  %v616 = vpop.f32.mrb[0].mxu0
  %617 = vmatprep.mubr.bf16.mxu0 %v465
  %618 = vmatmul.mubr.bf16.gmra.mrb[0].mxu0 %v308
  %v619 = vpop.f32.mrb[0].mxu0
  %v620 = vadd.f32 %v104, %v619
  %v621 = vpop.f32.mrb[0].mxu0
  %v622 = vpop.f32.mrb[0].mxu0
  %v623 = vadd.f32 %v104, %v622
  %v624 = vpop.f32.mrb[0].mxu0
  %625 = vmatprep.mubr.bf16.mxu0 %v468
  %626 = vmatmul.mubr.bf16.gmra.mrb[0].mxu0 %v310
  %v627 = vpop.f32.mrb[0].mxu0
  %v628 = vadd.f32 %v104, %v627
  %v629 = vpop.f32.mrb[0].mxu0
  %v630 = vpop.f32.mrb[0].mxu0
  %v631 = vadd.f32 %v104, %v630
  %v632 = vpop.f32.mrb[0].mxu0
  %633 = vmatprep.mubr.bf16.mxu0 %v471
  %634 = vmatmul.mubr.bf16.gmra.mrb[0].mxu0 %v312
  %v635 = vpop.f32.mrb[0].mxu0
  %v636 = vadd.f32 %v104, %v635
  %v637 = vpop.f32.mrb[0].mxu0
  %v638 = vpop.f32.mrb[0].mxu0
  %v639 = vadd.f32 %v104, %v638
  %v640 = vpop.f32.mrb[0].mxu0
  %641 = vmatprep.mubr.bf16.mxu0 %v474
  %642 = vmatmul.mubr.bf16.gmra.mrb[0].mxu0 %v314
  %v643 = vpop.f32.mrb[0].mxu0
  %v644 = vadd.f32 %v104, %v643
  %v645 = vpop.f32.mrb[0].mxu0
  %v646 = vpop.f32.mrb[0].mxu0
  %v647 = vadd.f32 %v104, %v646
  %v648 = vpop.f32.mrb[0].mxu0
  %649 = vmatprep.mubr.bf16.mxu0 %v477
  %650 = vmatmul.mubr.bf16.gmra.mrb[0].mxu0 %v316
  %v651 = vpop.f32.mrb[0].mxu0
  %v652 = vadd.f32 %v104, %v651
  %v653 = vpop.f32.mrb[0].mxu0
  %v654 = vpop.f32.mrb[0].mxu0
  %v655 = vadd.f32 %v104, %v654
  %v656 = vpop.f32.mrb[0].mxu0
  %657 = vmatprep.mubr.bf16.mxu0 %v480
  %658 = vmatmul.mubr.bf16.gmra.mrb[0].mxu0 %v318
  %v659 = vpop.f32.mrb[0].mxu0
  %v660 = vadd.f32 %v104, %v659
  %v661 = vpop.f32.mrb[0].mxu0
  %v662 = vpop.f32.mrb[0].mxu0
  %v663 = vadd.f32 %v104, %v662
  %v664 = vpop.f32.mrb[0].mxu0
  %665 = vmatprep.mubr.bf16.mxu0 %v483
  %666 = vmatmul.mubr.bf16.gmra.mrb[0].mxu0 %v320
  %v667 = vpop.f32.mrb[0].mxu0
  %v668 = vadd.f32 %v104, %v667
  %v669 = vpop.f32.mrb[0].mxu0
  %v670 = vpop.f32.mrb[0].mxu0
  %v671 = vadd.f32 %v104, %v670
  %v672 = vpop.f32.mrb[0].mxu0
  %673 = vmatprep.mubr.bf16.mxu0 %v486
  %674 = vmatmul.mubr.bf16.gmra.mrb[0].mxu0 %v322
  %v675 = vpop.f32.mrb[0].mxu0
  %v676 = vadd.f32 %v104, %v675
  %v677 = vpop.f32.mrb[0].mxu0
  %v678 = vpop.f32.mrb[0].mxu0
  %v679 = vadd.f32 %v104, %v678
  %v680 = vpop.f32.mrb[0].mxu0
  %681 = vmatprep.mubr.bf16.mxu0 %v489
  %682 = vmatmul.mubr.bf16.gmra.mrb[0].mxu0 %v324
  %v683 = vpop.f32.mrb[0].mxu0
  %v684 = vadd.f32 %v104, %v683
  %v685 = vpop.f32.mrb[0].mxu0
  %v686 = vpop.f32.mrb[0].mxu0
  %v687 = vadd.f32 %v104, %v686
  %v688 = vpop.f32.mrb[0].mxu0
  %689 = vmatprep.mubr.bf16.mxu0 %v492
  %690 = vmatmul.mubr.bf16.gmra.mrb[0].mxu0 %v326
  %v691 = vpop.f32.mrb[0].mxu0
  %v692 = vadd.f32 %v104, %v691
  %v693 = vpop.f32.mrb[0].mxu0
  %v694 = vpop.f32.mrb[0].mxu0
  %v695 = vadd.f32 %v104, %v694
  %v696 = vpop.f32.mrb[0].mxu0
  %697 = vmatprep.mubr.bf16.mxu0 %v495
  %698 = vmatmul.mubr.bf16.gmra.mrb[0].mxu0 %v328
  %v699 = vpop.f32.mrb[0].mxu0
  %v700 = vadd.f32 %v104, %v699
  %v701 = vpop.f32.mrb[0].mxu0
  %v702 = vpop.f32.mrb[0].mxu0
  %v703 = vadd.f32 %v104, %v702
  %v704 = vpop.f32.mrb[0].mxu0
  %705 = vmatprep.mubr.bf16.mxu0 %v498
  %706 = vmatmul.mubr.bf16.gmra.mrb[0].mxu0 %v330
  %v707 = vpop.f32.mrb[0].mxu0
  %v708 = vadd.f32 %v104, %v707
  %v709 = vpop.f32.mrb[0].mxu0
  %v710 = vpop.f32.mrb[0].mxu0
  %v711 = vadd.f32 %v104, %v710
  %v712 = vpop.f32.mrb[0].mxu0
  %713 = vmatprep.mubr.bf16.mxu0 %v501
  %714 = vmatmul.mubr.bf16.gmra.mrb[0].mxu0 %v332
  %v715 = vpop.f32.mrb[0].mxu0
  %v716 = vadd.f32 %v104, %v715
  %v717 = vpop.f32.mrb[0].mxu0
  %v718 = vpop.f32.mrb[0].mxu0
  %v719 = vadd.f32 %v104, %v718
  %v720 = vpop.f32.mrb[0].mxu0
  %721 = vmatprep.mubr.bf16.mxu0 %v504
  %722 = vmatmul.mubr.bf16.gmra.mrb[0].mxu0 %v334
  %v723 = vpop.f32.mrb[0].mxu0
  %v724 = vadd.f32 %v104, %v723
  %v725 = vpop.f32.mrb[0].mxu0
  %v726 = vpop.f32.mrb[0].mxu0
  %v727 = vadd.f32 %v104, %v726
  %v728 = vpop.f32.mrb[0].mxu0
  %729 = vmatprep.mubr.bf16.mxu0 %v507
  %730 = vmatmul.mubr.bf16.gmra.mrb[0].mxu0 %v336
  %v731 = vpop.f32.mrb[0].mxu0
  %v732 = vadd.f32 %v104, %v731
  %v733 = vpop.f32.mrb[0].mxu0
  %v734 = vpop.f32.mrb[0].mxu0
  %v735 = vadd.f32 %v104, %v734
  %v736 = vpop.f32.mrb[0].mxu0
  %737 = vmatprep.mubr.bf16.mxu0 %v510
  %738 = vmatmul.mubr.bf16.gmra.mrb[0].mxu0 %v338
  %v739 = vpop.f32.mrb[0].mxu0
  %v740 = vadd.f32 %v104, %v739
  %v741 = vpop.f32.mrb[0].mxu0
  %v742 = vpop.f32.mrb[0].mxu0
  %v743 = vadd.f32 %v104, %v742
  %v744 = vpop.f32.mrb[0].mxu0
  %745 = vmatprep.mubr.bf16.mxu0 %v513
  %746 = vmatmul.mubr.bf16.gmra.mrb[0].mxu0 %v340
  %v747 = vpop.f32.mrb[0].mxu0
  %v748 = vadd.f32 %v104, %v747
  %v749 = vpop.f32.mrb[0].mxu0
  %v750 = vpop.f32.mrb[0].mxu0
  %v751 = vadd.f32 %v104, %v750
  %v752 = vpop.f32.mrb[0].mxu0
  %753 = vmatprep.mubr.bf16.mxu0 %v516
  %754 = vmatmul.mubr.bf16.gmra.mrb[0].mxu0 %v342
  %v755 = vpop.f32.mrb[0].mxu0
  %v756 = vadd.f32 %v104, %v755
  %v757 = vpop.f32.mrb[0].mxu0
  %v758 = vpop.f32.mrb[0].mxu0
  %v759 = vadd.f32 %v104, %v758
  %v760 = vpop.f32.mrb[0].mxu0
  %761 = vmatprep.mubr.bf16.mxu0 %v519
  %762 = vmatmul.mubr.bf16.gmra.mrb[0].mxu0 %v344
  %v763 = vpop.f32.mrb[0].mxu0
  %v764 = vadd.f32 %v104, %v763
  %v765 = vpop.f32.mrb[0].mxu0
  %v766 = vpop.f32.mrb[0].mxu0
  %v767 = vadd.f32 %v104, %v766
  %v768 = vpop.f32.mrb[0].mxu0
  %769 = vmatprep.mubr.bf16.mxu0 %v522
  %770 = vmatmul.mubr.bf16.gmra.mrb[0].mxu0 %v346
  %v771 = vpop.f32.mrb[0].mxu0
  %v772 = vadd.f32 %v104, %v771
  %v773 = vpop.f32.mrb[0].mxu0
  %v774 = vpop.f32.mrb[0].mxu0
  %v775 = vadd.f32 %v104, %v774
  %v776 = vpop.f32.mrb[0].mxu0
  %777 = vmatprep.mubr.bf16.mxu0 %v525
  %778 = vmatmul.mubr.bf16.gmra.mrb[0].mxu0 %v348
  %v779 = vpop.f32.mrb[0].mxu0
  %v780 = vadd.f32 %v104, %v779
  %v781 = vpop.f32.mrb[0].mxu0
  %v782 = vpop.f32.mrb[0].mxu0
  %v783 = vadd.f32 %v104, %v782
  %v784 = vpop.f32.mrb[0].mxu0
  %785 = vmatprep.mubr.bf16.mxu0 %v528
  %786 = vmatmul.mubr.bf16.gmra.mrb[0].mxu0 %v350
  %v787 = vpop.f32.mrb[0].mxu0
  %v788 = vadd.f32 %v104, %v787
  %v789 = vpop.f32.mrb[0].mxu0
  %v790 = vpop.f32.mrb[0].mxu0
  %v791 = vadd.f32 %v104, %v790
  %v792 = vpop.f32.mrb[0].mxu0
  %793 = vmatprep.mubr.bf16.mxu0 %v531
  %794 = vmatmul.mubr.bf16.gmra.mrb[0].mxu0 %v352
  %v795 = vpop.f32.mrb[0].mxu0
  %v796 = vadd.f32 %v104, %v795
  %v797 = vpop.f32.mrb[0].mxu0
  %v798 = vpop.f32.mrb[0].mxu0
  %v799 = vadd.f32 %v104, %v798
  %v800 = vpop.f32.mrb[0].mxu0
  %801 = vmatprep.mubr.bf16.mxu0 %v534
  %802 = vmatmul.mubr.bf16.gmra.mrb[0].mxu0 %v354
  %v803 = vpop.f32.mrb[0].mxu0
  %v804 = vadd.f32 %v104, %v803
  %v805 = vpop.f32.mrb[0].mxu0
  %v806 = vpop.f32.mrb[0].mxu0
  %v807 = vadd.f32 %v104, %v806
  %v808 = vpop.f32.mrb[0].mxu0
  %809 = vmatprep.mubr.bf16.mxu0 %v537
  %810 = vmatmul.mubr.bf16.gmra.mrb[0].mxu0 %v356
  %v811 = vpop.f32.mrb[0].mxu0
  %v812 = vadd.f32 %v104, %v811
  %v813 = vpop.f32.mrb[0].mxu0
  %v814 = vpop.f32.mrb[0].mxu0
  %v815 = vadd.f32 %v104, %v814
  %v816 = vpop.f32.mrb[0].mxu0
  %817 = vmatprep.mubr.bf16.mxu0 %v540
  %818 = vmatmul.mubr.bf16.gmra.mrb[0].mxu0 %v358
  %v819 = vpop.f32.mrb[0].mxu0
  %v820 = vadd.f32 %v104, %v819
  %v821 = vpop.f32.mrb[0].mxu0
  %v822 = vpop.f32.mrb[0].mxu0
  %v823 = vadd.f32 %v104, %v822
  %v824 = vpop.f32.mrb[0].mxu0
  %825 = vmatprep.mubr.bf16.mxu0 %v543
  %826 = vmatmul.mubr.bf16.gmra.mrb[0].mxu0 %v360
  %v827 = vpop.f32.mrb[0].mxu0
  %v828 = vadd.f32 %v104, %v827
  %v829 = vpop.f32.mrb[0].mxu0
  %v830 = vpop.f32.mrb[0].mxu0
  %v831 = vadd.f32 %v104, %v830
  %v832 = vpop.f32.mrb[0].mxu0
  %833 = vdwg.mxu0
  %v834 = vtanh.pop %v580
  %v835 = vtanh.pop %v583
  %v836 = vtanh.pop %v588
  %v837 = vtanh.pop %v591
  %v838 = vtanh.pop %v596
  %v839 = vtanh.pop %v599
  %v840 = vtanh.pop %v604
  %v841 = vtanh.pop %v607
  %v842 = vtanh.pop %v612
  %v843 = vtanh.pop %v615
  %v844 = vtanh.pop %v620
  %v845 = vtanh.pop %v623
  %v846 = vtanh.pop %v628
  %v847 = vtanh.pop %v631
  %v848 = vtanh.pop %v636
  %v849 = vtanh.pop %v639
  %v850 = vtanh.pop %v644
  %v851 = vtanh.pop %v647
  %v852 = vtanh.pop %v652
  %v853 = vtanh.pop %v655
  %v854 = vtanh.pop %v660
  %v855 = vtanh.pop %v663
  %v856 = vtanh.pop %v668
  %v857 = vtanh.pop %v671
  %v858 = vtanh.pop %v676
  %v859 = vtanh.pop %v679
  %v860 = vtanh.pop %v684
  %v861 = vtanh.pop %v687
  %v862 = vtanh.pop %v692
  %v863 = vtanh.pop %v695
  %v864 = vtanh.pop %v700
  %v865 = vtanh.pop %v703
  %v866 = vtanh.pop %v708
  %v867 = vtanh.pop %v711
  %v868 = vtanh.pop %v716
  %v869 = vtanh.pop %v719
  %v870 = vtanh.pop %v724
  %v871 = vtanh.pop %v727
  %v872 = vtanh.pop %v732
  %v873 = vtanh.pop %v735
  %v874 = vtanh.pop %v740
  %v875 = vtanh.pop %v743
  %v876 = vtanh.pop %v748
  %v877 = vtanh.pop %v751
  %v878 = vtanh.pop %v756
  %v879 = vtanh.pop %v759
  %v880 = vtanh.pop %v764
  %v881 = vtanh.pop %v767
  %v882 = vtanh.pop %v772
  %v883 = vtanh.pop %v775
  %v884 = vtanh.pop %v780
  %v885 = vtanh.pop %v783
  %v886 = vtanh.pop %v788
  %v887 = vtanh.pop %v791
  %v888 = vtanh.pop %v796
  %v889 = vtanh.pop %v799
  %v890 = vtanh.pop %v804
  %v891 = vtanh.pop %v807
  %v892 = vtanh.pop %v812
  %v893 = vtanh.pop %v815
  %v894 = vtanh.pop %v820
  %v895 = vtanh.pop %v823
  %v896 = vtanh.pop %v828
  %v897 = vtanh.pop %v831
  %vm898 = vcmask 7168
  %899 = vst.msk [vmem:[%s3] sm:$0xff] %vm898, %v834
  %900 = vst.msk [vmem:[%s3 + $0x8] sm:$0xff] %vm898, %v835
  %901 = vst.msk [vmem:[%s3 + $0x10] sm:$0xff] %vm898, %v836
  %902 = vst.msk [vmem:[%s3 + $0x18] sm:$0xff] %vm898, %v837
  %903 = vst.msk [vmem:[%s3 + $0x20] sm:$0xff] %vm898, %v838
  %904 = vst.msk [vmem:[%s3 + $0x28] sm:$0xff] %vm898, %v839
  %905 = vst.msk [vmem:[%s3 + $0x30] sm:$0xff] %vm898, %v840
  %906 = vst.msk [vmem:[%s3 + $0x38] sm:$0xff] %vm898, %v841
  %907 = vst.msk [vmem:[%s3 + $0x40] sm:$0xff] %vm898, %v842
  %908 = vst.msk [vmem:[%s3 + $0x48] sm:$0xff] %vm898, %v843
  %909 = vst.msk [vmem:[%s3 + $0x50] sm:$0xff] %vm898, %v844
  %910 = vst.msk [vmem:[%s3 + $0x58] sm:$0xff] %vm898, %v845
  %911 = vst.msk [vmem:[%s3 + $0x60] sm:$0xff] %vm898, %v846
  %912 = vst.msk [vmem:[%s3 + $0x68] sm:$0xff] %vm898, %v847
  %913 = vst.msk [vmem:[%s3 + $0x70] sm:$0xff] %vm898, %v848
  %914 = vst.msk [vmem:[%s3 + $0x78] sm:$0xff] %vm898, %v849
  %915 = vst.msk [vmem:[%s3 + $0x80] sm:$0xff] %vm898, %v850
  %916 = vst.msk [vmem:[%s3 + $0x88] sm:$0xff] %vm898, %v851
  %917 = vst.msk [vmem:[%s3 + $0x90] sm:$0xff] %vm898, %v852
  %918 = vst.msk [vmem:[%s3 + $0x98] sm:$0xff] %vm898, %v853
  %919 = vst.msk [vmem:[%s3 + $0xa0] sm:$0xff] %vm898, %v854
  %920 = vst.msk [vmem:[%s3 + $0xa8] sm:$0xff] %vm898, %v855
  %921 = vst.msk [vmem:[%s3 + $0xb0] sm:$0xff] %vm898, %v856
  %922 = vst.msk [vmem:[%s3 + $0xb8] sm:$0xff] %vm898, %v857
  %923 = vst.msk [vmem:[%s3 + $0xc0] sm:$0xff] %vm898, %v858
  %924 = vst.msk [vmem:[%s3 + $0xc8] sm:$0xff] %vm898, %v859
  %925 = vst.msk [vmem:[%s3 + $0xd0] sm:$0xff] %vm898, %v860
  %926 = vst.msk [vmem:[%s3 + $0xd8] sm:$0xff] %vm898, %v861
  %927 = vst.msk [vmem:[%s3 + $0xe0] sm:$0xff] %vm898, %v862
  %928 = vst.msk [vmem:[%s3 + $0xe8] sm:$0xff] %vm898, %v863
  %929 = vst.msk [vmem:[%s3 + $0xf0] sm:$0xff] %vm898, %v864
  %930 = vst.msk [vmem:[%s3 + $0xf8] sm:$0xff] %vm898, %v865
  %931 = vst.msk [vmem:[%s3 + $0x100] sm:$0xff] %vm898, %v866
  %932 = vst.msk [vmem:[%s3 + $0x108] sm:$0xff] %vm898, %v867
  %933 = vst.msk [vmem:[%s3 + $0x110] sm:$0xff] %vm898, %v868
  %934 = vst.msk [vmem:[%s3 + $0x118] sm:$0xff] %vm898, %v869
  %935 = vst.msk [vmem:[%s3 + $0x120] sm:$0xff] %vm898, %v870
  %936 = vst.msk [vmem:[%s3 + $0x128] sm:$0xff] %vm898, %v871
  %937 = vst.msk [vmem:[%s3 + $0x130] sm:$0xff] %vm898, %v872
  %938 = vst.msk [vmem:[%s3 + $0x138] sm:$0xff] %vm898, %v873
  %939 = vst.msk [vmem:[%s3 + $0x140] sm:$0xff] %vm898, %v874
  %940 = vst.msk [vmem:[%s3 + $0x148] sm:$0xff] %vm898, %v875
  %941 = vst.msk [vmem:[%s3 + $0x150] sm:$0xff] %vm898, %v876
  %942 = vst.msk [vmem:[%s3 + $0x158] sm:$0xff] %vm898, %v877
  %943 = vst.msk [vmem:[%s3 + $0x160] sm:$0xff] %vm898, %v878
  %944 = vst.msk [vmem:[%s3 + $0x168] sm:$0xff] %vm898, %v879
  %945 = vst.msk [vmem:[%s3 + $0x170] sm:$0xff] %vm898, %v880
  %946 = vst.msk [vmem:[%s3 + $0x178] sm:$0xff] %vm898, %v881
  %947 = vst.msk [vmem:[%s3 + $0x180] sm:$0xff] %vm898, %v882
  %948 = vst.msk [vmem:[%s3 + $0x188] sm:$0xff] %vm898, %v883
  %949 = vst.msk [vmem:[%s3 + $0x190] sm:$0xff] %vm898, %v884
  %950 = vst.msk [vmem:[%s3 + $0x198] sm:$0xff] %vm898, %v885
  %951 = vst.msk [vmem:[%s3 + $0x1a0] sm:$0xff] %vm898, %v886
  %952 = vst.msk [vmem:[%s3 + $0x1a8] sm:$0xff] %vm898, %v887
  %953 = vst.msk [vmem:[%s3 + $0x1b0] sm:$0xff] %vm898, %v888
  %954 = vst.msk [vmem:[%s3 + $0x1b8] sm:$0xff] %vm898, %v889
  %955 = vst.msk [vmem:[%s3 + $0x1c0] sm:$0xff] %vm898, %v890
  %956 = vst.msk [vmem:[%s3 + $0x1c8] sm:$0xff] %vm898, %v891
  %957 = vst.msk [vmem:[%s3 + $0x1d0] sm:$0xff] %vm898, %v892
  %958 = vst.msk [vmem:[%s3 + $0x1d8] sm:$0xff] %vm898, %v893
  %959 = vst.msk [vmem:[%s3 + $0x1e0] sm:$0xff] %vm898, %v894
  %960 = vst.msk [vmem:[%s3 + $0x1e8] sm:$0xff] %vm898, %v895
  %961 = vst.msk [vmem:[%s3 + $0x1f0] sm:$0xff] %vm898, %v896
  %962 = vst.msk [vmem:[%s3 + $0x1f8] sm:$0xff] %vm898, %v897
  // Predicated region
  $region14: #{autoencoder_forward.15} parent=0 // pred_check
    _
  $region15: #{autoencoder_forward.15} parent=0 // pred_check_branch
    %964 = sbr.rel (0) target = $region17
  $region16: #{autoencoder_forward.15} parent=0 // pred_region
    _
  $region17: #{autoencoder_forward.15} parent=0 // pred_fallthru
    _
  // Predicated region
  $region18: #{autoencoder_forward.15} parent=0 // pred_check
    _
  $region19: #{autoencoder_forward.15} parent=0 // pred_check_branch
    %966 = sbr.rel (0) target = $region21
  $region20: #{autoencoder_forward.15} parent=0 // pred_region
    _
  $region21: #{autoencoder_forward.15} parent=0 // pred_fallthru
    _

</llo_original>
